<compile_context>
chip_gen: v7x
topology: tpu7x:2x2x1
jax: 0.10.0
libtpu: 0.0.40
codegen_flags: <defaults>
</compile_context>

<pallas_src>
import math
import functools

import jax
import jax.numpy as jnp
from jax.experimental import pallas as pl
from jax.experimental.pallas import tpu as pltpu


def _round_up(x, m):
    return ((x + m - 1) // m) * m


def _pick_block_batch(B, T, target_rows=256):
    """Largest divisor Bb of B with Bb*T <= target rows (MXU M-dim packing),
    keeping >= 2 grid steps when B >= 2 so both v7x TensorCores get work."""
    best = 1
    for bb in range(1, B + 1):
        if B % bb != 0:
            continue
        if B >= 2 and B // bb < 2:
            continue
        if bb * T <= max(target_rows, T):
            best = bb
    return best


def _vmem_limit_bytes(Bb, T, T_pad, C, M, FFN, single_buffer_weights):
    R = Bb * T
    # double-buffered per-step input/output blocks
    blocks = 2 * Bb * (T * C * 4 + T * T * 1 + M * T * 4)
    blocks += 2 * Bb * (T * C * 4 + T_pad * 4)
    # resident weights (bf16) + biases/LN params (f32)
    wmult = 1 if single_buffer_weights else 2
    weights = wmult * 2 * (C * 3 * C + C * C + 2 * C * FFN)
    weights += wmult * 4 * (3 * C + C + 4 * C + FFN + C)
    # VMEM scratch (ctx) + rough bound on live f32 temporaries
    scratch = R * C * 4
    inter = 4 * (R * 3 * C + 4 * T * T + 4 * R * C + R * FFN)
    est = 2 * (blocks + weights + scratch + inter)        # 2x safety margin
    try:
        info = pltpu.get_tpu_info()
        phys = int(getattr(info, "vmem_capacity_bytes", 64 << 20))
    except Exception:
        phys = 64 << 20                                   # v7x-safe fallback
    cap = max(min(int(0.85 * phys), 100 << 20), 16 << 20)
    return int(min(max(est, 16 << 20), cap))


def _dlwt_kernel(x_ref, mask_ref, mmask_ref,
                 wqkv_ref, bqkv_ref, wo_ref, bo_ref,
                 g1_ref, be1_ref, g2_ref, be2_ref,
                 w1_ref, bb1_ref, w2_ref, bb2_ref,
                 out_ref, attn_ref, ctx_ref,
                 *, Bb, T, C, H, T_pad):
    DH = C // H
    R = Bb * T
    inv_h = jnp.float32(1.0 / H)

    # (Bb, T, C) -> packed (Bb*T, C); T is kept a multiple of 8 by the caller
    # so this collapse is a free relayout.
    x = x_ref[...].reshape(R, C)                          # f32
    x_bf = x.astype(jnp.bfloat16)

    # --- fused QKV projection over all packed rows (one wide bf16 MXU matmul).
    #     Weights pre-transposed to (in, out); 1/sqrt(DH) folded into Q.
    qkv = jnp.dot(x_bf, wqkv_ref[...],
                  preferred_element_type=jnp.float32) + bqkv_ref[...]   # (R, 3C)

    # --- per-(batch, head) attention with deferred softmax normalization.
    for b in range(Bb):
        # int8 mask (1 = disallowed) -> additive bias, expanded in-kernel.
        bias = mask_ref[b].astype(jnp.float32) * jnp.float32(-1e9)      # (T, T)
        rows = slice(b * T, (b + 1) * T)
        hs = jnp.zeros((1, T), jnp.float32)
        for h in range(H):
            qh = qkv[rows, 0 * C + h * DH:0 * C + (h + 1) * DH].astype(jnp.bfloat16)
            kh = qkv[rows, 1 * C + h * DH:1 * C + (h + 1) * DH].astype(jnp.bfloat16)
            vh = qkv[rows, 2 * C + h * DH:2 * C + (h + 1) * DH].astype(jnp.bfloat16)
            # scores = qh @ kh^T (NT matmul) + additive mask
            s = jax.lax.dot_general(qh, kh, (((1,), (1,)), ((), ())),
                                    preferred_element_type=jnp.float32) + bias
            m = jnp.max(s, axis=-1, keepdims=True)
            e = jnp.exp(s - m)                                           # (T, T)
            r = pl.reciprocal(jnp.sum(e, axis=-1, keepdims=True),
                              approx=True)                               # (T, 1)
            e_bf = e.astype(jnp.bfloat16)
            # normalized context written straight into VMEM scratch
            ctx_ref[rows, h * DH:(h + 1) * DH] = (
                jnp.dot(e_bf, vh, preferred_element_type=jnp.float32) * r)
            # halting column-sums on the MXU: (1,T) = r^T @ e
            hs = hs + jax.lax.dot_general(r.astype(jnp.bfloat16), e_bf,
                                          (((0,), (0,)), ((), ())),
                                          preferred_element_type=jnp.float32)

        # --- halting score: head-averaged weights -> window softmax ---------
        mmask = mmask_ref[b]                                             # (M, T)
        hsw = hs * inv_h * mmask
        z = hsw + (jnp.float32(1.0) - mmask) * jnp.float32(-1e10)
        zm = jnp.max(z, axis=-1, keepdims=True)
        ez = jnp.exp(z - zm)
        sm = ez * pl.reciprocal(jnp.sum(ez, axis=-1, keepdims=True), approx=True)
        # NaN cleanup dropped: with the additive -1e10 mask sm is never NaN.
        halting = jnp.sum(sm * mmask, axis=0, keepdims=True)             # (1, T)
        if T_pad > T:
            halting = jnp.concatenate(
                [halting, jnp.zeros((1, T_pad - T), jnp.float32)], axis=-1)
        attn_ref[b] = halting                                            # lane-dense

    # --- single output projection over concatenated heads (full K = C) ------
    ctx = ctx_ref[...].astype(jnp.bfloat16)                              # (R, C)
    attn_out = jnp.dot(ctx, wo_ref[...],
                       preferred_element_type=jnp.float32) + bo_ref[...]

    # --- residual + LayerNorm 1 (f32) ---
    h1 = x + attn_out
    mu1 = jnp.mean(h1, axis=-1, keepdims=True)
    var1 = jnp.mean((h1 - mu1) * (h1 - mu1), axis=-1, keepdims=True)
    xn = (h1 - mu1) * jax.lax.rsqrt(var1 + jnp.float32(1e-5)) * g1_ref[...] + be1_ref[...]

    # --- FFN: Linear -> ReLU -> Linear (bf16 matmuls, f32 accumulation) ---
    f = jnp.dot(xn.astype(jnp.bfloat16), w1_ref[...],
                preferred_element_type=jnp.float32) + bb1_ref[...]
    f = jnp.maximum(f, jnp.float32(0.0))
    f = jnp.dot(f.astype(jnp.bfloat16), w2_ref[...],
                preferred_element_type=jnp.float32) + bb2_ref[...]

    # --- residual + LayerNorm 2 (f32) ---
    h2 = xn + f
    mu2 = jnp.mean(h2, axis=-1, keepdims=True)
    var2 = jnp.mean((h2 - mu2) * (h2 - mu2), axis=-1, keepdims=True)
    y = (h2 - mu2) * jax.lax.rsqrt(var2 + jnp.float32(1e-5)) * g2_ref[...] + be2_ref[...]
    out_ref[...] = y.reshape(Bb, T, C)


def _dlwt_call(B, T, C, H, M, FFN, Bb, T_pad, single_buffer_weights):
    steps = B // Bb
    kernel = functools.partial(_dlwt_kernel, Bb=Bb, T=T, C=C, H=H, T_pad=T_pad)

    def bspec(shape):
        return pl.BlockSpec(shape, lambda i: (i, 0, 0))

    wkw = dict(pipeline_mode=pl.Buffered(1)) if single_buffer_weights else {}

    def wspec(shape):                      # constant-indexed, resident weights
        return pl.BlockSpec(shape, lambda i: (0, 0), **wkw)

    vmem_limit = _vmem_limit_bytes(Bb, T, T_pad, C, M, FFN, single_buffer_weights)

    flops = B * (2 * T * C * (3 * C + C + 2 * FFN) + 4 * T * T * C + 4 * T * T)
    transcendentals = B * (H * T * T + M * T + H * T + M)
    bytes_accessed = (B * (2 * T * C * 4 + T * T + M * T * 4 + T_pad * 4)
                      + 2 * (3 * C * C + C * C + 2 * C * FFN)
                      + 4 * (3 * C + 6 * C + FFN))

    return pl.pallas_call(
        kernel,
        out_shape=(
            jax.ShapeDtypeStruct((B, T, C), jnp.float32),
            jax.ShapeDtypeStruct((B, 1, T_pad), jnp.float32),
        ),
        grid=(steps,),
        in_specs=[
            bspec((Bb, T, C)),              # x (f32)
            bspec((Bb, T, T)),              # attention mask (int8, 1 = disallowed)
            bspec((Bb, M, T)),              # mapping mask (f32)
            wspec((C, 3 * C)),              # in_proj weight^T, Q pre-scaled, bf16
            wspec((1, 3 * C)),              # in_proj bias (Q pre-scaled), f32
            wspec((C, C)),                  # out_proj weight^T, bf16
            wspec((1, C)),                  # out_proj bias
            wspec((1, C)), wspec((1, C)),   # ln1 gamma / beta
            wspec((1, C)), wspec((1, C)),   # ln2 gamma / beta
            wspec((C, FFN)),                # FFN W1^T, bf16
            wspec((1, FFN)),                # FFN b1
            wspec((FFN, C)),                # FFN W2^T, bf16
            wspec((1, C)),                  # FFN b2
        ],
        out_specs=(
            pl.BlockSpec((Bb, T, C), lambda i: (i, 0, 0)),
            pl.BlockSpec((Bb, 1, T_pad), lambda i: (i, 0, 0)),
        ),
        scratch_shapes=[pltpu.VMEM((Bb * T, C), jnp.float32)],
        compiler_params=pltpu.CompilerParams(
            dimension_semantics=("parallel",),
            vmem_limit_bytes=vmem_limit),
        cost_estimate=pl.CostEstimate(
            flops=int(flops),
            transcendentals=int(transcendentals),
            bytes_accessed=int(bytes_accessed)),
    )


def dlwt_forward(x, mask_bool, mappingmask, kp, *, head):
    """x: (B,T,C) f32; mask_bool: (B,T,T) bool (True = disallowed);
    mappingmask: (B,M,T) f32.  Returns (out (B,T,C), halting (B,T))."""
    B, T, C = x.shape
    M = mappingmask.shape[1]
    FFN = kp["w1_t"].shape[1]
    Bb = _pick_block_batch(B, T)
    T_pad = _round_up(T, 128)               # lane-dense halting slab

    args = (x.astype(jnp.float32),
            mask_bool.astype(jnp.int8),     # compact mask, expanded in-kernel
            mappingmask.astype(jnp.float32),
            kp["wqkv_t"], kp["bqkv"], kp["wo_t"], kp["bo"],
            kp["g1"], kp["be1"], kp["g2"], kp["be2"],
            kp["w1_t"], kp["bb1"], kp["w2_t"], kp["bb2"])

    try:
        out, attn = _dlwt_call(B, T, C, head, M, FFN, Bb, T_pad, True)(*args)
    except Exception:
        # pipeline_mode=pl.Buffered(1) unsupported on this jax version ->
        # fall back to default (double-buffered) weight blocks.
        out, attn = _dlwt_call(B, T, C, head, M, FFN, Bb, T_pad, False)(*args)
    return out, attn[:, 0, :T]


def prepare_params(params, *, head):
    """One-time host-side prep: PyTorch-layout f32 params -> kernel layout.

    Weights are transposed to (in, out), cast to bf16, and 1/sqrt(head_dim) is
    folded into the Q columns of the in-projection (and its bias)."""
    C = params["wo"].shape[0]
    scale = jnp.float32(1.0 / math.sqrt(C // head))
    wq = params["wqkv"][0 * C:1 * C]
    wk = params["wqkv"][1 * C:2 * C]
    wv = params["wqkv"][2 * C:3 * C]
    wqkv_t = jnp.concatenate([wq.T * scale, wk.T, wv.T], axis=1)       # (C, 3C)
    bqkv = params["bqkv"]
    bqkv_s = jnp.concatenate([bqkv[:, :C] * scale, bqkv[:, C:]], axis=1)
    return {
        "wqkv_t": wqkv_t.astype(jnp.bfloat16),
        "bqkv": bqkv_s.astype(jnp.float32),
        "wo_t": params["wo"].T.astype(jnp.bfloat16),
        "bo": params["bo"].astype(jnp.float32),
        "g1": params["g1"].astype(jnp.float32),
        "be1": params["be1"].astype(jnp.float32),
        "g2": params["g2"].astype(jnp.float32),
        "be2": params["be2"].astype(jnp.float32),
        "w1_t": params["w1"].T.astype(jnp.bfloat16),                   # (C, FFN)
        "bb1": params["bb1"].astype(jnp.float32),
        "w2_t": params["w2"].T.astype(jnp.bfloat16),                   # (FFN, C)
        "bb2": params["bb2"].astype(jnp.float32),
    }


def init_params(key, dim, head, ffn_dim):
    """PyTorch-layout parameters (as nn.MultiheadAttention / Linear store them)."""
    ks = jax.random.split(key, 4)
    s = 0.02
    return {
        "wqkv": s * jax.random.normal(ks[0], (3 * dim, dim), jnp.float32),
        "bqkv": jnp.zeros((1, 3 * dim), jnp.float32),
        "wo":   s * jax.random.normal(ks[1], (dim, dim), jnp.float32),
        "bo":   jnp.zeros((1, dim), jnp.float32),
        "g1":   jnp.ones((1, dim), jnp.float32),
        "be1":  jnp.zeros((1, dim), jnp.float32),
        "g2":   jnp.ones((1, dim), jnp.float32),
        "be2":  jnp.zeros((1, dim), jnp.float32),
        "w1":   s * jax.random.normal(ks[2], (ffn_dim, dim), jnp.float32),
        "bb1":  jnp.zeros((1, ffn_dim), jnp.float32),
        "w2":   s * jax.random.normal(ks[3], (dim, ffn_dim), jnp.float32),
        "bb2":  jnp.zeros((1, dim), jnp.float32),
    }


if __name__ == "__main__":
    B, T, C, H, FFN = 4, 8, 32, 4, 64
    M = 4  # number of local windows in mappingmask

    key = jax.random.PRNGKey(0)
    kx, kp = jax.random.split(key)
    x = jax.random.normal(kx, (B, T, C), jnp.float32)

    # attention mask: True = NOT allowed to attend (PyTorch bool attn_mask convention)
    idx = jnp.arange(T)
    allowed = jnp.abs(idx[:, None] - idx[None, :]) <= 2          # local window |i-j|<=2
    mask_bool = jnp.broadcast_to(~allowed, (B, T, T))

    # mapping mask: (B, M, T), window w covers tokens [w*2, w*2+1]
    win_id = idx // (T // M)
    mappingmask = (win_id[None, :] == jnp.arange(M)[:, None]).astype(jnp.float32)
    mappingmask = jnp.broadcast_to(mappingmask, (B, M, T))

    params = init_params(kp, C, H, FFN)
    kparams = prepare_params(params, head=H)     # one-time host-side weight prep

    out, halting = dlwt_forward(x, mask_bool, mappingmask, kparams, head=H)
    jax.block_until_ready((out, halting))

    assert out.shape == (B, T, C) and halting.shape == (B, T)
    assert bool(jnp.all(jnp.isfinite(out))) and bool(jnp.all(jnp.isfinite(halting)))
    print("KERNEL_OK")
</pallas_src>

<mosaic_0001>
module attributes {stable_mosaic.version = 11 : i64} {
  func.func @_dlwt_kernel(%arg0: i32, %arg1: memref<2x8x32xf32, #tpu.memory_space<vmem>>, %arg2: memref<2x8x8xi8, #tpu.memory_space<vmem>>, %arg3: memref<2x4x8xf32, #tpu.memory_space<vmem>>, %arg4: memref<32x96xbf16, #tpu.memory_space<vmem>>, %arg5: memref<1x96xf32, #tpu.memory_space<vmem>>, %arg6: memref<32x32xbf16, #tpu.memory_space<vmem>>, %arg7: memref<1x32xf32, #tpu.memory_space<vmem>>, %arg8: memref<1x32xf32, #tpu.memory_space<vmem>>, %arg9: memref<1x32xf32, #tpu.memory_space<vmem>>, %arg10: memref<1x32xf32, #tpu.memory_space<vmem>>, %arg11: memref<1x32xf32, #tpu.memory_space<vmem>>, %arg12: memref<32x64xbf16, #tpu.memory_space<vmem>>, %arg13: memref<1x64xf32, #tpu.memory_space<vmem>>, %arg14: memref<64x32xbf16, #tpu.memory_space<vmem>>, %arg15: memref<1x32xf32, #tpu.memory_space<vmem>>, %arg16: memref<2x8x32xf32, #tpu.memory_space<vmem>>, %arg17: memref<2x1x128xf32, #tpu.memory_space<vmem>>, %arg18: memref<16x32xf32, #tpu.memory_space<vmem>>) attributes {dimension_semantics = [#tpu.dimension_semantics<parallel>], iteration_bounds = array<i64: 2>, scalar_prefetch = 0 : i64, scratch_operands = 1 : i64, tpu.core_type = #tpu.core_type<tc>, window_params = [{transform_indices = @transform_0, window_bounds = array<i64: 2, 8, 32>}, {transform_indices = @transform_1, window_bounds = array<i64: 2, 8, 8>}, {transform_indices = @transform_2, window_bounds = array<i64: 2, 4, 8>}, {pipeline_mode = #tpu.pipeline_mode<synchronous>, transform_indices = @transform_3, window_bounds = array<i64: 32, 96>}, {pipeline_mode = #tpu.pipeline_mode<synchronous>, transform_indices = @transform_4, window_bounds = array<i64: 1, 96>}, {pipeline_mode = #tpu.pipeline_mode<synchronous>, transform_indices = @transform_5, window_bounds = array<i64: 32, 32>}, {pipeline_mode = #tpu.pipeline_mode<synchronous>, transform_indices = @transform_6, window_bounds = array<i64: 1, 32>}, {pipeline_mode = #tpu.pipeline_mode<synchronous>, transform_indices = @transform_7, window_bounds = array<i64: 1, 32>}, {pipeline_mode = #tpu.pipeline_mode<synchronous>, transform_indices = @transform_8, window_bounds = array<i64: 1, 32>}, {pipeline_mode = #tpu.pipeline_mode<synchronous>, transform_indices = @transform_9, window_bounds = array<i64: 1, 32>}, {pipeline_mode = #tpu.pipeline_mode<synchronous>, transform_indices = @transform_10, window_bounds = array<i64: 1, 32>}, {pipeline_mode = #tpu.pipeline_mode<synchronous>, transform_indices = @transform_11, window_bounds = array<i64: 32, 64>}, {pipeline_mode = #tpu.pipeline_mode<synchronous>, transform_indices = @transform_12, window_bounds = array<i64: 1, 64>}, {pipeline_mode = #tpu.pipeline_mode<synchronous>, transform_indices = @transform_13, window_bounds = array<i64: 64, 32>}, {pipeline_mode = #tpu.pipeline_mode<synchronous>, transform_indices = @transform_14, window_bounds = array<i64: 1, 32>}, {transform_indices = @transform_15, window_bounds = array<i64: 2, 8, 32>}, {transform_indices = @transform_16, window_bounds = array<i64: 2, 1, 128>}]} {
    %c0 = arith.constant 0 : index
    %c0_0 = arith.constant 0 : index
    %c0_1 = arith.constant 0 : index
    %0 = vector.load %arg1[%c0, %c0_0, %c0_1] : memref<2x8x32xf32, #tpu.memory_space<vmem>>, vector<2x8x32xf32>
    %1 = vector.shape_cast %0 : vector<2x8x32xf32> to vector<16x32xf32>
    %2 = arith.truncf %1 : vector<16x32xf32> to vector<16x32xbf16>
    %c0_2 = arith.constant 0 : index
    %c0_3 = arith.constant 0 : index
    %3 = vector.load %arg4[%c0_2, %c0_3] : memref<32x96xbf16, #tpu.memory_space<vmem>>, vector<32x96xbf16>
    %cst = arith.constant dense<0.000000e+00> : vector<16x96xf32>
    %4 = tpu.matmul %2, %3, %cst {dimension_numbers = #tpu.dot_dimension_numbers<[1], [0], [0], [1], [0, 0, 1, 1], [], []>} : vector<16x32xbf16>, vector<32x96xbf16>, vector<16x96xf32> -> vector<16x96xf32>
    %c0_4 = arith.constant 0 : index
    %c0_5 = arith.constant 0 : index
    %5 = vector.load %arg5[%c0_4, %c0_5] : memref<1x96xf32, #tpu.memory_space<vmem>>, vector<1x96xf32>
    %6 = vector.broadcast %5 : vector<1x96xf32> to vector<16x96xf32>
    %7 = arith.addf %4, %6 : vector<16x96xf32>
    %c0_6 = arith.constant 0 : index
    %c0_7 = arith.constant 0 : index
    %c0_8 = arith.constant 0 : index
    %8 = vector.load %arg2[%c0_6, %c0_7, %c0_8] : memref<2x8x8xi8, #tpu.memory_space<vmem>>, vector<1x8x8xi8>
    %9 = vector.shape_cast %8 : vector<1x8x8xi8> to vector<8x8xi8>
    %10 = arith.sitofp %9 : vector<8x8xi8> to vector<8x8xf32>
    %cst_9 = arith.constant -1.000000e+09 : f32
    %11 = vector.broadcast %cst_9 : f32 to vector<8x8xf32>
    %12 = arith.mulf %10, %11 : vector<8x8xf32>
    %cst_10 = arith.constant 0.000000e+00 : f32
    %13 = vector.broadcast %cst_10 : f32 to vector<1x8xf32>
    %14 = vector.extract_strided_slice %7 {offsets = [0, 0], sizes = [8, 8], strides = [1, 1]} : vector<16x96xf32> to vector<8x8xf32>
    %15 = arith.truncf %14 : vector<8x8xf32> to vector<8x8xbf16>
    %16 = vector.extract_strided_slice %7 {offsets = [0, 32], sizes = [8, 8], strides = [1, 1]} : vector<16x96xf32> to vector<8x8xf32>
    %17 = arith.truncf %16 : vector<8x8xf32> to vector<8x8xbf16>
    %18 = vector.extract_strided_slice %7 {offsets = [0, 64], sizes = [8, 8], strides = [1, 1]} : vector<16x96xf32> to vector<8x8xf32>
    %19 = arith.truncf %18 : vector<8x8xf32> to vector<8x8xbf16>
    %cst_11 = arith.constant dense<0.000000e+00> : vector<8x8xf32>
    %20 = tpu.matmul %15, %17, %cst_11 {dimension_numbers = #tpu.dot_dimension_numbers<[1], [1], [0], [0], [0, 0, 1, 0], [], []>} : vector<8x8xbf16>, vector<8x8xbf16>, vector<8x8xf32> -> vector<8x8xf32>
    %21 = arith.addf %20, %12 : vector<8x8xf32>
    %cst_12 = arith.constant dense<0xFF800000> : vector<8xf32>
    %22 = vector.multi_reduction <maximumf>, %21, %cst_12 [1] : vector<8x8xf32> to vector<8xf32>
    %23 = vector.shape_cast %22 : vector<8xf32> to vector<8x1xf32>
    %24 = vector.broadcast %23 : vector<8x1xf32> to vector<8x8xf32>
    %25 = arith.subf %21, %24 : vector<8x8xf32>
    %26 = math.exp %25 : vector<8x8xf32>
    %cst_13 = arith.constant dense<0.000000e+00> : vector<8xf32>
    %27 = vector.multi_reduction <add>, %26, %cst_13 [1] : vector<8x8xf32> to vector<8xf32>
    %28 = vector.shape_cast %27 : vector<8xf32> to vector<8x1xf32>
    %29 = tpu.reciprocal %28 {approx = true} : vector<8x1xf32> -> vector<8x1xf32>
    %30 = arith.truncf %26 : vector<8x8xf32> to vector<8x8xbf16>
    %cst_14 = arith.constant dense<0.000000e+00> : vector<8x8xf32>
    %31 = tpu.matmul %30, %19, %cst_14 {dimension_numbers = #tpu.dot_dimension_numbers<[1], [0], [0], [1], [0, 0, 1, 1], [], []>} : vector<8x8xbf16>, vector<8x8xbf16>, vector<8x8xf32> -> vector<8x8xf32>
    %32 = vector.broadcast %29 : vector<8x1xf32> to vector<8x8xf32>
    %33 = arith.mulf %31, %32 : vector<8x8xf32>
    %c0_15 = arith.constant 0 : index
    %c0_16 = arith.constant 0 : index
    %34 = vector.load %arg18[%c0_15, %c0_16] : memref<16x32xf32, #tpu.memory_space<vmem>>, vector<8x8xf32>
    tpu.vector_store %arg18[%c0_15, %c0_16], %33 {strides = array<i32>} : memref<16x32xf32, #tpu.memory_space<vmem>>, vector<8x8xf32>,
    %35 = arith.truncf %29 : vector<8x1xf32> to vector<8x1xbf16>
    %cst_17 = arith.constant dense<0.000000e+00> : vector<1x8xf32>
    %36 = tpu.matmul %35, %30, %cst_17 {dimension_numbers = #tpu.dot_dimension_numbers<[0], [0], [1], [1], [0, 1, 1, 1], [], []>} : vector<8x1xbf16>, vector<8x8xbf16>, vector<1x8xf32> -> vector<1x8xf32>
    %37 = arith.addf %13, %36 : vector<1x8xf32>
    %38 = vector.extract_strided_slice %7 {offsets = [0, 8], sizes = [8, 8], strides = [1, 1]} : vector<16x96xf32> to vector<8x8xf32>
    %39 = arith.truncf %38 : vector<8x8xf32> to vector<8x8xbf16>
    %40 = vector.extract_strided_slice %7 {offsets = [0, 40], sizes = [8, 8], strides = [1, 1]} : vector<16x96xf32> to vector<8x8xf32>
    %41 = arith.truncf %40 : vector<8x8xf32> to vector<8x8xbf16>
    %42 = vector.extract_strided_slice %7 {offsets = [0, 72], sizes = [8, 8], strides = [1, 1]} : vector<16x96xf32> to vector<8x8xf32>
    %43 = arith.truncf %42 : vector<8x8xf32> to vector<8x8xbf16>
    %cst_18 = arith.constant dense<0.000000e+00> : vector<8x8xf32>
    %44 = tpu.matmul %39, %41, %cst_18 {dimension_numbers = #tpu.dot_dimension_numbers<[1], [1], [0], [0], [0, 0, 1, 0], [], []>} : vector<8x8xbf16>, vector<8x8xbf16>, vector<8x8xf32> -> vector<8x8xf32>
    %45 = arith.addf %44, %12 : vector<8x8xf32>
    %cst_19 = arith.constant dense<0xFF800000> : vector<8xf32>
    %46 = vector.multi_reduction <maximumf>, %45, %cst_19 [1] : vector<8x8xf32> to vector<8xf32>
    %47 = vector.shape_cast %46 : vector<8xf32> to vector<8x1xf32>
    %48 = vector.broadcast %47 : vector<8x1xf32> to vector<8x8xf32>
    %49 = arith.subf %45, %48 : vector<8x8xf32>
    %50 = math.exp %49 : vector<8x8xf32>
    %cst_20 = arith.constant dense<0.000000e+00> : vector<8xf32>
    %51 = vector.multi_reduction <add>, %50, %cst_20 [1] : vector<8x8xf32> to vector<8xf32>
    %52 = vector.shape_cast %51 : vector<8xf32> to vector<8x1xf32>
    %53 = tpu.reciprocal %52 {approx = true} : vector<8x1xf32> -> vector<8x1xf32>
    %54 = arith.truncf %50 : vector<8x8xf32> to vector<8x8xbf16>
    %cst_21 = arith.constant dense<0.000000e+00> : vector<8x8xf32>
    %55 = tpu.matmul %54, %43, %cst_21 {dimension_numbers = #tpu.dot_dimension_numbers<[1], [0], [0], [1], [0, 0, 1, 1], [], []>} : vector<8x8xbf16>, vector<8x8xbf16>, vector<8x8xf32> -> vector<8x8xf32>
    %56 = vector.broadcast %53 : vector<8x1xf32> to vector<8x8xf32>
    %57 = arith.mulf %55, %56 : vector<8x8xf32>
    %c0_22 = arith.constant 0 : index
    %c8 = arith.constant 8 : index
    %58 = vector.load %arg18[%c0_22, %c8] : memref<16x32xf32, #tpu.memory_space<vmem>>, vector<8x8xf32>
    tpu.vector_store %arg18[%c0_22, %c8], %57 {strides = array<i32>} : memref<16x32xf32, #tpu.memory_space<vmem>>, vector<8x8xf32>,
    %59 = arith.truncf %53 : vector<8x1xf32> to vector<8x1xbf16>
    %cst_23 = arith.constant dense<0.000000e+00> : vector<1x8xf32>
    %60 = tpu.matmul %59, %54, %cst_23 {dimension_numbers = #tpu.dot_dimension_numbers<[0], [0], [1], [1], [0, 1, 1, 1], [], []>} : vector<8x1xbf16>, vector<8x8xbf16>, vector<1x8xf32> -> vector<1x8xf32>
    %61 = arith.addf %37, %60 : vector<1x8xf32>
    %62 = vector.extract_strided_slice %7 {offsets = [0, 16], sizes = [8, 8], strides = [1, 1]} : vector<16x96xf32> to vector<8x8xf32>
    %63 = arith.truncf %62 : vector<8x8xf32> to vector<8x8xbf16>
    %64 = vector.extract_strided_slice %7 {offsets = [0, 48], sizes = [8, 8], strides = [1, 1]} : vector<16x96xf32> to vector<8x8xf32>
    %65 = arith.truncf %64 : vector<8x8xf32> to vector<8x8xbf16>
    %66 = vector.extract_strided_slice %7 {offsets = [0, 80], sizes = [8, 8], strides = [1, 1]} : vector<16x96xf32> to vector<8x8xf32>
    %67 = arith.truncf %66 : vector<8x8xf32> to vector<8x8xbf16>
    %cst_24 = arith.constant dense<0.000000e+00> : vector<8x8xf32>
    %68 = tpu.matmul %63, %65, %cst_24 {dimension_numbers = #tpu.dot_dimension_numbers<[1], [1], [0], [0], [0, 0, 1, 0], [], []>} : vector<8x8xbf16>, vector<8x8xbf16>, vector<8x8xf32> -> vector<8x8xf32>
    %69 = arith.addf %68, %12 : vector<8x8xf32>
    %cst_25 = arith.constant dense<0xFF800000> : vector<8xf32>
    %70 = vector.multi_reduction <maximumf>, %69, %cst_25 [1] : vector<8x8xf32> to vector<8xf32>
    %71 = vector.shape_cast %70 : vector<8xf32> to vector<8x1xf32>
    %72 = vector.broadcast %71 : vector<8x1xf32> to vector<8x8xf32>
    %73 = arith.subf %69, %72 : vector<8x8xf32>
    %74 = math.exp %73 : vector<8x8xf32>
    %cst_26 = arith.constant dense<0.000000e+00> : vector<8xf32>
    %75 = vector.multi_reduction <add>, %74, %cst_26 [1] : vector<8x8xf32> to vector<8xf32>
    %76 = vector.shape_cast %75 : vector<8xf32> to vector<8x1xf32>
    %77 = tpu.reciprocal %76 {approx = true} : vector<8x1xf32> -> vector<8x1xf32>
    %78 = arith.truncf %74 : vector<8x8xf32> to vector<8x8xbf16>
    %cst_27 = arith.constant dense<0.000000e+00> : vector<8x8xf32>
    %79 = tpu.matmul %78, %67, %cst_27 {dimension_numbers = #tpu.dot_dimension_numbers<[1], [0], [0], [1], [0, 0, 1, 1], [], []>} : vector<8x8xbf16>, vector<8x8xbf16>, vector<8x8xf32> -> vector<8x8xf32>
    %80 = vector.broadcast %77 : vector<8x1xf32> to vector<8x8xf32>
    %81 = arith.mulf %79, %80 : vector<8x8xf32>
    %c0_28 = arith.constant 0 : index
    %c16 = arith.constant 16 : index
    %82 = vector.load %arg18[%c0_28, %c16] : memref<16x32xf32, #tpu.memory_space<vmem>>, vector<8x8xf32>
    tpu.vector_store %arg18[%c0_28, %c16], %81 {strides = array<i32>} : memref<16x32xf32, #tpu.memory_space<vmem>>, vector<8x8xf32>,
    %83 = arith.truncf %77 : vector<8x1xf32> to vector<8x1xbf16>
    %cst_29 = arith.constant dense<0.000000e+00> : vector<1x8xf32>
    %84 = tpu.matmul %83, %78, %cst_29 {dimension_numbers = #tpu.dot_dimension_numbers<[0], [0], [1], [1], [0, 1, 1, 1], [], []>} : vector<8x1xbf16>, vector<8x8xbf16>, vector<1x8xf32> -> vector<1x8xf32>
    %85 = arith.addf %61, %84 : vector<1x8xf32>
    %86 = vector.extract_strided_slice %7 {offsets = [0, 24], sizes = [8, 8], strides = [1, 1]} : vector<16x96xf32> to vector<8x8xf32>
    %87 = arith.truncf %86 : vector<8x8xf32> to vector<8x8xbf16>
    %88 = vector.extract_strided_slice %7 {offsets = [0, 56], sizes = [8, 8], strides = [1, 1]} : vector<16x96xf32> to vector<8x8xf32>
    %89 = arith.truncf %88 : vector<8x8xf32> to vector<8x8xbf16>
    %90 = vector.extract_strided_slice %7 {offsets = [0, 88], sizes = [8, 8], strides = [1, 1]} : vector<16x96xf32> to vector<8x8xf32>
    %91 = arith.truncf %90 : vector<8x8xf32> to vector<8x8xbf16>
    %cst_30 = arith.constant dense<0.000000e+00> : vector<8x8xf32>
    %92 = tpu.matmul %87, %89, %cst_30 {dimension_numbers = #tpu.dot_dimension_numbers<[1], [1], [0], [0], [0, 0, 1, 0], [], []>} : vector<8x8xbf16>, vector<8x8xbf16>, vector<8x8xf32> -> vector<8x8xf32>
    %93 = arith.addf %92, %12 : vector<8x8xf32>
    %cst_31 = arith.constant dense<0xFF800000> : vector<8xf32>
    %94 = vector.multi_reduction <maximumf>, %93, %cst_31 [1] : vector<8x8xf32> to vector<8xf32>
    %95 = vector.shape_cast %94 : vector<8xf32> to vector<8x1xf32>
    %96 = vector.broadcast %95 : vector<8x1xf32> to vector<8x8xf32>
    %97 = arith.subf %93, %96 : vector<8x8xf32>
    %98 = math.exp %97 : vector<8x8xf32>
    %cst_32 = arith.constant dense<0.000000e+00> : vector<8xf32>
    %99 = vector.multi_reduction <add>, %98, %cst_32 [1] : vector<8x8xf32> to vector<8xf32>
    %100 = vector.shape_cast %99 : vector<8xf32> to vector<8x1xf32>
    %101 = tpu.reciprocal %100 {approx = true} : vector<8x1xf32> -> vector<8x1xf32>
    %102 = arith.truncf %98 : vector<8x8xf32> to vector<8x8xbf16>
    %cst_33 = arith.constant dense<0.000000e+00> : vector<8x8xf32>
    %103 = tpu.matmul %102, %91, %cst_33 {dimension_numbers = #tpu.dot_dimension_numbers<[1], [0], [0], [1], [0, 0, 1, 1], [], []>} : vector<8x8xbf16>, vector<8x8xbf16>, vector<8x8xf32> -> vector<8x8xf32>
    %104 = vector.broadcast %101 : vector<8x1xf32> to vector<8x8xf32>
    %105 = arith.mulf %103, %104 : vector<8x8xf32>
    %c0_34 = arith.constant 0 : index
    %c24 = arith.constant 24 : index
    %106 = vector.load %arg18[%c0_34, %c24] : memref<16x32xf32, #tpu.memory_space<vmem>>, vector<8x8xf32>
    tpu.vector_store %arg18[%c0_34, %c24], %105 {strides = array<i32>} : memref<16x32xf32, #tpu.memory_space<vmem>>, vector<8x8xf32>,
    %107 = arith.truncf %101 : vector<8x1xf32> to vector<8x1xbf16>
    %cst_35 = arith.constant dense<0.000000e+00> : vector<1x8xf32>
    %108 = tpu.matmul %107, %102, %cst_35 {dimension_numbers = #tpu.dot_dimension_numbers<[0], [0], [1], [1], [0, 1, 1, 1], [], []>} : vector<8x1xbf16>, vector<8x8xbf16>, vector<1x8xf32> -> vector<1x8xf32>
    %109 = arith.addf %85, %108 : vector<1x8xf32>
    %c0_36 = arith.constant 0 : index
    %c0_37 = arith.constant 0 : index
    %c0_38 = arith.constant 0 : index
    %110 = vector.load %arg3[%c0_36, %c0_37, %c0_38] : memref<2x4x8xf32, #tpu.memory_space<vmem>>, vector<1x4x8xf32>
    %111 = vector.shape_cast %110 : vector<1x4x8xf32> to vector<4x8xf32>
    %cst_39 = arith.constant 2.500000e-01 : f32
    %112 = vector.broadcast %cst_39 : f32 to vector<1x8xf32>
    %113 = arith.mulf %109, %112 : vector<1x8xf32>
    %114 = vector.broadcast %113 : vector<1x8xf32> to vector<4x8xf32>
    %115 = arith.mulf %114, %111 : vector<4x8xf32>
    %cst_40 = arith.constant 1.000000e+00 : f32
    %116 = vector.broadcast %cst_40 : f32 to vector<4x8xf32>
    %117 = arith.subf %116, %111 : vector<4x8xf32>
    %cst_41 = arith.constant -1.000000e+10 : f32
    %118 = vector.broadcast %cst_41 : f32 to vector<4x8xf32>
    %119 = arith.mulf %117, %118 : vector<4x8xf32>
    %120 = arith.addf %115, %119 : vector<4x8xf32>
    %cst_42 = arith.constant dense<0xFF800000> : vector<4xf32>
    %121 = vector.multi_reduction <maximumf>, %120, %cst_42 [1] : vector<4x8xf32> to vector<4xf32>
    %122 = vector.shape_cast %121 : vector<4xf32> to vector<4x1xf32>
    %123 = vector.broadcast %122 : vector<4x1xf32> to vector<4x8xf32>
    %124 = arith.subf %120, %123 : vector<4x8xf32>
    %125 = math.exp %124 : vector<4x8xf32>
    %cst_43 = arith.constant dense<0.000000e+00> : vector<4xf32>
    %126 = vector.multi_reduction <add>, %125, %cst_43 [1] : vector<4x8xf32> to vector<4xf32>
    %127 = vector.shape_cast %126 : vector<4xf32> to vector<4x1xf32>
    %128 = tpu.reciprocal %127 {approx = true} : vector<4x1xf32> -> vector<4x1xf32>
    %129 = vector.broadcast %128 : vector<4x1xf32> to vector<4x8xf32>
    %130 = arith.mulf %125, %129 : vector<4x8xf32>
    %131 = arith.mulf %130, %111 : vector<4x8xf32>
    %cst_44 = arith.constant dense<0.000000e+00> : vector<8xf32>
    %132 = vector.multi_reduction <add>, %131, %cst_44 [0] : vector<4x8xf32> to vector<8xf32>
    %133 = vector.shape_cast %132 : vector<8xf32> to vector<1x8xf32>
    %cst_45 = arith.constant 0.000000e+00 : f32
    %134 = vector.broadcast %cst_45 : f32 to vector<1x120xf32>
    %135 = tpu.concatenate %133, %134 in 1 : vector<1x8xf32>, vector<1x120xf32> -> vector<1x128xf32>
    %c0_46 = arith.constant 0 : index
    %c0_47 = arith.constant 0 : index
    %c0_48 = arith.constant 0 : index
    %136 = vector.load %arg17[%c0_46, %c0_47, %c0_48] : memref<2x1x128xf32, #tpu.memory_space<vmem>>, vector<1x1x128xf32>
    %137 = vector.shape_cast %136 : vector<1x1x128xf32> to vector<1x128xf32>
    %138 = vector.shape_cast %135 : vector<1x128xf32> to vector<1x1x128xf32>
    tpu.vector_store %arg17[%c0_46, %c0_47, %c0_48], %138 {strides = array<i32>} : memref<2x1x128xf32, #tpu.memory_space<vmem>>, vector<1x1x128xf32>,
    %c1 = arith.constant 1 : index
    %c0_49 = arith.constant 0 : index
    %c0_50 = arith.constant 0 : index
    %139 = vector.load %arg2[%c1, %c0_49, %c0_50] : memref<2x8x8xi8, #tpu.memory_space<vmem>>, vector<1x8x8xi8>
    %140 = vector.shape_cast %139 : vector<1x8x8xi8> to vector<8x8xi8>
    %141 = arith.sitofp %140 : vector<8x8xi8> to vector<8x8xf32>
    %cst_51 = arith.constant -1.000000e+09 : f32
    %142 = vector.broadcast %cst_51 : f32 to vector<8x8xf32>
    %143 = arith.mulf %141, %142 : vector<8x8xf32>
    %cst_52 = arith.constant 0.000000e+00 : f32
    %144 = vector.broadcast %cst_52 : f32 to vector<1x8xf32>
    %145 = vector.extract_strided_slice %7 {offsets = [8, 0], sizes = [8, 8], strides = [1, 1]} : vector<16x96xf32> to vector<8x8xf32>
    %146 = arith.truncf %145 : vector<8x8xf32> to vector<8x8xbf16>
    %147 = vector.extract_strided_slice %7 {offsets = [8, 32], sizes = [8, 8], strides = [1, 1]} : vector<16x96xf32> to vector<8x8xf32>
    %148 = arith.truncf %147 : vector<8x8xf32> to vector<8x8xbf16>
    %149 = vector.extract_strided_slice %7 {offsets = [8, 64], sizes = [8, 8], strides = [1, 1]} : vector<16x96xf32> to vector<8x8xf32>
    %150 = arith.truncf %149 : vector<8x8xf32> to vector<8x8xbf16>
    %cst_53 = arith.constant dense<0.000000e+00> : vector<8x8xf32>
    %151 = tpu.matmul %146, %148, %cst_53 {dimension_numbers = #tpu.dot_dimension_numbers<[1], [1], [0], [0], [0, 0, 1, 0], [], []>} : vector<8x8xbf16>, vector<8x8xbf16>, vector<8x8xf32> -> vector<8x8xf32>
    %152 = arith.addf %151, %143 : vector<8x8xf32>
    %cst_54 = arith.constant dense<0xFF800000> : vector<8xf32>
    %153 = vector.multi_reduction <maximumf>, %152, %cst_54 [1] : vector<8x8xf32> to vector<8xf32>
    %154 = vector.shape_cast %153 : vector<8xf32> to vector<8x1xf32>
    %155 = vector.broadcast %154 : vector<8x1xf32> to vector<8x8xf32>
    %156 = arith.subf %152, %155 : vector<8x8xf32>
    %157 = math.exp %156 : vector<8x8xf32>
    %cst_55 = arith.constant dense<0.000000e+00> : vector<8xf32>
    %158 = vector.multi_reduction <add>, %157, %cst_55 [1] : vector<8x8xf32> to vector<8xf32>
    %159 = vector.shape_cast %158 : vector<8xf32> to vector<8x1xf32>
    %160 = tpu.reciprocal %159 {approx = true} : vector<8x1xf32> -> vector<8x1xf32>
    %161 = arith.truncf %157 : vector<8x8xf32> to vector<8x8xbf16>
    %cst_56 = arith.constant dense<0.000000e+00> : vector<8x8xf32>
    %162 = tpu.matmul %161, %150, %cst_56 {dimension_numbers = #tpu.dot_dimension_numbers<[1], [0], [0], [1], [0, 0, 1, 1], [], []>} : vector<8x8xbf16>, vector<8x8xbf16>, vector<8x8xf32> -> vector<8x8xf32>
    %163 = vector.broadcast %160 : vector<8x1xf32> to vector<8x8xf32>
    %164 = arith.mulf %162, %163 : vector<8x8xf32>
    %c8_57 = arith.constant 8 : index
    %c0_58 = arith.constant 0 : index
    %165 = vector.load %arg18[%c8_57, %c0_58] : memref<16x32xf32, #tpu.memory_space<vmem>>, vector<8x8xf32>
    tpu.vector_store %arg18[%c8_57, %c0_58], %164 {strides = array<i32>} : memref<16x32xf32, #tpu.memory_space<vmem>>, vector<8x8xf32>,
    %166 = arith.truncf %160 : vector<8x1xf32> to vector<8x1xbf16>
    %cst_59 = arith.constant dense<0.000000e+00> : vector<1x8xf32>
    %167 = tpu.matmul %166, %161, %cst_59 {dimension_numbers = #tpu.dot_dimension_numbers<[0], [0], [1], [1], [0, 1, 1, 1], [], []>} : vector<8x1xbf16>, vector<8x8xbf16>, vector<1x8xf32> -> vector<1x8xf32>
    %168 = arith.addf %144, %167 : vector<1x8xf32>
    %169 = vector.extract_strided_slice %7 {offsets = [8, 8], sizes = [8, 8], strides = [1, 1]} : vector<16x96xf32> to vector<8x8xf32>
    %170 = arith.truncf %169 : vector<8x8xf32> to vector<8x8xbf16>
    %171 = vector.extract_strided_slice %7 {offsets = [8, 40], sizes = [8, 8], strides = [1, 1]} : vector<16x96xf32> to vector<8x8xf32>
    %172 = arith.truncf %171 : vector<8x8xf32> to vector<8x8xbf16>
    %173 = vector.extract_strided_slice %7 {offsets = [8, 72], sizes = [8, 8], strides = [1, 1]} : vector<16x96xf32> to vector<8x8xf32>
    %174 = arith.truncf %173 : vector<8x8xf32> to vector<8x8xbf16>
    %cst_60 = arith.constant dense<0.000000e+00> : vector<8x8xf32>
    %175 = tpu.matmul %170, %172, %cst_60 {dimension_numbers = #tpu.dot_dimension_numbers<[1], [1], [0], [0], [0, 0, 1, 0], [], []>} : vector<8x8xbf16>, vector<8x8xbf16>, vector<8x8xf32> -> vector<8x8xf32>
    %176 = arith.addf %175, %143 : vector<8x8xf32>
    %cst_61 = arith.constant dense<0xFF800000> : vector<8xf32>
    %177 = vector.multi_reduction <maximumf>, %176, %cst_61 [1] : vector<8x8xf32> to vector<8xf32>
    %178 = vector.shape_cast %177 : vector<8xf32> to vector<8x1xf32>
    %179 = vector.broadcast %178 : vector<8x1xf32> to vector<8x8xf32>
    %180 = arith.subf %176, %179 : vector<8x8xf32>
    %181 = math.exp %180 : vector<8x8xf32>
    %cst_62 = arith.constant dense<0.000000e+00> : vector<8xf32>
    %182 = vector.multi_reduction <add>, %181, %cst_62 [1] : vector<8x8xf32> to vector<8xf32>
    %183 = vector.shape_cast %182 : vector<8xf32> to vector<8x1xf32>
    %184 = tpu.reciprocal %183 {approx = true} : vector<8x1xf32> -> vector<8x1xf32>
    %185 = arith.truncf %181 : vector<8x8xf32> to vector<8x8xbf16>
    %cst_63 = arith.constant dense<0.000000e+00> : vector<8x8xf32>
    %186 = tpu.matmul %185, %174, %cst_63 {dimension_numbers = #tpu.dot_dimension_numbers<[1], [0], [0], [1], [0, 0, 1, 1], [], []>} : vector<8x8xbf16>, vector<8x8xbf16>, vector<8x8xf32> -> vector<8x8xf32>
    %187 = vector.broadcast %184 : vector<8x1xf32> to vector<8x8xf32>
    %188 = arith.mulf %186, %187 : vector<8x8xf32>
    %c8_64 = arith.constant 8 : index
    %c8_65 = arith.constant 8 : index
    %189 = vector.load %arg18[%c8_64, %c8_65] : memref<16x32xf32, #tpu.memory_space<vmem>>, vector<8x8xf32>
    tpu.vector_store %arg18[%c8_64, %c8_65], %188 {strides = array<i32>} : memref<16x32xf32, #tpu.memory_space<vmem>>, vector<8x8xf32>,
    %190 = arith.truncf %184 : vector<8x1xf32> to vector<8x1xbf16>
    %cst_66 = arith.constant dense<0.000000e+00> : vector<1x8xf32>
    %191 = tpu.matmul %190, %185, %cst_66 {dimension_numbers = #tpu.dot_dimension_numbers<[0], [0], [1], [1], [0, 1, 1, 1], [], []>} : vector<8x1xbf16>, vector<8x8xbf16>, vector<1x8xf32> -> vector<1x8xf32>
    %192 = arith.addf %168, %191 : vector<1x8xf32>
    %193 = vector.extract_strided_slice %7 {offsets = [8, 16], sizes = [8, 8], strides = [1, 1]} : vector<16x96xf32> to vector<8x8xf32>
    %194 = arith.truncf %193 : vector<8x8xf32> to vector<8x8xbf16>
    %195 = vector.extract_strided_slice %7 {offsets = [8, 48], sizes = [8, 8], strides = [1, 1]} : vector<16x96xf32> to vector<8x8xf32>
    %196 = arith.truncf %195 : vector<8x8xf32> to vector<8x8xbf16>
    %197 = vector.extract_strided_slice %7 {offsets = [8, 80], sizes = [8, 8], strides = [1, 1]} : vector<16x96xf32> to vector<8x8xf32>
    %198 = arith.truncf %197 : vector<8x8xf32> to vector<8x8xbf16>
    %cst_67 = arith.constant dense<0.000000e+00> : vector<8x8xf32>
    %199 = tpu.matmul %194, %196, %cst_67 {dimension_numbers = #tpu.dot_dimension_numbers<[1], [1], [0], [0], [0, 0, 1, 0], [], []>} : vector<8x8xbf16>, vector<8x8xbf16>, vector<8x8xf32> -> vector<8x8xf32>
    %200 = arith.addf %199, %143 : vector<8x8xf32>
    %cst_68 = arith.constant dense<0xFF800000> : vector<8xf32>
    %201 = vector.multi_reduction <maximumf>, %200, %cst_68 [1] : vector<8x8xf32> to vector<8xf32>
    %202 = vector.shape_cast %201 : vector<8xf32> to vector<8x1xf32>
    %203 = vector.broadcast %202 : vector<8x1xf32> to vector<8x8xf32>
    %204 = arith.subf %200, %203 : vector<8x8xf32>
    %205 = math.exp %204 : vector<8x8xf32>
    %cst_69 = arith.constant dense<0.000000e+00> : vector<8xf32>
    %206 = vector.multi_reduction <add>, %205, %cst_69 [1] : vector<8x8xf32> to vector<8xf32>
    %207 = vector.shape_cast %206 : vector<8xf32> to vector<8x1xf32>
    %208 = tpu.reciprocal %207 {approx = true} : vector<8x1xf32> -> vector<8x1xf32>
    %209 = arith.truncf %205 : vector<8x8xf32> to vector<8x8xbf16>
    %cst_70 = arith.constant dense<0.000000e+00> : vector<8x8xf32>
    %210 = tpu.matmul %209, %198, %cst_70 {dimension_numbers = #tpu.dot_dimension_numbers<[1], [0], [0], [1], [0, 0, 1, 1], [], []>} : vector<8x8xbf16>, vector<8x8xbf16>, vector<8x8xf32> -> vector<8x8xf32>
    %211 = vector.broadcast %208 : vector<8x1xf32> to vector<8x8xf32>
    %212 = arith.mulf %210, %211 : vector<8x8xf32>
    %c8_71 = arith.constant 8 : index
    %c16_72 = arith.constant 16 : index
    %213 = vector.load %arg18[%c8_71, %c16_72] : memref<16x32xf32, #tpu.memory_space<vmem>>, vector<8x8xf32>
    tpu.vector_store %arg18[%c8_71, %c16_72], %212 {strides = array<i32>} : memref<16x32xf32, #tpu.memory_space<vmem>>, vector<8x8xf32>,
    %214 = arith.truncf %208 : vector<8x1xf32> to vector<8x1xbf16>
    %cst_73 = arith.constant dense<0.000000e+00> : vector<1x8xf32>
    %215 = tpu.matmul %214, %209, %cst_73 {dimension_numbers = #tpu.dot_dimension_numbers<[0], [0], [1], [1], [0, 1, 1, 1], [], []>} : vector<8x1xbf16>, vector<8x8xbf16>, vector<1x8xf32> -> vector<1x8xf32>
    %216 = arith.addf %192, %215 : vector<1x8xf32>
    %217 = vector.extract_strided_slice %7 {offsets = [8, 24], sizes = [8, 8], strides = [1, 1]} : vector<16x96xf32> to vector<8x8xf32>
    %218 = arith.truncf %217 : vector<8x8xf32> to vector<8x8xbf16>
    %219 = vector.extract_strided_slice %7 {offsets = [8, 56], sizes = [8, 8], strides = [1, 1]} : vector<16x96xf32> to vector<8x8xf32>
    %220 = arith.truncf %219 : vector<8x8xf32> to vector<8x8xbf16>
    %221 = vector.extract_strided_slice %7 {offsets = [8, 88], sizes = [8, 8], strides = [1, 1]} : vector<16x96xf32> to vector<8x8xf32>
    %222 = arith.truncf %221 : vector<8x8xf32> to vector<8x8xbf16>
    %cst_74 = arith.constant dense<0.000000e+00> : vector<8x8xf32>
    %223 = tpu.matmul %218, %220, %cst_74 {dimension_numbers = #tpu.dot_dimension_numbers<[1], [1], [0], [0], [0, 0, 1, 0], [], []>} : vector<8x8xbf16>, vector<8x8xbf16>, vector<8x8xf32> -> vector<8x8xf32>
    %224 = arith.addf %223, %143 : vector<8x8xf32>
    %cst_75 = arith.constant dense<0xFF800000> : vector<8xf32>
    %225 = vector.multi_reduction <maximumf>, %224, %cst_75 [1] : vector<8x8xf32> to vector<8xf32>
    %226 = vector.shape_cast %225 : vector<8xf32> to vector<8x1xf32>
    %227 = vector.broadcast %226 : vector<8x1xf32> to vector<8x8xf32>
    %228 = arith.subf %224, %227 : vector<8x8xf32>
    %229 = math.exp %228 : vector<8x8xf32>
    %cst_76 = arith.constant dense<0.000000e+00> : vector<8xf32>
    %230 = vector.multi_reduction <add>, %229, %cst_76 [1] : vector<8x8xf32> to vector<8xf32>
    %231 = vector.shape_cast %230 : vector<8xf32> to vector<8x1xf32>
    %232 = tpu.reciprocal %231 {approx = true} : vector<8x1xf32> -> vector<8x1xf32>
    %233 = arith.truncf %229 : vector<8x8xf32> to vector<8x8xbf16>
    %cst_77 = arith.constant dense<0.000000e+00> : vector<8x8xf32>
    %234 = tpu.matmul %233, %222, %cst_77 {dimension_numbers = #tpu.dot_dimension_numbers<[1], [0], [0], [1], [0, 0, 1, 1], [], []>} : vector<8x8xbf16>, vector<8x8xbf16>, vector<8x8xf32> -> vector<8x8xf32>
    %235 = vector.broadcast %232 : vector<8x1xf32> to vector<8x8xf32>
    %236 = arith.mulf %234, %235 : vector<8x8xf32>
    %c8_78 = arith.constant 8 : index
    %c24_79 = arith.constant 24 : index
    %237 = vector.load %arg18[%c8_78, %c24_79] : memref<16x32xf32, #tpu.memory_space<vmem>>, vector<8x8xf32>
    tpu.vector_store %arg18[%c8_78, %c24_79], %236 {strides = array<i32>} : memref<16x32xf32, #tpu.memory_space<vmem>>, vector<8x8xf32>,
    %238 = arith.truncf %232 : vector<8x1xf32> to vector<8x1xbf16>
    %cst_80 = arith.constant dense<0.000000e+00> : vector<1x8xf32>
    %239 = tpu.matmul %238, %233, %cst_80 {dimension_numbers = #tpu.dot_dimension_numbers<[0], [0], [1], [1], [0, 1, 1, 1], [], []>} : vector<8x1xbf16>, vector<8x8xbf16>, vector<1x8xf32> -> vector<1x8xf32>
    %240 = arith.addf %216, %239 : vector<1x8xf32>
    %c1_81 = arith.constant 1 : index
    %c0_82 = arith.constant 0 : index
    %c0_83 = arith.constant 0 : index
    %241 = vector.load %arg3[%c1_81, %c0_82, %c0_83] : memref<2x4x8xf32, #tpu.memory_space<vmem>>, vector<1x4x8xf32>
    %242 = vector.shape_cast %241 : vector<1x4x8xf32> to vector<4x8xf32>
    %cst_84 = arith.constant 2.500000e-01 : f32
    %243 = vector.broadcast %cst_84 : f32 to vector<1x8xf32>
    %244 = arith.mulf %240, %243 : vector<1x8xf32>
    %245 = vector.broadcast %244 : vector<1x8xf32> to vector<4x8xf32>
    %246 = arith.mulf %245, %242 : vector<4x8xf32>
    %cst_85 = arith.constant 1.000000e+00 : f32
    %247 = vector.broadcast %cst_85 : f32 to vector<4x8xf32>
    %248 = arith.subf %247, %242 : vector<4x8xf32>
    %cst_86 = arith.constant -1.000000e+10 : f32
    %249 = vector.broadcast %cst_86 : f32 to vector<4x8xf32>
    %250 = arith.mulf %248, %249 : vector<4x8xf32>
    %251 = arith.addf %246, %250 : vector<4x8xf32>
    %cst_87 = arith.constant dense<0xFF800000> : vector<4xf32>
    %252 = vector.multi_reduction <maximumf>, %251, %cst_87 [1] : vector<4x8xf32> to vector<4xf32>
    %253 = vector.shape_cast %252 : vector<4xf32> to vector<4x1xf32>
    %254 = vector.broadcast %253 : vector<4x1xf32> to vector<4x8xf32>
    %255 = arith.subf %251, %254 : vector<4x8xf32>
    %256 = math.exp %255 : vector<4x8xf32>
    %cst_88 = arith.constant dense<0.000000e+00> : vector<4xf32>
    %257 = vector.multi_reduction <add>, %256, %cst_88 [1] : vector<4x8xf32> to vector<4xf32>
    %258 = vector.shape_cast %257 : vector<4xf32> to vector<4x1xf32>
    %259 = tpu.reciprocal %258 {approx = true} : vector<4x1xf32> -> vector<4x1xf32>
    %260 = vector.broadcast %259 : vector<4x1xf32> to vector<4x8xf32>
    %261 = arith.mulf %256, %260 : vector<4x8xf32>
    %262 = arith.mulf %261, %242 : vector<4x8xf32>
    %cst_89 = arith.constant dense<0.000000e+00> : vector<8xf32>
    %263 = vector.multi_reduction <add>, %262, %cst_89 [0] : vector<4x8xf32> to vector<8xf32>
    %264 = vector.shape_cast %263 : vector<8xf32> to vector<1x8xf32>
    %cst_90 = arith.constant 0.000000e+00 : f32
    %265 = vector.broadcast %cst_90 : f32 to vector<1x120xf32>
    %266 = tpu.concatenate %264, %265 in 1 : vector<1x8xf32>, vector<1x120xf32> -> vector<1x128xf32>
    %c1_91 = arith.constant 1 : index
    %c0_92 = arith.constant 0 : index
    %c0_93 = arith.constant 0 : index
    %267 = vector.load %arg17[%c1_91, %c0_92, %c0_93] : memref<2x1x128xf32, #tpu.memory_space<vmem>>, vector<1x1x128xf32>
    %268 = vector.shape_cast %267 : vector<1x1x128xf32> to vector<1x128xf32>
    %269 = vector.shape_cast %266 : vector<1x128xf32> to vector<1x1x128xf32>
    tpu.vector_store %arg17[%c1_91, %c0_92, %c0_93], %269 {strides = array<i32>} : memref<2x1x128xf32, #tpu.memory_space<vmem>>, vector<1x1x128xf32>,
    %c0_94 = arith.constant 0 : index
    %c0_95 = arith.constant 0 : index
    %270 = vector.load %arg18[%c0_94, %c0_95] : memref<16x32xf32, #tpu.memory_space<vmem>>, vector<16x32xf32>
    %271 = arith.truncf %270 : vector<16x32xf32> to vector<16x32xbf16>
    %c0_96 = arith.constant 0 : index
    %c0_97 = arith.constant 0 : index
    %272 = vector.load %arg6[%c0_96, %c0_97] : memref<32x32xbf16, #tpu.memory_space<vmem>>, vector<32x32xbf16>
    %cst_98 = arith.constant dense<0.000000e+00> : vector<16x32xf32>
    %273 = tpu.matmul %271, %272, %cst_98 {dimension_numbers = #tpu.dot_dimension_numbers<[1], [0], [0], [1], [0, 0, 1, 1], [], []>} : vector<16x32xbf16>, vector<32x32xbf16>, vector<16x32xf32> -> vector<16x32xf32>
    %c0_99 = arith.constant 0 : index
    %c0_100 = arith.constant 0 : index
    %274 = vector.load %arg7[%c0_99, %c0_100] : memref<1x32xf32, #tpu.memory_space<vmem>>, vector<1x32xf32>
    %275 = vector.broadcast %274 : vector<1x32xf32> to vector<16x32xf32>
    %276 = arith.addf %273, %275 : vector<16x32xf32>
    %277 = arith.addf %1, %276 : vector<16x32xf32>
    %cst_101 = arith.constant dense<0.000000e+00> : vector<16xf32>
    %278 = vector.multi_reduction <add>, %277, %cst_101 [1] : vector<16x32xf32> to vector<16xf32>
    %279 = vector.shape_cast %278 : vector<16xf32> to vector<16x1xf32>
    %cst_102 = arith.constant 3.200000e+01 : f32
    %280 = vector.broadcast %cst_102 : f32 to vector<16x1xf32>
    %281 = arith.divf %279, %280 : vector<16x1xf32>
    %282 = vector.broadcast %281 : vector<16x1xf32> to vector<16x32xf32>
    %283 = arith.subf %277, %282 : vector<16x32xf32>
    %284 = vector.broadcast %281 : vector<16x1xf32> to vector<16x32xf32>
    %285 = arith.subf %277, %284 : vector<16x32xf32>
    %286 = arith.mulf %283, %285 : vector<16x32xf32>
    %cst_103 = arith.constant dense<0.000000e+00> : vector<16xf32>
    %287 = vector.multi_reduction <add>, %286, %cst_103 [1] : vector<16x32xf32> to vector<16xf32>
    %288 = vector.shape_cast %287 : vector<16xf32> to vector<16x1xf32>
    %cst_104 = arith.constant 3.200000e+01 : f32
    %289 = vector.broadcast %cst_104 : f32 to vector<16x1xf32>
    %290 = arith.divf %288, %289 : vector<16x1xf32>
    %291 = vector.broadcast %281 : vector<16x1xf32> to vector<16x32xf32>
    %292 = arith.subf %277, %291 : vector<16x32xf32>
    %cst_105 = arith.constant 9.99999974E-6 : f32
    %293 = vector.broadcast %cst_105 : f32 to vector<16x1xf32>
    %294 = arith.addf %290, %293 : vector<16x1xf32>
    %295 = math.rsqrt %294 : vector<16x1xf32>
    %296 = vector.broadcast %295 : vector<16x1xf32> to vector<16x32xf32>
    %297 = arith.mulf %292, %296 : vector<16x32xf32>
    %c0_106 = arith.constant 0 : index
    %c0_107 = arith.constant 0 : index
    %298 = vector.load %arg8[%c0_106, %c0_107] : memref<1x32xf32, #tpu.memory_space<vmem>>, vector<1x32xf32>
    %299 = vector.broadcast %298 : vector<1x32xf32> to vector<16x32xf32>
    %300 = arith.mulf %297, %299 : vector<16x32xf32>
    %c0_108 = arith.constant 0 : index
    %c0_109 = arith.constant 0 : index
    %301 = vector.load %arg9[%c0_108, %c0_109] : memref<1x32xf32, #tpu.memory_space<vmem>>, vector<1x32xf32>
    %302 = vector.broadcast %301 : vector<1x32xf32> to vector<16x32xf32>
    %303 = arith.addf %300, %302 : vector<16x32xf32>
    %304 = arith.truncf %303 : vector<16x32xf32> to vector<16x32xbf16>
    %c0_110 = arith.constant 0 : index
    %c0_111 = arith.constant 0 : index
    %305 = vector.load %arg12[%c0_110, %c0_111] : memref<32x64xbf16, #tpu.memory_space<vmem>>, vector<32x64xbf16>
    %cst_112 = arith.constant dense<0.000000e+00> : vector<16x64xf32>
    %306 = tpu.matmul %304, %305, %cst_112 {dimension_numbers = #tpu.dot_dimension_numbers<[1], [0], [0], [1], [0, 0, 1, 1], [], []>} : vector<16x32xbf16>, vector<32x64xbf16>, vector<16x64xf32> -> vector<16x64xf32>
    %c0_113 = arith.constant 0 : index
    %c0_114 = arith.constant 0 : index
    %307 = vector.load %arg13[%c0_113, %c0_114] : memref<1x64xf32, #tpu.memory_space<vmem>>, vector<1x64xf32>
    %308 = vector.broadcast %307 : vector<1x64xf32> to vector<16x64xf32>
    %309 = arith.addf %306, %308 : vector<16x64xf32>
    %cst_115 = arith.constant 0.000000e+00 : f32
    %310 = vector.broadcast %cst_115 : f32 to vector<16x64xf32>
    %311 = arith.maximumf %309, %310 : vector<16x64xf32>
    %312 = arith.truncf %311 : vector<16x64xf32> to vector<16x64xbf16>
    %c0_116 = arith.constant 0 : index
    %c0_117 = arith.constant 0 : index
    %313 = vector.load %arg14[%c0_116, %c0_117] : memref<64x32xbf16, #tpu.memory_space<vmem>>, vector<64x32xbf16>
    %cst_118 = arith.constant dense<0.000000e+00> : vector<16x32xf32>
    %314 = tpu.matmul %312, %313, %cst_118 {dimension_numbers = #tpu.dot_dimension_numbers<[1], [0], [0], [1], [0, 0, 1, 1], [], []>} : vector<16x64xbf16>, vector<64x32xbf16>, vector<16x32xf32> -> vector<16x32xf32>
    %c0_119 = arith.constant 0 : index
    %c0_120 = arith.constant 0 : index
    %315 = vector.load %arg15[%c0_119, %c0_120] : memref<1x32xf32, #tpu.memory_space<vmem>>, vector<1x32xf32>
    %316 = vector.broadcast %315 : vector<1x32xf32> to vector<16x32xf32>
    %317 = arith.addf %314, %316 : vector<16x32xf32>
    %318 = arith.addf %303, %317 : vector<16x32xf32>
    %cst_121 = arith.constant dense<0.000000e+00> : vector<16xf32>
    %319 = vector.multi_reduction <add>, %318, %cst_121 [1] : vector<16x32xf32> to vector<16xf32>
    %320 = vector.shape_cast %319 : vector<16xf32> to vector<16x1xf32>
    %cst_122 = arith.constant 3.200000e+01 : f32
    %321 = vector.broadcast %cst_122 : f32 to vector<16x1xf32>
    %322 = arith.divf %320, %321 : vector<16x1xf32>
    %323 = vector.broadcast %322 : vector<16x1xf32> to vector<16x32xf32>
    %324 = arith.subf %318, %323 : vector<16x32xf32>
    %325 = vector.broadcast %322 : vector<16x1xf32> to vector<16x32xf32>
    %326 = arith.subf %318, %325 : vector<16x32xf32>
    %327 = arith.mulf %324, %326 : vector<16x32xf32>
    %cst_123 = arith.constant dense<0.000000e+00> : vector<16xf32>
    %328 = vector.multi_reduction <add>, %327, %cst_123 [1] : vector<16x32xf32> to vector<16xf32>
    %329 = vector.shape_cast %328 : vector<16xf32> to vector<16x1xf32>
    %cst_124 = arith.constant 3.200000e+01 : f32
    %330 = vector.broadcast %cst_124 : f32 to vector<16x1xf32>
    %331 = arith.divf %329, %330 : vector<16x1xf32>
    %332 = vector.broadcast %322 : vector<16x1xf32> to vector<16x32xf32>
    %333 = arith.subf %318, %332 : vector<16x32xf32>
    %cst_125 = arith.constant 9.99999974E-6 : f32
    %334 = vector.broadcast %cst_125 : f32 to vector<16x1xf32>
    %335 = arith.addf %331, %334 : vector<16x1xf32>
    %336 = math.rsqrt %335 : vector<16x1xf32>
    %337 = vector.broadcast %336 : vector<16x1xf32> to vector<16x32xf32>
    %338 = arith.mulf %333, %337 : vector<16x32xf32>
    %c0_126 = arith.constant 0 : index
    %c0_127 = arith.constant 0 : index
    %339 = vector.load %arg10[%c0_126, %c0_127] : memref<1x32xf32, #tpu.memory_space<vmem>>, vector<1x32xf32>
    %340 = vector.broadcast %339 : vector<1x32xf32> to vector<16x32xf32>
    %341 = arith.mulf %338, %340 : vector<16x32xf32>
    %c0_128 = arith.constant 0 : index
    %c0_129 = arith.constant 0 : index
    %342 = vector.load %arg11[%c0_128, %c0_129] : memref<1x32xf32, #tpu.memory_space<vmem>>, vector<1x32xf32>
    %343 = vector.broadcast %342 : vector<1x32xf32> to vector<16x32xf32>
    %344 = arith.addf %341, %343 : vector<16x32xf32>
    %345 = vector.shape_cast %344 : vector<16x32xf32> to vector<2x8x32xf32>
    %c0_130 = arith.constant 0 : index
    %c0_131 = arith.constant 0 : index
    %c0_132 = arith.constant 0 : index
    %346 = vector.load %arg16[%c0_130, %c0_131, %c0_132] : memref<2x8x32xf32, #tpu.memory_space<vmem>>, vector<2x8x32xf32>
    tpu.vector_store %arg16[%c0_130, %c0_131, %c0_132], %345 {strides = array<i32>} : memref<2x8x32xf32, #tpu.memory_space<vmem>>, vector<2x8x32xf32>,
    return
  }
  func.func @transform_0(%arg0: i32) -> (i32, i32, i32) {
    %c0_i32 = arith.constant 0 : i32
    %c0_i32_0 = arith.constant 0 : i32
    %c0_i32_1 = arith.constant 0 : i32
    return %arg0, %c0_i32, %c0_i32_0 : i32, i32, i32
  }
  func.func @transform_1(%arg0: i32) -> (i32, i32, i32) {
    %c0_i32 = arith.constant 0 : i32
    %c0_i32_0 = arith.constant 0 : i32
    %c0_i32_1 = arith.constant 0 : i32
    return %arg0, %c0_i32, %c0_i32_0 : i32, i32, i32
  }
  func.func @transform_2(%arg0: i32) -> (i32, i32, i32) {
    %c0_i32 = arith.constant 0 : i32
    %c0_i32_0 = arith.constant 0 : i32
    %c0_i32_1 = arith.constant 0 : i32
    return %arg0, %c0_i32, %c0_i32_0 : i32, i32, i32
  }
  func.func @transform_3(%arg0: i32) -> (i32, i32) {
    %c0_i32 = arith.constant 0 : i32
    %c0_i32_0 = arith.constant 0 : i32
    %c0_i32_1 = arith.constant 0 : i32
    return %c0_i32, %c0_i32_0 : i32, i32
  }
  func.func @transform_4(%arg0: i32) -> (i32, i32) {
    %c0_i32 = arith.constant 0 : i32
    %c0_i32_0 = arith.constant 0 : i32
    %c0_i32_1 = arith.constant 0 : i32
    return %c0_i32, %c0_i32_0 : i32, i32
  }
  func.func @transform_5(%arg0: i32) -> (i32, i32) {
    %c0_i32 = arith.constant 0 : i32
    %c0_i32_0 = arith.constant 0 : i32
    %c0_i32_1 = arith.constant 0 : i32
    return %c0_i32, %c0_i32_0 : i32, i32
  }
  func.func @transform_6(%arg0: i32) -> (i32, i32) {
    %c0_i32 = arith.constant 0 : i32
    %c0_i32_0 = arith.constant 0 : i32
    %c0_i32_1 = arith.constant 0 : i32
    return %c0_i32, %c0_i32_0 : i32, i32
  }
  func.func @transform_7(%arg0: i32) -> (i32, i32) {
    %c0_i32 = arith.constant 0 : i32
    %c0_i32_0 = arith.constant 0 : i32
    %c0_i32_1 = arith.constant 0 : i32
    return %c0_i32, %c0_i32_0 : i32, i32
  }
  func.func @transform_8(%arg0: i32) -> (i32, i32) {
    %c0_i32 = arith.constant 0 : i32
    %c0_i32_0 = arith.constant 0 : i32
    %c0_i32_1 = arith.constant 0 : i32
    return %c0_i32, %c0_i32_0 : i32, i32
  }
  func.func @transform_9(%arg0: i32) -> (i32, i32) {
    %c0_i32 = arith.constant 0 : i32
    %c0_i32_0 = arith.constant 0 : i32
    %c0_i32_1 = arith.constant 0 : i32
    return %c0_i32, %c0_i32_0 : i32, i32
  }
  func.func @transform_10(%arg0: i32) -> (i32, i32) {
    %c0_i32 = arith.constant 0 : i32
    %c0_i32_0 = arith.constant 0 : i32
    %c0_i32_1 = arith.constant 0 : i32
    return %c0_i32, %c0_i32_0 : i32, i32
  }
  func.func @transform_11(%arg0: i32) -> (i32, i32) {
    %c0_i32 = arith.constant 0 : i32
    %c0_i32_0 = arith.constant 0 : i32
    %c0_i32_1 = arith.constant 0 : i32
    return %c0_i32, %c0_i32_0 : i32, i32
  }
  func.func @transform_12(%arg0: i32) -> (i32, i32) {
    %c0_i32 = arith.constant 0 : i32
    %c0_i32_0 = arith.constant 0 : i32
    %c0_i32_1 = arith.constant 0 : i32
    return %c0_i32, %c0_i32_0 : i32, i32
  }
  func.func @transform_13(%arg0: i32) -> (i32, i32) {
    %c0_i32 = arith.constant 0 : i32
    %c0_i32_0 = arith.constant 0 : i32
    %c0_i32_1 = arith.constant 0 : i32
    return %c0_i32, %c0_i32_0 : i32, i32
  }
  func.func @transform_14(%arg0: i32) -> (i32, i32) {
    %c0_i32 = arith.constant 0 : i32
    %c0_i32_0 = arith.constant 0 : i32
    %c0_i32_1 = arith.constant 0 : i32
    return %c0_i32, %c0_i32_0 : i32, i32
  }
  func.func @transform_15(%arg0: i32) -> (i32, i32, i32) {
    %c0_i32 = arith.constant 0 : i32
    %c0_i32_0 = arith.constant 0 : i32
    %c0_i32_1 = arith.constant 0 : i32
    return %arg0, %c0_i32, %c0_i32_0 : i32, i32, i32
  }
  func.func @transform_16(%arg0: i32) -> (i32, i32, i32) {
    %c0_i32 = arith.constant 0 : i32
    %c0_i32_0 = arith.constant 0 : i32
    %c0_i32_1 = arith.constant 0 : i32
    return %arg0, %c0_i32, %c0_i32_0 : i32, i32, i32
  }
}

module attributes {stable_mosaic.version = 11 : i64} {
  func.func @_dlwt_kernel(%arg0: i32, %arg1: memref<2x8x32xf32, #tpu.memory_space<vmem>>, %arg2: memref<2x8x8xi8, #tpu.memory_space<vmem>>, %arg3: memref<2x4x8xf32, #tpu.memory_space<vmem>>, %arg4: memref<32x96xbf16, #tpu.memory_space<vmem>>, %arg5: memref<1x96xf32, #tpu.memory_space<vmem>>, %arg6: memref<32x32xbf16, #tpu.memory_space<vmem>>, %arg7: memref<1x32xf32, #tpu.memory_space<vmem>>, %arg8: memref<1x32xf32, #tpu.memory_space<vmem>>, %arg9: memref<1x32xf32, #tpu.memory_space<vmem>>, %arg10: memref<1x32xf32, #tpu.memory_space<vmem>>, %arg11: memref<1x32xf32, #tpu.memory_space<vmem>>, %arg12: memref<32x64xbf16, #tpu.memory_space<vmem>>, %arg13: memref<1x64xf32, #tpu.memory_space<vmem>>, %arg14: memref<64x32xbf16, #tpu.memory_space<vmem>>, %arg15: memref<1x32xf32, #tpu.memory_space<vmem>>, %arg16: memref<2x8x32xf32, #tpu.memory_space<vmem>>, %arg17: memref<2x1x128xf32, #tpu.memory_space<vmem>>, %arg18: memref<16x32xf32, #tpu.memory_space<vmem>>) attributes {dimension_semantics = [#tpu.dimension_semantics<parallel>], iteration_bounds = array<i64: 2>, scalar_prefetch = 0 : i64, scratch_operands = 1 : i64, tpu.core_type = #tpu.core_type<tc>, window_params = [{transform_indices = @transform_0, window_bounds = array<i64: 2, 8, 32>}, {transform_indices = @transform_1, window_bounds = array<i64: 2, 8, 8>}, {transform_indices = @transform_2, window_bounds = array<i64: 2, 4, 8>}, {pipeline_mode = #tpu.pipeline_mode<synchronous>, transform_indices = @transform_3, window_bounds = array<i64: 32, 96>}, {pipeline_mode = #tpu.pipeline_mode<synchronous>, transform_indices = @transform_4, window_bounds = array<i64: 1, 96>}, {pipeline_mode = #tpu.pipeline_mode<synchronous>, transform_indices = @transform_5, window_bounds = array<i64: 32, 32>}, {pipeline_mode = #tpu.pipeline_mode<synchronous>, transform_indices = @transform_6, window_bounds = array<i64: 1, 32>}, {pipeline_mode = #tpu.pipeline_mode<synchronous>, transform_indices = @transform_7, window_bounds = array<i64: 1, 32>}, {pipeline_mode = #tpu.pipeline_mode<synchronous>, transform_indices = @transform_8, window_bounds = array<i64: 1, 32>}, {pipeline_mode = #tpu.pipeline_mode<synchronous>, transform_indices = @transform_9, window_bounds = array<i64: 1, 32>}, {pipeline_mode = #tpu.pipeline_mode<synchronous>, transform_indices = @transform_10, window_bounds = array<i64: 1, 32>}, {pipeline_mode = #tpu.pipeline_mode<synchronous>, transform_indices = @transform_11, window_bounds = array<i64: 32, 64>}, {pipeline_mode = #tpu.pipeline_mode<synchronous>, transform_indices = @transform_12, window_bounds = array<i64: 1, 64>}, {pipeline_mode = #tpu.pipeline_mode<synchronous>, transform_indices = @transform_13, window_bounds = array<i64: 64, 32>}, {pipeline_mode = #tpu.pipeline_mode<synchronous>, transform_indices = @transform_14, window_bounds = array<i64: 1, 32>}, {transform_indices = @transform_15, window_bounds = array<i64: 2, 8, 32>}, {transform_indices = @transform_16, window_bounds = array<i64: 2, 1, 128>}]} {
    %c0 = arith.constant 0 : index
    %c0_0 = arith.constant 0 : index
    %c0_1 = arith.constant 0 : index
    %0 = vector.load %arg1[%c0, %c0_0, %c0_1] : memref<2x8x32xf32, #tpu.memory_space<vmem>>, vector<2x8x32xf32>
    %1 = vector.shape_cast %0 : vector<2x8x32xf32> to vector<16x32xf32>
    %2 = arith.truncf %1 : vector<16x32xf32> to vector<16x32xbf16>
    %c0_2 = arith.constant 0 : index
    %c0_3 = arith.constant 0 : index
    %3 = vector.load %arg4[%c0_2, %c0_3] : memref<32x96xbf16, #tpu.memory_space<vmem>>, vector<32x96xbf16>
    %cst = arith.constant dense<0.000000e+00> : vector<16x96xf32>
    %4 = tpu.matmul %2, %3, %cst {dimension_numbers = #tpu.dot_dimension_numbers<[1], [0], [0], [1], [0, 0, 1, 1], [], []>} : vector<16x32xbf16>, vector<32x96xbf16>, vector<16x96xf32> -> vector<16x96xf32>
    %c0_4 = arith.constant 0 : index
    %c0_5 = arith.constant 0 : index
    %5 = vector.load %arg5[%c0_4, %c0_5] : memref<1x96xf32, #tpu.memory_space<vmem>>, vector<1x96xf32>
    %6 = vector.broadcast %5 : vector<1x96xf32> to vector<16x96xf32>
    %7 = arith.addf %4, %6 : vector<16x96xf32>
    %c0_6 = arith.constant 0 : index
    %c0_7 = arith.constant 0 : index
    %c0_8 = arith.constant 0 : index
    %8 = vector.load %arg2[%c0_6, %c0_7, %c0_8] : memref<2x8x8xi8, #tpu.memory_space<vmem>>, vector<1x8x8xi8>
    %9 = vector.shape_cast %8 : vector<1x8x8xi8> to vector<8x8xi8>
    %10 = arith.sitofp %9 : vector<8x8xi8> to vector<8x8xf32>
    %cst_9 = arith.constant -1.000000e+09 : f32
    %11 = vector.broadcast %cst_9 : f32 to vector<8x8xf32>
    %12 = arith.mulf %10, %11 : vector<8x8xf32>
    %cst_10 = arith.constant 0.000000e+00 : f32
    %13 = vector.broadcast %cst_10 : f32 to vector<1x8xf32>
    %14 = vector.extract_strided_slice %7 {offsets = [0, 0], sizes = [8, 8], strides = [1, 1]} : vector<16x96xf32> to vector<8x8xf32>
    %15 = arith.truncf %14 : vector<8x8xf32> to vector<8x8xbf16>
    %16 = vector.extract_strided_slice %7 {offsets = [0, 32], sizes = [8, 8], strides = [1, 1]} : vector<16x96xf32> to vector<8x8xf32>
    %17 = arith.truncf %16 : vector<8x8xf32> to vector<8x8xbf16>
    %18 = vector.extract_strided_slice %7 {offsets = [0, 64], sizes = [8, 8], strides = [1, 1]} : vector<16x96xf32> to vector<8x8xf32>
    %19 = arith.truncf %18 : vector<8x8xf32> to vector<8x8xbf16>
    %cst_11 = arith.constant dense<0.000000e+00> : vector<8x8xf32>
    %20 = tpu.matmul %15, %17, %cst_11 {dimension_numbers = #tpu.dot_dimension_numbers<[1], [1], [0], [0], [0, 0, 1, 0], [], []>} : vector<8x8xbf16>, vector<8x8xbf16>, vector<8x8xf32> -> vector<8x8xf32>
    %21 = arith.addf %20, %12 : vector<8x8xf32>
    %cst_12 = arith.constant dense<0xFF800000> : vector<8xf32>
    %22 = vector.multi_reduction <maximumf>, %21, %cst_12 [1] : vector<8x8xf32> to vector<8xf32>
    %23 = vector.shape_cast %22 : vector<8xf32> to vector<8x1xf32>
    %24 = vector.broadcast %23 : vector<8x1xf32> to vector<8x8xf32>
    %25 = arith.subf %21, %24 : vector<8x8xf32>
    %26 = math.exp %25 : vector<8x8xf32>
    %cst_13 = arith.constant dense<0.000000e+00> : vector<8xf32>
    %27 = vector.multi_reduction <add>, %26, %cst_13 [1] : vector<8x8xf32> to vector<8xf32>
    %28 = vector.shape_cast %27 : vector<8xf32> to vector<8x1xf32>
    %29 = tpu.reciprocal %28 {approx = true} : vector<8x1xf32> -> vector<8x1xf32>
    %30 = arith.truncf %26 : vector<8x8xf32> to vector<8x8xbf16>
    %cst_14 = arith.constant dense<0.000000e+00> : vector<8x8xf32>
    %31 = tpu.matmul %30, %19, %cst_14 {dimension_numbers = #tpu.dot_dimension_numbers<[1], [0], [0], [1], [0, 0, 1, 1], [], []>} : vector<8x8xbf16>, vector<8x8xbf16>, vector<8x8xf32> -> vector<8x8xf32>
    %32 = vector.broadcast %29 : vector<8x1xf32> to vector<8x8xf32>
    %33 = arith.mulf %31, %32 : vector<8x8xf32>
    %c0_15 = arith.constant 0 : index
    %c0_16 = arith.constant 0 : index
    %34 = vector.load %arg18[%c0_15, %c0_16] : memref<16x32xf32, #tpu.memory_space<vmem>>, vector<8x8xf32>
    tpu.vector_store %arg18[%c0_15, %c0_16], %33 {strides = array<i32>} : memref<16x32xf32, #tpu.memory_space<vmem>>, vector<8x8xf32>,
    %35 = arith.truncf %29 : vector<8x1xf32> to vector<8x1xbf16>
    %cst_17 = arith.constant dense<0.000000e+00> : vector<1x8xf32>
    %36 = tpu.matmul %35, %30, %cst_17 {dimension_numbers = #tpu.dot_dimension_numbers<[0], [0], [1], [1], [0, 1, 1, 1], [], []>} : vector<8x1xbf16>, vector<8x8xbf16>, vector<1x8xf32> -> vector<1x8xf32>
    %37 = arith.addf %13, %36 : vector<1x8xf32>
    %38 = vector.extract_strided_slice %7 {offsets = [0, 8], sizes = [8, 8], strides = [1, 1]} : vector<16x96xf32> to vector<8x8xf32>
    %39 = arith.truncf %38 : vector<8x8xf32> to vector<8x8xbf16>
    %40 = vector.extract_strided_slice %7 {offsets = [0, 40], sizes = [8, 8], strides = [1, 1]} : vector<16x96xf32> to vector<8x8xf32>
    %41 = arith.truncf %40 : vector<8x8xf32> to vector<8x8xbf16>
    %42 = vector.extract_strided_slice %7 {offsets = [0, 72], sizes = [8, 8], strides = [1, 1]} : vector<16x96xf32> to vector<8x8xf32>
    %43 = arith.truncf %42 : vector<8x8xf32> to vector<8x8xbf16>
    %cst_18 = arith.constant dense<0.000000e+00> : vector<8x8xf32>
    %44 = tpu.matmul %39, %41, %cst_18 {dimension_numbers = #tpu.dot_dimension_numbers<[1], [1], [0], [0], [0, 0, 1, 0], [], []>} : vector<8x8xbf16>, vector<8x8xbf16>, vector<8x8xf32> -> vector<8x8xf32>
    %45 = arith.addf %44, %12 : vector<8x8xf32>
    %cst_19 = arith.constant dense<0xFF800000> : vector<8xf32>
    %46 = vector.multi_reduction <maximumf>, %45, %cst_19 [1] : vector<8x8xf32> to vector<8xf32>
    %47 = vector.shape_cast %46 : vector<8xf32> to vector<8x1xf32>
    %48 = vector.broadcast %47 : vector<8x1xf32> to vector<8x8xf32>
    %49 = arith.subf %45, %48 : vector<8x8xf32>
    %50 = math.exp %49 : vector<8x8xf32>
    %cst_20 = arith.constant dense<0.000000e+00> : vector<8xf32>
    %51 = vector.multi_reduction <add>, %50, %cst_20 [1] : vector<8x8xf32> to vector<8xf32>
    %52 = vector.shape_cast %51 : vector<8xf32> to vector<8x1xf32>
    %53 = tpu.reciprocal %52 {approx = true} : vector<8x1xf32> -> vector<8x1xf32>
    %54 = arith.truncf %50 : vector<8x8xf32> to vector<8x8xbf16>
    %cst_21 = arith.constant dense<0.000000e+00> : vector<8x8xf32>
    %55 = tpu.matmul %54, %43, %cst_21 {dimension_numbers = #tpu.dot_dimension_numbers<[1], [0], [0], [1], [0, 0, 1, 1], [], []>} : vector<8x8xbf16>, vector<8x8xbf16>, vector<8x8xf32> -> vector<8x8xf32>
    %56 = vector.broadcast %53 : vector<8x1xf32> to vector<8x8xf32>
    %57 = arith.mulf %55, %56 : vector<8x8xf32>
    %c0_22 = arith.constant 0 : index
    %c8 = arith.constant 8 : index
    %58 = vector.load %arg18[%c0_22, %c8] : memref<16x32xf32, #tpu.memory_space<vmem>>, vector<8x8xf32>
    tpu.vector_store %arg18[%c0_22, %c8], %57 {strides = array<i32>} : memref<16x32xf32, #tpu.memory_space<vmem>>, vector<8x8xf32>,
    %59 = arith.truncf %53 : vector<8x1xf32> to vector<8x1xbf16>
    %cst_23 = arith.constant dense<0.000000e+00> : vector<1x8xf32>
    %60 = tpu.matmul %59, %54, %cst_23 {dimension_numbers = #tpu.dot_dimension_numbers<[0], [0], [1], [1], [0, 1, 1, 1], [], []>} : vector<8x1xbf16>, vector<8x8xbf16>, vector<1x8xf32> -> vector<1x8xf32>
    %61 = arith.addf %37, %60 : vector<1x8xf32>
    %62 = vector.extract_strided_slice %7 {offsets = [0, 16], sizes = [8, 8], strides = [1, 1]} : vector<16x96xf32> to vector<8x8xf32>
    %63 = arith.truncf %62 : vector<8x8xf32> to vector<8x8xbf16>
    %64 = vector.extract_strided_slice %7 {offsets = [0, 48], sizes = [8, 8], strides = [1, 1]} : vector<16x96xf32> to vector<8x8xf32>
    %65 = arith.truncf %64 : vector<8x8xf32> to vector<8x8xbf16>
    %66 = vector.extract_strided_slice %7 {offsets = [0, 80], sizes = [8, 8], strides = [1, 1]} : vector<16x96xf32> to vector<8x8xf32>
    %67 = arith.truncf %66 : vector<8x8xf32> to vector<8x8xbf16>
    %cst_24 = arith.constant dense<0.000000e+00> : vector<8x8xf32>
    %68 = tpu.matmul %63, %65, %cst_24 {dimension_numbers = #tpu.dot_dimension_numbers<[1], [1], [0], [0], [0, 0, 1, 0], [], []>} : vector<8x8xbf16>, vector<8x8xbf16>, vector<8x8xf32> -> vector<8x8xf32>
    %69 = arith.addf %68, %12 : vector<8x8xf32>
    %cst_25 = arith.constant dense<0xFF800000> : vector<8xf32>
    %70 = vector.multi_reduction <maximumf>, %69, %cst_25 [1] : vector<8x8xf32> to vector<8xf32>
    %71 = vector.shape_cast %70 : vector<8xf32> to vector<8x1xf32>
    %72 = vector.broadcast %71 : vector<8x1xf32> to vector<8x8xf32>
    %73 = arith.subf %69, %72 : vector<8x8xf32>
    %74 = math.exp %73 : vector<8x8xf32>
    %cst_26 = arith.constant dense<0.000000e+00> : vector<8xf32>
    %75 = vector.multi_reduction <add>, %74, %cst_26 [1] : vector<8x8xf32> to vector<8xf32>
    %76 = vector.shape_cast %75 : vector<8xf32> to vector<8x1xf32>
    %77 = tpu.reciprocal %76 {approx = true} : vector<8x1xf32> -> vector<8x1xf32>
    %78 = arith.truncf %74 : vector<8x8xf32> to vector<8x8xbf16>
    %cst_27 = arith.constant dense<0.000000e+00> : vector<8x8xf32>
    %79 = tpu.matmul %78, %67, %cst_27 {dimension_numbers = #tpu.dot_dimension_numbers<[1], [0], [0], [1], [0, 0, 1, 1], [], []>} : vector<8x8xbf16>, vector<8x8xbf16>, vector<8x8xf32> -> vector<8x8xf32>
    %80 = vector.broadcast %77 : vector<8x1xf32> to vector<8x8xf32>
    %81 = arith.mulf %79, %80 : vector<8x8xf32>
    %c0_28 = arith.constant 0 : index
    %c16 = arith.constant 16 : index
    %82 = vector.load %arg18[%c0_28, %c16] : memref<16x32xf32, #tpu.memory_space<vmem>>, vector<8x8xf32>
    tpu.vector_store %arg18[%c0_28, %c16], %81 {strides = array<i32>} : memref<16x32xf32, #tpu.memory_space<vmem>>, vector<8x8xf32>,
    %83 = arith.truncf %77 : vector<8x1xf32> to vector<8x1xbf16>
    %cst_29 = arith.constant dense<0.000000e+00> : vector<1x8xf32>
    %84 = tpu.matmul %83, %78, %cst_29 {dimension_numbers = #tpu.dot_dimension_numbers<[0], [0], [1], [1], [0, 1, 1, 1], [], []>} : vector<8x1xbf16>, vector<8x8xbf16>, vector<1x8xf32> -> vector<1x8xf32>
    %85 = arith.addf %61, %84 : vector<1x8xf32>
    %86 = vector.extract_strided_slice %7 {offsets = [0, 24], sizes = [8, 8], strides = [1, 1]} : vector<16x96xf32> to vector<8x8xf32>
    %87 = arith.truncf %86 : vector<8x8xf32> to vector<8x8xbf16>
    %88 = vector.extract_strided_slice %7 {offsets = [0, 56], sizes = [8, 8], strides = [1, 1]} : vector<16x96xf32> to vector<8x8xf32>
    %89 = arith.truncf %88 : vector<8x8xf32> to vector<8x8xbf16>
    %90 = vector.extract_strided_slice %7 {offsets = [0, 88], sizes = [8, 8], strides = [1, 1]} : vector<16x96xf32> to vector<8x8xf32>
    %91 = arith.truncf %90 : vector<8x8xf32> to vector<8x8xbf16>
    %cst_30 = arith.constant dense<0.000000e+00> : vector<8x8xf32>
    %92 = tpu.matmul %87, %89, %cst_30 {dimension_numbers = #tpu.dot_dimension_numbers<[1], [1], [0], [0], [0, 0, 1, 0], [], []>} : vector<8x8xbf16>, vector<8x8xbf16>, vector<8x8xf32> -> vector<8x8xf32>
    %93 = arith.addf %92, %12 : vector<8x8xf32>
    %cst_31 = arith.constant dense<0xFF800000> : vector<8xf32>
    %94 = vector.multi_reduction <maximumf>, %93, %cst_31 [1] : vector<8x8xf32> to vector<8xf32>
    %95 = vector.shape_cast %94 : vector<8xf32> to vector<8x1xf32>
    %96 = vector.broadcast %95 : vector<8x1xf32> to vector<8x8xf32>
    %97 = arith.subf %93, %96 : vector<8x8xf32>
    %98 = math.exp %97 : vector<8x8xf32>
    %cst_32 = arith.constant dense<0.000000e+00> : vector<8xf32>
    %99 = vector.multi_reduction <add>, %98, %cst_32 [1] : vector<8x8xf32> to vector<8xf32>
    %100 = vector.shape_cast %99 : vector<8xf32> to vector<8x1xf32>
    %101 = tpu.reciprocal %100 {approx = true} : vector<8x1xf32> -> vector<8x1xf32>
    %102 = arith.truncf %98 : vector<8x8xf32> to vector<8x8xbf16>
    %cst_33 = arith.constant dense<0.000000e+00> : vector<8x8xf32>
    %103 = tpu.matmul %102, %91, %cst_33 {dimension_numbers = #tpu.dot_dimension_numbers<[1], [0], [0], [1], [0, 0, 1, 1], [], []>} : vector<8x8xbf16>, vector<8x8xbf16>, vector<8x8xf32> -> vector<8x8xf32>
    %104 = vector.broadcast %101 : vector<8x1xf32> to vector<8x8xf32>
    %105 = arith.mulf %103, %104 : vector<8x8xf32>
    %c0_34 = arith.constant 0 : index
    %c24 = arith.constant 24 : index
    %106 = vector.load %arg18[%c0_34, %c24] : memref<16x32xf32, #tpu.memory_space<vmem>>, vector<8x8xf32>
    tpu.vector_store %arg18[%c0_34, %c24], %105 {strides = array<i32>} : memref<16x32xf32, #tpu.memory_space<vmem>>, vector<8x8xf32>,
    %107 = arith.truncf %101 : vector<8x1xf32> to vector<8x1xbf16>
    %cst_35 = arith.constant dense<0.000000e+00> : vector<1x8xf32>
    %108 = tpu.matmul %107, %102, %cst_35 {dimension_numbers = #tpu.dot_dimension_numbers<[0], [0], [1], [1], [0, 1, 1, 1], [], []>} : vector<8x1xbf16>, vector<8x8xbf16>, vector<1x8xf32> -> vector<1x8xf32>
    %109 = arith.addf %85, %108 : vector<1x8xf32>
    %c0_36 = arith.constant 0 : index
    %c0_37 = arith.constant 0 : index
    %c0_38 = arith.constant 0 : index
    %110 = vector.load %arg3[%c0_36, %c0_37, %c0_38] : memref<2x4x8xf32, #tpu.memory_space<vmem>>, vector<1x4x8xf32>
    %111 = vector.shape_cast %110 : vector<1x4x8xf32> to vector<4x8xf32>
    %cst_39 = arith.constant 2.500000e-01 : f32
    %112 = vector.broadcast %cst_39 : f32 to vector<1x8xf32>
    %113 = arith.mulf %109, %112 : vector<1x8xf32>
    %114 = vector.broadcast %113 : vector<1x8xf32> to vector<4x8xf32>
    %115 = arith.mulf %114, %111 : vector<4x8xf32>
    %cst_40 = arith.constant 1.000000e+00 : f32
    %116 = vector.broadcast %cst_40 : f32 to vector<4x8xf32>
    %117 = arith.subf %116, %111 : vector<4x8xf32>
    %cst_41 = arith.constant -1.000000e+10 : f32
    %118 = vector.broadcast %cst_41 : f32 to vector<4x8xf32>
    %119 = arith.mulf %117, %118 : vector<4x8xf32>
    %120 = arith.addf %115, %119 : vector<4x8xf32>
    %cst_42 = arith.constant dense<0xFF800000> : vector<4xf32>
    %121 = vector.multi_reduction <maximumf>, %120, %cst_42 [1] : vector<4x8xf32> to vector<4xf32>
    %122 = vector.shape_cast %121 : vector<4xf32> to vector<4x1xf32>
    %123 = vector.broadcast %122 : vector<4x1xf32> to vector<4x8xf32>
    %124 = arith.subf %120, %123 : vector<4x8xf32>
    %125 = math.exp %124 : vector<4x8xf32>
    %cst_43 = arith.constant dense<0.000000e+00> : vector<4xf32>
    %126 = vector.multi_reduction <add>, %125, %cst_43 [1] : vector<4x8xf32> to vector<4xf32>
    %127 = vector.shape_cast %126 : vector<4xf32> to vector<4x1xf32>
    %128 = tpu.reciprocal %127 {approx = true} : vector<4x1xf32> -> vector<4x1xf32>
    %129 = vector.broadcast %128 : vector<4x1xf32> to vector<4x8xf32>
    %130 = arith.mulf %125, %129 : vector<4x8xf32>
    %131 = arith.mulf %130, %111 : vector<4x8xf32>
    %cst_44 = arith.constant dense<0.000000e+00> : vector<8xf32>
    %132 = vector.multi_reduction <add>, %131, %cst_44 [0] : vector<4x8xf32> to vector<8xf32>
    %133 = vector.shape_cast %132 : vector<8xf32> to vector<1x8xf32>
    %cst_45 = arith.constant 0.000000e+00 : f32
    %134 = vector.broadcast %cst_45 : f32 to vector<1x120xf32>
    %135 = tpu.concatenate %133, %134 in 1 : vector<1x8xf32>, vector<1x120xf32> -> vector<1x128xf32>
    %c0_46 = arith.constant 0 : index
    %c0_47 = arith.constant 0 : index
    %c0_48 = arith.constant 0 : index
    %136 = vector.load %arg17[%c0_46, %c0_47, %c0_48] : memref<2x1x128xf32, #tpu.memory_space<vmem>>, vector<1x1x128xf32>
    %137 = vector.shape_cast %136 : vector<1x1x128xf32> to vector<1x128xf32>
    %138 = vector.shape_cast %135 : vector<1x128xf32> to vector<1x1x128xf32>
    tpu.vector_store %arg17[%c0_46, %c0_47, %c0_48], %138 {strides = array<i32>} : memref<2x1x128xf32, #tpu.memory_space<vmem>>, vector<1x1x128xf32>,
    %c1 = arith.constant 1 : index
    %c0_49 = arith.constant 0 : index
    %c0_50 = arith.constant 0 : index
    %139 = vector.load %arg2[%c1, %c0_49, %c0_50] : memref<2x8x8xi8, #tpu.memory_space<vmem>>, vector<1x8x8xi8>
    %140 = vector.shape_cast %139 : vector<1x8x8xi8> to vector<8x8xi8>
    %141 = arith.sitofp %140 : vector<8x8xi8> to vector<8x8xf32>
    %cst_51 = arith.constant -1.000000e+09 : f32
    %142 = vector.broadcast %cst_51 : f32 to vector<8x8xf32>
    %143 = arith.mulf %141, %142 : vector<8x8xf32>
    %cst_52 = arith.constant 0.000000e+00 : f32
    %144 = vector.broadcast %cst_52 : f32 to vector<1x8xf32>
    %145 = vector.extract_strided_slice %7 {offsets = [8, 0], sizes = [8, 8], strides = [1, 1]} : vector<16x96xf32> to vector<8x8xf32>
    %146 = arith.truncf %145 : vector<8x8xf32> to vector<8x8xbf16>
    %147 = vector.extract_strided_slice %7 {offsets = [8, 32], sizes = [8, 8], strides = [1, 1]} : vector<16x96xf32> to vector<8x8xf32>
    %148 = arith.truncf %147 : vector<8x8xf32> to vector<8x8xbf16>
    %149 = vector.extract_strided_slice %7 {offsets = [8, 64], sizes = [8, 8], strides = [1, 1]} : vector<16x96xf32> to vector<8x8xf32>
    %150 = arith.truncf %149 : vector<8x8xf32> to vector<8x8xbf16>
    %cst_53 = arith.constant dense<0.000000e+00> : vector<8x8xf32>
    %151 = tpu.matmul %146, %148, %cst_53 {dimension_numbers = #tpu.dot_dimension_numbers<[1], [1], [0], [0], [0, 0, 1, 0], [], []>} : vector<8x8xbf16>, vector<8x8xbf16>, vector<8x8xf32> -> vector<8x8xf32>
    %152 = arith.addf %151, %143 : vector<8x8xf32>
    %cst_54 = arith.constant dense<0xFF800000> : vector<8xf32>
    %153 = vector.multi_reduction <maximumf>, %152, %cst_54 [1] : vector<8x8xf32> to vector<8xf32>
    %154 = vector.shape_cast %153 : vector<8xf32> to vector<8x1xf32>
    %155 = vector.broadcast %154 : vector<8x1xf32> to vector<8x8xf32>
    %156 = arith.subf %152, %155 : vector<8x8xf32>
    %157 = math.exp %156 : vector<8x8xf32>
    %cst_55 = arith.constant dense<0.000000e+00> : vector<8xf32>
    %158 = vector.multi_reduction <add>, %157, %cst_55 [1] : vector<8x8xf32> to vector<8xf32>
    %159 = vector.shape_cast %158 : vector<8xf32> to vector<8x1xf32>
    %160 = tpu.reciprocal %159 {approx = true} : vector<8x1xf32> -> vector<8x1xf32>
    %161 = arith.truncf %157 : vector<8x8xf32> to vector<8x8xbf16>
    %cst_56 = arith.constant dense<0.000000e+00> : vector<8x8xf32>
    %162 = tpu.matmul %161, %150, %cst_56 {dimension_numbers = #tpu.dot_dimension_numbers<[1], [0], [0], [1], [0, 0, 1, 1], [], []>} : vector<8x8xbf16>, vector<8x8xbf16>, vector<8x8xf32> -> vector<8x8xf32>
    %163 = vector.broadcast %160 : vector<8x1xf32> to vector<8x8xf32>
    %164 = arith.mulf %162, %163 : vector<8x8xf32>
    %c8_57 = arith.constant 8 : index
    %c0_58 = arith.constant 0 : index
    %165 = vector.load %arg18[%c8_57, %c0_58] : memref<16x32xf32, #tpu.memory_space<vmem>>, vector<8x8xf32>
    tpu.vector_store %arg18[%c8_57, %c0_58], %164 {strides = array<i32>} : memref<16x32xf32, #tpu.memory_space<vmem>>, vector<8x8xf32>,
    %166 = arith.truncf %160 : vector<8x1xf32> to vector<8x1xbf16>
    %cst_59 = arith.constant dense<0.000000e+00> : vector<1x8xf32>
    %167 = tpu.matmul %166, %161, %cst_59 {dimension_numbers = #tpu.dot_dimension_numbers<[0], [0], [1], [1], [0, 1, 1, 1], [], []>} : vector<8x1xbf16>, vector<8x8xbf16>, vector<1x8xf32> -> vector<1x8xf32>
    %168 = arith.addf %144, %167 : vector<1x8xf32>
    %169 = vector.extract_strided_slice %7 {offsets = [8, 8], sizes = [8, 8], strides = [1, 1]} : vector<16x96xf32> to vector<8x8xf32>
    %170 = arith.truncf %169 : vector<8x8xf32> to vector<8x8xbf16>
    %171 = vector.extract_strided_slice %7 {offsets = [8, 40], sizes = [8, 8], strides = [1, 1]} : vector<16x96xf32> to vector<8x8xf32>
    %172 = arith.truncf %171 : vector<8x8xf32> to vector<8x8xbf16>
    %173 = vector.extract_strided_slice %7 {offsets = [8, 72], sizes = [8, 8], strides = [1, 1]} : vector<16x96xf32> to vector<8x8xf32>
    %174 = arith.truncf %173 : vector<8x8xf32> to vector<8x8xbf16>
    %cst_60 = arith.constant dense<0.000000e+00> : vector<8x8xf32>
    %175 = tpu.matmul %170, %172, %cst_60 {dimension_numbers = #tpu.dot_dimension_numbers<[1], [1], [0], [0], [0, 0, 1, 0], [], []>} : vector<8x8xbf16>, vector<8x8xbf16>, vector<8x8xf32> -> vector<8x8xf32>
    %176 = arith.addf %175, %143 : vector<8x8xf32>
    %cst_61 = arith.constant dense<0xFF800000> : vector<8xf32>
    %177 = vector.multi_reduction <maximumf>, %176, %cst_61 [1] : vector<8x8xf32> to vector<8xf32>
    %178 = vector.shape_cast %177 : vector<8xf32> to vector<8x1xf32>
    %179 = vector.broadcast %178 : vector<8x1xf32> to vector<8x8xf32>
    %180 = arith.subf %176, %179 : vector<8x8xf32>
    %181 = math.exp %180 : vector<8x8xf32>
    %cst_62 = arith.constant dense<0.000000e+00> : vector<8xf32>
    %182 = vector.multi_reduction <add>, %181, %cst_62 [1] : vector<8x8xf32> to vector<8xf32>
    %183 = vector.shape_cast %182 : vector<8xf32> to vector<8x1xf32>
    %184 = tpu.reciprocal %183 {approx = true} : vector<8x1xf32> -> vector<8x1xf32>
    %185 = arith.truncf %181 : vector<8x8xf32> to vector<8x8xbf16>
    %cst_63 = arith.constant dense<0.000000e+00> : vector<8x8xf32>
    %186 = tpu.matmul %185, %174, %cst_63 {dimension_numbers = #tpu.dot_dimension_numbers<[1], [0], [0], [1], [0, 0, 1, 1], [], []>} : vector<8x8xbf16>, vector<8x8xbf16>, vector<8x8xf32> -> vector<8x8xf32>
    %187 = vector.broadcast %184 : vector<8x1xf32> to vector<8x8xf32>
    %188 = arith.mulf %186, %187 : vector<8x8xf32>
    %c8_64 = arith.constant 8 : index
    %c8_65 = arith.constant 8 : index
    %189 = vector.load %arg18[%c8_64, %c8_65] : memref<16x32xf32, #tpu.memory_space<vmem>>, vector<8x8xf32>
    tpu.vector_store %arg18[%c8_64, %c8_65], %188 {strides = array<i32>} : memref<16x32xf32, #tpu.memory_space<vmem>>, vector<8x8xf32>,
    %190 = arith.truncf %184 : vector<8x1xf32> to vector<8x1xbf16>
    %cst_66 = arith.constant dense<0.000000e+00> : vector<1x8xf32>
    %191 = tpu.matmul %190, %185, %cst_66 {dimension_numbers = #tpu.dot_dimension_numbers<[0], [0], [1], [1], [0, 1, 1, 1], [], []>} : vector<8x1xbf16>, vector<8x8xbf16>, vector<1x8xf32> -> vector<1x8xf32>
    %192 = arith.addf %168, %191 : vector<1x8xf32>
    %193 = vector.extract_strided_slice %7 {offsets = [8, 16], sizes = [8, 8], strides = [1, 1]} : vector<16x96xf32> to vector<8x8xf32>
    %194 = arith.truncf %193 : vector<8x8xf32> to vector<8x8xbf16>
    %195 = vector.extract_strided_slice %7 {offsets = [8, 48], sizes = [8, 8], strides = [1, 1]} : vector<16x96xf32> to vector<8x8xf32>
    %196 = arith.truncf %195 : vector<8x8xf32> to vector<8x8xbf16>
    %197 = vector.extract_strided_slice %7 {offsets = [8, 80], sizes = [8, 8], strides = [1, 1]} : vector<16x96xf32> to vector<8x8xf32>
    %198 = arith.truncf %197 : vector<8x8xf32> to vector<8x8xbf16>
    %cst_67 = arith.constant dense<0.000000e+00> : vector<8x8xf32>
    %199 = tpu.matmul %194, %196, %cst_67 {dimension_numbers = #tpu.dot_dimension_numbers<[1], [1], [0], [0], [0, 0, 1, 0], [], []>} : vector<8x8xbf16>, vector<8x8xbf16>, vector<8x8xf32> -> vector<8x8xf32>
    %200 = arith.addf %199, %143 : vector<8x8xf32>
    %cst_68 = arith.constant dense<0xFF800000> : vector<8xf32>
    %201 = vector.multi_reduction <maximumf>, %200, %cst_68 [1] : vector<8x8xf32> to vector<8xf32>
    %202 = vector.shape_cast %201 : vector<8xf32> to vector<8x1xf32>
    %203 = vector.broadcast %202 : vector<8x1xf32> to vector<8x8xf32>
    %204 = arith.subf %200, %203 : vector<8x8xf32>
    %205 = math.exp %204 : vector<8x8xf32>
    %cst_69 = arith.constant dense<0.000000e+00> : vector<8xf32>
    %206 = vector.multi_reduction <add>, %205, %cst_69 [1] : vector<8x8xf32> to vector<8xf32>
    %207 = vector.shape_cast %206 : vector<8xf32> to vector<8x1xf32>
    %208 = tpu.reciprocal %207 {approx = true} : vector<8x1xf32> -> vector<8x1xf32>
    %209 = arith.truncf %205 : vector<8x8xf32> to vector<8x8xbf16>
    %cst_70 = arith.constant dense<0.000000e+00> : vector<8x8xf32>
    %210 = tpu.matmul %209, %198, %cst_70 {dimension_numbers = #tpu.dot_dimension_numbers<[1], [0], [0], [1], [0, 0, 1, 1], [], []>} : vector<8x8xbf16>, vector<8x8xbf16>, vector<8x8xf32> -> vector<8x8xf32>
    %211 = vector.broadcast %208 : vector<8x1xf32> to vector<8x8xf32>
    %212 = arith.mulf %210, %211 : vector<8x8xf32>
    %c8_71 = arith.constant 8 : index
    %c16_72 = arith.constant 16 : index
    %213 = vector.load %arg18[%c8_71, %c16_72] : memref<16x32xf32, #tpu.memory_space<vmem>>, vector<8x8xf32>
    tpu.vector_store %arg18[%c8_71, %c16_72], %212 {strides = array<i32>} : memref<16x32xf32, #tpu.memory_space<vmem>>, vector<8x8xf32>,
    %214 = arith.truncf %208 : vector<8x1xf32> to vector<8x1xbf16>
    %cst_73 = arith.constant dense<0.000000e+00> : vector<1x8xf32>
    %215 = tpu.matmul %214, %209, %cst_73 {dimension_numbers = #tpu.dot_dimension_numbers<[0], [0], [1], [1], [0, 1, 1, 1], [], []>} : vector<8x1xbf16>, vector<8x8xbf16>, vector<1x8xf32> -> vector<1x8xf32>
    %216 = arith.addf %192, %215 : vector<1x8xf32>
    %217 = vector.extract_strided_slice %7 {offsets = [8, 24], sizes = [8, 8], strides = [1, 1]} : vector<16x96xf32> to vector<8x8xf32>
    %218 = arith.truncf %217 : vector<8x8xf32> to vector<8x8xbf16>
    %219 = vector.extract_strided_slice %7 {offsets = [8, 56], sizes = [8, 8], strides = [1, 1]} : vector<16x96xf32> to vector<8x8xf32>
    %220 = arith.truncf %219 : vector<8x8xf32> to vector<8x8xbf16>
    %221 = vector.extract_strided_slice %7 {offsets = [8, 88], sizes = [8, 8], strides = [1, 1]} : vector<16x96xf32> to vector<8x8xf32>
    %222 = arith.truncf %221 : vector<8x8xf32> to vector<8x8xbf16>
    %cst_74 = arith.constant dense<0.000000e+00> : vector<8x8xf32>
    %223 = tpu.matmul %218, %220, %cst_74 {dimension_numbers = #tpu.dot_dimension_numbers<[1], [1], [0], [0], [0, 0, 1, 0], [], []>} : vector<8x8xbf16>, vector<8x8xbf16>, vector<8x8xf32> -> vector<8x8xf32>
    %224 = arith.addf %223, %143 : vector<8x8xf32>
    %cst_75 = arith.constant dense<0xFF800000> : vector<8xf32>
    %225 = vector.multi_reduction <maximumf>, %224, %cst_75 [1] : vector<8x8xf32> to vector<8xf32>
    %226 = vector.shape_cast %225 : vector<8xf32> to vector<8x1xf32>
    %227 = vector.broadcast %226 : vector<8x1xf32> to vector<8x8xf32>
    %228 = arith.subf %224, %227 : vector<8x8xf32>
    %229 = math.exp %228 : vector<8x8xf32>
    %cst_76 = arith.constant dense<0.000000e+00> : vector<8xf32>
    %230 = vector.multi_reduction <add>, %229, %cst_76 [1] : vector<8x8xf32> to vector<8xf32>
    %231 = vector.shape_cast %230 : vector<8xf32> to vector<8x1xf32>
    %232 = tpu.reciprocal %231 {approx = true} : vector<8x1xf32> -> vector<8x1xf32>
    %233 = arith.truncf %229 : vector<8x8xf32> to vector<8x8xbf16>
    %cst_77 = arith.constant dense<0.000000e+00> : vector<8x8xf32>
    %234 = tpu.matmul %233, %222, %cst_77 {dimension_numbers = #tpu.dot_dimension_numbers<[1], [0], [0], [1], [0, 0, 1, 1], [], []>} : vector<8x8xbf16>, vector<8x8xbf16>, vector<8x8xf32> -> vector<8x8xf32>
    %235 = vector.broadcast %232 : vector<8x1xf32> to vector<8x8xf32>
    %236 = arith.mulf %234, %235 : vector<8x8xf32>
    %c8_78 = arith.constant 8 : index
    %c24_79 = arith.constant 24 : index
    %237 = vector.load %arg18[%c8_78, %c24_79] : memref<16x32xf32, #tpu.memory_space<vmem>>, vector<8x8xf32>
    tpu.vector_store %arg18[%c8_78, %c24_79], %236 {strides = array<i32>} : memref<16x32xf32, #tpu.memory_space<vmem>>, vector<8x8xf32>,
    %238 = arith.truncf %232 : vector<8x1xf32> to vector<8x1xbf16>
    %cst_80 = arith.constant dense<0.000000e+00> : vector<1x8xf32>
    %239 = tpu.matmul %238, %233, %cst_80 {dimension_numbers = #tpu.dot_dimension_numbers<[0], [0], [1], [1], [0, 1, 1, 1], [], []>} : vector<8x1xbf16>, vector<8x8xbf16>, vector<1x8xf32> -> vector<1x8xf32>
    %240 = arith.addf %216, %239 : vector<1x8xf32>
    %c1_81 = arith.constant 1 : index
    %c0_82 = arith.constant 0 : index
    %c0_83 = arith.constant 0 : index
    %241 = vector.load %arg3[%c1_81, %c0_82, %c0_83] : memref<2x4x8xf32, #tpu.memory_space<vmem>>, vector<1x4x8xf32>
    %242 = vector.shape_cast %241 : vector<1x4x8xf32> to vector<4x8xf32>
    %cst_84 = arith.constant 2.500000e-01 : f32
    %243 = vector.broadcast %cst_84 : f32 to vector<1x8xf32>
    %244 = arith.mulf %240, %243 : vector<1x8xf32>
    %245 = vector.broadcast %244 : vector<1x8xf32> to vector<4x8xf32>
    %246 = arith.mulf %245, %242 : vector<4x8xf32>
    %cst_85 = arith.constant 1.000000e+00 : f32
    %247 = vector.broadcast %cst_85 : f32 to vector<4x8xf32>
    %248 = arith.subf %247, %242 : vector<4x8xf32>
    %cst_86 = arith.constant -1.000000e+10 : f32
    %249 = vector.broadcast %cst_86 : f32 to vector<4x8xf32>
    %250 = arith.mulf %248, %249 : vector<4x8xf32>
    %251 = arith.addf %246, %250 : vector<4x8xf32>
    %cst_87 = arith.constant dense<0xFF800000> : vector<4xf32>
    %252 = vector.multi_reduction <maximumf>, %251, %cst_87 [1] : vector<4x8xf32> to vector<4xf32>
    %253 = vector.shape_cast %252 : vector<4xf32> to vector<4x1xf32>
    %254 = vector.broadcast %253 : vector<4x1xf32> to vector<4x8xf32>
    %255 = arith.subf %251, %254 : vector<4x8xf32>
    %256 = math.exp %255 : vector<4x8xf32>
    %cst_88 = arith.constant dense<0.000000e+00> : vector<4xf32>
    %257 = vector.multi_reduction <add>, %256, %cst_88 [1] : vector<4x8xf32> to vector<4xf32>
    %258 = vector.shape_cast %257 : vector<4xf32> to vector<4x1xf32>
    %259 = tpu.reciprocal %258 {approx = true} : vector<4x1xf32> -> vector<4x1xf32>
    %260 = vector.broadcast %259 : vector<4x1xf32> to vector<4x8xf32>
    %261 = arith.mulf %256, %260 : vector<4x8xf32>
    %262 = arith.mulf %261, %242 : vector<4x8xf32>
    %cst_89 = arith.constant dense<0.000000e+00> : vector<8xf32>
    %263 = vector.multi_reduction <add>, %262, %cst_89 [0] : vector<4x8xf32> to vector<8xf32>
    %264 = vector.shape_cast %263 : vector<8xf32> to vector<1x8xf32>
    %cst_90 = arith.constant 0.000000e+00 : f32
    %265 = vector.broadcast %cst_90 : f32 to vector<1x120xf32>
    %266 = tpu.concatenate %264, %265 in 1 : vector<1x8xf32>, vector<1x120xf32> -> vector<1x128xf32>
    %c1_91 = arith.constant 1 : index
    %c0_92 = arith.constant 0 : index
    %c0_93 = arith.constant 0 : index
    %267 = vector.load %arg17[%c1_91, %c0_92, %c0_93] : memref<2x1x128xf32, #tpu.memory_space<vmem>>, vector<1x1x128xf32>
    %268 = vector.shape_cast %267 : vector<1x1x128xf32> to vector<1x128xf32>
    %269 = vector.shape_cast %266 : vector<1x128xf32> to vector<1x1x128xf32>
    tpu.vector_store %arg17[%c1_91, %c0_92, %c0_93], %269 {strides = array<i32>} : memref<2x1x128xf32, #tpu.memory_space<vmem>>, vector<1x1x128xf32>,
    %c0_94 = arith.constant 0 : index
    %c0_95 = arith.constant 0 : index
    %270 = vector.load %arg18[%c0_94, %c0_95] : memref<16x32xf32, #tpu.memory_space<vmem>>, vector<16x32xf32>
    %271 = arith.truncf %270 : vector<16x32xf32> to vector<16x32xbf16>
    %c0_96 = arith.constant 0 : index
    %c0_97 = arith.constant 0 : index
    %272 = vector.load %arg6[%c0_96, %c0_97] : memref<32x32xbf16, #tpu.memory_space<vmem>>, vector<32x32xbf16>
    %cst_98 = arith.constant dense<0.000000e+00> : vector<16x32xf32>
    %273 = tpu.matmul %271, %272, %cst_98 {dimension_numbers = #tpu.dot_dimension_numbers<[1], [0], [0], [1], [0, 0, 1, 1], [], []>} : vector<16x32xbf16>, vector<32x32xbf16>, vector<16x32xf32> -> vector<16x32xf32>
    %c0_99 = arith.constant 0 : index
    %c0_100 = arith.constant 0 : index
    %274 = vector.load %arg7[%c0_99, %c0_100] : memref<1x32xf32, #tpu.memory_space<vmem>>, vector<1x32xf32>
    %275 = vector.broadcast %274 : vector<1x32xf32> to vector<16x32xf32>
    %276 = arith.addf %273, %275 : vector<16x32xf32>
    %277 = arith.addf %1, %276 : vector<16x32xf32>
    %cst_101 = arith.constant dense<0.000000e+00> : vector<16xf32>
    %278 = vector.multi_reduction <add>, %277, %cst_101 [1] : vector<16x32xf32> to vector<16xf32>
    %279 = vector.shape_cast %278 : vector<16xf32> to vector<16x1xf32>
    %cst_102 = arith.constant 3.200000e+01 : f32
    %280 = vector.broadcast %cst_102 : f32 to vector<16x1xf32>
    %281 = arith.divf %279, %280 : vector<16x1xf32>
    %282 = vector.broadcast %281 : vector<16x1xf32> to vector<16x32xf32>
    %283 = arith.subf %277, %282 : vector<16x32xf32>
    %284 = vector.broadcast %281 : vector<16x1xf32> to vector<16x32xf32>
    %285 = arith.subf %277, %284 : vector<16x32xf32>
    %286 = arith.mulf %283, %285 : vector<16x32xf32>
    %cst_103 = arith.constant dense<0.000000e+00> : vector<16xf32>
    %287 = vector.multi_reduction <add>, %286, %cst_103 [1] : vector<16x32xf32> to vector<16xf32>
    %288 = vector.shape_cast %287 : vector<16xf32> to vector<16x1xf32>
    %cst_104 = arith.constant 3.200000e+01 : f32
    %289 = vector.broadcast %cst_104 : f32 to vector<16x1xf32>
    %290 = arith.divf %288, %289 : vector<16x1xf32>
    %291 = vector.broadcast %281 : vector<16x1xf32> to vector<16x32xf32>
    %292 = arith.subf %277, %291 : vector<16x32xf32>
    %cst_105 = arith.constant 9.99999974E-6 : f32
    %293 = vector.broadcast %cst_105 : f32 to vector<16x1xf32>
    %294 = arith.addf %290, %293 : vector<16x1xf32>
    %295 = math.rsqrt %294 : vector<16x1xf32>
    %296 = vector.broadcast %295 : vector<16x1xf32> to vector<16x32xf32>
    %297 = arith.mulf %292, %296 : vector<16x32xf32>
    %c0_106 = arith.constant 0 : index
    %c0_107 = arith.constant 0 : index
    %298 = vector.load %arg8[%c0_106, %c0_107] : memref<1x32xf32, #tpu.memory_space<vmem>>, vector<1x32xf32>
    %299 = vector.broadcast %298 : vector<1x32xf32> to vector<16x32xf32>
    %300 = arith.mulf %297, %299 : vector<16x32xf32>
    %c0_108 = arith.constant 0 : index
    %c0_109 = arith.constant 0 : index
    %301 = vector.load %arg9[%c0_108, %c0_109] : memref<1x32xf32, #tpu.memory_space<vmem>>, vector<1x32xf32>
    %302 = vector.broadcast %301 : vector<1x32xf32> to vector<16x32xf32>
    %303 = arith.addf %300, %302 : vector<16x32xf32>
    %304 = arith.truncf %303 : vector<16x32xf32> to vector<16x32xbf16>
    %c0_110 = arith.constant 0 : index
    %c0_111 = arith.constant 0 : index
    %305 = vector.load %arg12[%c0_110, %c0_111] : memref<32x64xbf16, #tpu.memory_space<vmem>>, vector<32x64xbf16>
    %cst_112 = arith.constant dense<0.000000e+00> : vector<16x64xf32>
    %306 = tpu.matmul %304, %305, %cst_112 {dimension_numbers = #tpu.dot_dimension_numbers<[1], [0], [0], [1], [0, 0, 1, 1], [], []>} : vector<16x32xbf16>, vector<32x64xbf16>, vector<16x64xf32> -> vector<16x64xf32>
    %c0_113 = arith.constant 0 : index
    %c0_114 = arith.constant 0 : index
    %307 = vector.load %arg13[%c0_113, %c0_114] : memref<1x64xf32, #tpu.memory_space<vmem>>, vector<1x64xf32>
    %308 = vector.broadcast %307 : vector<1x64xf32> to vector<16x64xf32>
    %309 = arith.addf %306, %308 : vector<16x64xf32>
    %cst_115 = arith.constant 0.000000e+00 : f32
    %310 = vector.broadcast %cst_115 : f32 to vector<16x64xf32>
    %311 = arith.maximumf %309, %310 : vector<16x64xf32>
    %312 = arith.truncf %311 : vector<16x64xf32> to vector<16x64xbf16>
    %c0_116 = arith.constant 0 : index
    %c0_117 = arith.constant 0 : index
    %313 = vector.load %arg14[%c0_116, %c0_117] : memref<64x32xbf16, #tpu.memory_space<vmem>>, vector<64x32xbf16>
    %cst_118 = arith.constant dense<0.000000e+00> : vector<16x32xf32>
    %314 = tpu.matmul %312, %313, %cst_118 {dimension_numbers = #tpu.dot_dimension_numbers<[1], [0], [0], [1], [0, 0, 1, 1], [], []>} : vector<16x64xbf16>, vector<64x32xbf16>, vector<16x32xf32> -> vector<16x32xf32>
    %c0_119 = arith.constant 0 : index
    %c0_120 = arith.constant 0 : index
    %315 = vector.load %arg15[%c0_119, %c0_120] : memref<1x32xf32, #tpu.memory_space<vmem>>, vector<1x32xf32>
    %316 = vector.broadcast %315 : vector<1x32xf32> to vector<16x32xf32>
    %317 = arith.addf %314, %316 : vector<16x32xf32>
    %318 = arith.addf %303, %317 : vector<16x32xf32>
    %cst_121 = arith.constant dense<0.000000e+00> : vector<16xf32>
    %319 = vector.multi_reduction <add>, %318, %cst_121 [1] : vector<16x32xf32> to vector<16xf32>
    %320 = vector.shape_cast %319 : vector<16xf32> to vector<16x1xf32>
    %cst_122 = arith.constant 3.200000e+01 : f32
    %321 = vector.broadcast %cst_122 : f32 to vector<16x1xf32>
    %322 = arith.divf %320, %321 : vector<16x1xf32>
    %323 = vector.broadcast %322 : vector<16x1xf32> to vector<16x32xf32>
    %324 = arith.subf %318, %323 : vector<16x32xf32>
    %325 = vector.broadcast %322 : vector<16x1xf32> to vector<16x32xf32>
    %326 = arith.subf %318, %325 : vector<16x32xf32>
    %327 = arith.mulf %324, %326 : vector<16x32xf32>
    %cst_123 = arith.constant dense<0.000000e+00> : vector<16xf32>
    %328 = vector.multi_reduction <add>, %327, %cst_123 [1] : vector<16x32xf32> to vector<16xf32>
    %329 = vector.shape_cast %328 : vector<16xf32> to vector<16x1xf32>
    %cst_124 = arith.constant 3.200000e+01 : f32
    %330 = vector.broadcast %cst_124 : f32 to vector<16x1xf32>
    %331 = arith.divf %329, %330 : vector<16x1xf32>
    %332 = vector.broadcast %322 : vector<16x1xf32> to vector<16x32xf32>
    %333 = arith.subf %318, %332 : vector<16x32xf32>
    %cst_125 = arith.constant 9.99999974E-6 : f32
    %334 = vector.broadcast %cst_125 : f32 to vector<16x1xf32>
    %335 = arith.addf %331, %334 : vector<16x1xf32>
    %336 = math.rsqrt %335 : vector<16x1xf32>
    %337 = vector.broadcast %336 : vector<16x1xf32> to vector<16x32xf32>
    %338 = arith.mulf %333, %337 : vector<16x32xf32>
    %c0_126 = arith.constant 0 : index
    %c0_127 = arith.constant 0 : index
    %339 = vector.load %arg10[%c0_126, %c0_127] : memref<1x32xf32, #tpu.memory_space<vmem>>, vector<1x32xf32>
    %340 = vector.broadcast %339 : vector<1x32xf32> to vector<16x32xf32>
    %341 = arith.mulf %338, %340 : vector<16x32xf32>
    %c0_128 = arith.constant 0 : index
    %c0_129 = arith.constant 0 : index
    %342 = vector.load %arg11[%c0_128, %c0_129] : memref<1x32xf32, #tpu.memory_space<vmem>>, vector<1x32xf32>
    %343 = vector.broadcast %342 : vector<1x32xf32> to vector<16x32xf32>
    %344 = arith.addf %341, %343 : vector<16x32xf32>
    %345 = vector.shape_cast %344 : vector<16x32xf32> to vector<2x8x32xf32>
    %c0_130 = arith.constant 0 : index
    %c0_131 = arith.constant 0 : index
    %c0_132 = arith.constant 0 : index
    %346 = vector.load %arg16[%c0_130, %c0_131, %c0_132] : memref<2x8x32xf32, #tpu.memory_space<vmem>>, vector<2x8x32xf32>
    tpu.vector_store %arg16[%c0_130, %c0_131, %c0_132], %345 {strides = array<i32>} : memref<2x8x32xf32, #tpu.memory_space<vmem>>, vector<2x8x32xf32>,
    return
  }
  func.func @transform_0(%arg0: i32) -> (i32, i32, i32) {
    %c0_i32 = arith.constant 0 : i32
    %c0_i32_0 = arith.constant 0 : i32
    %c0_i32_1 = arith.constant 0 : i32
    return %arg0, %c0_i32, %c0_i32_0 : i32, i32, i32
  }
  func.func @transform_1(%arg0: i32) -> (i32, i32, i32) {
    %c0_i32 = arith.constant 0 : i32
    %c0_i32_0 = arith.constant 0 : i32
    %c0_i32_1 = arith.constant 0 : i32
    return %arg0, %c0_i32, %c0_i32_0 : i32, i32, i32
  }
  func.func @transform_2(%arg0: i32) -> (i32, i32, i32) {
    %c0_i32 = arith.constant 0 : i32
    %c0_i32_0 = arith.constant 0 : i32
    %c0_i32_1 = arith.constant 0 : i32
    return %arg0, %c0_i32, %c0_i32_0 : i32, i32, i32
  }
  func.func @transform_3(%arg0: i32) -> (i32, i32) {
    %c0_i32 = arith.constant 0 : i32
    %c0_i32_0 = arith.constant 0 : i32
    %c0_i32_1 = arith.constant 0 : i32
    return %c0_i32, %c0_i32_0 : i32, i32
  }
  func.func @transform_4(%arg0: i32) -> (i32, i32) {
    %c0_i32 = arith.constant 0 : i32
    %c0_i32_0 = arith.constant 0 : i32
    %c0_i32_1 = arith.constant 0 : i32
    return %c0_i32, %c0_i32_0 : i32, i32
  }
  func.func @transform_5(%arg0: i32) -> (i32, i32) {
    %c0_i32 = arith.constant 0 : i32
    %c0_i32_0 = arith.constant 0 : i32
    %c0_i32_1 = arith.constant 0 : i32
    return %c0_i32, %c0_i32_0 : i32, i32
  }
  func.func @transform_6(%arg0: i32) -> (i32, i32) {
    %c0_i32 = arith.constant 0 : i32
    %c0_i32_0 = arith.constant 0 : i32
    %c0_i32_1 = arith.constant 0 : i32
    return %c0_i32, %c0_i32_0 : i32, i32
  }
  func.func @transform_7(%arg0: i32) -> (i32, i32) {
    %c0_i32 = arith.constant 0 : i32
    %c0_i32_0 = arith.constant 0 : i32
    %c0_i32_1 = arith.constant 0 : i32
    return %c0_i32, %c0_i32_0 : i32, i32
  }
  func.func @transform_8(%arg0: i32) -> (i32, i32) {
    %c0_i32 = arith.constant 0 : i32
    %c0_i32_0 = arith.constant 0 : i32
    %c0_i32_1 = arith.constant 0 : i32
    return %c0_i32, %c0_i32_0 : i32, i32
  }
  func.func @transform_9(%arg0: i32) -> (i32, i32) {
    %c0_i32 = arith.constant 0 : i32
    %c0_i32_0 = arith.constant 0 : i32
    %c0_i32_1 = arith.constant 0 : i32
    return %c0_i32, %c0_i32_0 : i32, i32
  }
  func.func @transform_10(%arg0: i32) -> (i32, i32) {
    %c0_i32 = arith.constant 0 : i32
    %c0_i32_0 = arith.constant 0 : i32
    %c0_i32_1 = arith.constant 0 : i32
    return %c0_i32, %c0_i32_0 : i32, i32
  }
  func.func @transform_11(%arg0: i32) -> (i32, i32) {
    %c0_i32 = arith.constant 0 : i32
    %c0_i32_0 = arith.constant 0 : i32
    %c0_i32_1 = arith.constant 0 : i32
    return %c0_i32, %c0_i32_0 : i32, i32
  }
  func.func @transform_12(%arg0: i32) -> (i32, i32) {
    %c0_i32 = arith.constant 0 : i32
    %c0_i32_0 = arith.constant 0 : i32
    %c0_i32_1 = arith.constant 0 : i32
    return %c0_i32, %c0_i32_0 : i32, i32
  }
  func.func @transform_13(%arg0: i32) -> (i32, i32) {
    %c0_i32 = arith.constant 0 : i32
    %c0_i32_0 = arith.constant 0 : i32
    %c0_i32_1 = arith.constant 0 : i32
    return %c0_i32, %c0_i32_0 : i32, i32
  }
  func.func @transform_14(%arg0: i32) -> (i32, i32) {
    %c0_i32 = arith.constant 0 : i32
    %c0_i32_0 = arith.constant 0 : i32
    %c0_i32_1 = arith.constant 0 : i32
    return %c0_i32, %c0_i32_0 : i32, i32
  }
  func.func @transform_15(%arg0: i32) -> (i32, i32, i32) {
    %c0_i32 = arith.constant 0 : i32
    %c0_i32_0 = arith.constant 0 : i32
    %c0_i32_1 = arith.constant 0 : i32
    return %arg0, %c0_i32, %c0_i32_0 : i32, i32, i32
  }
  func.func @transform_16(%arg0: i32) -> (i32, i32, i32) {
    %c0_i32 = arith.constant 0 : i32
    %c0_i32_0 = arith.constant 0 : i32
    %c0_i32_1 = arith.constant 0 : i32
    return %arg0, %c0_i32, %c0_i32_0 : i32, i32, i32
  }
}

</mosaic_0001>

<llo_original>
// kernel: tpu_custom_call.1
$region0: #{tpu_custom_call.1}
  #allocation0 [shape = 'u32[]', space=smem, size = 0x4, offset = 0x4, fixed_abs, tag = 'smem constant byte address 0x4 - core index']
  #allocation1 [shape = 'u32[144,128]{1,0:T(1,128)}', space=vmem, size = 0x12000, scoped, tag = 'internal scratch']
  #allocation2 [shape = 'f32[16,32]{1,0:T(8,128)}', space=vmem, size = 0x2000, scoped, tag = 'scratch operand']
  %s0 = inlined_call_operand.vmem [shape: f32[4,8,32], index: 0, kind: input, shape index: {}]
  %s1 = inlined_call_operand.hbm [shape: s8[4,8,8], index: 1, kind: input, shape index: {}]
  %s2 = inlined_call_operand.vmem [shape: f32[4,4,8], index: 2, kind: input, shape index: {}]
  %s3 = inlined_call_operand.hbm [shape: bf16[32,96], index: 3, kind: input, shape index: {}]
  %s4 = inlined_call_operand.vmem [shape: f32[1,96], index: 4, kind: input, shape index: {}]
  %s5 = inlined_call_operand.hbm [shape: bf16[32,32], index: 5, kind: input, shape index: {}]
  %s6 = inlined_call_operand.vmem [shape: f32[1,32], index: 6, kind: input, shape index: {}]
  %s7 = inlined_call_operand.hbm [shape: f32[1,32], index: 7, kind: input, shape index: {}]
  %s8 = inlined_call_operand.hbm [shape: f32[1,32], index: 8, kind: input, shape index: {}]
  %s9 = inlined_call_operand.hbm [shape: f32[1,32], index: 9, kind: input, shape index: {}]
  %s10 = inlined_call_operand.vmem [shape: f32[1,32], index: 10, kind: input, shape index: {}]
  %s11 = inlined_call_operand.vmem [shape: bf16[32,64], index: 11, kind: input, shape index: {}]
  %s12 = inlined_call_operand.vmem [shape: f32[1,64], index: 12, kind: input, shape index: {}]
  %s13 = inlined_call_operand.vmem [shape: bf16[64,32], index: 13, kind: input, shape index: {}]
  %s14 = inlined_call_operand.vmem [shape: f32[1,32], index: 14, kind: input, shape index: {}]
  %s15 = inlined_call_operand.hbm [shape: f32[4,8,32], index: 15, kind: output, shape index: {0}]
  %s16 = inlined_call_operand.hbm [shape: f32[4,1,128], index: 16, kind: output, shape index: {1}]
  %17 = xla_tuple %s15, %s16
  %s18 = sld [smem:[#allocation0]]
  $region125: #{tpu_custom_call.1} parent=0
    _
  %s20 = ssub.s32 1, %s18
  %s21 = scalar_select 0, %s20, %s18
  $region1: #{tpu_custom_call.1} parent=0
    #allocation3 [shape = 'u8[4096]{0}', space=vmem, size = 0x1000, scoped, tag = 'input window, operand 1']
    #allocation4 [shape = 's32[2]{0}', space=sflag, size = 0x8, scoped, tag = 'scoped memory for tpu_custom_call.1']
    #allocation5 [shape = 's32[2]{0}', space=sflag, size = 0x8, scoped, tag = 'scoped memory for tpu_custom_call.1']
    #allocation6 [shape = 'u8[8192]{0}', space=vmem, size = 0x2000, scoped, tag = 'input window, operand 3, single buffered']
    #allocation7 [shape = 's32[1]{0}', space=sflag, size = 0x4, scoped, tag = 'scoped memory for tpu_custom_call.1']
    #allocation8 [shape = 'u8[8192]{0}', space=vmem, size = 0x2000, scoped, tag = 'input window, operand 5, single buffered']
    #allocation9 [shape = 'u8[512]{0}', space=vmem, size = 0x400, scoped, tag = 'input window, operand 7, single buffered']
    #allocation10 [shape = 's32[1]{0}', space=sflag, size = 0x4, scoped, tag = 'scoped memory for tpu_custom_call.1']
    #allocation11 [shape = 'u8[512]{0}', space=vmem, size = 0x400, scoped, tag = 'input window, operand 8, single buffered']
    #allocation12 [shape = 'u8[512]{0}', space=vmem, size = 0x400, scoped, tag = 'input window, operand 9, single buffered']
    #allocation13 [shape = 's32[1]{0}', space=sflag, size = 0x4, scoped, tag = 'scoped memory for tpu_custom_call.1']
    #allocation14 [shape = 'u8[16384]{0}', space=vmem, size = 0x4000, scoped, tag = 'output window, operand 0']
    #allocation15 [shape = 'u8[2048]{0}', space=vmem, size = 0x800, scoped, tag = 'output window, operand 1']
    #allocation16 [shape = 's32[2]{0}', space=sflag, size = 0x8, scoped, tag = 'scoped memory for tpu_custom_call.1']
    %22 = vsyncpa [#allocation4], 0
    %s23 = scalar_lea.sflag [#allocation4], 1
    %24 = vsyncpa %s23, 0
    %25 = vsyncpa [#allocation7], 0
    %26 = vsyncpa [#allocation10], 0
    %27 = vsyncpa [#allocation13], 0
    %28 = vsyncpa [#allocation5], 0
    %s29 = scalar_lea.sflag [#allocation5], 1
    %30 = vsyncpa %s29, 0
    %31 = vsyncpa [#allocation16], 0
    %s32 = scalar_lea.sflag [#allocation16], 1
    %33 = vsyncpa %s32, 0
    loop: start=0, step=1, limit=4
    $region2: #{tpu_custom_call.1} parent=1 // loop_pre_header
      _
    $region3: #{tpu_custom_call.1} parent=1 // loop_header
      %s35 = sphi 0, %s39
      %p36 = scmp.ge.s32.totalorder %s35, 4
      %s45 = sphi 0, %s47
      %s48 = sphi 0, %s45
      %s49 = sphi 0, %s48
      %s65 = sphi 0, %s49
      %s71 = sphi 0, %s73
      %s74 = sphi 0, %s71
      %s75 = sphi 0, %s74
      %s91 = sphi 0, %s75
      %s97 = sphi 0, %s99
      %s100 = sphi 0, %s97
      %s101 = sphi 0, %s100
      %s117 = sphi 0, %s101
      %s121 = sphi 0, %s121
      %s123 = sphi 0, %s121
      %s124 = sphi 0, %s123
      %s138 = sphi 0, %s124
      %s142 = sphi 0, %s142
      %s144 = sphi 0, %s142
      %s145 = sphi 0, %s144
      %s159 = sphi 0, %s145
      %s163 = sphi 0, %s163
      %s165 = sphi 0, %s163
      %s166 = sphi 0, %s165
      %s180 = sphi 0, %s166
      %s184 = sphi 0, %s184
      %s186 = sphi 0, %s184
      %s187 = sphi 0, %s186
      %s201 = sphi 0, %s187
      %s205 = sphi 0, %s205
      %s207 = sphi 0, %s205
      %s208 = sphi 0, %s207
      %s222 = sphi 0, %s208
      %s226 = sphi 0, %s226
      %s228 = sphi 0, %s226
      %s229 = sphi 0, %s228
      %s243 = sphi 0, %s229
      %s247 = sphi 0, %s247
      %s249 = sphi 0, %s247
      %s250 = sphi 0, %s249
      %s264 = sphi 0, %s250
      %s268 = sphi 0, %s268
      %s270 = sphi 0, %s268
      %s271 = sphi 0, %s270
      %s285 = sphi 0, %s271
      %s289 = sphi 0, %s289
      %s291 = sphi 0, %s289
      %s292 = sphi 0, %s291
      %s306 = sphi 0, %s292
      %s310 = sphi 0, %s310
      %s312 = sphi 0, %s310
      %s313 = sphi 0, %s312
      %s327 = sphi 0, %s313
      %s331 = sphi 0, %s331
      %s333 = sphi 0, %s331
      %s334 = sphi 0, %s333
      %s348 = sphi 0, %s334
      %s352 = sphi 0, %s352
      %s354 = sphi 0, %s352
      %s355 = sphi 0, %s354
      %s369 = sphi 0, %s355
      %s375 = sphi 0, %s377
      %s378 = sphi 0, %s375
      %s379 = sphi 0, %s378
      %s395 = sphi 0, %s379
      %s401 = sphi 0, %s403
      %s404 = sphi 0, %s401
      %s405 = sphi 0, %s404
      %s421 = sphi 0, %s405
    $region4: #{tpu_custom_call.1} parent=1 // loop_header_branch
      %38 = sbr.rel (%p36) target = $region8
    $region5: #{tpu_custom_call.1} parent=1 // loop_body
      %s40 = ssub.s32 %s35, 1
      %s41 = ssub.s32 %s35, 2
      %s42 = sadd.s32 %s35, 1
      %s43 = ssub.s32 %s35, %s42
      %p44 = scmp.eq.s32.totalorder %s43, 0
      %s46 = sadd.s32 %s45, 1
      %s47 = scalar_select %p44, %s45, %s46
      %p50 = pneg %p44
      %p51 = scmp.eq.s32.totalorder %s35, 1
      %p52 = por %p50, %p51
      %p53 = scmp.ne.s32.totalorder %s45, %s48
      %p54 = scmp.eq.s32.totalorder %s35, 0
      %p55 = por %p53, %p54
      %p56 = scmp.ne.s32.totalorder %s45, %s48
      %p57 = scmp.eq.s32.totalorder %s40, 1
      %p58 = por %p56, %p57
      %p59 = scmp.ne.s32.totalorder %s48, %s49
      %p60 = scmp.eq.s32.totalorder %s40, 0
      %p61 = por %p59, %p60
      %p62 = scmp.ne.s32.totalorder %s48, %s49
      %p63 = scmp.eq.s32.totalorder %s41, 1
      %p64 = por %p62, %p63
      %p66 = scmp.ne.s32.totalorder %s49, %s65
      %p67 = scmp.eq.s32.totalorder %s41, 0
      %p68 = por %p66, %p67
      %s69 = ssub.s32 %s35, %s42
      %p70 = scmp.eq.s32.totalorder %s69, 0
      %s72 = sadd.s32 %s71, 1
      %s73 = scalar_select %p70, %s71, %s72
      %p76 = pneg %p70
      %p77 = scmp.eq.s32.totalorder %s35, 1
      %p78 = por %p76, %p77
      %p79 = scmp.ne.s32.totalorder %s71, %s74
      %p80 = scmp.eq.s32.totalorder %s35, 0
      %p81 = por %p79, %p80
      %p82 = scmp.ne.s32.totalorder %s71, %s74
      %p83 = scmp.eq.s32.totalorder %s40, 1
      %p84 = por %p82, %p83
      %p85 = scmp.ne.s32.totalorder %s74, %s75
      %p86 = scmp.eq.s32.totalorder %s40, 0
      %p87 = por %p85, %p86
      %p88 = scmp.ne.s32.totalorder %s74, %s75
      %p89 = scmp.eq.s32.totalorder %s41, 1
      %p90 = por %p88, %p89
      %p92 = scmp.ne.s32.totalorder %s75, %s91
      %p93 = scmp.eq.s32.totalorder %s41, 0
      %p94 = por %p92, %p93
      %s95 = ssub.s32 %s35, %s42
      %p96 = scmp.eq.s32.totalorder %s95, 0
      %s98 = sadd.s32 %s97, 1
      %s99 = scalar_select %p96, %s97, %s98
      %p102 = pneg %p96
      %p103 = scmp.eq.s32.totalorder %s35, 1
      %p104 = por %p102, %p103
      %p105 = scmp.ne.s32.totalorder %s97, %s100
      %p106 = scmp.eq.s32.totalorder %s35, 0
      %p107 = por %p105, %p106
      %p108 = scmp.ne.s32.totalorder %s97, %s100
      %p109 = scmp.eq.s32.totalorder %s40, 1
      %p110 = por %p108, %p109
      %p111 = scmp.ne.s32.totalorder %s100, %s101
      %p112 = scmp.eq.s32.totalorder %s40, 0
      %p113 = por %p111, %p112
      %p114 = scmp.ne.s32.totalorder %s100, %s101
      %p115 = scmp.eq.s32.totalorder %s41, 1
      %p116 = por %p114, %p115
      %p118 = scmp.ne.s32.totalorder %s101, %s117
      %p119 = scmp.eq.s32.totalorder %s41, 0
      %p120 = por %p118, %p119
      %s122 = sadd.s32 %s121, 1
      %p125 = scmp.eq.s32.totalorder %s35, 1
      %p126 = scmp.ne.s32.totalorder %s121, %s123
      %p127 = scmp.eq.s32.totalorder %s35, 0
      %p128 = por %p126, %p127
      %p129 = scmp.ne.s32.totalorder %s121, %s123
      %p130 = scmp.eq.s32.totalorder %s40, 1
      %p131 = por %p129, %p130
      %p132 = scmp.ne.s32.totalorder %s123, %s124
      %p133 = scmp.eq.s32.totalorder %s40, 0
      %p134 = por %p132, %p133
      %p135 = scmp.ne.s32.totalorder %s123, %s124
      %p136 = scmp.eq.s32.totalorder %s41, 1
      %p137 = por %p135, %p136
      %p139 = scmp.ne.s32.totalorder %s124, %s138
      %p140 = scmp.eq.s32.totalorder %s41, 0
      %p141 = por %p139, %p140
      %s143 = sadd.s32 %s142, 1
      %p146 = scmp.eq.s32.totalorder %s35, 1
      %p147 = scmp.ne.s32.totalorder %s142, %s144
      %p148 = scmp.eq.s32.totalorder %s35, 0
      %p149 = por %p147, %p148
      %p150 = scmp.ne.s32.totalorder %s142, %s144
      %p151 = scmp.eq.s32.totalorder %s40, 1
      %p152 = por %p150, %p151
      %p153 = scmp.ne.s32.totalorder %s144, %s145
      %p154 = scmp.eq.s32.totalorder %s40, 0
      %p155 = por %p153, %p154
      %p156 = scmp.ne.s32.totalorder %s144, %s145
      %p157 = scmp.eq.s32.totalorder %s41, 1
      %p158 = por %p156, %p157
      %p160 = scmp.ne.s32.totalorder %s145, %s159
      %p161 = scmp.eq.s32.totalorder %s41, 0
      %p162 = por %p160, %p161
      %s164 = sadd.s32 %s163, 1
      %p167 = scmp.eq.s32.totalorder %s35, 1
      %p168 = scmp.ne.s32.totalorder %s163, %s165
      %p169 = scmp.eq.s32.totalorder %s35, 0
      %p170 = por %p168, %p169
      %p171 = scmp.ne.s32.totalorder %s163, %s165
      %p172 = scmp.eq.s32.totalorder %s40, 1
      %p173 = por %p171, %p172
      %p174 = scmp.ne.s32.totalorder %s165, %s166
      %p175 = scmp.eq.s32.totalorder %s40, 0
      %p176 = por %p174, %p175
      %p177 = scmp.ne.s32.totalorder %s165, %s166
      %p178 = scmp.eq.s32.totalorder %s41, 1
      %p179 = por %p177, %p178
      %p181 = scmp.ne.s32.totalorder %s166, %s180
      %p182 = scmp.eq.s32.totalorder %s41, 0
      %p183 = por %p181, %p182
      %s185 = sadd.s32 %s184, 1
      %p188 = scmp.eq.s32.totalorder %s35, 1
      %p189 = scmp.ne.s32.totalorder %s184, %s186
      %p190 = scmp.eq.s32.totalorder %s35, 0
      %p191 = por %p189, %p190
      %p192 = scmp.ne.s32.totalorder %s184, %s186
      %p193 = scmp.eq.s32.totalorder %s40, 1
      %p194 = por %p192, %p193
      %p195 = scmp.ne.s32.totalorder %s186, %s187
      %p196 = scmp.eq.s32.totalorder %s40, 0
      %p197 = por %p195, %p196
      %p198 = scmp.ne.s32.totalorder %s186, %s187
      %p199 = scmp.eq.s32.totalorder %s41, 1
      %p200 = por %p198, %p199
      %p202 = scmp.ne.s32.totalorder %s187, %s201
      %p203 = scmp.eq.s32.totalorder %s41, 0
      %p204 = por %p202, %p203
      %s206 = sadd.s32 %s205, 1
      %p209 = scmp.eq.s32.totalorder %s35, 1
      %p210 = scmp.ne.s32.totalorder %s205, %s207
      %p211 = scmp.eq.s32.totalorder %s35, 0
      %p212 = por %p210, %p211
      %p213 = scmp.ne.s32.totalorder %s205, %s207
      %p214 = scmp.eq.s32.totalorder %s40, 1
      %p215 = por %p213, %p214
      %p216 = scmp.ne.s32.totalorder %s207, %s208
      %p217 = scmp.eq.s32.totalorder %s40, 0
      %p218 = por %p216, %p217
      %p219 = scmp.ne.s32.totalorder %s207, %s208
      %p220 = scmp.eq.s32.totalorder %s41, 1
      %p221 = por %p219, %p220
      %p223 = scmp.ne.s32.totalorder %s208, %s222
      %p224 = scmp.eq.s32.totalorder %s41, 0
      %p225 = por %p223, %p224
      %s227 = sadd.s32 %s226, 1
      %p230 = scmp.eq.s32.totalorder %s35, 1
      %p231 = scmp.ne.s32.totalorder %s226, %s228
      %p232 = scmp.eq.s32.totalorder %s35, 0
      %p233 = por %p231, %p232
      %p234 = scmp.ne.s32.totalorder %s226, %s228
      %p235 = scmp.eq.s32.totalorder %s40, 1
      %p236 = por %p234, %p235
      %p237 = scmp.ne.s32.totalorder %s228, %s229
      %p238 = scmp.eq.s32.totalorder %s40, 0
      %p239 = por %p237, %p238
      %p240 = scmp.ne.s32.totalorder %s228, %s229
      %p241 = scmp.eq.s32.totalorder %s41, 1
      %p242 = por %p240, %p241
      %p244 = scmp.ne.s32.totalorder %s229, %s243
      %p245 = scmp.eq.s32.totalorder %s41, 0
      %p246 = por %p244, %p245
      %s248 = sadd.s32 %s247, 1
      %p251 = scmp.eq.s32.totalorder %s35, 1
      %p252 = scmp.ne.s32.totalorder %s247, %s249
      %p253 = scmp.eq.s32.totalorder %s35, 0
      %p254 = por %p252, %p253
      %p255 = scmp.ne.s32.totalorder %s247, %s249
      %p256 = scmp.eq.s32.totalorder %s40, 1
      %p257 = por %p255, %p256
      %p258 = scmp.ne.s32.totalorder %s249, %s250
      %p259 = scmp.eq.s32.totalorder %s40, 0
      %p260 = por %p258, %p259
      %p261 = scmp.ne.s32.totalorder %s249, %s250
      %p262 = scmp.eq.s32.totalorder %s41, 1
      %p263 = por %p261, %p262
      %p265 = scmp.ne.s32.totalorder %s250, %s264
      %p266 = scmp.eq.s32.totalorder %s41, 0
      %p267 = por %p265, %p266
      %s269 = sadd.s32 %s268, 1
      %p272 = scmp.eq.s32.totalorder %s35, 1
      %p273 = scmp.ne.s32.totalorder %s268, %s270
      %p274 = scmp.eq.s32.totalorder %s35, 0
      %p275 = por %p273, %p274
      %p276 = scmp.ne.s32.totalorder %s268, %s270
      %p277 = scmp.eq.s32.totalorder %s40, 1
      %p278 = por %p276, %p277
      %p279 = scmp.ne.s32.totalorder %s270, %s271
      %p280 = scmp.eq.s32.totalorder %s40, 0
      %p281 = por %p279, %p280
      %p282 = scmp.ne.s32.totalorder %s270, %s271
      %p283 = scmp.eq.s32.totalorder %s41, 1
      %p284 = por %p282, %p283
      %p286 = scmp.ne.s32.totalorder %s271, %s285
      %p287 = scmp.eq.s32.totalorder %s41, 0
      %p288 = por %p286, %p287
      %s290 = sadd.s32 %s289, 1
      %p293 = scmp.eq.s32.totalorder %s35, 1
      %p294 = scmp.ne.s32.totalorder %s289, %s291
      %p295 = scmp.eq.s32.totalorder %s35, 0
      %p296 = por %p294, %p295
      %p297 = scmp.ne.s32.totalorder %s289, %s291
      %p298 = scmp.eq.s32.totalorder %s40, 1
      %p299 = por %p297, %p298
      %p300 = scmp.ne.s32.totalorder %s291, %s292
      %p301 = scmp.eq.s32.totalorder %s40, 0
      %p302 = por %p300, %p301
      %p303 = scmp.ne.s32.totalorder %s291, %s292
      %p304 = scmp.eq.s32.totalorder %s41, 1
      %p305 = por %p303, %p304
      %p307 = scmp.ne.s32.totalorder %s292, %s306
      %p308 = scmp.eq.s32.totalorder %s41, 0
      %p309 = por %p307, %p308
      %s311 = sadd.s32 %s310, 1
      %p314 = scmp.eq.s32.totalorder %s35, 1
      %p315 = scmp.ne.s32.totalorder %s310, %s312
      %p316 = scmp.eq.s32.totalorder %s35, 0
      %p317 = por %p315, %p316
      %p318 = scmp.ne.s32.totalorder %s310, %s312
      %p319 = scmp.eq.s32.totalorder %s40, 1
      %p320 = por %p318, %p319
      %p321 = scmp.ne.s32.totalorder %s312, %s313
      %p322 = scmp.eq.s32.totalorder %s40, 0
      %p323 = por %p321, %p322
      %p324 = scmp.ne.s32.totalorder %s312, %s313
      %p325 = scmp.eq.s32.totalorder %s41, 1
      %p326 = por %p324, %p325
      %p328 = scmp.ne.s32.totalorder %s313, %s327
      %p329 = scmp.eq.s32.totalorder %s41, 0
      %p330 = por %p328, %p329
      %s332 = sadd.s32 %s331, 1
      %p335 = scmp.eq.s32.totalorder %s35, 1
      %p336 = scmp.ne.s32.totalorder %s331, %s333
      %p337 = scmp.eq.s32.totalorder %s35, 0
      %p338 = por %p336, %p337
      %p339 = scmp.ne.s32.totalorder %s331, %s333
      %p340 = scmp.eq.s32.totalorder %s40, 1
      %p341 = por %p339, %p340
      %p342 = scmp.ne.s32.totalorder %s333, %s334
      %p343 = scmp.eq.s32.totalorder %s40, 0
      %p344 = por %p342, %p343
      %p345 = scmp.ne.s32.totalorder %s333, %s334
      %p346 = scmp.eq.s32.totalorder %s41, 1
      %p347 = por %p345, %p346
      %p349 = scmp.ne.s32.totalorder %s334, %s348
      %p350 = scmp.eq.s32.totalorder %s41, 0
      %p351 = por %p349, %p350
      %s353 = sadd.s32 %s352, 1
      %p356 = scmp.eq.s32.totalorder %s35, 1
      %p357 = scmp.ne.s32.totalorder %s352, %s354
      %p358 = scmp.eq.s32.totalorder %s35, 0
      %p359 = por %p357, %p358
      %p360 = scmp.ne.s32.totalorder %s352, %s354
      %p361 = scmp.eq.s32.totalorder %s40, 1
      %p362 = por %p360, %p361
      %p363 = scmp.ne.s32.totalorder %s354, %s355
      %p364 = scmp.eq.s32.totalorder %s40, 0
      %p365 = por %p363, %p364
      %p366 = scmp.ne.s32.totalorder %s354, %s355
      %p367 = scmp.eq.s32.totalorder %s41, 1
      %p368 = por %p366, %p367
      %p370 = scmp.ne.s32.totalorder %s355, %s369
      %p371 = scmp.eq.s32.totalorder %s41, 0
      %p372 = por %p370, %p371
      %s373 = ssub.s32 %s35, %s42
      %p374 = scmp.eq.s32.totalorder %s373, 0
      %s376 = sadd.s32 %s375, 1
      %s377 = scalar_select %p374, %s375, %s376
      %p380 = pneg %p374
      %p381 = scmp.eq.s32.totalorder %s35, 1
      %p382 = por %p380, %p381
      %p383 = scmp.ne.s32.totalorder %s375, %s378
      %p384 = scmp.eq.s32.totalorder %s35, 0
      %p385 = por %p383, %p384
      %p386 = scmp.ne.s32.totalorder %s375, %s378
      %p387 = scmp.eq.s32.totalorder %s40, 1
      %p388 = por %p386, %p387
      %p389 = scmp.ne.s32.totalorder %s378, %s379
      %p390 = scmp.eq.s32.totalorder %s40, 0
      %p391 = por %p389, %p390
      %p392 = scmp.ne.s32.totalorder %s378, %s379
      %p393 = scmp.eq.s32.totalorder %s41, 1
      %p394 = por %p392, %p393
      %p396 = scmp.ne.s32.totalorder %s379, %s395
      %p397 = scmp.eq.s32.totalorder %s41, 0
      %p398 = por %p396, %p397
      %s399 = ssub.s32 %s35, %s42
      %p400 = scmp.eq.s32.totalorder %s399, 0
      %s402 = sadd.s32 %s401, 1
      %s403 = scalar_select %p400, %s401, %s402
      %p406 = pneg %p400
      %p407 = scmp.eq.s32.totalorder %s35, 1
      %p408 = por %p406, %p407
      %p409 = scmp.ne.s32.totalorder %s401, %s404
      %p410 = scmp.eq.s32.totalorder %s35, 0
      %p411 = por %p409, %p410
      %p412 = scmp.ne.s32.totalorder %s401, %s404
      %p413 = scmp.eq.s32.totalorder %s40, 1
      %p414 = por %p412, %p413
      %p415 = scmp.ne.s32.totalorder %s404, %s405
      %p416 = scmp.eq.s32.totalorder %s40, 0
      %p417 = por %p415, %p416
      %p418 = scmp.ne.s32.totalorder %s404, %s405
      %p419 = scmp.eq.s32.totalorder %s41, 1
      %p420 = por %p418, %p419
      %p422 = scmp.ne.s32.totalorder %s405, %s421
      %p423 = scmp.eq.s32.totalorder %s41, 0
      %p424 = por %p422, %p423
      %p425 = scmp.le.s32.totalorder 1, %s35
      %p426 = scmp.lt.s32.totalorder %s35, 3
      %p427 = pnand %p425, %p426
      %p428 = pneg %p427
      // Predicated region
      $region9: #{tpu_custom_call.1} parent=5 // pred_check
        _
      $region10: #{tpu_custom_call.1} parent=5 // pred_check_branch
        %430 = sbr.rel (%p427) target = $region12
      $region11: #{tpu_custom_call.1} parent=5 // pred_region
        %s431 = ssub.s32 %s35, 1
        // Predicated region
        $region13: #{tpu_custom_call.1} parent=11 // pred_check
          %p432 = pneg %p134
        $region14: #{tpu_custom_call.1} parent=11 // pred_check_branch
          %434 = sbr.rel (%p432) target = $region16
        $region15: #{tpu_custom_call.1} parent=11 // pred_region
          %s436 = ssub.s32 256, 256
          %437 = vsyncadd [#allocation7], %s436
          %s438 = sshll.u32 [#allocation6], 4
          %s439 = int_to_ptr.vmem [resolvable:$true] %s438
          %444 = dma.hbm_to_vmem [thread:$0]  %s3, 256, %s439, [#allocation7], 64, 64, 4
        $region16: #{tpu_custom_call.1} parent=11 // pred_fallthru
          _
        // Predicated region
        $region17: #{tpu_custom_call.1} parent=11 // pred_check
          %p445 = pneg %p155
        $region18: #{tpu_custom_call.1} parent=11 // pred_check_branch
          %447 = sbr.rel (%p445) target = $region20
        $region19: #{tpu_custom_call.1} parent=11 // pred_region
          _
        $region20: #{tpu_custom_call.1} parent=11 // pred_fallthru
          _
        // Predicated region
        $region21: #{tpu_custom_call.1} parent=11 // pred_check
          %p448 = pneg %p176
        $region22: #{tpu_custom_call.1} parent=11 // pred_check_branch
          %450 = sbr.rel (%p448) target = $region24
        $region23: #{tpu_custom_call.1} parent=11 // pred_region
          %s452 = ssub.s32 256, 256
          %453 = vsyncadd [#allocation7], %s452
          %s454 = sshll.u32 [#allocation8], 4
          %s455 = int_to_ptr.vmem [resolvable:$true] %s454
          %460 = dma.hbm_to_vmem [thread:$0]  %s5, 256, %s455, [#allocation7], 64, 64, 4
        $region24: #{tpu_custom_call.1} parent=11 // pred_fallthru
          _
        // Predicated region
        $region25: #{tpu_custom_call.1} parent=11 // pred_check
          %p461 = pneg %p197
        $region26: #{tpu_custom_call.1} parent=11 // pred_check_branch
          %463 = sbr.rel (%p461) target = $region28
        $region27: #{tpu_custom_call.1} parent=11 // pred_region
          _
        $region28: #{tpu_custom_call.1} parent=11 // pred_fallthru
          _
        // Predicated region
        $region29: #{tpu_custom_call.1} parent=11 // pred_check
          %p464 = pneg %p218
        $region30: #{tpu_custom_call.1} parent=11 // pred_check_branch
          %466 = sbr.rel (%p464) target = $region32
        $region31: #{tpu_custom_call.1} parent=11 // pred_region
          %s468 = ssub.s32 16, 16
          %469 = vsyncadd [#allocation10], %s468
          %s471 = sshll.u32 [#allocation9], 4
          %s472 = int_to_ptr.vmem [resolvable:$true] %s471
          %474 = dma.hbm_to_vmem [thread:$0]  %s7, 16, %s472, [#allocation10]
        $region32: #{tpu_custom_call.1} parent=11 // pred_fallthru
          _
        // Predicated region
        $region33: #{tpu_custom_call.1} parent=11 // pred_check
          %p475 = pneg %p239
        $region34: #{tpu_custom_call.1} parent=11 // pred_check_branch
          %477 = sbr.rel (%p475) target = $region36
        $region35: #{tpu_custom_call.1} parent=11 // pred_region
          %s479 = ssub.s32 16, 16
          %480 = vsyncadd [#allocation10], %s479
          %s482 = sshll.u32 [#allocation11], 4
          %s483 = int_to_ptr.vmem [resolvable:$true] %s482
          %485 = dma.hbm_to_vmem [thread:$0]  %s8, 16, %s483, [#allocation10]
        $region36: #{tpu_custom_call.1} parent=11 // pred_fallthru
          _
        // Predicated region
        $region37: #{tpu_custom_call.1} parent=11 // pred_check
          %p486 = pneg %p260
        $region38: #{tpu_custom_call.1} parent=11 // pred_check_branch
          %488 = sbr.rel (%p486) target = $region40
        $region39: #{tpu_custom_call.1} parent=11 // pred_region
          %s490 = ssub.s32 16, 16
          %491 = vsyncadd [#allocation13], %s490
          %s493 = sshll.u32 [#allocation12], 4
          %s494 = int_to_ptr.vmem [resolvable:$true] %s493
          %496 = dma.hbm_to_vmem [thread:$0]  %s9, 16, %s494, [#allocation13]
        $region40: #{tpu_custom_call.1} parent=11 // pred_fallthru
          _
        // Predicated region
        $region41: #{tpu_custom_call.1} parent=11 // pred_check
          %p497 = pneg %p281
        $region42: #{tpu_custom_call.1} parent=11 // pred_check_branch
          %499 = sbr.rel (%p497) target = $region44
        $region43: #{tpu_custom_call.1} parent=11 // pred_region
          _
        $region44: #{tpu_custom_call.1} parent=11 // pred_fallthru
          _
        // Predicated region
        $region45: #{tpu_custom_call.1} parent=11 // pred_check
          %p500 = pneg %p302
        $region46: #{tpu_custom_call.1} parent=11 // pred_check_branch
          %502 = sbr.rel (%p500) target = $region48
        $region47: #{tpu_custom_call.1} parent=11 // pred_region
          _
        $region48: #{tpu_custom_call.1} parent=11 // pred_fallthru
          _
        // Predicated region
        $region49: #{tpu_custom_call.1} parent=11 // pred_check
          %p503 = pneg %p323
        $region50: #{tpu_custom_call.1} parent=11 // pred_check_branch
          %505 = sbr.rel (%p503) target = $region52
        $region51: #{tpu_custom_call.1} parent=11 // pred_region
          _
        $region52: #{tpu_custom_call.1} parent=11 // pred_fallthru
          _
        // Predicated region
        $region53: #{tpu_custom_call.1} parent=11 // pred_check
          %p506 = pneg %p344
        $region54: #{tpu_custom_call.1} parent=11 // pred_check_branch
          %508 = sbr.rel (%p506) target = $region56
        $region55: #{tpu_custom_call.1} parent=11 // pred_region
          _
        $region56: #{tpu_custom_call.1} parent=11 // pred_fallthru
          _
        // Predicated region
        $region57: #{tpu_custom_call.1} parent=11 // pred_check
          %p509 = pneg %p365
        $region58: #{tpu_custom_call.1} parent=11 // pred_check_branch
          %511 = sbr.rel (%p509) target = $region60
        $region59: #{tpu_custom_call.1} parent=11 // pred_region
          _
        $region60: #{tpu_custom_call.1} parent=11 // pred_fallthru
          _
      $region12: #{tpu_custom_call.1} parent=5 // pred_fallthru
        _
      %p512 = scmp.lt.s32.totalorder %s35, 2
      // Predicated region
      $region61: #{tpu_custom_call.1} parent=5 // pred_check
        %p513 = pneg %p512
      $region62: #{tpu_custom_call.1} parent=5 // pred_check_branch
        %515 = sbr.rel (%p513) target = $region64
      $region63: #{tpu_custom_call.1} parent=5 // pred_region
        // Predicated region
        $region65: #{tpu_custom_call.1} parent=63 // pred_check
          %p516 = pneg %p55
        $region66: #{tpu_custom_call.1} parent=63 // pred_check_branch
          %518 = sbr.rel (%p516) target = $region68
        $region67: #{tpu_custom_call.1} parent=63 // pred_region
          %s519 = smul.u32 2, %s35
          %p520 = scmp.lt.s32.totalorder %s519, 3
          %s521 = scalar_select %p520, %s519, 3
          %s522 = smul.addr %s521, 8
          %s523 = scalar_lea.vmem %s0, %s522
          %s524 = smul.u32 2, %s35
        $region68: #{tpu_custom_call.1} parent=63 // pred_fallthru
          _
        // Predicated region
        $region69: #{tpu_custom_call.1} parent=63 // pred_check
          %p525 = pneg %p81
        $region70: #{tpu_custom_call.1} parent=63 // pred_check_branch
          %527 = sbr.rel (%p525) target = $region72
        $region71: #{tpu_custom_call.1} parent=63 // pred_region
          %s528 = sand.u32 %s71, 1
          %s529 = scalar_lea.sflag [#allocation4], %s528
          %s530 = sand.u32 %s71, 1
          %s531 = smul.addr %s530, 4
          %s532 = scalar_lea.vmem [#allocation3], %s531
          %s533 = smul.u32 2, %s35
          %s535 = ssub.s32 64, 64
          %536 = vsyncadd %s529, %s535
          %s537 = smul.addr %s533, 32
          %s538 = scalar_lea.hbm %s1, %s537
          %s539 = sshll.u32 %s532, 4
          %s540 = int_to_ptr.vmem [resolvable:$true] %s539
          %545 = dma.hbm_to_vmem [thread:$0]  %s538, 64, %s540, %s529, 32, 32, 2
        $region72: #{tpu_custom_call.1} parent=63 // pred_fallthru
          _
        // Predicated region
        $region73: #{tpu_custom_call.1} parent=63 // pred_check
          %p546 = pneg %p107
        $region74: #{tpu_custom_call.1} parent=63 // pred_check_branch
          %548 = sbr.rel (%p546) target = $region76
        $region75: #{tpu_custom_call.1} parent=63 // pred_region
          %s549 = smul.u32 2, %s35
          %p550 = scmp.lt.s32.totalorder %s549, 3
          %s551 = scalar_select %p550, %s549, 3
          %s552 = smul.addr %s551, 4
          %s553 = scalar_lea.vmem %s2, %s552
          %s554 = smul.u32 2, %s35
        $region76: #{tpu_custom_call.1} parent=63 // pred_fallthru
          _
      $region64: #{tpu_custom_call.1} parent=5 // pred_fallthru
        _
      %p555 = scmp.le.s32.totalorder 1, %s35
      %p556 = scmp.lt.s32.totalorder %s35, 3
      %p557 = pnand %p555, %p556
      %p558 = pneg %p557
      // Predicated region
      $region77: #{tpu_custom_call.1} parent=5 // pred_check
        _
      $region78: #{tpu_custom_call.1} parent=5 // pred_check_branch
        %560 = sbr.rel (%p557) target = $region80
      $region79: #{tpu_custom_call.1} parent=5 // pred_region
        %s561 = ssub.s32 %s35, 1
        %s562 = sand.u32 %s74, 1
        %s563 = scalar_lea.sflag [#allocation4], %s562
        %s564 = sand.u32 %s74, 1
        %s565 = smul.addr %s564, 4
        %s566 = scalar_lea.vmem [#allocation3], %s565
        // Predicated region
        $region81: #{tpu_custom_call.1} parent=79 // pred_check
          %p567 = pneg %p87
        $region82: #{tpu_custom_call.1} parent=79 // pred_check_branch
          %569 = sbr.rel (%p567) target = $region84
        $region83: #{tpu_custom_call.1} parent=79 // pred_region
          %570 = dma.done %s563, 64
        $region84: #{tpu_custom_call.1} parent=79 // pred_fallthru
          _
        // Predicated region
        $region85: #{tpu_custom_call.1} parent=79 // pred_check
          %p571 = pneg %p134
        $region86: #{tpu_custom_call.1} parent=79 // pred_check_branch
          %573 = sbr.rel (%p571) target = $region88
        $region87: #{tpu_custom_call.1} parent=79 // pred_region
          %574 = dma.done [#allocation7], 256
        $region88: #{tpu_custom_call.1} parent=79 // pred_fallthru
          _
        // Predicated region
        $region89: #{tpu_custom_call.1} parent=79 // pred_check
          %p575 = pneg %p176
        $region90: #{tpu_custom_call.1} parent=79 // pred_check_branch
          %577 = sbr.rel (%p575) target = $region92
        $region91: #{tpu_custom_call.1} parent=79 // pred_region
          %578 = dma.done [#allocation7], 256
        $region92: #{tpu_custom_call.1} parent=79 // pred_fallthru
          _
        // Predicated region
        $region93: #{tpu_custom_call.1} parent=79 // pred_check
          %p579 = pneg %p218
        $region94: #{tpu_custom_call.1} parent=79 // pred_check_branch
          %581 = sbr.rel (%p579) target = $region96
        $region95: #{tpu_custom_call.1} parent=79 // pred_region
          %582 = dma.done [#allocation10], 16
        $region96: #{tpu_custom_call.1} parent=79 // pred_fallthru
          _
        // Predicated region
        $region97: #{tpu_custom_call.1} parent=79 // pred_check
          %p583 = pneg %p239
        $region98: #{tpu_custom_call.1} parent=79 // pred_check_branch
          %585 = sbr.rel (%p583) target = $region100
        $region99: #{tpu_custom_call.1} parent=79 // pred_region
          %586 = dma.done [#allocation10], 16
        $region100: #{tpu_custom_call.1} parent=79 // pred_fallthru
          _
        // Predicated region
        $region101: #{tpu_custom_call.1} parent=79 // pred_check
          %p587 = pneg %p260
        $region102: #{tpu_custom_call.1} parent=79 // pred_check_branch
          %589 = sbr.rel (%p587) target = $region104
        $region103: #{tpu_custom_call.1} parent=79 // pred_region
          %590 = dma.done [#allocation13], 16
        $region104: #{tpu_custom_call.1} parent=79 // pred_fallthru
          _
        %s591 = smul.u32 2, %s40
        %p592 = scmp.lt.s32.totalorder %s591, 3
        %s593 = scalar_select %p592, %s591, 3
        %s594 = smul.addr %s593, 8
        %s595 = scalar_lea.vmem %s0, %s594
        %p596 = pneg %p61
        %p597 = pneg %p58
        %s598 = sand.u32 %s74, 1
        %s599 = scalar_lea.sflag [#allocation4], %s598
        %s600 = sand.u32 %s74, 1
        %s601 = smul.addr %s600, 4
        %s602 = scalar_lea.vmem [#allocation3], %s601
        %p603 = pneg %p87
        %p604 = pneg %p84
        %s605 = smul.u32 2, %s40
        %p606 = scmp.lt.s32.totalorder %s605, 3
        %s607 = scalar_select %p606, %s605, 3
        %s608 = smul.addr %s607, 4
        %s609 = scalar_lea.vmem %s2, %s608
        %p610 = pneg %p113
        %p611 = pneg %p110
        %p612 = pneg %p134
        %p613 = pneg %p131
        %p614 = pneg %p155
        %p615 = pneg %p152
        %p616 = pneg %p176
        %p617 = pneg %p173
        %p618 = pneg %p197
        %p619 = pneg %p194
        %p620 = pneg %p218
        %p621 = pneg %p215
        %p622 = pneg %p239
        %p623 = pneg %p236
        %p624 = pneg %p260
        %p625 = pneg %p257
        %p626 = pneg %p281
        %p627 = pneg %p278
        %p628 = pneg %p302
        %p629 = pneg %p299
        %p630 = pneg %p323
        %p631 = pneg %p320
        %p632 = pneg %p344
        %p633 = pneg %p341
        %p634 = pneg %p365
        %p635 = pneg %p362
        %p636 = pneg %p391
        %p637 = pneg %p388
        %s638 = sand.u32 %s378, 1
        %s639 = scalar_lea.sflag [#allocation5], %s638
        %s640 = sand.u32 %s378, 1
        %s641 = smul.addr %s640, 16
        %s642 = scalar_lea.vmem [#allocation14], %s641
        %p643 = pneg %p417
        %p644 = pneg %p414
        %s645 = sand.u32 %s404, 1
        %s646 = scalar_lea.sflag [#allocation16], %s645
        %s647 = sand.u32 %s404, 1
        %s648 = smul.addr %s647, 2
        %s649 = scalar_lea.vmem [#allocation15], %s648
        %s650 = smul.u32 2, %s40
        %p651 = scmp.lt.s32.totalorder %s650, 3
        %s652 = scalar_select %p651, %s650, 3
        %s653 = smul.addr %s652, 8
        %s654 = scalar_lea.vmem %s0, %s653
        %s655 = smul.u32 2, %s40
        %s656 = smul.u32 2, %s40
        %s657 = smul.u32 2, %s40
        %p658 = scmp.lt.s32.totalorder %s657, 3
        %s659 = scalar_select %p658, %s657, 3
        %s660 = smul.addr %s659, 4
        %s661 = scalar_lea.vmem %s2, %s660
        %s662 = smul.u32 2, %s40
        %s663 = smul.u32 2, %s40
        %s664 = smul.u32 2, %s40
        %v666 = vld [vmem:[%s654] sm:$0xff]
        %v667 = vld [vmem:[%s654 + $0x8] sm:$0xff]
        %v668 = vpack.c.bf16 %v667, %v666
        %v669 = vld [vmem:[#allocation6] sm:$0xf]
        %v670 = vld [vmem:[#allocation6 + $0x4] sm:$0xf]
        %v671 = vld [vmem:[#allocation6 + $0x8] sm:$0xf]
        %v672 = vld [vmem:[#allocation6 + $0xc] sm:$0xf]
        %v673 = vld [vmem:[%s4] sm:$0x1]
        %v675 = vlaneseq
        %v676 = vshrl.u32 %v675, 7
        %v677 = vsub.s32 0, %v676
        %v678 = vrot.slane %v673, %v677
        %v684 = vunpack.c.l.b16 %v669
        %v685 = vunpack.c.l.b16 %v670
        %v686 = vunpack.c.l.b16 %v671
        %v687 = vunpack.c.l.b16 %v672
        %v688 = vpack.c.b16 %v685, %v684
        %v689 = vpack.c.b16 %v687, %v686
        %vm692 = vcmask 261120
        %v694 = vsel %vm692, %v668, 0
        %696 = vmatprep.subr.bf16.mxu0 0
        %697 = vmatpush1.bf16.msra.mxu0 %v688
        %698 = vmatprep.subr.bf16.mxu0 0
        %699 = vmatpush1.bf16.msra.mxu0 %v689
        %700 = vmatprep.subr.bf16.mxu0 0
        %701 = vmatpush1.bf16.msra.mxu0 0
        %702 = vmatprep.subr.bf16.mxu0 0
        %703 = vmatpush1.bf16.msra.mxu0 0
        %704 = vmatprep.subr.bf16.mxu0 0
        %705 = vmatpush1.bf16.msra.mxu0 0
        %706 = vmatprep.subr.bf16.mxu0 0
        %707 = vmatpush1.bf16.msra.mxu0 0
        %708 = vmatprep.subr.bf16.mxu0 0
        %709 = vmatpush1.bf16.msra.mxu0 0
        %710 = vmatprep.subr.bf16.mxu0 0
        %711 = vmatpush1.bf16.msra.mxu0 0
        %712 = vmatprep.subr.bf16.mxu0 0
        %713 = vmatpush1.bf16.msra.mxu0 0
        %714 = vmatprep.subr.bf16.mxu0 0
        %715 = vmatpush1.bf16.msra.mxu0 0
        %716 = vmatprep.subr.bf16.mxu0 0
        %717 = vmatpush1.bf16.msra.mxu0 0
        %718 = vmatprep.subr.bf16.mxu0 0
        %719 = vmatpush1.bf16.msra.mxu0 0
        %720 = vmatprep.subr.bf16.mxu0 0
        %721 = vmatpush1.bf16.msra.mxu0 0
        %722 = vmatprep.subr.bf16.mxu0 0
        %723 = vmatpush1.bf16.msra.mxu0 0
        %724 = vmatprep.subr.bf16.mxu0 0
        %725 = vmatpush1.bf16.msra.mxu0 0
        %726 = vmatprep.subr.bf16.mxu0 0
        %727 = vmatpush1.bf16.msra.mxu0 0
        %728 = vmatprep.mubr.bf16.mxu0 0
        %729 = vmatmul.mubr.bf16.gmra.mrb[0].mxu0 %v694
        %v730 = vpop.f32.mrb[0].mxu0
        %v731 = vadd.f32 %v678, %v730
        %v732 = vpop.f32.mrb[0].mxu0
        %v733 = vpop.f32.mrb[0].mxu0
        %v734 = vadd.f32 %v678, %v733
        %v735 = vpop.f32.mrb[0].mxu0
        %736 = vdwg.mxu0
        %v737 = vld [vmem:[%s566] sm:$0x3]
        %v738 = vunpack.c.0.s8 %v737
        %v739 = vcvt.s32.f32 %v738
        %v740 = vmul.f32 %v739, -1e+09
        %v741 = vpack.c.bf16 %v731, %v731
        %743 = vrot.lane.b32.xlu0 %v741, 96
        %v744 = vpop.permute.xlu0 %743
        %vm745 = vcmask 64512
        %v747 = vsel %vm745, %v741, 0
        %v750 = vsel %vm745, %v744, 0
        %752 = vmatprep.subr.bf16.mxu0 0
        %753 = vmatpush1.bf16.xpose.msra.mxu0 %v750
        %754 = vmatprep.subr.bf16.mxu0 0
        %755 = vmatpush1.bf16.xpose.msra.mxu0 0
        %756 = vmatprep.subr.bf16.mxu0 0
        %757 = vmatpush1.bf16.xpose.msra.mxu0 0
        %758 = vmatprep.subr.bf16.mxu0 0
        %759 = vmatpush1.bf16.xpose.msra.mxu0 0
        %760 = vmatprep.subr.bf16.mxu0 0
        %761 = vmatpush1.bf16.xpose.msra.mxu0 0
        %762 = vmatprep.subr.bf16.mxu0 0
        %763 = vmatpush1.bf16.xpose.msra.mxu0 0
        %764 = vmatprep.subr.bf16.mxu0 0
        %765 = vmatpush1.bf16.xpose.msra.mxu0 0
        %766 = vmatprep.subr.bf16.mxu0 0
        %767 = vmatpush1.bf16.xpose.msra.mxu0 0
        %768 = vmatprep.subr.bf16.mxu0 0
        %769 = vmatpush1.bf16.xpose.msra.mxu0 0
        %770 = vmatprep.subr.bf16.mxu0 0
        %771 = vmatpush1.bf16.xpose.msra.mxu0 0
        %772 = vmatprep.subr.bf16.mxu0 0
        %773 = vmatpush1.bf16.xpose.msra.mxu0 0
        %774 = vmatprep.subr.bf16.mxu0 0
        %775 = vmatpush1.bf16.xpose.msra.mxu0 0
        %776 = vmatprep.subr.bf16.mxu0 0
        %777 = vmatpush1.bf16.xpose.msra.mxu0 0
        %778 = vmatprep.subr.bf16.mxu0 0
        %779 = vmatpush1.bf16.xpose.msra.mxu0 0
        %780 = vmatprep.subr.bf16.mxu0 0
        %781 = vmatpush1.bf16.xpose.msra.mxu0 0
        %782 = vmatprep.subr.bf16.mxu0 0
        %783 = vmatpush1.bf16.xpose.msra.mxu0 0
        %784 = vmatprep.mubr.bf16.mxu0 0
        %785 = vmatmul.mubr.bf16.gmra.mrb[0].mxu0 %v747
        %v786 = vpop.f32.mrb[0].mxu0
        %v787 = vadd.f32 %v740, %v786
        %v788 = vpop.f32.mrb[0].mxu0
        %v789 = vpop.f32.mrb[0].mxu0
        %v790 = vpop.f32.mrb[0].mxu0
        %791 = vdwg.mxu0
        %v792 = vsel %vm745, %v787, -inf
        %793 = vmax.xlane.f32.xlu0 %v792
        %v794 = vpop.xlane.xlu0 %793
        %v795 = vsub.f32 %v787, %v794
        %v796 = vmul.f32 %v795, 1.442695
        %v797 = vpow.pop %v796
        %v798 = vsel %vm745, %v797, 0.0
        %799 = vadd.xlane.f32.xlu0 %v798
        %v800 = vpop.xlane.xlu0 %799
        %v801 = vrcp.pop %v800
        %v802 = vpack.c.bf16 %v797, %v797
        %803 = vrot.lane.b32.xlu0 %v741, 64
        %v804 = vpop.permute.xlu0 %803
        %v806 = vsel %vm745, %v802, 0
        %vm808 = vcmask 1043456
        %v810 = vsel %vm808, %v804, 0
        %812 = vmatprep.subr.bf16.mxu0 0
        %813 = vmatpush1.bf16.msra.mxu0 %v810
        %814 = vmatprep.subr.bf16.mxu0 0
        %815 = vmatpush1.bf16.msra.mxu0 0
        %816 = vmatprep.subr.bf16.mxu0 0
        %817 = vmatpush1.bf16.msra.mxu0 0
        %818 = vmatprep.subr.bf16.mxu0 0
        %819 = vmatpush1.bf16.msra.mxu0 0
        %820 = vmatprep.subr.bf16.mxu0 0
        %821 = vmatpush1.bf16.msra.mxu0 0
        %822 = vmatprep.subr.bf16.mxu0 0
        %823 = vmatpush1.bf16.msra.mxu0 0
        %824 = vmatprep.subr.bf16.mxu0 0
        %825 = vmatpush1.bf16.msra.mxu0 0
        %826 = vmatprep.subr.bf16.mxu0 0
        %827 = vmatpush1.bf16.msra.mxu0 0
        %828 = vmatprep.subr.bf16.mxu0 0
        %829 = vmatpush1.bf16.msra.mxu0 0
        %830 = vmatprep.subr.bf16.mxu0 0
        %831 = vmatpush1.bf16.msra.mxu0 0
        %832 = vmatprep.subr.bf16.mxu0 0
        %833 = vmatpush1.bf16.msra.mxu0 0
        %834 = vmatprep.subr.bf16.mxu0 0
        %835 = vmatpush1.bf16.msra.mxu0 0
        %836 = vmatprep.subr.bf16.mxu0 0
        %837 = vmatpush1.bf16.msra.mxu0 0
        %838 = vmatprep.subr.bf16.mxu0 0
        %839 = vmatpush1.bf16.msra.mxu0 0
        %840 = vmatprep.subr.bf16.mxu0 0
        %841 = vmatpush1.bf16.msra.mxu0 0
        %842 = vmatprep.subr.bf16.mxu0 0
        %843 = vmatpush1.bf16.msra.mxu0 0
        %844 = vmatprep.mubr.bf16.mxu0 0
        %845 = vmatmul.mubr.bf16.gmra.mrb[0].mxu0 %v806
        %v846 = vpop.f32.mrb[0].mxu0
        %v847 = vadd.f32 0.0, %v846
        %v848 = vpop.f32.mrb[0].mxu0
        %v849 = vpop.f32.mrb[0].mxu0
        %v850 = vpop.f32.mrb[0].mxu0
        %851 = vdwg.mxu0
        %v852 = vmul.f32 %v847, %v801
        %853 = vst.msk [vmem:[#allocation2] sm:$0xff] %vm745, %v852
        %v854 = vpack.c.bf16 %v801, %v801
        %855 = vrot.lane.b32.xlu0 %v741, 120
        %v856 = vpop.permute.xlu0 %855
        %857 = vrot.lane.b32.xlu0 %v741, 88
        %v858 = vpop.permute.xlu0 %857
        %v860 = vsel %vm745, %v856, 0
        %v863 = vsel %vm745, %v858, 0
        %865 = vmatprep.subr.bf16.mxu0 0
        %866 = vmatpush1.bf16.xpose.msra.mxu0 %v863
        %867 = vmatprep.subr.bf16.mxu0 0
        %868 = vmatpush1.bf16.xpose.msra.mxu0 0
        %869 = vmatprep.subr.bf16.mxu0 0
        %870 = vmatpush1.bf16.xpose.msra.mxu0 0
        %871 = vmatprep.subr.bf16.mxu0 0
        %872 = vmatpush1.bf16.xpose.msra.mxu0 0
        %873 = vmatprep.subr.bf16.mxu0 0
        %874 = vmatpush1.bf16.xpose.msra.mxu0 0
        %875 = vmatprep.subr.bf16.mxu0 0
        %876 = vmatpush1.bf16.xpose.msra.mxu0 0
        %877 = vmatprep.subr.bf16.mxu0 0
        %878 = vmatpush1.bf16.xpose.msra.mxu0 0
        %879 = vmatprep.subr.bf16.mxu0 0
        %880 = vmatpush1.bf16.xpose.msra.mxu0 0
        %881 = vmatprep.subr.bf16.mxu0 0
        %882 = vmatpush1.bf16.xpose.msra.mxu0 0
        %883 = vmatprep.subr.bf16.mxu0 0
        %884 = vmatpush1.bf16.xpose.msra.mxu0 0
        %885 = vmatprep.subr.bf16.mxu0 0
        %886 = vmatpush1.bf16.xpose.msra.mxu0 0
        %887 = vmatprep.subr.bf16.mxu0 0
        %888 = vmatpush1.bf16.xpose.msra.mxu0 0
        %889 = vmatprep.subr.bf16.mxu0 0
        %890 = vmatpush1.bf16.xpose.msra.mxu0 0
        %891 = vmatprep.subr.bf16.mxu0 0
        %892 = vmatpush1.bf16.xpose.msra.mxu0 0
        %893 = vmatprep.subr.bf16.mxu0 0
        %894 = vmatpush1.bf16.xpose.msra.mxu0 0
        %895 = vmatprep.subr.bf16.mxu0 0
        %896 = vmatpush1.bf16.xpose.msra.mxu0 0
        %897 = vmatprep.mubr.bf16.mxu0 0
        %898 = vmatmul.mubr.bf16.gmra.mrb[0].mxu0 %v860
        %v899 = vpop.f32.mrb[0].mxu0
        %v900 = vadd.f32 %v740, %v899
        %v901 = vpop.f32.mrb[0].mxu0
        %v902 = vpop.f32.mrb[0].mxu0
        %v903 = vpop.f32.mrb[0].mxu0
        %904 = vdwg.mxu0
        %v905 = vsel %vm745, %v900, -inf
        %906 = vmax.xlane.f32.xlu0 %v905
        %v907 = vpop.xlane.xlu0 %906
        %v908 = vsub.f32 %v900, %v907
        %v909 = vmul.f32 %v908, 1.442695
        %v910 = vpow.pop %v909
        %v911 = vsel %vm745, %v910, 0.0
        %912 = vadd.xlane.f32.xlu0 %v911
        %v913 = vpop.xlane.xlu0 %912
        %v914 = vrcp.pop %v913
        %v915 = vpack.c.bf16 %v910, %v910
        %916 = vrot.lane.b32.xlu0 %v741, 56
        %v917 = vpop.permute.xlu0 %916
        %v919 = vsel %vm745, %v915, 0
        %v922 = vsel %vm808, %v917, 0
        %924 = vmatprep.subr.bf16.mxu0 0
        %925 = vmatpush1.bf16.msra.mxu0 %v922
        %926 = vmatprep.subr.bf16.mxu0 0
        %927 = vmatpush1.bf16.msra.mxu0 0
        %928 = vmatprep.subr.bf16.mxu0 0
        %929 = vmatpush1.bf16.msra.mxu0 0
        %930 = vmatprep.subr.bf16.mxu0 0
        %931 = vmatpush1.bf16.msra.mxu0 0
        %932 = vmatprep.subr.bf16.mxu0 0
        %933 = vmatpush1.bf16.msra.mxu0 0
        %934 = vmatprep.subr.bf16.mxu0 0
        %935 = vmatpush1.bf16.msra.mxu0 0
        %936 = vmatprep.subr.bf16.mxu0 0
        %937 = vmatpush1.bf16.msra.mxu0 0
        %938 = vmatprep.subr.bf16.mxu0 0
        %939 = vmatpush1.bf16.msra.mxu0 0
        %940 = vmatprep.subr.bf16.mxu0 0
        %941 = vmatpush1.bf16.msra.mxu0 0
        %942 = vmatprep.subr.bf16.mxu0 0
        %943 = vmatpush1.bf16.msra.mxu0 0
        %944 = vmatprep.subr.bf16.mxu0 0
        %945 = vmatpush1.bf16.msra.mxu0 0
        %946 = vmatprep.subr.bf16.mxu0 0
        %947 = vmatpush1.bf16.msra.mxu0 0
        %948 = vmatprep.subr.bf16.mxu0 0
        %949 = vmatpush1.bf16.msra.mxu0 0
        %950 = vmatprep.subr.bf16.mxu0 0
        %951 = vmatpush1.bf16.msra.mxu0 0
        %952 = vmatprep.subr.bf16.mxu0 0
        %953 = vmatpush1.bf16.msra.mxu0 0
        %954 = vmatprep.subr.bf16.mxu0 0
        %955 = vmatpush1.bf16.msra.mxu0 0
        %956 = vmatprep.mubr.bf16.mxu0 0
        %957 = vmatmul.mubr.bf16.gmra.mrb[0].mxu0 %v919
        %v958 = vpop.f32.mrb[0].mxu0
        %v959 = vadd.f32 0.0, %v958
        %v960 = vpop.f32.mrb[0].mxu0
        %v961 = vpop.f32.mrb[0].mxu0
        %v962 = vpop.f32.mrb[0].mxu0
        %963 = vdwg.mxu0
        %v964 = vmul.f32 %v959, %v914
        %966 = vrot.lane.b32.xlu0 %v964, 8
        %v967 = vpop.permute.xlu0 %966
        %vm969 = vcmask 130112
        %970 = vst.msk [vmem:[#allocation2] sm:$0xff] %vm969, %v967
        %v971 = vpack.c.bf16 %v914, %v914
        %972 = vxpose.xlu0.c.b16.start [1/8] %v971, 128
        %973 = vxpose.xlu0.c.b16.cont [2/8] 0, 128
        %974 = vxpose.xlu0.c.b16.cont [3/8] 0, 128
        %975 = vxpose.xlu0.c.b16.cont [4/8] 0, 128
        %976 = vxpose.xlu0.c.b16.cont [5/8] 0, 128
        %977 = vxpose.xlu0.c.b16.cont [6/8] 0, 128
        %978 = vxpose.xlu0.c.b16.cont [7/8] 0, 128
        %979 = vxpose.xlu0.c.b16.end [8/8] 0, 128
        %v980 = vpop.trf.xlu0
        %v981 = vpop.trf.xlu0
        %v982 = vpop.trf.xlu0
        %v983 = vpop.trf.xlu0
        %v984 = vpop.trf.xlu0
        %v985 = vpop.trf.xlu0
        %v986 = vpop.trf.xlu0
        %v987 = vpop.trf.xlu0
        %v989 = vsel %vm745, %v980, 0
        %v991 = vsel %vm808, %v915, 0
        %993 = vmatprep.subr.bf16.mxu0 0
        %994 = vmatpush1.bf16.msra.mxu0 %v991
        %995 = vmatprep.subr.bf16.mxu0 0
        %996 = vmatpush1.bf16.msra.mxu0 0
        %997 = vmatprep.subr.bf16.mxu0 0
        %998 = vmatpush1.bf16.msra.mxu0 0
        %999 = vmatprep.subr.bf16.mxu0 0
        %1000 = vmatpush1.bf16.msra.mxu0 0
        %1001 = vmatprep.subr.bf16.mxu0 0
        %1002 = vmatpush1.bf16.msra.mxu0 0
        %1003 = vmatprep.subr.bf16.mxu0 0
        %1004 = vmatpush1.bf16.msra.mxu0 0
        %1005 = vmatprep.subr.bf16.mxu0 0
        %1006 = vmatpush1.bf16.msra.mxu0 0
        %1007 = vmatprep.subr.bf16.mxu0 0
        %1008 = vmatpush1.bf16.msra.mxu0 0
        %1009 = vmatprep.subr.bf16.mxu0 0
        %1010 = vmatpush1.bf16.msra.mxu0 0
        %1011 = vmatprep.subr.bf16.mxu0 0
        %1012 = vmatpush1.bf16.msra.mxu0 0
        %1013 = vmatprep.subr.bf16.mxu0 0
        %1014 = vmatpush1.bf16.msra.mxu0 0
        %1015 = vmatprep.subr.bf16.mxu0 0
        %1016 = vmatpush1.bf16.msra.mxu0 0
        %1017 = vmatprep.subr.bf16.mxu0 0
        %1018 = vmatpush1.bf16.msra.mxu0 0
        %1019 = vmatprep.subr.bf16.mxu0 0
        %1020 = vmatpush1.bf16.msra.mxu0 0
        %1021 = vmatprep.subr.bf16.mxu0 0
        %1022 = vmatpush1.bf16.msra.mxu0 0
        %1023 = vmatprep.subr.bf16.mxu0 0
        %1024 = vmatpush1.bf16.msra.mxu0 0
        %1025 = vmatprep.mubr.bf16.mxu0 0
        %1026 = vmatmul.mubr.bf16.gmra.mrb[0].mxu0 %v989
        %v1027 = vpop.f32.mrb[0].mxu0
        %v1028 = vadd.f32 0.0, %v1027
        %v1029 = vpop.f32.mrb[0].mxu0
        %v1030 = vpop.f32.mrb[0].mxu0
        %v1031 = vpop.f32.mrb[0].mxu0
        %1032 = vdwg.mxu0
        %1033 = vxpose.xlu0.c.b16.start [1/8] %v854, 128
        %1034 = vxpose.xlu0.c.b16.cont [2/8] 0, 128
        %1035 = vxpose.xlu0.c.b16.cont [3/8] 0, 128
        %1036 = vxpose.xlu0.c.b16.cont [4/8] 0, 128
        %1037 = vxpose.xlu0.c.b16.cont [5/8] 0, 128
        %1038 = vxpose.xlu0.c.b16.cont [6/8] 0, 128
        %1039 = vxpose.xlu0.c.b16.cont [7/8] 0, 128
        %1040 = vxpose.xlu0.c.b16.end [8/8] 0, 128
        %v1041 = vpop.trf.xlu0
        %v1042 = vpop.trf.xlu0
        %v1043 = vpop.trf.xlu0
        %v1044 = vpop.trf.xlu0
        %v1045 = vpop.trf.xlu0
        %v1046 = vpop.trf.xlu0
        %v1047 = vpop.trf.xlu0
        %v1048 = vpop.trf.xlu0
        %v1050 = vsel %vm745, %v1041, 0
        %v1052 = vsel %vm808, %v802, 0
        %1054 = vmatprep.subr.bf16.mxu0 0
        %1055 = vmatpush1.bf16.msra.mxu0 %v1052
        %1056 = vmatprep.subr.bf16.mxu0 0
        %1057 = vmatpush1.bf16.msra.mxu0 0
        %1058 = vmatprep.subr.bf16.mxu0 0
        %1059 = vmatpush1.bf16.msra.mxu0 0
        %1060 = vmatprep.subr.bf16.mxu0 0
        %1061 = vmatpush1.bf16.msra.mxu0 0
        %1062 = vmatprep.subr.bf16.mxu0 0
        %1063 = vmatpush1.bf16.msra.mxu0 0
        %1064 = vmatprep.subr.bf16.mxu0 0
        %1065 = vmatpush1.bf16.msra.mxu0 0
        %1066 = vmatprep.subr.bf16.mxu0 0
        %1067 = vmatpush1.bf16.msra.mxu0 0
        %1068 = vmatprep.subr.bf16.mxu0 0
        %1069 = vmatpush1.bf16.msra.mxu0 0
        %1070 = vmatprep.subr.bf16.mxu0 0
        %1071 = vmatpush1.bf16.msra.mxu0 0
        %1072 = vmatprep.subr.bf16.mxu0 0
        %1073 = vmatpush1.bf16.msra.mxu0 0
        %1074 = vmatprep.subr.bf16.mxu0 0
        %1075 = vmatpush1.bf16.msra.mxu0 0
        %1076 = vmatprep.subr.bf16.mxu0 0
        %1077 = vmatpush1.bf16.msra.mxu0 0
        %1078 = vmatprep.subr.bf16.mxu0 0
        %1079 = vmatpush1.bf16.msra.mxu0 0
        %1080 = vmatprep.subr.bf16.mxu0 0
        %1081 = vmatpush1.bf16.msra.mxu0 0
        %1082 = vmatprep.subr.bf16.mxu0 0
        %1083 = vmatpush1.bf16.msra.mxu0 0
        %1084 = vmatprep.subr.bf16.mxu0 0
        %1085 = vmatpush1.bf16.msra.mxu0 0
        %1086 = vmatprep.mubr.bf16.mxu0 0
        %1087 = vmatmul.mubr.bf16.gmra.mrb[0].mxu0 %v1050
        %v1088 = vpop.f32.mrb[0].mxu0
        %v1089 = vadd.f32 %v1028, %v1088
        %v1090 = vpop.f32.mrb[0].mxu0
        %v1091 = vpop.f32.mrb[0].mxu0
        %v1092 = vpop.f32.mrb[0].mxu0
        %1093 = vdwg.mxu0
        %1094 = vrot.lane.b32.xlu0 %v741, 112
        %v1095 = vpop.permute.xlu0 %1094
        %1096 = vrot.lane.b32.xlu0 %v741, 80
        %v1097 = vpop.permute.xlu0 %1096
        %v1099 = vsel %vm745, %v1095, 0
        %v1102 = vsel %vm745, %v1097, 0
        %1104 = vmatprep.subr.bf16.mxu0 0
        %1105 = vmatpush1.bf16.xpose.msra.mxu0 %v1102
        %1106 = vmatprep.subr.bf16.mxu0 0
        %1107 = vmatpush1.bf16.xpose.msra.mxu0 0
        %1108 = vmatprep.subr.bf16.mxu0 0
        %1109 = vmatpush1.bf16.xpose.msra.mxu0 0
        %1110 = vmatprep.subr.bf16.mxu0 0
        %1111 = vmatpush1.bf16.xpose.msra.mxu0 0
        %1112 = vmatprep.subr.bf16.mxu0 0
        %1113 = vmatpush1.bf16.xpose.msra.mxu0 0
        %1114 = vmatprep.subr.bf16.mxu0 0
        %1115 = vmatpush1.bf16.xpose.msra.mxu0 0
        %1116 = vmatprep.subr.bf16.mxu0 0
        %1117 = vmatpush1.bf16.xpose.msra.mxu0 0
        %1118 = vmatprep.subr.bf16.mxu0 0
        %1119 = vmatpush1.bf16.xpose.msra.mxu0 0
        %1120 = vmatprep.subr.bf16.mxu0 0
        %1121 = vmatpush1.bf16.xpose.msra.mxu0 0
        %1122 = vmatprep.subr.bf16.mxu0 0
        %1123 = vmatpush1.bf16.xpose.msra.mxu0 0
        %1124 = vmatprep.subr.bf16.mxu0 0
        %1125 = vmatpush1.bf16.xpose.msra.mxu0 0
        %1126 = vmatprep.subr.bf16.mxu0 0
        %1127 = vmatpush1.bf16.xpose.msra.mxu0 0
        %1128 = vmatprep.subr.bf16.mxu0 0
        %1129 = vmatpush1.bf16.xpose.msra.mxu0 0
        %1130 = vmatprep.subr.bf16.mxu0 0
        %1131 = vmatpush1.bf16.xpose.msra.mxu0 0
        %1132 = vmatprep.subr.bf16.mxu0 0
        %1133 = vmatpush1.bf16.xpose.msra.mxu0 0
        %1134 = vmatprep.subr.bf16.mxu0 0
        %1135 = vmatpush1.bf16.xpose.msra.mxu0 0
        %1136 = vmatprep.mubr.bf16.mxu0 0
        %1137 = vmatmul.mubr.bf16.gmra.mrb[0].mxu0 %v1099
        %v1138 = vpop.f32.mrb[0].mxu0
        %v1139 = vadd.f32 %v740, %v1138
        %v1140 = vpop.f32.mrb[0].mxu0
        %v1141 = vpop.f32.mrb[0].mxu0
        %v1142 = vpop.f32.mrb[0].mxu0
        %1143 = vdwg.mxu0
        %v1144 = vsel %vm745, %v1139, -inf
        %1145 = vmax.xlane.f32.xlu0 %v1144
        %v1146 = vpop.xlane.xlu0 %1145
        %v1147 = vsub.f32 %v1139, %v1146
        %v1148 = vmul.f32 %v1147, 1.442695
        %v1149 = vpow.pop %v1148
        %v1150 = vsel %vm745, %v1149, 0.0
        %1151 = vadd.xlane.f32.xlu0 %v1150
        %v1152 = vpop.xlane.xlu0 %1151
        %v1153 = vrcp.pop %v1152
        %v1154 = vpack.c.bf16 %v1149, %v1149
        %1155 = vrot.lane.b32.xlu0 %v741, 48
        %v1156 = vpop.permute.xlu0 %1155
        %v1158 = vsel %vm745, %v1154, 0
        %v1161 = vsel %vm808, %v1156, 0
        %1163 = vmatprep.subr.bf16.mxu0 0
        %1164 = vmatpush1.bf16.msra.mxu0 %v1161
        %1165 = vmatprep.subr.bf16.mxu0 0
        %1166 = vmatpush1.bf16.msra.mxu0 0
        %1167 = vmatprep.subr.bf16.mxu0 0
        %1168 = vmatpush1.bf16.msra.mxu0 0
        %1169 = vmatprep.subr.bf16.mxu0 0
        %1170 = vmatpush1.bf16.msra.mxu0 0
        %1171 = vmatprep.subr.bf16.mxu0 0
        %1172 = vmatpush1.bf16.msra.mxu0 0
        %1173 = vmatprep.subr.bf16.mxu0 0
        %1174 = vmatpush1.bf16.msra.mxu0 0
        %1175 = vmatprep.subr.bf16.mxu0 0
        %1176 = vmatpush1.bf16.msra.mxu0 0
        %1177 = vmatprep.subr.bf16.mxu0 0
        %1178 = vmatpush1.bf16.msra.mxu0 0
        %1179 = vmatprep.subr.bf16.mxu0 0
        %1180 = vmatpush1.bf16.msra.mxu0 0
        %1181 = vmatprep.subr.bf16.mxu0 0
        %1182 = vmatpush1.bf16.msra.mxu0 0
        %1183 = vmatprep.subr.bf16.mxu0 0
        %1184 = vmatpush1.bf16.msra.mxu0 0
        %1185 = vmatprep.subr.bf16.mxu0 0
        %1186 = vmatpush1.bf16.msra.mxu0 0
        %1187 = vmatprep.subr.bf16.mxu0 0
        %1188 = vmatpush1.bf16.msra.mxu0 0
        %1189 = vmatprep.subr.bf16.mxu0 0
        %1190 = vmatpush1.bf16.msra.mxu0 0
        %1191 = vmatprep.subr.bf16.mxu0 0
        %1192 = vmatpush1.bf16.msra.mxu0 0
        %1193 = vmatprep.subr.bf16.mxu0 0
        %1194 = vmatpush1.bf16.msra.mxu0 0
        %1195 = vmatprep.mubr.bf16.mxu0 0
        %1196 = vmatmul.mubr.bf16.gmra.mrb[0].mxu0 %v1158
        %v1197 = vpop.f32.mrb[0].mxu0
        %v1198 = vadd.f32 0.0, %v1197
        %v1199 = vpop.f32.mrb[0].mxu0
        %v1200 = vpop.f32.mrb[0].mxu0
        %v1201 = vpop.f32.mrb[0].mxu0
        %1202 = vdwg.mxu0
        %v1203 = vmul.f32 %v1198, %v1153
        %1205 = vrot.lane.b32.xlu0 %v1203, 16
        %v1206 = vpop.permute.xlu0 %1205
        %vm1208 = vcmask 195712
        %1209 = vst.msk [vmem:[#allocation2] sm:$0xff] %vm1208, %v1206
        %v1210 = vpack.c.bf16 %v1153, %v1153
        %1211 = vxpose.xlu0.c.b16.start [1/8] %v1210, 128
        %1212 = vxpose.xlu0.c.b16.cont [2/8] 0, 128
        %1213 = vxpose.xlu0.c.b16.cont [3/8] 0, 128
        %1214 = vxpose.xlu0.c.b16.cont [4/8] 0, 128
        %1215 = vxpose.xlu0.c.b16.cont [5/8] 0, 128
        %1216 = vxpose.xlu0.c.b16.cont [6/8] 0, 128
        %1217 = vxpose.xlu0.c.b16.cont [7/8] 0, 128
        %1218 = vxpose.xlu0.c.b16.end [8/8] 0, 128
        %v1219 = vpop.trf.xlu0
        %v1220 = vpop.trf.xlu0
        %v1221 = vpop.trf.xlu0
        %v1222 = vpop.trf.xlu0
        %v1223 = vpop.trf.xlu0
        %v1224 = vpop.trf.xlu0
        %v1225 = vpop.trf.xlu0
        %v1226 = vpop.trf.xlu0
        %v1228 = vsel %vm745, %v1219, 0
        %v1230 = vsel %vm808, %v1154, 0
        %1232 = vmatprep.subr.bf16.mxu0 0
        %1233 = vmatpush1.bf16.msra.mxu0 %v1230
        %1234 = vmatprep.subr.bf16.mxu0 0
        %1235 = vmatpush1.bf16.msra.mxu0 0
        %1236 = vmatprep.subr.bf16.mxu0 0
        %1237 = vmatpush1.bf16.msra.mxu0 0
        %1238 = vmatprep.subr.bf16.mxu0 0
        %1239 = vmatpush1.bf16.msra.mxu0 0
        %1240 = vmatprep.subr.bf16.mxu0 0
        %1241 = vmatpush1.bf16.msra.mxu0 0
        %1242 = vmatprep.subr.bf16.mxu0 0
        %1243 = vmatpush1.bf16.msra.mxu0 0
        %1244 = vmatprep.subr.bf16.mxu0 0
        %1245 = vmatpush1.bf16.msra.mxu0 0
        %1246 = vmatprep.subr.bf16.mxu0 0
        %1247 = vmatpush1.bf16.msra.mxu0 0
        %1248 = vmatprep.subr.bf16.mxu0 0
        %1249 = vmatpush1.bf16.msra.mxu0 0
        %1250 = vmatprep.subr.bf16.mxu0 0
        %1251 = vmatpush1.bf16.msra.mxu0 0
        %1252 = vmatprep.subr.bf16.mxu0 0
        %1253 = vmatpush1.bf16.msra.mxu0 0
        %1254 = vmatprep.subr.bf16.mxu0 0
        %1255 = vmatpush1.bf16.msra.mxu0 0
        %1256 = vmatprep.subr.bf16.mxu0 0
        %1257 = vmatpush1.bf16.msra.mxu0 0
        %1258 = vmatprep.subr.bf16.mxu0 0
        %1259 = vmatpush1.bf16.msra.mxu0 0
        %1260 = vmatprep.subr.bf16.mxu0 0
        %1261 = vmatpush1.bf16.msra.mxu0 0
        %1262 = vmatprep.subr.bf16.mxu0 0
        %1263 = vmatpush1.bf16.msra.mxu0 0
        %1264 = vmatprep.mubr.bf16.mxu0 0
        %1265 = vmatmul.mubr.bf16.gmra.mrb[0].mxu0 %v1228
        %v1266 = vpop.f32.mrb[0].mxu0
        %v1267 = vadd.f32 0.0, %v1266
        %v1268 = vpop.f32.mrb[0].mxu0
        %v1269 = vpop.f32.mrb[0].mxu0
        %v1270 = vpop.f32.mrb[0].mxu0
        %1271 = vdwg.mxu0
        %v1272 = vadd.f32 %v1089, %v1267
        %1273 = vrot.lane.b32.xlu0 %v741, 104
        %v1274 = vpop.permute.xlu0 %1273
        %1275 = vrot.lane.b32.xlu0 %v741, 72
        %v1276 = vpop.permute.xlu0 %1275
        %v1278 = vsel %vm745, %v1274, 0
        %v1281 = vsel %vm745, %v1276, 0
        %1283 = vmatprep.subr.bf16.mxu0 0
        %1284 = vmatpush1.bf16.xpose.msra.mxu0 %v1281
        %1285 = vmatprep.subr.bf16.mxu0 0
        %1286 = vmatpush1.bf16.xpose.msra.mxu0 0
        %1287 = vmatprep.subr.bf16.mxu0 0
        %1288 = vmatpush1.bf16.xpose.msra.mxu0 0
        %1289 = vmatprep.subr.bf16.mxu0 0
        %1290 = vmatpush1.bf16.xpose.msra.mxu0 0
        %1291 = vmatprep.subr.bf16.mxu0 0
        %1292 = vmatpush1.bf16.xpose.msra.mxu0 0
        %1293 = vmatprep.subr.bf16.mxu0 0
        %1294 = vmatpush1.bf16.xpose.msra.mxu0 0
        %1295 = vmatprep.subr.bf16.mxu0 0
        %1296 = vmatpush1.bf16.xpose.msra.mxu0 0
        %1297 = vmatprep.subr.bf16.mxu0 0
        %1298 = vmatpush1.bf16.xpose.msra.mxu0 0
        %1299 = vmatprep.subr.bf16.mxu0 0
        %1300 = vmatpush1.bf16.xpose.msra.mxu0 0
        %1301 = vmatprep.subr.bf16.mxu0 0
        %1302 = vmatpush1.bf16.xpose.msra.mxu0 0
        %1303 = vmatprep.subr.bf16.mxu0 0
        %1304 = vmatpush1.bf16.xpose.msra.mxu0 0
        %1305 = vmatprep.subr.bf16.mxu0 0
        %1306 = vmatpush1.bf16.xpose.msra.mxu0 0
        %1307 = vmatprep.subr.bf16.mxu0 0
        %1308 = vmatpush1.bf16.xpose.msra.mxu0 0
        %1309 = vmatprep.subr.bf16.mxu0 0
        %1310 = vmatpush1.bf16.xpose.msra.mxu0 0
        %1311 = vmatprep.subr.bf16.mxu0 0
        %1312 = vmatpush1.bf16.xpose.msra.mxu0 0
        %1313 = vmatprep.subr.bf16.mxu0 0
        %1314 = vmatpush1.bf16.xpose.msra.mxu0 0
        %1315 = vmatprep.mubr.bf16.mxu0 0
        %1316 = vmatmul.mubr.bf16.gmra.mrb[0].mxu0 %v1278
        %v1317 = vpop.f32.mrb[0].mxu0
        %v1318 = vadd.f32 %v740, %v1317
        %v1319 = vpop.f32.mrb[0].mxu0
        %v1320 = vpop.f32.mrb[0].mxu0
        %v1321 = vpop.f32.mrb[0].mxu0
        %1322 = vdwg.mxu0
        %v1323 = vsel %vm745, %v1318, -inf
        %1324 = vmax.xlane.f32.xlu0 %v1323
        %v1325 = vpop.xlane.xlu0 %1324
        %v1326 = vsub.f32 %v1318, %v1325
        %v1327 = vmul.f32 %v1326, 1.442695
        %v1328 = vpow.pop %v1327
        %v1329 = vsel %vm745, %v1328, 0.0
        %1330 = vadd.xlane.f32.xlu0 %v1329
        %v1331 = vpop.xlane.xlu0 %1330
        %v1332 = vrcp.pop %v1331
        %v1333 = vpack.c.bf16 %v1328, %v1328
        %1334 = vrot.lane.b32.xlu0 %v741, 40
        %v1335 = vpop.permute.xlu0 %1334
        %v1337 = vsel %vm745, %v1333, 0
        %v1340 = vsel %vm808, %v1335, 0
        %1342 = vmatprep.subr.bf16.mxu0 0
        %1343 = vmatpush1.bf16.msra.mxu0 %v1340
        %1344 = vmatprep.subr.bf16.mxu0 0
        %1345 = vmatpush1.bf16.msra.mxu0 0
        %1346 = vmatprep.subr.bf16.mxu0 0
        %1347 = vmatpush1.bf16.msra.mxu0 0
        %1348 = vmatprep.subr.bf16.mxu0 0
        %1349 = vmatpush1.bf16.msra.mxu0 0
        %1350 = vmatprep.subr.bf16.mxu0 0
        %1351 = vmatpush1.bf16.msra.mxu0 0
        %1352 = vmatprep.subr.bf16.mxu0 0
        %1353 = vmatpush1.bf16.msra.mxu0 0
        %1354 = vmatprep.subr.bf16.mxu0 0
        %1355 = vmatpush1.bf16.msra.mxu0 0
        %1356 = vmatprep.subr.bf16.mxu0 0
        %1357 = vmatpush1.bf16.msra.mxu0 0
        %1358 = vmatprep.subr.bf16.mxu0 0
        %1359 = vmatpush1.bf16.msra.mxu0 0
        %1360 = vmatprep.subr.bf16.mxu0 0
        %1361 = vmatpush1.bf16.msra.mxu0 0
        %1362 = vmatprep.subr.bf16.mxu0 0
        %1363 = vmatpush1.bf16.msra.mxu0 0
        %1364 = vmatprep.subr.bf16.mxu0 0
        %1365 = vmatpush1.bf16.msra.mxu0 0
        %1366 = vmatprep.subr.bf16.mxu0 0
        %1367 = vmatpush1.bf16.msra.mxu0 0
        %1368 = vmatprep.subr.bf16.mxu0 0
        %1369 = vmatpush1.bf16.msra.mxu0 0
        %1370 = vmatprep.subr.bf16.mxu0 0
        %1371 = vmatpush1.bf16.msra.mxu0 0
        %1372 = vmatprep.subr.bf16.mxu0 0
        %1373 = vmatpush1.bf16.msra.mxu0 0
        %1374 = vmatprep.mubr.bf16.mxu0 0
        %1375 = vmatmul.mubr.bf16.gmra.mrb[0].mxu0 %v1337
        %v1376 = vpop.f32.mrb[0].mxu0
        %v1377 = vadd.f32 0.0, %v1376
        %v1378 = vpop.f32.mrb[0].mxu0
        %v1379 = vpop.f32.mrb[0].mxu0
        %v1380 = vpop.f32.mrb[0].mxu0
        %1381 = vdwg.mxu0
        %v1382 = vmul.f32 %v1377, %v1332
        %1384 = vrot.lane.b32.xlu0 %v1382, 24
        %v1385 = vpop.permute.xlu0 %1384
        %vm1387 = vcmask 261312
        %1388 = vst.msk [vmem:[#allocation2] sm:$0xff] %vm1387, %v1385
        %v1389 = vpack.c.bf16 %v1332, %v1332
        %1390 = vxpose.xlu0.c.b16.start [1/8] %v1389, 128
        %1391 = vxpose.xlu0.c.b16.cont [2/8] 0, 128
        %1392 = vxpose.xlu0.c.b16.cont [3/8] 0, 128
        %1393 = vxpose.xlu0.c.b16.cont [4/8] 0, 128
        %1394 = vxpose.xlu0.c.b16.cont [5/8] 0, 128
        %1395 = vxpose.xlu0.c.b16.cont [6/8] 0, 128
        %1396 = vxpose.xlu0.c.b16.cont [7/8] 0, 128
        %1397 = vxpose.xlu0.c.b16.end [8/8] 0, 128
        %v1398 = vpop.trf.xlu0
        %v1399 = vpop.trf.xlu0
        %v1400 = vpop.trf.xlu0
        %v1401 = vpop.trf.xlu0
        %v1402 = vpop.trf.xlu0
        %v1403 = vpop.trf.xlu0
        %v1404 = vpop.trf.xlu0
        %v1405 = vpop.trf.xlu0
        %v1407 = vsel %vm745, %v1398, 0
        %v1409 = vsel %vm808, %v1333, 0
        %1411 = vmatprep.subr.bf16.mxu0 0
        %1412 = vmatpush1.bf16.msra.mxu0 %v1409
        %1413 = vmatprep.subr.bf16.mxu0 0
        %1414 = vmatpush1.bf16.msra.mxu0 0
        %1415 = vmatprep.subr.bf16.mxu0 0
        %1416 = vmatpush1.bf16.msra.mxu0 0
        %1417 = vmatprep.subr.bf16.mxu0 0
        %1418 = vmatpush1.bf16.msra.mxu0 0
        %1419 = vmatprep.subr.bf16.mxu0 0
        %1420 = vmatpush1.bf16.msra.mxu0 0
        %1421 = vmatprep.subr.bf16.mxu0 0
        %1422 = vmatpush1.bf16.msra.mxu0 0
        %1423 = vmatprep.subr.bf16.mxu0 0
        %1424 = vmatpush1.bf16.msra.mxu0 0
        %1425 = vmatprep.subr.bf16.mxu0 0
        %1426 = vmatpush1.bf16.msra.mxu0 0
        %1427 = vmatprep.subr.bf16.mxu0 0
        %1428 = vmatpush1.bf16.msra.mxu0 0
        %1429 = vmatprep.subr.bf16.mxu0 0
        %1430 = vmatpush1.bf16.msra.mxu0 0
        %1431 = vmatprep.subr.bf16.mxu0 0
        %1432 = vmatpush1.bf16.msra.mxu0 0
        %1433 = vmatprep.subr.bf16.mxu0 0
        %1434 = vmatpush1.bf16.msra.mxu0 0
        %1435 = vmatprep.subr.bf16.mxu0 0
        %1436 = vmatpush1.bf16.msra.mxu0 0
        %1437 = vmatprep.subr.bf16.mxu0 0
        %1438 = vmatpush1.bf16.msra.mxu0 0
        %1439 = vmatprep.subr.bf16.mxu0 0
        %1440 = vmatpush1.bf16.msra.mxu0 0
        %1441 = vmatprep.subr.bf16.mxu0 0
        %1442 = vmatpush1.bf16.msra.mxu0 0
        %1443 = vmatprep.mubr.bf16.mxu0 0
        %1444 = vmatmul.mubr.bf16.gmra.mrb[0].mxu0 %v1407
        %v1445 = vpop.f32.mrb[0].mxu0
        %v1446 = vadd.f32 0.0, %v1445
        %v1447 = vpop.f32.mrb[0].mxu0
        %v1448 = vpop.f32.mrb[0].mxu0
        %v1449 = vpop.f32.mrb[0].mxu0
        %1450 = vdwg.mxu0
        %v1451 = vadd.f32 %v1272, %v1446
        %v1452 = vld [vmem:[%s661] sm:$0xf]
        %v1453 = vmul.f32 %v1451, 0.25
        %v1454 = vlaneseq
        %v1455 = vshrl.u32 %v1454, 7
        %v1456 = vsub.s32 0, %v1455
        %v1457 = vrot.slane %v1453, %v1456
        %v1458 = vmul.f32 %v1457, %v1452
        %v1459 = vsub.f32 1.0, %v1452
        %v1460 = vmul.f32 %v1459, -1e+10
        %v1461 = vadd.f32 %v1458, %v1460
        %vm1462 = vcmask 60416
        %v1463 = vsel %vm1462, %v1461, -inf
        %1464 = vmax.xlane.f32.xlu0 %v1463
        %v1465 = vpop.xlane.xlu0 %1464
        %v1466 = vsub.f32 %v1461, %v1465
        %v1467 = vmul.f32 %v1466, 1.442695
        %v1468 = vpow.pop %v1467
        %v1469 = vsel %vm1462, %v1468, 0.0
        %1470 = vadd.xlane.f32.xlu0 %v1469
        %v1471 = vpop.xlane.xlu0 %1470
        %v1472 = vrcp.pop %v1471
        %v1473 = vmul.f32 %v1468, %v1472
        %v1474 = vmul.f32 %v1473, %v1452
        %v1475 = vsel %vm1462, %v1474, 0.0
        %v1476 = vrot.slane %v1475, 4
        %v1477 = vadd.f32 %v1475, %v1476
        %v1478 = vrot.slane %v1477, 2
        %v1479 = vadd.f32 %v1477, %v1478
        %v1480 = vrot.slane %v1479, 1
        %v1481 = vadd.f32 %v1479, %v1480
        %v1482 = vsel %vm745, %v1481, 0.0
        %1483 = vst [vmem:[%s649] sm:$0x1] %v1482
        %s1484 = scalar_lea.vmem %s566, 2 [#allocation3]
        %v1485 = vld [vmem:[%s1484] sm:$0x3]
        %v1486 = vunpack.c.0.s8 %v1485
        %v1487 = vcvt.s32.f32 %v1486
        %v1488 = vmul.f32 %v1487, -1e+09
        %v1489 = vpack.c.bf16 %v734, %v734
        %1491 = vrot.lane.b32.xlu0 %v1489, 96
        %v1492 = vpop.permute.xlu0 %1491
        %v1494 = vsel %vm745, %v1489, 0
        %v1497 = vsel %vm745, %v1492, 0
        %1499 = vmatprep.subr.bf16.mxu0 0
        %1500 = vmatpush1.bf16.xpose.msra.mxu0 %v1497
        %1501 = vmatprep.subr.bf16.mxu0 0
        %1502 = vmatpush1.bf16.xpose.msra.mxu0 0
        %1503 = vmatprep.subr.bf16.mxu0 0
        %1504 = vmatpush1.bf16.xpose.msra.mxu0 0
        %1505 = vmatprep.subr.bf16.mxu0 0
        %1506 = vmatpush1.bf16.xpose.msra.mxu0 0
        %1507 = vmatprep.subr.bf16.mxu0 0
        %1508 = vmatpush1.bf16.xpose.msra.mxu0 0
        %1509 = vmatprep.subr.bf16.mxu0 0
        %1510 = vmatpush1.bf16.xpose.msra.mxu0 0
        %1511 = vmatprep.subr.bf16.mxu0 0
        %1512 = vmatpush1.bf16.xpose.msra.mxu0 0
        %1513 = vmatprep.subr.bf16.mxu0 0
        %1514 = vmatpush1.bf16.xpose.msra.mxu0 0
        %1515 = vmatprep.subr.bf16.mxu0 0
        %1516 = vmatpush1.bf16.xpose.msra.mxu0 0
        %1517 = vmatprep.subr.bf16.mxu0 0
        %1518 = vmatpush1.bf16.xpose.msra.mxu0 0
        %1519 = vmatprep.subr.bf16.mxu0 0
        %1520 = vmatpush1.bf16.xpose.msra.mxu0 0
        %1521 = vmatprep.subr.bf16.mxu0 0
        %1522 = vmatpush1.bf16.xpose.msra.mxu0 0
        %1523 = vmatprep.subr.bf16.mxu0 0
        %1524 = vmatpush1.bf16.xpose.msra.mxu0 0
        %1525 = vmatprep.subr.bf16.mxu0 0
        %1526 = vmatpush1.bf16.xpose.msra.mxu0 0
        %1527 = vmatprep.subr.bf16.mxu0 0
        %1528 = vmatpush1.bf16.xpose.msra.mxu0 0
        %1529 = vmatprep.subr.bf16.mxu0 0
        %1530 = vmatpush1.bf16.xpose.msra.mxu0 0
        %1531 = vmatprep.mubr.bf16.mxu0 0
        %1532 = vmatmul.mubr.bf16.gmra.mrb[0].mxu0 %v1494
        %v1533 = vpop.f32.mrb[0].mxu0
        %v1534 = vadd.f32 %v1488, %v1533
        %v1535 = vpop.f32.mrb[0].mxu0
        %v1536 = vpop.f32.mrb[0].mxu0
        %v1537 = vpop.f32.mrb[0].mxu0
        %1538 = vdwg.mxu0
        %v1539 = vsel %vm745, %v1534, -inf
        %1540 = vmax.xlane.f32.xlu0 %v1539
        %v1541 = vpop.xlane.xlu0 %1540
        %v1542 = vsub.f32 %v1534, %v1541
        %v1543 = vmul.f32 %v1542, 1.442695
        %v1544 = vpow.pop %v1543
        %v1545 = vsel %vm745, %v1544, 0.0
        %1546 = vadd.xlane.f32.xlu0 %v1545
        %v1547 = vpop.xlane.xlu0 %1546
        %v1548 = vrcp.pop %v1547
        %v1549 = vpack.c.bf16 %v1544, %v1544
        %1550 = vrot.lane.b32.xlu0 %v1489, 64
        %v1551 = vpop.permute.xlu0 %1550
        %v1553 = vsel %vm745, %v1549, 0
        %v1556 = vsel %vm808, %v1551, 0
        %1558 = vmatprep.subr.bf16.mxu0 0
        %1559 = vmatpush1.bf16.msra.mxu0 %v1556
        %1560 = vmatprep.subr.bf16.mxu0 0
        %1561 = vmatpush1.bf16.msra.mxu0 0
        %1562 = vmatprep.subr.bf16.mxu0 0
        %1563 = vmatpush1.bf16.msra.mxu0 0
        %1564 = vmatprep.subr.bf16.mxu0 0
        %1565 = vmatpush1.bf16.msra.mxu0 0
        %1566 = vmatprep.subr.bf16.mxu0 0
        %1567 = vmatpush1.bf16.msra.mxu0 0
        %1568 = vmatprep.subr.bf16.mxu0 0
        %1569 = vmatpush1.bf16.msra.mxu0 0
        %1570 = vmatprep.subr.bf16.mxu0 0
        %1571 = vmatpush1.bf16.msra.mxu0 0
        %1572 = vmatprep.subr.bf16.mxu0 0
        %1573 = vmatpush1.bf16.msra.mxu0 0
        %1574 = vmatprep.subr.bf16.mxu0 0
        %1575 = vmatpush1.bf16.msra.mxu0 0
        %1576 = vmatprep.subr.bf16.mxu0 0
        %1577 = vmatpush1.bf16.msra.mxu0 0
        %1578 = vmatprep.subr.bf16.mxu0 0
        %1579 = vmatpush1.bf16.msra.mxu0 0
        %1580 = vmatprep.subr.bf16.mxu0 0
        %1581 = vmatpush1.bf16.msra.mxu0 0
        %1582 = vmatprep.subr.bf16.mxu0 0
        %1583 = vmatpush1.bf16.msra.mxu0 0
        %1584 = vmatprep.subr.bf16.mxu0 0
        %1585 = vmatpush1.bf16.msra.mxu0 0
        %1586 = vmatprep.subr.bf16.mxu0 0
        %1587 = vmatpush1.bf16.msra.mxu0 0
        %1588 = vmatprep.subr.bf16.mxu0 0
        %1589 = vmatpush1.bf16.msra.mxu0 0
        %1590 = vmatprep.mubr.bf16.mxu0 0
        %1591 = vmatmul.mubr.bf16.gmra.mrb[0].mxu0 %v1553
        %v1592 = vpop.f32.mrb[0].mxu0
        %v1593 = vadd.f32 0.0, %v1592
        %v1594 = vpop.f32.mrb[0].mxu0
        %v1595 = vpop.f32.mrb[0].mxu0
        %v1596 = vpop.f32.mrb[0].mxu0
        %1597 = vdwg.mxu0
        %v1598 = vmul.f32 %v1593, %v1548
        %1599 = vst.msk [vmem:[#allocation2 + $0x8] sm:$0xff] %vm745, %v1598
        %v1600 = vpack.c.bf16 %v1548, %v1548
        %1601 = vrot.lane.b32.xlu0 %v1489, 120
        %v1602 = vpop.permute.xlu0 %1601
        %1603 = vrot.lane.b32.xlu0 %v1489, 88
        %v1604 = vpop.permute.xlu0 %1603
        %v1606 = vsel %vm745, %v1602, 0
        %v1609 = vsel %vm745, %v1604, 0
        %1611 = vmatprep.subr.bf16.mxu0 0
        %1612 = vmatpush1.bf16.xpose.msra.mxu0 %v1609
        %1613 = vmatprep.subr.bf16.mxu0 0
        %1614 = vmatpush1.bf16.xpose.msra.mxu0 0
        %1615 = vmatprep.subr.bf16.mxu0 0
        %1616 = vmatpush1.bf16.xpose.msra.mxu0 0
        %1617 = vmatprep.subr.bf16.mxu0 0
        %1618 = vmatpush1.bf16.xpose.msra.mxu0 0
        %1619 = vmatprep.subr.bf16.mxu0 0
        %1620 = vmatpush1.bf16.xpose.msra.mxu0 0
        %1621 = vmatprep.subr.bf16.mxu0 0
        %1622 = vmatpush1.bf16.xpose.msra.mxu0 0
        %1623 = vmatprep.subr.bf16.mxu0 0
        %1624 = vmatpush1.bf16.xpose.msra.mxu0 0
        %1625 = vmatprep.subr.bf16.mxu0 0
        %1626 = vmatpush1.bf16.xpose.msra.mxu0 0
        %1627 = vmatprep.subr.bf16.mxu0 0
        %1628 = vmatpush1.bf16.xpose.msra.mxu0 0
        %1629 = vmatprep.subr.bf16.mxu0 0
        %1630 = vmatpush1.bf16.xpose.msra.mxu0 0
        %1631 = vmatprep.subr.bf16.mxu0 0
        %1632 = vmatpush1.bf16.xpose.msra.mxu0 0
        %1633 = vmatprep.subr.bf16.mxu0 0
        %1634 = vmatpush1.bf16.xpose.msra.mxu0 0
        %1635 = vmatprep.subr.bf16.mxu0 0
        %1636 = vmatpush1.bf16.xpose.msra.mxu0 0
        %1637 = vmatprep.subr.bf16.mxu0 0
        %1638 = vmatpush1.bf16.xpose.msra.mxu0 0
        %1639 = vmatprep.subr.bf16.mxu0 0
        %1640 = vmatpush1.bf16.xpose.msra.mxu0 0
        %1641 = vmatprep.subr.bf16.mxu0 0
        %1642 = vmatpush1.bf16.xpose.msra.mxu0 0
        %1643 = vmatprep.mubr.bf16.mxu0 0
        %1644 = vmatmul.mubr.bf16.gmra.mrb[0].mxu0 %v1606
        %v1645 = vpop.f32.mrb[0].mxu0
        %v1646 = vadd.f32 %v1488, %v1645
        %v1647 = vpop.f32.mrb[0].mxu0
        %v1648 = vpop.f32.mrb[0].mxu0
        %v1649 = vpop.f32.mrb[0].mxu0
        %1650 = vdwg.mxu0
        %v1651 = vsel %vm745, %v1646, -inf
        %1652 = vmax.xlane.f32.xlu0 %v1651
        %v1653 = vpop.xlane.xlu0 %1652
        %v1654 = vsub.f32 %v1646, %v1653
        %v1655 = vmul.f32 %v1654, 1.442695
        %v1656 = vpow.pop %v1655
        %v1657 = vsel %vm745, %v1656, 0.0
        %1658 = vadd.xlane.f32.xlu0 %v1657
        %v1659 = vpop.xlane.xlu0 %1658
        %v1660 = vrcp.pop %v1659
        %v1661 = vpack.c.bf16 %v1656, %v1656
        %1662 = vrot.lane.b32.xlu0 %v1489, 56
        %v1663 = vpop.permute.xlu0 %1662
        %v1665 = vsel %vm745, %v1661, 0
        %v1668 = vsel %vm808, %v1663, 0
        %1670 = vmatprep.subr.bf16.mxu0 0
        %1671 = vmatpush1.bf16.msra.mxu0 %v1668
        %1672 = vmatprep.subr.bf16.mxu0 0
        %1673 = vmatpush1.bf16.msra.mxu0 0
        %1674 = vmatprep.subr.bf16.mxu0 0
        %1675 = vmatpush1.bf16.msra.mxu0 0
        %1676 = vmatprep.subr.bf16.mxu0 0
        %1677 = vmatpush1.bf16.msra.mxu0 0
        %1678 = vmatprep.subr.bf16.mxu0 0
        %1679 = vmatpush1.bf16.msra.mxu0 0
        %1680 = vmatprep.subr.bf16.mxu0 0
        %1681 = vmatpush1.bf16.msra.mxu0 0
        %1682 = vmatprep.subr.bf16.mxu0 0
        %1683 = vmatpush1.bf16.msra.mxu0 0
        %1684 = vmatprep.subr.bf16.mxu0 0
        %1685 = vmatpush1.bf16.msra.mxu0 0
        %1686 = vmatprep.subr.bf16.mxu0 0
        %1687 = vmatpush1.bf16.msra.mxu0 0
        %1688 = vmatprep.subr.bf16.mxu0 0
        %1689 = vmatpush1.bf16.msra.mxu0 0
        %1690 = vmatprep.subr.bf16.mxu0 0
        %1691 = vmatpush1.bf16.msra.mxu0 0
        %1692 = vmatprep.subr.bf16.mxu0 0
        %1693 = vmatpush1.bf16.msra.mxu0 0
        %1694 = vmatprep.subr.bf16.mxu0 0
        %1695 = vmatpush1.bf16.msra.mxu0 0
        %1696 = vmatprep.subr.bf16.mxu0 0
        %1697 = vmatpush1.bf16.msra.mxu0 0
        %1698 = vmatprep.subr.bf16.mxu0 0
        %1699 = vmatpush1.bf16.msra.mxu0 0
        %1700 = vmatprep.subr.bf16.mxu0 0
        %1701 = vmatpush1.bf16.msra.mxu0 0
        %1702 = vmatprep.mubr.bf16.mxu0 0
        %1703 = vmatmul.mubr.bf16.gmra.mrb[0].mxu0 %v1665
        %v1704 = vpop.f32.mrb[0].mxu0
        %v1705 = vadd.f32 0.0, %v1704
        %v1706 = vpop.f32.mrb[0].mxu0
        %v1707 = vpop.f32.mrb[0].mxu0
        %v1708 = vpop.f32.mrb[0].mxu0
        %1709 = vdwg.mxu0
        %v1710 = vmul.f32 %v1705, %v1660
        %1712 = vrot.lane.b32.xlu0 %v1710, 8
        %v1713 = vpop.permute.xlu0 %1712
        %1715 = vst.msk [vmem:[#allocation2 + $0x8] sm:$0xff] %vm969, %v1713
        %v1716 = vpack.c.bf16 %v1660, %v1660
        %1717 = vxpose.xlu0.c.b16.start [1/8] %v1716, 128
        %1718 = vxpose.xlu0.c.b16.cont [2/8] 0, 128
        %1719 = vxpose.xlu0.c.b16.cont [3/8] 0, 128
        %1720 = vxpose.xlu0.c.b16.cont [4/8] 0, 128
        %1721 = vxpose.xlu0.c.b16.cont [5/8] 0, 128
        %1722 = vxpose.xlu0.c.b16.cont [6/8] 0, 128
        %1723 = vxpose.xlu0.c.b16.cont [7/8] 0, 128
        %1724 = vxpose.xlu0.c.b16.end [8/8] 0, 128
        %v1725 = vpop.trf.xlu0
        %v1726 = vpop.trf.xlu0
        %v1727 = vpop.trf.xlu0
        %v1728 = vpop.trf.xlu0
        %v1729 = vpop.trf.xlu0
        %v1730 = vpop.trf.xlu0
        %v1731 = vpop.trf.xlu0
        %v1732 = vpop.trf.xlu0
        %v1734 = vsel %vm745, %v1725, 0
        %v1736 = vsel %vm808, %v1661, 0
        %1738 = vmatprep.subr.bf16.mxu0 0
        %1739 = vmatpush1.bf16.msra.mxu0 %v1736
        %1740 = vmatprep.subr.bf16.mxu0 0
        %1741 = vmatpush1.bf16.msra.mxu0 0
        %1742 = vmatprep.subr.bf16.mxu0 0
        %1743 = vmatpush1.bf16.msra.mxu0 0
        %1744 = vmatprep.subr.bf16.mxu0 0
        %1745 = vmatpush1.bf16.msra.mxu0 0
        %1746 = vmatprep.subr.bf16.mxu0 0
        %1747 = vmatpush1.bf16.msra.mxu0 0
        %1748 = vmatprep.subr.bf16.mxu0 0
        %1749 = vmatpush1.bf16.msra.mxu0 0
        %1750 = vmatprep.subr.bf16.mxu0 0
        %1751 = vmatpush1.bf16.msra.mxu0 0
        %1752 = vmatprep.subr.bf16.mxu0 0
        %1753 = vmatpush1.bf16.msra.mxu0 0
        %1754 = vmatprep.subr.bf16.mxu0 0
        %1755 = vmatpush1.bf16.msra.mxu0 0
        %1756 = vmatprep.subr.bf16.mxu0 0
        %1757 = vmatpush1.bf16.msra.mxu0 0
        %1758 = vmatprep.subr.bf16.mxu0 0
        %1759 = vmatpush1.bf16.msra.mxu0 0
        %1760 = vmatprep.subr.bf16.mxu0 0
        %1761 = vmatpush1.bf16.msra.mxu0 0
        %1762 = vmatprep.subr.bf16.mxu0 0
        %1763 = vmatpush1.bf16.msra.mxu0 0
        %1764 = vmatprep.subr.bf16.mxu0 0
        %1765 = vmatpush1.bf16.msra.mxu0 0
        %1766 = vmatprep.subr.bf16.mxu0 0
        %1767 = vmatpush1.bf16.msra.mxu0 0
        %1768 = vmatprep.subr.bf16.mxu0 0
        %1769 = vmatpush1.bf16.msra.mxu0 0
        %1770 = vmatprep.mubr.bf16.mxu0 0
        %1771 = vmatmul.mubr.bf16.gmra.mrb[0].mxu0 %v1734
        %v1772 = vpop.f32.mrb[0].mxu0
        %v1773 = vadd.f32 0.0, %v1772
        %v1774 = vpop.f32.mrb[0].mxu0
        %v1775 = vpop.f32.mrb[0].mxu0
        %v1776 = vpop.f32.mrb[0].mxu0
        %1777 = vdwg.mxu0
        %1778 = vxpose.xlu0.c.b16.start [1/8] %v1600, 128
        %1779 = vxpose.xlu0.c.b16.cont [2/8] 0, 128
        %1780 = vxpose.xlu0.c.b16.cont [3/8] 0, 128
        %1781 = vxpose.xlu0.c.b16.cont [4/8] 0, 128
        %1782 = vxpose.xlu0.c.b16.cont [5/8] 0, 128
        %1783 = vxpose.xlu0.c.b16.cont [6/8] 0, 128
        %1784 = vxpose.xlu0.c.b16.cont [7/8] 0, 128
        %1785 = vxpose.xlu0.c.b16.end [8/8] 0, 128
        %v1786 = vpop.trf.xlu0
        %v1787 = vpop.trf.xlu0
        %v1788 = vpop.trf.xlu0
        %v1789 = vpop.trf.xlu0
        %v1790 = vpop.trf.xlu0
        %v1791 = vpop.trf.xlu0
        %v1792 = vpop.trf.xlu0
        %v1793 = vpop.trf.xlu0
        %v1795 = vsel %vm745, %v1786, 0
        %v1797 = vsel %vm808, %v1549, 0
        %1799 = vmatprep.subr.bf16.mxu0 0
        %1800 = vmatpush1.bf16.msra.mxu0 %v1797
        %1801 = vmatprep.subr.bf16.mxu0 0
        %1802 = vmatpush1.bf16.msra.mxu0 0
        %1803 = vmatprep.subr.bf16.mxu0 0
        %1804 = vmatpush1.bf16.msra.mxu0 0
        %1805 = vmatprep.subr.bf16.mxu0 0
        %1806 = vmatpush1.bf16.msra.mxu0 0
        %1807 = vmatprep.subr.bf16.mxu0 0
        %1808 = vmatpush1.bf16.msra.mxu0 0
        %1809 = vmatprep.subr.bf16.mxu0 0
        %1810 = vmatpush1.bf16.msra.mxu0 0
        %1811 = vmatprep.subr.bf16.mxu0 0
        %1812 = vmatpush1.bf16.msra.mxu0 0
        %1813 = vmatprep.subr.bf16.mxu0 0
        %1814 = vmatpush1.bf16.msra.mxu0 0
        %1815 = vmatprep.subr.bf16.mxu0 0
        %1816 = vmatpush1.bf16.msra.mxu0 0
        %1817 = vmatprep.subr.bf16.mxu0 0
        %1818 = vmatpush1.bf16.msra.mxu0 0
        %1819 = vmatprep.subr.bf16.mxu0 0
        %1820 = vmatpush1.bf16.msra.mxu0 0
        %1821 = vmatprep.subr.bf16.mxu0 0
        %1822 = vmatpush1.bf16.msra.mxu0 0
        %1823 = vmatprep.subr.bf16.mxu0 0
        %1824 = vmatpush1.bf16.msra.mxu0 0
        %1825 = vmatprep.subr.bf16.mxu0 0
        %1826 = vmatpush1.bf16.msra.mxu0 0
        %1827 = vmatprep.subr.bf16.mxu0 0
        %1828 = vmatpush1.bf16.msra.mxu0 0
        %1829 = vmatprep.subr.bf16.mxu0 0
        %1830 = vmatpush1.bf16.msra.mxu0 0
        %1831 = vmatprep.mubr.bf16.mxu0 0
        %1832 = vmatmul.mubr.bf16.gmra.mrb[0].mxu0 %v1795
        %v1833 = vpop.f32.mrb[0].mxu0
        %v1834 = vadd.f32 %v1773, %v1833
        %v1835 = vpop.f32.mrb[0].mxu0
        %v1836 = vpop.f32.mrb[0].mxu0
        %v1837 = vpop.f32.mrb[0].mxu0
        %1838 = vdwg.mxu0
        %1839 = vrot.lane.b32.xlu0 %v1489, 112
        %v1840 = vpop.permute.xlu0 %1839
        %1841 = vrot.lane.b32.xlu0 %v1489, 80
        %v1842 = vpop.permute.xlu0 %1841
        %v1844 = vsel %vm745, %v1840, 0
        %v1847 = vsel %vm745, %v1842, 0
        %1849 = vmatprep.subr.bf16.mxu0 0
        %1850 = vmatpush1.bf16.xpose.msra.mxu0 %v1847
        %1851 = vmatprep.subr.bf16.mxu0 0
        %1852 = vmatpush1.bf16.xpose.msra.mxu0 0
        %1853 = vmatprep.subr.bf16.mxu0 0
        %1854 = vmatpush1.bf16.xpose.msra.mxu0 0
        %1855 = vmatprep.subr.bf16.mxu0 0
        %1856 = vmatpush1.bf16.xpose.msra.mxu0 0
        %1857 = vmatprep.subr.bf16.mxu0 0
        %1858 = vmatpush1.bf16.xpose.msra.mxu0 0
        %1859 = vmatprep.subr.bf16.mxu0 0
        %1860 = vmatpush1.bf16.xpose.msra.mxu0 0
        %1861 = vmatprep.subr.bf16.mxu0 0
        %1862 = vmatpush1.bf16.xpose.msra.mxu0 0
        %1863 = vmatprep.subr.bf16.mxu0 0
        %1864 = vmatpush1.bf16.xpose.msra.mxu0 0
        %1865 = vmatprep.subr.bf16.mxu0 0
        %1866 = vmatpush1.bf16.xpose.msra.mxu0 0
        %1867 = vmatprep.subr.bf16.mxu0 0
        %1868 = vmatpush1.bf16.xpose.msra.mxu0 0
        %1869 = vmatprep.subr.bf16.mxu0 0
        %1870 = vmatpush1.bf16.xpose.msra.mxu0 0
        %1871 = vmatprep.subr.bf16.mxu0 0
        %1872 = vmatpush1.bf16.xpose.msra.mxu0 0
        %1873 = vmatprep.subr.bf16.mxu0 0
        %1874 = vmatpush1.bf16.xpose.msra.mxu0 0
        %1875 = vmatprep.subr.bf16.mxu0 0
        %1876 = vmatpush1.bf16.xpose.msra.mxu0 0
        %1877 = vmatprep.subr.bf16.mxu0 0
        %1878 = vmatpush1.bf16.xpose.msra.mxu0 0
        %1879 = vmatprep.subr.bf16.mxu0 0
        %1880 = vmatpush1.bf16.xpose.msra.mxu0 0
        %1881 = vmatprep.mubr.bf16.mxu0 0
        %1882 = vmatmul.mubr.bf16.gmra.mrb[0].mxu0 %v1844
        %v1883 = vpop.f32.mrb[0].mxu0
        %v1884 = vadd.f32 %v1488, %v1883
        %v1885 = vpop.f32.mrb[0].mxu0
        %v1886 = vpop.f32.mrb[0].mxu0
        %v1887 = vpop.f32.mrb[0].mxu0
        %1888 = vdwg.mxu0
        %v1889 = vsel %vm745, %v1884, -inf
        %1890 = vmax.xlane.f32.xlu0 %v1889
        %v1891 = vpop.xlane.xlu0 %1890
        %v1892 = vsub.f32 %v1884, %v1891
        %v1893 = vmul.f32 %v1892, 1.442695
        %v1894 = vpow.pop %v1893
        %v1895 = vsel %vm745, %v1894, 0.0
        %1896 = vadd.xlane.f32.xlu0 %v1895
        %v1897 = vpop.xlane.xlu0 %1896
        %v1898 = vrcp.pop %v1897
        %v1899 = vpack.c.bf16 %v1894, %v1894
        %1900 = vrot.lane.b32.xlu0 %v1489, 48
        %v1901 = vpop.permute.xlu0 %1900
        %v1903 = vsel %vm745, %v1899, 0
        %v1906 = vsel %vm808, %v1901, 0
        %1908 = vmatprep.subr.bf16.mxu0 0
        %1909 = vmatpush1.bf16.msra.mxu0 %v1906
        %1910 = vmatprep.subr.bf16.mxu0 0
        %1911 = vmatpush1.bf16.msra.mxu0 0
        %1912 = vmatprep.subr.bf16.mxu0 0
        %1913 = vmatpush1.bf16.msra.mxu0 0
        %1914 = vmatprep.subr.bf16.mxu0 0
        %1915 = vmatpush1.bf16.msra.mxu0 0
        %1916 = vmatprep.subr.bf16.mxu0 0
        %1917 = vmatpush1.bf16.msra.mxu0 0
        %1918 = vmatprep.subr.bf16.mxu0 0
        %1919 = vmatpush1.bf16.msra.mxu0 0
        %1920 = vmatprep.subr.bf16.mxu0 0
        %1921 = vmatpush1.bf16.msra.mxu0 0
        %1922 = vmatprep.subr.bf16.mxu0 0
        %1923 = vmatpush1.bf16.msra.mxu0 0
        %1924 = vmatprep.subr.bf16.mxu0 0
        %1925 = vmatpush1.bf16.msra.mxu0 0
        %1926 = vmatprep.subr.bf16.mxu0 0
        %1927 = vmatpush1.bf16.msra.mxu0 0
        %1928 = vmatprep.subr.bf16.mxu0 0
        %1929 = vmatpush1.bf16.msra.mxu0 0
        %1930 = vmatprep.subr.bf16.mxu0 0
        %1931 = vmatpush1.bf16.msra.mxu0 0
        %1932 = vmatprep.subr.bf16.mxu0 0
        %1933 = vmatpush1.bf16.msra.mxu0 0
        %1934 = vmatprep.subr.bf16.mxu0 0
        %1935 = vmatpush1.bf16.msra.mxu0 0
        %1936 = vmatprep.subr.bf16.mxu0 0
        %1937 = vmatpush1.bf16.msra.mxu0 0
        %1938 = vmatprep.subr.bf16.mxu0 0
        %1939 = vmatpush1.bf16.msra.mxu0 0
        %1940 = vmatprep.mubr.bf16.mxu0 0
        %1941 = vmatmul.mubr.bf16.gmra.mrb[0].mxu0 %v1903
        %v1942 = vpop.f32.mrb[0].mxu0
        %v1943 = vadd.f32 0.0, %v1942
        %v1944 = vpop.f32.mrb[0].mxu0
        %v1945 = vpop.f32.mrb[0].mxu0
        %v1946 = vpop.f32.mrb[0].mxu0
        %1947 = vdwg.mxu0
        %v1948 = vmul.f32 %v1943, %v1898
        %1950 = vrot.lane.b32.xlu0 %v1948, 16
        %v1951 = vpop.permute.xlu0 %1950
        %1953 = vst.msk [vmem:[#allocation2 + $0x8] sm:$0xff] %vm1208, %v1951
        %v1954 = vpack.c.bf16 %v1898, %v1898
        %1955 = vxpose.xlu0.c.b16.start [1/8] %v1954, 128
        %1956 = vxpose.xlu0.c.b16.cont [2/8] 0, 128
        %1957 = vxpose.xlu0.c.b16.cont [3/8] 0, 128
        %1958 = vxpose.xlu0.c.b16.cont [4/8] 0, 128
        %1959 = vxpose.xlu0.c.b16.cont [5/8] 0, 128
        %1960 = vxpose.xlu0.c.b16.cont [6/8] 0, 128
        %1961 = vxpose.xlu0.c.b16.cont [7/8] 0, 128
        %1962 = vxpose.xlu0.c.b16.end [8/8] 0, 128
        %v1963 = vpop.trf.xlu0
        %v1964 = vpop.trf.xlu0
        %v1965 = vpop.trf.xlu0
        %v1966 = vpop.trf.xlu0
        %v1967 = vpop.trf.xlu0
        %v1968 = vpop.trf.xlu0
        %v1969 = vpop.trf.xlu0
        %v1970 = vpop.trf.xlu0
        %v1972 = vsel %vm745, %v1963, 0
        %v1974 = vsel %vm808, %v1899, 0
        %1976 = vmatprep.subr.bf16.mxu0 0
        %1977 = vmatpush1.bf16.msra.mxu0 %v1974
        %1978 = vmatprep.subr.bf16.mxu0 0
        %1979 = vmatpush1.bf16.msra.mxu0 0
        %1980 = vmatprep.subr.bf16.mxu0 0
        %1981 = vmatpush1.bf16.msra.mxu0 0
        %1982 = vmatprep.subr.bf16.mxu0 0
        %1983 = vmatpush1.bf16.msra.mxu0 0
        %1984 = vmatprep.subr.bf16.mxu0 0
        %1985 = vmatpush1.bf16.msra.mxu0 0
        %1986 = vmatprep.subr.bf16.mxu0 0
        %1987 = vmatpush1.bf16.msra.mxu0 0
        %1988 = vmatprep.subr.bf16.mxu0 0
        %1989 = vmatpush1.bf16.msra.mxu0 0
        %1990 = vmatprep.subr.bf16.mxu0 0
        %1991 = vmatpush1.bf16.msra.mxu0 0
        %1992 = vmatprep.subr.bf16.mxu0 0
        %1993 = vmatpush1.bf16.msra.mxu0 0
        %1994 = vmatprep.subr.bf16.mxu0 0
        %1995 = vmatpush1.bf16.msra.mxu0 0
        %1996 = vmatprep.subr.bf16.mxu0 0
        %1997 = vmatpush1.bf16.msra.mxu0 0
        %1998 = vmatprep.subr.bf16.mxu0 0
        %1999 = vmatpush1.bf16.msra.mxu0 0
        %2000 = vmatprep.subr.bf16.mxu0 0
        %2001 = vmatpush1.bf16.msra.mxu0 0
        %2002 = vmatprep.subr.bf16.mxu0 0
        %2003 = vmatpush1.bf16.msra.mxu0 0
        %2004 = vmatprep.subr.bf16.mxu0 0
        %2005 = vmatpush1.bf16.msra.mxu0 0
        %2006 = vmatprep.subr.bf16.mxu0 0
        %2007 = vmatpush1.bf16.msra.mxu0 0
        %2008 = vmatprep.mubr.bf16.mxu0 0
        %2009 = vmatmul.mubr.bf16.gmra.mrb[0].mxu0 %v1972
        %v2010 = vpop.f32.mrb[0].mxu0
        %v2011 = vadd.f32 0.0, %v2010
        %v2012 = vpop.f32.mrb[0].mxu0
        %v2013 = vpop.f32.mrb[0].mxu0
        %v2014 = vpop.f32.mrb[0].mxu0
        %2015 = vdwg.mxu0
        %v2016 = vadd.f32 %v1834, %v2011
        %2017 = vrot.lane.b32.xlu0 %v1489, 104
        %v2018 = vpop.permute.xlu0 %2017
        %2019 = vrot.lane.b32.xlu0 %v1489, 72
        %v2020 = vpop.permute.xlu0 %2019
        %v2022 = vsel %vm745, %v2018, 0
        %v2025 = vsel %vm745, %v2020, 0
        %2027 = vmatprep.subr.bf16.mxu0 0
        %2028 = vmatpush1.bf16.xpose.msra.mxu0 %v2025
        %2029 = vmatprep.subr.bf16.mxu0 0
        %2030 = vmatpush1.bf16.xpose.msra.mxu0 0
        %2031 = vmatprep.subr.bf16.mxu0 0
        %2032 = vmatpush1.bf16.xpose.msra.mxu0 0
        %2033 = vmatprep.subr.bf16.mxu0 0
        %2034 = vmatpush1.bf16.xpose.msra.mxu0 0
        %2035 = vmatprep.subr.bf16.mxu0 0
        %2036 = vmatpush1.bf16.xpose.msra.mxu0 0
        %2037 = vmatprep.subr.bf16.mxu0 0
        %2038 = vmatpush1.bf16.xpose.msra.mxu0 0
        %2039 = vmatprep.subr.bf16.mxu0 0
        %2040 = vmatpush1.bf16.xpose.msra.mxu0 0
        %2041 = vmatprep.subr.bf16.mxu0 0
        %2042 = vmatpush1.bf16.xpose.msra.mxu0 0
        %2043 = vmatprep.subr.bf16.mxu0 0
        %2044 = vmatpush1.bf16.xpose.msra.mxu0 0
        %2045 = vmatprep.subr.bf16.mxu0 0
        %2046 = vmatpush1.bf16.xpose.msra.mxu0 0
        %2047 = vmatprep.subr.bf16.mxu0 0
        %2048 = vmatpush1.bf16.xpose.msra.mxu0 0
        %2049 = vmatprep.subr.bf16.mxu0 0
        %2050 = vmatpush1.bf16.xpose.msra.mxu0 0
        %2051 = vmatprep.subr.bf16.mxu0 0
        %2052 = vmatpush1.bf16.xpose.msra.mxu0 0
        %2053 = vmatprep.subr.bf16.mxu0 0
        %2054 = vmatpush1.bf16.xpose.msra.mxu0 0
        %2055 = vmatprep.subr.bf16.mxu0 0
        %2056 = vmatpush1.bf16.xpose.msra.mxu0 0
        %2057 = vmatprep.subr.bf16.mxu0 0
        %2058 = vmatpush1.bf16.xpose.msra.mxu0 0
        %2059 = vmatprep.mubr.bf16.mxu0 0
        %2060 = vmatmul.mubr.bf16.gmra.mrb[0].mxu0 %v2022
        %v2061 = vpop.f32.mrb[0].mxu0
        %v2062 = vadd.f32 %v1488, %v2061
        %v2063 = vpop.f32.mrb[0].mxu0
        %v2064 = vpop.f32.mrb[0].mxu0
        %v2065 = vpop.f32.mrb[0].mxu0
        %2066 = vdwg.mxu0
        %v2067 = vsel %vm745, %v2062, -inf
        %2068 = vmax.xlane.f32.xlu0 %v2067
        %v2069 = vpop.xlane.xlu0 %2068
        %v2070 = vsub.f32 %v2062, %v2069
        %v2071 = vmul.f32 %v2070, 1.442695
        %v2072 = vpow.pop %v2071
        %v2073 = vsel %vm745, %v2072, 0.0
        %2074 = vadd.xlane.f32.xlu0 %v2073
        %v2075 = vpop.xlane.xlu0 %2074
        %v2076 = vrcp.pop %v2075
        %v2077 = vpack.c.bf16 %v2072, %v2072
        %2078 = vrot.lane.b32.xlu0 %v1489, 40
        %v2079 = vpop.permute.xlu0 %2078
        %v2081 = vsel %vm745, %v2077, 0
        %v2084 = vsel %vm808, %v2079, 0
        %2086 = vmatprep.subr.bf16.mxu0 0
        %2087 = vmatpush1.bf16.msra.mxu0 %v2084
        %2088 = vmatprep.subr.bf16.mxu0 0
        %2089 = vmatpush1.bf16.msra.mxu0 0
        %2090 = vmatprep.subr.bf16.mxu0 0
        %2091 = vmatpush1.bf16.msra.mxu0 0
        %2092 = vmatprep.subr.bf16.mxu0 0
        %2093 = vmatpush1.bf16.msra.mxu0 0
        %2094 = vmatprep.subr.bf16.mxu0 0
        %2095 = vmatpush1.bf16.msra.mxu0 0
        %2096 = vmatprep.subr.bf16.mxu0 0
        %2097 = vmatpush1.bf16.msra.mxu0 0
        %2098 = vmatprep.subr.bf16.mxu0 0
        %2099 = vmatpush1.bf16.msra.mxu0 0
        %2100 = vmatprep.subr.bf16.mxu0 0
        %2101 = vmatpush1.bf16.msra.mxu0 0
        %2102 = vmatprep.subr.bf16.mxu0 0
        %2103 = vmatpush1.bf16.msra.mxu0 0
        %2104 = vmatprep.subr.bf16.mxu0 0
        %2105 = vmatpush1.bf16.msra.mxu0 0
        %2106 = vmatprep.subr.bf16.mxu0 0
        %2107 = vmatpush1.bf16.msra.mxu0 0
        %2108 = vmatprep.subr.bf16.mxu0 0
        %2109 = vmatpush1.bf16.msra.mxu0 0
        %2110 = vmatprep.subr.bf16.mxu0 0
        %2111 = vmatpush1.bf16.msra.mxu0 0
        %2112 = vmatprep.subr.bf16.mxu0 0
        %2113 = vmatpush1.bf16.msra.mxu0 0
        %2114 = vmatprep.subr.bf16.mxu0 0
        %2115 = vmatpush1.bf16.msra.mxu0 0
        %2116 = vmatprep.subr.bf16.mxu0 0
        %2117 = vmatpush1.bf16.msra.mxu0 0
        %2118 = vmatprep.mubr.bf16.mxu0 0
        %2119 = vmatmul.mubr.bf16.gmra.mrb[0].mxu0 %v2081
        %v2120 = vpop.f32.mrb[0].mxu0
        %v2121 = vadd.f32 0.0, %v2120
        %v2122 = vpop.f32.mrb[0].mxu0
        %v2123 = vpop.f32.mrb[0].mxu0
        %v2124 = vpop.f32.mrb[0].mxu0
        %2125 = vdwg.mxu0
        %v2126 = vmul.f32 %v2121, %v2076
        %2128 = vrot.lane.b32.xlu0 %v2126, 24
        %v2129 = vpop.permute.xlu0 %2128
        %2131 = vst.msk [vmem:[#allocation2 + $0x8] sm:$0xff] %vm1387, %v2129
        %v2132 = vpack.c.bf16 %v2076, %v2076
        %2133 = vxpose.xlu0.c.b16.start [1/8] %v2132, 128
        %2134 = vxpose.xlu0.c.b16.cont [2/8] 0, 128
        %2135 = vxpose.xlu0.c.b16.cont [3/8] 0, 128
        %2136 = vxpose.xlu0.c.b16.cont [4/8] 0, 128
        %2137 = vxpose.xlu0.c.b16.cont [5/8] 0, 128
        %2138 = vxpose.xlu0.c.b16.cont [6/8] 0, 128
        %2139 = vxpose.xlu0.c.b16.cont [7/8] 0, 128
        %2140 = vxpose.xlu0.c.b16.end [8/8] 0, 128
        %v2141 = vpop.trf.xlu0
        %v2142 = vpop.trf.xlu0
        %v2143 = vpop.trf.xlu0
        %v2144 = vpop.trf.xlu0
        %v2145 = vpop.trf.xlu0
        %v2146 = vpop.trf.xlu0
        %v2147 = vpop.trf.xlu0
        %v2148 = vpop.trf.xlu0
        %v2150 = vsel %vm745, %v2141, 0
        %v2152 = vsel %vm808, %v2077, 0
        %2154 = vmatprep.subr.bf16.mxu0 0
        %2155 = vmatpush1.bf16.msra.mxu0 %v2152
        %2156 = vmatprep.subr.bf16.mxu0 0
        %2157 = vmatpush1.bf16.msra.mxu0 0
        %2158 = vmatprep.subr.bf16.mxu0 0
        %2159 = vmatpush1.bf16.msra.mxu0 0
        %2160 = vmatprep.subr.bf16.mxu0 0
        %2161 = vmatpush1.bf16.msra.mxu0 0
        %2162 = vmatprep.subr.bf16.mxu0 0
        %2163 = vmatpush1.bf16.msra.mxu0 0
        %2164 = vmatprep.subr.bf16.mxu0 0
        %2165 = vmatpush1.bf16.msra.mxu0 0
        %2166 = vmatprep.subr.bf16.mxu0 0
        %2167 = vmatpush1.bf16.msra.mxu0 0
        %2168 = vmatprep.subr.bf16.mxu0 0
        %2169 = vmatpush1.bf16.msra.mxu0 0
        %2170 = vmatprep.subr.bf16.mxu0 0
        %2171 = vmatpush1.bf16.msra.mxu0 0
        %2172 = vmatprep.subr.bf16.mxu0 0
        %2173 = vmatpush1.bf16.msra.mxu0 0
        %2174 = vmatprep.subr.bf16.mxu0 0
        %2175 = vmatpush1.bf16.msra.mxu0 0
        %2176 = vmatprep.subr.bf16.mxu0 0
        %2177 = vmatpush1.bf16.msra.mxu0 0
        %2178 = vmatprep.subr.bf16.mxu0 0
        %2179 = vmatpush1.bf16.msra.mxu0 0
        %2180 = vmatprep.subr.bf16.mxu0 0
        %2181 = vmatpush1.bf16.msra.mxu0 0
        %2182 = vmatprep.subr.bf16.mxu0 0
        %2183 = vmatpush1.bf16.msra.mxu0 0
        %2184 = vmatprep.subr.bf16.mxu0 0
        %2185 = vmatpush1.bf16.msra.mxu0 0
        %2186 = vmatprep.mubr.bf16.mxu0 0
        %2187 = vmatmul.mubr.bf16.gmra.mrb[0].mxu0 %v2150
        %v2188 = vpop.f32.mrb[0].mxu0
        %v2189 = vadd.f32 0.0, %v2188
        %v2190 = vpop.f32.mrb[0].mxu0
        %v2191 = vpop.f32.mrb[0].mxu0
        %v2192 = vpop.f32.mrb[0].mxu0
        %2193 = vdwg.mxu0
        %v2194 = vadd.f32 %v2016, %v2189
        %s2195 = scalar_lea.vmem %s661, 4
        %v2196 = vld [vmem:[%s2195] sm:$0xf]
        %v2197 = vmul.f32 %v2194, 0.25
        %v2198 = vlaneseq
        %v2199 = vshrl.u32 %v2198, 7
        %v2200 = vsub.s32 0, %v2199
        %v2201 = vrot.slane %v2197, %v2200
        %v2202 = vmul.f32 %v2201, %v2196
        %v2203 = vsub.f32 1.0, %v2196
        %v2204 = vmul.f32 %v2203, -1e+10
        %v2205 = vadd.f32 %v2202, %v2204
        %v2206 = vsel %vm1462, %v2205, -inf
        %2207 = vmax.xlane.f32.xlu0 %v2206
        %v2208 = vpop.xlane.xlu0 %2207
        %v2209 = vsub.f32 %v2205, %v2208
        %v2210 = vmul.f32 %v2209, 1.442695
        %v2211 = vpow.pop %v2210
        %v2212 = vsel %vm1462, %v2211, 0.0
        %2213 = vadd.xlane.f32.xlu0 %v2212
        %v2214 = vpop.xlane.xlu0 %2213
        %v2215 = vrcp.pop %v2214
        %v2216 = vmul.f32 %v2211, %v2215
        %v2217 = vmul.f32 %v2216, %v2196
        %v2218 = vsel %vm1462, %v2217, 0.0
        %v2219 = vrot.slane %v2218, 4
        %v2220 = vadd.f32 %v2218, %v2219
        %v2221 = vrot.slane %v2220, 2
        %v2222 = vadd.f32 %v2220, %v2221
        %v2223 = vrot.slane %v2222, 1
        %v2224 = vadd.f32 %v2222, %v2223
        %v2225 = vsel %vm745, %v2224, 0.0
        %s2226 = scalar_lea.vmem %s649, 1 [#allocation15]
        %2227 = vst [vmem:[%s2226] sm:$0x1] %v2225
        %v2228 = vld [vmem:[#allocation2] sm:$0xff]
        %v2229 = vld [vmem:[#allocation2 + $0x8] sm:$0xff]
        %v2230 = vpack.c.bf16 %v2229, %v2228
        %v2231 = vld [vmem:[#allocation8] sm:$0xf]
        %v2232 = vld [vmem:[#allocation8 + $0x4] sm:$0xf]
        %v2233 = vld [vmem:[#allocation8 + $0x8] sm:$0xf]
        %v2234 = vld [vmem:[#allocation8 + $0xc] sm:$0xf]
        %v2235 = vld [vmem:[%s6] sm:$0x1]
        %v2237 = vlaneseq
        %v2238 = vshrl.u32 %v2237, 7
        %v2239 = vsub.s32 0, %v2238
        %v2240 = vrot.slane %v2235, %v2239
        %v2246 = vunpack.c.l.b16 %v2231
        %v2247 = vunpack.c.l.b16 %v2232
        %v2248 = vunpack.c.l.b16 %v2233
        %v2249 = vunpack.c.l.b16 %v2234
        %v2250 = vpack.c.b16 %v2247, %v2246
        %v2251 = vpack.c.b16 %v2249, %v2248
        %v2255 = vsel %vm692, %v2230, 0
        %2257 = vmatprep.subr.bf16.mxu0 0
        %2258 = vmatpush1.bf16.msra.mxu0 %v2250
        %2259 = vmatprep.subr.bf16.mxu0 0
        %2260 = vmatpush1.bf16.msra.mxu0 %v2251
        %2261 = vmatprep.subr.bf16.mxu0 0
        %2262 = vmatpush1.bf16.msra.mxu0 0
        %2263 = vmatprep.subr.bf16.mxu0 0
        %2264 = vmatpush1.bf16.msra.mxu0 0
        %2265 = vmatprep.subr.bf16.mxu0 0
        %2266 = vmatpush1.bf16.msra.mxu0 0
        %2267 = vmatprep.subr.bf16.mxu0 0
        %2268 = vmatpush1.bf16.msra.mxu0 0
        %2269 = vmatprep.subr.bf16.mxu0 0
        %2270 = vmatpush1.bf16.msra.mxu0 0
        %2271 = vmatprep.subr.bf16.mxu0 0
        %2272 = vmatpush1.bf16.msra.mxu0 0
        %2273 = vmatprep.subr.bf16.mxu0 0
        %2274 = vmatpush1.bf16.msra.mxu0 0
        %2275 = vmatprep.subr.bf16.mxu0 0
        %2276 = vmatpush1.bf16.msra.mxu0 0
        %2277 = vmatprep.subr.bf16.mxu0 0
        %2278 = vmatpush1.bf16.msra.mxu0 0
        %2279 = vmatprep.subr.bf16.mxu0 0
        %2280 = vmatpush1.bf16.msra.mxu0 0
        %2281 = vmatprep.subr.bf16.mxu0 0
        %2282 = vmatpush1.bf16.msra.mxu0 0
        %2283 = vmatprep.subr.bf16.mxu0 0
        %2284 = vmatpush1.bf16.msra.mxu0 0
        %2285 = vmatprep.subr.bf16.mxu0 0
        %2286 = vmatpush1.bf16.msra.mxu0 0
        %2287 = vmatprep.subr.bf16.mxu0 0
        %2288 = vmatpush1.bf16.msra.mxu0 0
        %2289 = vmatprep.mubr.bf16.mxu0 0
        %2290 = vmatmul.mubr.bf16.gmra.mrb[0].mxu0 %v2255
        %v2291 = vpop.f32.mrb[0].mxu0
        %v2292 = vadd.f32 %v2240, %v2291
        %v2293 = vpop.f32.mrb[0].mxu0
        %v2294 = vpop.f32.mrb[0].mxu0
        %v2295 = vadd.f32 %v2240, %v2294
        %v2296 = vpop.f32.mrb[0].mxu0
        %2297 = vdwg.mxu0
        %v2298 = vadd.f32 %v666, %v2292
        %v2299 = vadd.f32 %v667, %v2295
        %v2300 = vsel %vm692, %v2298, 0.0
        %2301 = vadd.xlane.f32.xlu0 %v2300
        %v2302 = vpop.xlane.xlu0 %2301
        %v2303 = vsel %vm692, %v2299, 0.0
        %2304 = vadd.xlane.f32.xlu0 %v2303
        %v2305 = vpop.xlane.xlu0 %2304
        %v2306 = vrcp.pop 32.0
        %v2307 = vmul.f32 %v2302, %v2306
        %v2308 = vmul.f32 %v2305, %v2306
        %v2309 = vsub.f32 %v2298, %v2307
        %v2310 = vsub.f32 %v2299, %v2308
        %v2311 = vmul.f32 %v2309, %v2309
        %v2312 = vmul.f32 %v2310, %v2310
        %v2313 = vsel %vm692, %v2311, 0.0
        %2314 = vadd.xlane.f32.xlu0 %v2313
        %v2315 = vpop.xlane.xlu0 %2314
        %v2316 = vsel %vm692, %v2312, 0.0
        %2317 = vadd.xlane.f32.xlu0 %v2316
        %v2318 = vpop.xlane.xlu0 %2317
        %v2319 = vmul.f32 %v2315, %v2306
        %v2320 = vmul.f32 %v2318, %v2306
        %v2321 = vadd.f32 %v2319, 1e-05
        %v2322 = vadd.f32 %v2320, 1e-05
        %v2323 = vrsqrt.pop %v2321
        %v2324 = vrsqrt.pop %v2322
        %v2325 = vmul.f32 %v2309, %v2323
        %v2326 = vmul.f32 %v2310, %v2324
        %v2327 = vld [vmem:[#allocation9] sm:$0x1]
        %v2329 = vlaneseq
        %v2330 = vshrl.u32 %v2329, 7
        %v2331 = vsub.s32 0, %v2330
        %v2332 = vrot.slane %v2327, %v2331
        %v2334 = vmul.f32 %v2325, %v2332
        %v2335 = vmul.f32 %v2326, %v2332
        %v2336 = vld [vmem:[#allocation11] sm:$0x1]
        %v2338 = vlaneseq
        %v2339 = vshrl.u32 %v2338, 7
        %v2340 = vsub.s32 0, %v2339
        %v2341 = vrot.slane %v2336, %v2340
        %v2343 = vadd.f32 %v2334, %v2341
        %v2344 = vadd.f32 %v2335, %v2341
        %v2345 = vpack.c.bf16 %v2344, %v2343
        %v2346 = vld [vmem:[%s11] sm:$0xf]
        %v2347 = vld [vmem:[%s11 + $0x4] sm:$0xf]
        %v2348 = vld [vmem:[%s11 + $0x8] sm:$0xf]
        %v2349 = vld [vmem:[%s11 + $0xc] sm:$0xf]
        %v2350 = vld [vmem:[%s12] sm:$0x1]
        %v2352 = vlaneseq
        %v2353 = vshrl.u32 %v2352, 7
        %v2354 = vsub.s32 0, %v2353
        %v2355 = vrot.slane %v2350, %v2354
        %v2361 = vunpack.c.l.b16 %v2346
        %v2362 = vunpack.c.l.b16 %v2347
        %v2363 = vunpack.c.l.b16 %v2348
        %v2364 = vunpack.c.l.b16 %v2349
        %v2365 = vpack.c.b16 %v2362, %v2361
        %v2366 = vpack.c.b16 %v2364, %v2363
        %v2370 = vsel %vm692, %v2345, 0
        %2372 = vmatprep.subr.bf16.mxu0 0
        %2373 = vmatpush1.bf16.msra.mxu0 %v2365
        %2374 = vmatprep.subr.bf16.mxu0 0
        %2375 = vmatpush1.bf16.msra.mxu0 %v2366
        %2376 = vmatprep.subr.bf16.mxu0 0
        %2377 = vmatpush1.bf16.msra.mxu0 0
        %2378 = vmatprep.subr.bf16.mxu0 0
        %2379 = vmatpush1.bf16.msra.mxu0 0
        %2380 = vmatprep.subr.bf16.mxu0 0
        %2381 = vmatpush1.bf16.msra.mxu0 0
        %2382 = vmatprep.subr.bf16.mxu0 0
        %2383 = vmatpush1.bf16.msra.mxu0 0
        %2384 = vmatprep.subr.bf16.mxu0 0
        %2385 = vmatpush1.bf16.msra.mxu0 0
        %2386 = vmatprep.subr.bf16.mxu0 0
        %2387 = vmatpush1.bf16.msra.mxu0 0
        %2388 = vmatprep.subr.bf16.mxu0 0
        %2389 = vmatpush1.bf16.msra.mxu0 0
        %2390 = vmatprep.subr.bf16.mxu0 0
        %2391 = vmatpush1.bf16.msra.mxu0 0
        %2392 = vmatprep.subr.bf16.mxu0 0
        %2393 = vmatpush1.bf16.msra.mxu0 0
        %2394 = vmatprep.subr.bf16.mxu0 0
        %2395 = vmatpush1.bf16.msra.mxu0 0
        %2396 = vmatprep.subr.bf16.mxu0 0
        %2397 = vmatpush1.bf16.msra.mxu0 0
        %2398 = vmatprep.subr.bf16.mxu0 0
        %2399 = vmatpush1.bf16.msra.mxu0 0
        %2400 = vmatprep.subr.bf16.mxu0 0
        %2401 = vmatpush1.bf16.msra.mxu0 0
        %2402 = vmatprep.subr.bf16.mxu0 0
        %2403 = vmatpush1.bf16.msra.mxu0 0
        %2404 = vmatprep.mubr.bf16.mxu0 0
        %2405 = vmatmul.mubr.bf16.gmra.mrb[0].mxu0 %v2370
        %v2406 = vpop.f32.mrb[0].mxu0
        %v2407 = vadd.f32 %v2355, %v2406
        %v2408 = vpop.f32.mrb[0].mxu0
        %v2409 = vpop.f32.mrb[0].mxu0
        %v2410 = vadd.f32 %v2355, %v2409
        %v2411 = vpop.f32.mrb[0].mxu0
        %2412 = vdwg.mxu0
        %v2413 = vmax.f32 %v2407, 0.0
        %v2414 = vmax.f32 %v2410, 0.0
        %v2415 = vpack.c.bf16 %v2414, %v2413
        %v2416 = vld [vmem:[%s13] sm:$0xf]
        %v2417 = vld [vmem:[%s13 + $0x4] sm:$0xf]
        %v2418 = vld [vmem:[%s13 + $0x8] sm:$0xf]
        %v2419 = vld [vmem:[%s13 + $0xc] sm:$0xf]
        %v2420 = vld [vmem:[%s13 + $0x10] sm:$0xf]
        %v2421 = vld [vmem:[%s13 + $0x14] sm:$0xf]
        %v2422 = vld [vmem:[%s13 + $0x18] sm:$0xf]
        %v2423 = vld [vmem:[%s13 + $0x1c] sm:$0xf]
        %v2424 = vld [vmem:[%s14] sm:$0x1]
        %v2426 = vlaneseq
        %v2427 = vshrl.u32 %v2426, 7
        %v2428 = vsub.s32 0, %v2427
        %v2429 = vrot.slane %v2424, %v2428
        %v2439 = vunpack.c.l.b16 %v2416
        %v2440 = vunpack.c.l.b16 %v2417
        %v2441 = vunpack.c.l.b16 %v2418
        %v2442 = vunpack.c.l.b16 %v2419
        %v2443 = vunpack.c.l.b16 %v2420
        %v2444 = vunpack.c.l.b16 %v2421
        %v2445 = vunpack.c.l.b16 %v2422
        %v2446 = vunpack.c.l.b16 %v2423
        %v2447 = vpack.c.b16 %v2440, %v2439
        %v2448 = vpack.c.b16 %v2442, %v2441
        %v2449 = vpack.c.b16 %v2444, %v2443
        %v2450 = vpack.c.b16 %v2446, %v2445
        %vm2455 = vcmask 523264
        %v2457 = vsel %vm2455, %v2415, 0
        %2459 = vmatprep.subr.bf16.mxu0 0
        %2460 = vmatpush1.bf16.msra.mxu0 %v2447
        %2461 = vmatprep.subr.bf16.mxu0 0
        %2462 = vmatpush1.bf16.msra.mxu0 %v2448
        %2463 = vmatprep.subr.bf16.mxu0 0
        %2464 = vmatpush1.bf16.msra.mxu0 %v2449
        %2465 = vmatprep.subr.bf16.mxu0 0
        %2466 = vmatpush1.bf16.msra.mxu0 %v2450
        %2467 = vmatprep.subr.bf16.mxu0 0
        %2468 = vmatpush1.bf16.msra.mxu0 0
        %2469 = vmatprep.subr.bf16.mxu0 0
        %2470 = vmatpush1.bf16.msra.mxu0 0
        %2471 = vmatprep.subr.bf16.mxu0 0
        %2472 = vmatpush1.bf16.msra.mxu0 0
        %2473 = vmatprep.subr.bf16.mxu0 0
        %2474 = vmatpush1.bf16.msra.mxu0 0
        %2475 = vmatprep.subr.bf16.mxu0 0
        %2476 = vmatpush1.bf16.msra.mxu0 0
        %2477 = vmatprep.subr.bf16.mxu0 0
        %2478 = vmatpush1.bf16.msra.mxu0 0
        %2479 = vmatprep.subr.bf16.mxu0 0
        %2480 = vmatpush1.bf16.msra.mxu0 0
        %2481 = vmatprep.subr.bf16.mxu0 0
        %2482 = vmatpush1.bf16.msra.mxu0 0
        %2483 = vmatprep.subr.bf16.mxu0 0
        %2484 = vmatpush1.bf16.msra.mxu0 0
        %2485 = vmatprep.subr.bf16.mxu0 0
        %2486 = vmatpush1.bf16.msra.mxu0 0
        %2487 = vmatprep.subr.bf16.mxu0 0
        %2488 = vmatpush1.bf16.msra.mxu0 0
        %2489 = vmatprep.subr.bf16.mxu0 0
        %2490 = vmatpush1.bf16.msra.mxu0 0
        %2491 = vmatprep.mubr.bf16.mxu0 0
        %2492 = vmatmul.mubr.bf16.gmra.mrb[0].mxu0 %v2457
        %v2493 = vpop.f32.mrb[0].mxu0
        %v2494 = vadd.f32 %v2429, %v2493
        %v2495 = vpop.f32.mrb[0].mxu0
        %v2496 = vpop.f32.mrb[0].mxu0
        %v2497 = vadd.f32 %v2429, %v2496
        %v2498 = vpop.f32.mrb[0].mxu0
        %2499 = vdwg.mxu0
        %v2500 = vadd.f32 %v2343, %v2494
        %v2501 = vadd.f32 %v2344, %v2497
        %v2502 = vsel %vm692, %v2500, 0.0
        %2503 = vadd.xlane.f32.xlu0 %v2502
        %v2504 = vpop.xlane.xlu0 %2503
        %v2505 = vsel %vm692, %v2501, 0.0
        %2506 = vadd.xlane.f32.xlu0 %v2505
        %v2507 = vpop.xlane.xlu0 %2506
        %v2508 = vmul.f32 %v2504, %v2306
        %v2509 = vmul.f32 %v2507, %v2306
        %v2510 = vsub.f32 %v2500, %v2508
        %v2511 = vsub.f32 %v2501, %v2509
        %v2512 = vmul.f32 %v2510, %v2510
        %v2513 = vmul.f32 %v2511, %v2511
        %v2514 = vsel %vm692, %v2512, 0.0
        %2515 = vadd.xlane.f32.xlu0 %v2514
        %v2516 = vpop.xlane.xlu0 %2515
        %v2517 = vsel %vm692, %v2513, 0.0
        %2518 = vadd.xlane.f32.xlu0 %v2517
        %v2519 = vpop.xlane.xlu0 %2518
        %v2520 = vmul.f32 %v2516, %v2306
        %v2521 = vmul.f32 %v2519, %v2306
        %v2522 = vadd.f32 %v2520, 1e-05
        %v2523 = vadd.f32 %v2521, 1e-05
        %v2524 = vrsqrt.pop %v2522
        %v2525 = vrsqrt.pop %v2523
        %v2526 = vmul.f32 %v2510, %v2524
        %v2527 = vmul.f32 %v2511, %v2525
        %v2528 = vld [vmem:[#allocation12] sm:$0x1]
        %v2530 = vlaneseq
        %v2531 = vshrl.u32 %v2530, 7
        %v2532 = vsub.s32 0, %v2531
        %v2533 = vrot.slane %v2528, %v2532
        %v2535 = vmul.f32 %v2526, %v2533
        %v2536 = vmul.f32 %v2527, %v2533
        %v2537 = vld [vmem:[%s10] sm:$0x1]
        %v2539 = vlaneseq
        %v2540 = vshrl.u32 %v2539, 7
        %v2541 = vsub.s32 0, %v2540
        %v2542 = vrot.slane %v2537, %v2541
        %v2544 = vadd.f32 %v2535, %v2542
        %v2545 = vadd.f32 %v2536, %v2542
        %2546 = vst.msk [vmem:[%s642] sm:$0xff] %vm692, %v2544
        %2547 = vst.msk [vmem:[%s642 + $0x8] sm:$0xff] %vm692, %v2545
        %s2548 = sand.u32 %s378, 1
        %s2549 = scalar_lea.sflag [#allocation5], %s2548
        %s2550 = sand.u32 %s378, 1
        %s2551 = smul.addr %s2550, 16
        %s2552 = scalar_lea.vmem [#allocation14], %s2551
        %s2553 = sand.u32 %s404, 1
        %s2554 = scalar_lea.sflag [#allocation16], %s2553
        %s2555 = sand.u32 %s404, 1
        %s2556 = smul.addr %s2555, 2
        %s2557 = scalar_lea.vmem [#allocation15], %s2556
        // Predicated region
        $region105: #{tpu_custom_call.1} parent=79 // pred_check
          %p2558 = pneg %p388
        $region106: #{tpu_custom_call.1} parent=79 // pred_check_branch
          %2560 = sbr.rel (%p2558) target = $region108
        $region107: #{tpu_custom_call.1} parent=79 // pred_region
          %s2561 = smul.u32 2, %s40
          %s2563 = ssub.s32 256, 256
          %2564 = vsyncadd %s2549, %s2563
          %s2565 = smul.addr %s2561, 128
          %s2566 = scalar_lea.hbm %s15, %s2565
          %s2567 = sshll.u32 %s2552, 4
          %s2568 = int_to_ptr.vmem [resolvable:$true] %s2567
          %2573 = dma.vmem_to_hbm [thread:$0]  %s2568, 256, %s2566, %s2549, 128, 128, 8
        $region108: #{tpu_custom_call.1} parent=79 // pred_fallthru
          _
        // Predicated region
        $region109: #{tpu_custom_call.1} parent=79 // pred_check
          %p2574 = pneg %p414
        $region110: #{tpu_custom_call.1} parent=79 // pred_check_branch
          %2576 = sbr.rel (%p2574) target = $region112
        $region111: #{tpu_custom_call.1} parent=79 // pred_region
          %s2577 = smul.u32 2, %s40
          %s2579 = ssub.s32 32, 32
          %2580 = vsyncadd %s2554, %s2579
          %s2581 = smul.addr %s2577, 16
          %s2582 = scalar_lea.hbm %s16, %s2581
          %s2583 = sshll.u32 %s2557, 4
          %s2584 = int_to_ptr.vmem [resolvable:$true] %s2583
          %2589 = dma.vmem_to_hbm [thread:$0]  %s2584, 32, %s2582, %s2554, 16, 16, 1
        $region112: #{tpu_custom_call.1} parent=79 // pred_fallthru
          _
      $region80: #{tpu_custom_call.1} parent=5 // pred_fallthru
        _
      %p2590 = scmp.le.s32.totalorder 2, %s35
      // Predicated region
      $region113: #{tpu_custom_call.1} parent=5 // pred_check
        %p2591 = pneg %p2590
      $region114: #{tpu_custom_call.1} parent=5 // pred_check_branch
        %2593 = sbr.rel (%p2591) target = $region116
      $region115: #{tpu_custom_call.1} parent=5 // pred_region
        %s2594 = ssub.s32 %s35, 2
        // Predicated region
        $region117: #{tpu_custom_call.1} parent=115 // pred_check
          %p2595 = pneg %p394
        $region118: #{tpu_custom_call.1} parent=115 // pred_check_branch
          %2597 = sbr.rel (%p2595) target = $region120
        $region119: #{tpu_custom_call.1} parent=115 // pred_region
          %s2598 = sand.u32 %s379, 1
          %s2599 = scalar_lea.sflag [#allocation5], %s2598
          %s2600 = sand.u32 %s379, 1
          %s2601 = smul.addr %s2600, 16
          %s2602 = scalar_lea.vmem [#allocation14], %s2601
          %2603 = dma.done %s2599, 256
        $region120: #{tpu_custom_call.1} parent=115 // pred_fallthru
          _
        // Predicated region
        $region121: #{tpu_custom_call.1} parent=115 // pred_check
          %p2604 = pneg %p420
        $region122: #{tpu_custom_call.1} parent=115 // pred_check_branch
          %2606 = sbr.rel (%p2604) target = $region124
        $region123: #{tpu_custom_call.1} parent=115 // pred_region
          %s2607 = sand.u32 %s405, 1
          %s2608 = scalar_lea.sflag [#allocation16], %s2607
          %s2609 = sand.u32 %s405, 1
          %s2610 = smul.addr %s2609, 2
          %s2611 = scalar_lea.vmem [#allocation15], %s2610
          %2612 = dma.done %s2608, 32
        $region124: #{tpu_custom_call.1} parent=115 // pred_fallthru
          _
      $region116: #{tpu_custom_call.1} parent=5 // pred_fallthru
        _
    $region6: #{tpu_custom_call.1} parent=1 // loop_footer
      %s39 = sadd.s32 1, %s35
    $region7: #{tpu_custom_call.1} parent=1 // loop_footer_branch
      %34 = sbr.rel target = $region3
    $region8: #{tpu_custom_call.1} parent=1 // loop_exit
      _
    %2613 = vsyncpa [#allocation4], 1
    %s2614 = scalar_lea.sflag [#allocation4], 1
    %2615 = vsyncpa %s2614, 1
    %2616 = vsyncpa [#allocation7], 1
    %2617 = vsyncpa [#allocation10], 1
    %2618 = vsyncpa [#allocation13], 1
    %2619 = vsyncpa [#allocation5], 1
    %s2620 = scalar_lea.sflag [#allocation5], 1
    %2621 = vsyncpa %s2620, 1
    %2622 = vsyncpa [#allocation16], 1
    %s2623 = scalar_lea.sflag [#allocation16], 1
    %2624 = vsyncpa %s2623, 1

// kernel: tpu_custom_call.1
$region0: #{tpu_custom_call.1}
  #allocation0 [shape = 'u32[]', space=smem, size = 0x4, offset = 0x4, fixed_abs, tag = 'smem constant byte address 0x4 - core index']
  #allocation1 [shape = 'u32[144,128]{1,0:T(1,128)}', space=vmem, size = 0x12000, scoped, tag = 'internal scratch']
  #allocation2 [shape = 'f32[16,32]{1,0:T(8,128)}', space=vmem, size = 0x2000, scoped, tag = 'scratch operand']
  %s0 = inlined_call_operand.vmem [shape: f32[4,8,32], index: 0, kind: input, shape index: {}]
  %s1 = inlined_call_operand.hbm [shape: s8[4,8,8], index: 1, kind: input, shape index: {}]
  %s2 = inlined_call_operand.vmem [shape: f32[4,4,8], index: 2, kind: input, shape index: {}]
  %s3 = inlined_call_operand.hbm [shape: bf16[32,96], index: 3, kind: input, shape index: {}]
  %s4 = inlined_call_operand.vmem [shape: f32[1,96], index: 4, kind: input, shape index: {}]
  %s5 = inlined_call_operand.hbm [shape: bf16[32,32], index: 5, kind: input, shape index: {}]
  %s6 = inlined_call_operand.vmem [shape: f32[1,32], index: 6, kind: input, shape index: {}]
  %s7 = inlined_call_operand.hbm [shape: f32[1,32], index: 7, kind: input, shape index: {}]
  %s8 = inlined_call_operand.hbm [shape: f32[1,32], index: 8, kind: input, shape index: {}]
  %s9 = inlined_call_operand.hbm [shape: f32[1,32], index: 9, kind: input, shape index: {}]
  %s10 = inlined_call_operand.vmem [shape: f32[1,32], index: 10, kind: input, shape index: {}]
  %s11 = inlined_call_operand.vmem [shape: bf16[32,64], index: 11, kind: input, shape index: {}]
  %s12 = inlined_call_operand.vmem [shape: f32[1,64], index: 12, kind: input, shape index: {}]
  %s13 = inlined_call_operand.vmem [shape: bf16[64,32], index: 13, kind: input, shape index: {}]
  %s14 = inlined_call_operand.vmem [shape: f32[1,32], index: 14, kind: input, shape index: {}]
  %s15 = inlined_call_operand.hbm [shape: f32[4,8,32], index: 15, kind: output, shape index: {0}]
  %s16 = inlined_call_operand.hbm [shape: f32[4,1,128], index: 16, kind: output, shape index: {1}]
  %17 = xla_tuple %s15, %s16
  %s18 = sld [smem:[#allocation0]]
  $region125: #{tpu_custom_call.1} parent=0
    _
  %s20 = ssub.s32 1, %s18
  %s21 = scalar_select 0, %s20, %s18
  $region1: #{tpu_custom_call.1} parent=0
    #allocation3 [shape = 'u8[4096]{0}', space=vmem, size = 0x1000, scoped, tag = 'input window, operand 1']
    #allocation4 [shape = 's32[2]{0}', space=sflag, size = 0x8, scoped, tag = 'scoped memory for tpu_custom_call.1']
    #allocation5 [shape = 's32[2]{0}', space=sflag, size = 0x8, scoped, tag = 'scoped memory for tpu_custom_call.1']
    #allocation6 [shape = 'u8[8192]{0}', space=vmem, size = 0x2000, scoped, tag = 'input window, operand 3, single buffered']
    #allocation7 [shape = 's32[1]{0}', space=sflag, size = 0x4, scoped, tag = 'scoped memory for tpu_custom_call.1']
    #allocation8 [shape = 'u8[8192]{0}', space=vmem, size = 0x2000, scoped, tag = 'input window, operand 5, single buffered']
    #allocation9 [shape = 'u8[512]{0}', space=vmem, size = 0x400, scoped, tag = 'input window, operand 7, single buffered']
    #allocation10 [shape = 's32[1]{0}', space=sflag, size = 0x4, scoped, tag = 'scoped memory for tpu_custom_call.1']
    #allocation11 [shape = 'u8[512]{0}', space=vmem, size = 0x400, scoped, tag = 'input window, operand 8, single buffered']
    #allocation12 [shape = 'u8[512]{0}', space=vmem, size = 0x400, scoped, tag = 'input window, operand 9, single buffered']
    #allocation13 [shape = 's32[1]{0}', space=sflag, size = 0x4, scoped, tag = 'scoped memory for tpu_custom_call.1']
    #allocation14 [shape = 'u8[16384]{0}', space=vmem, size = 0x4000, scoped, tag = 'output window, operand 0']
    #allocation15 [shape = 'u8[2048]{0}', space=vmem, size = 0x800, scoped, tag = 'output window, operand 1']
    #allocation16 [shape = 's32[2]{0}', space=sflag, size = 0x8, scoped, tag = 'scoped memory for tpu_custom_call.1']
    %22 = vsyncpa [#allocation4], 0
    %s23 = scalar_lea.sflag [#allocation4], 1
    %24 = vsyncpa %s23, 0
    %25 = vsyncpa [#allocation7], 0
    %26 = vsyncpa [#allocation10], 0
    %27 = vsyncpa [#allocation13], 0
    %28 = vsyncpa [#allocation5], 0
    %s29 = scalar_lea.sflag [#allocation5], 1
    %30 = vsyncpa %s29, 0
    %31 = vsyncpa [#allocation16], 0
    %s32 = scalar_lea.sflag [#allocation16], 1
    %33 = vsyncpa %s32, 0
    loop: start=0, step=1, limit=4
    $region2: #{tpu_custom_call.1} parent=1 // loop_pre_header
      _
    $region3: #{tpu_custom_call.1} parent=1 // loop_header
      %s35 = sphi 0, %s39
      %p36 = scmp.ge.s32.totalorder %s35, 4
      %s45 = sphi 0, %s47
      %s48 = sphi 0, %s45
      %s49 = sphi 0, %s48
      %s65 = sphi 0, %s49
      %s71 = sphi 0, %s73
      %s74 = sphi 0, %s71
      %s75 = sphi 0, %s74
      %s91 = sphi 0, %s75
      %s97 = sphi 0, %s99
      %s100 = sphi 0, %s97
      %s101 = sphi 0, %s100
      %s117 = sphi 0, %s101
      %s121 = sphi 0, %s121
      %s123 = sphi 0, %s121
      %s124 = sphi 0, %s123
      %s138 = sphi 0, %s124
      %s142 = sphi 0, %s142
      %s144 = sphi 0, %s142
      %s145 = sphi 0, %s144
      %s159 = sphi 0, %s145
      %s163 = sphi 0, %s163
      %s165 = sphi 0, %s163
      %s166 = sphi 0, %s165
      %s180 = sphi 0, %s166
      %s184 = sphi 0, %s184
      %s186 = sphi 0, %s184
      %s187 = sphi 0, %s186
      %s201 = sphi 0, %s187
      %s205 = sphi 0, %s205
      %s207 = sphi 0, %s205
      %s208 = sphi 0, %s207
      %s222 = sphi 0, %s208
      %s226 = sphi 0, %s226
      %s228 = sphi 0, %s226
      %s229 = sphi 0, %s228
      %s243 = sphi 0, %s229
      %s247 = sphi 0, %s247
      %s249 = sphi 0, %s247
      %s250 = sphi 0, %s249
      %s264 = sphi 0, %s250
      %s268 = sphi 0, %s268
      %s270 = sphi 0, %s268
      %s271 = sphi 0, %s270
      %s285 = sphi 0, %s271
      %s289 = sphi 0, %s289
      %s291 = sphi 0, %s289
      %s292 = sphi 0, %s291
      %s306 = sphi 0, %s292
      %s310 = sphi 0, %s310
      %s312 = sphi 0, %s310
      %s313 = sphi 0, %s312
      %s327 = sphi 0, %s313
      %s331 = sphi 0, %s331
      %s333 = sphi 0, %s331
      %s334 = sphi 0, %s333
      %s348 = sphi 0, %s334
      %s352 = sphi 0, %s352
      %s354 = sphi 0, %s352
      %s355 = sphi 0, %s354
      %s369 = sphi 0, %s355
      %s375 = sphi 0, %s377
      %s378 = sphi 0, %s375
      %s379 = sphi 0, %s378
      %s395 = sphi 0, %s379
      %s401 = sphi 0, %s403
      %s404 = sphi 0, %s401
      %s405 = sphi 0, %s404
      %s421 = sphi 0, %s405
    $region4: #{tpu_custom_call.1} parent=1 // loop_header_branch
      %38 = sbr.rel (%p36) target = $region8
    $region5: #{tpu_custom_call.1} parent=1 // loop_body
      %s40 = ssub.s32 %s35, 1
      %s41 = ssub.s32 %s35, 2
      %s42 = sadd.s32 %s35, 1
      %s43 = ssub.s32 %s35, %s42
      %p44 = scmp.eq.s32.totalorder %s43, 0
      %s46 = sadd.s32 %s45, 1
      %s47 = scalar_select %p44, %s45, %s46
      %p50 = pneg %p44
      %p51 = scmp.eq.s32.totalorder %s35, 1
      %p52 = por %p50, %p51
      %p53 = scmp.ne.s32.totalorder %s45, %s48
      %p54 = scmp.eq.s32.totalorder %s35, 0
      %p55 = por %p53, %p54
      %p56 = scmp.ne.s32.totalorder %s45, %s48
      %p57 = scmp.eq.s32.totalorder %s40, 1
      %p58 = por %p56, %p57
      %p59 = scmp.ne.s32.totalorder %s48, %s49
      %p60 = scmp.eq.s32.totalorder %s40, 0
      %p61 = por %p59, %p60
      %p62 = scmp.ne.s32.totalorder %s48, %s49
      %p63 = scmp.eq.s32.totalorder %s41, 1
      %p64 = por %p62, %p63
      %p66 = scmp.ne.s32.totalorder %s49, %s65
      %p67 = scmp.eq.s32.totalorder %s41, 0
      %p68 = por %p66, %p67
      %s69 = ssub.s32 %s35, %s42
      %p70 = scmp.eq.s32.totalorder %s69, 0
      %s72 = sadd.s32 %s71, 1
      %s73 = scalar_select %p70, %s71, %s72
      %p76 = pneg %p70
      %p77 = scmp.eq.s32.totalorder %s35, 1
      %p78 = por %p76, %p77
      %p79 = scmp.ne.s32.totalorder %s71, %s74
      %p80 = scmp.eq.s32.totalorder %s35, 0
      %p81 = por %p79, %p80
      %p82 = scmp.ne.s32.totalorder %s71, %s74
      %p83 = scmp.eq.s32.totalorder %s40, 1
      %p84 = por %p82, %p83
      %p85 = scmp.ne.s32.totalorder %s74, %s75
      %p86 = scmp.eq.s32.totalorder %s40, 0
      %p87 = por %p85, %p86
      %p88 = scmp.ne.s32.totalorder %s74, %s75
      %p89 = scmp.eq.s32.totalorder %s41, 1
      %p90 = por %p88, %p89
      %p92 = scmp.ne.s32.totalorder %s75, %s91
      %p93 = scmp.eq.s32.totalorder %s41, 0
      %p94 = por %p92, %p93
      %s95 = ssub.s32 %s35, %s42
      %p96 = scmp.eq.s32.totalorder %s95, 0
      %s98 = sadd.s32 %s97, 1
      %s99 = scalar_select %p96, %s97, %s98
      %p102 = pneg %p96
      %p103 = scmp.eq.s32.totalorder %s35, 1
      %p104 = por %p102, %p103
      %p105 = scmp.ne.s32.totalorder %s97, %s100
      %p106 = scmp.eq.s32.totalorder %s35, 0
      %p107 = por %p105, %p106
      %p108 = scmp.ne.s32.totalorder %s97, %s100
      %p109 = scmp.eq.s32.totalorder %s40, 1
      %p110 = por %p108, %p109
      %p111 = scmp.ne.s32.totalorder %s100, %s101
      %p112 = scmp.eq.s32.totalorder %s40, 0
      %p113 = por %p111, %p112
      %p114 = scmp.ne.s32.totalorder %s100, %s101
      %p115 = scmp.eq.s32.totalorder %s41, 1
      %p116 = por %p114, %p115
      %p118 = scmp.ne.s32.totalorder %s101, %s117
      %p119 = scmp.eq.s32.totalorder %s41, 0
      %p120 = por %p118, %p119
      %s122 = sadd.s32 %s121, 1
      %p125 = scmp.eq.s32.totalorder %s35, 1
      %p126 = scmp.ne.s32.totalorder %s121, %s123
      %p127 = scmp.eq.s32.totalorder %s35, 0
      %p128 = por %p126, %p127
      %p129 = scmp.ne.s32.totalorder %s121, %s123
      %p130 = scmp.eq.s32.totalorder %s40, 1
      %p131 = por %p129, %p130
      %p132 = scmp.ne.s32.totalorder %s123, %s124
      %p133 = scmp.eq.s32.totalorder %s40, 0
      %p134 = por %p132, %p133
      %p135 = scmp.ne.s32.totalorder %s123, %s124
      %p136 = scmp.eq.s32.totalorder %s41, 1
      %p137 = por %p135, %p136
      %p139 = scmp.ne.s32.totalorder %s124, %s138
      %p140 = scmp.eq.s32.totalorder %s41, 0
      %p141 = por %p139, %p140
      %s143 = sadd.s32 %s142, 1
      %p146 = scmp.eq.s32.totalorder %s35, 1
      %p147 = scmp.ne.s32.totalorder %s142, %s144
      %p148 = scmp.eq.s32.totalorder %s35, 0
      %p149 = por %p147, %p148
      %p150 = scmp.ne.s32.totalorder %s142, %s144
      %p151 = scmp.eq.s32.totalorder %s40, 1
      %p152 = por %p150, %p151
      %p153 = scmp.ne.s32.totalorder %s144, %s145
      %p154 = scmp.eq.s32.totalorder %s40, 0
      %p155 = por %p153, %p154
      %p156 = scmp.ne.s32.totalorder %s144, %s145
      %p157 = scmp.eq.s32.totalorder %s41, 1
      %p158 = por %p156, %p157
      %p160 = scmp.ne.s32.totalorder %s145, %s159
      %p161 = scmp.eq.s32.totalorder %s41, 0
      %p162 = por %p160, %p161
      %s164 = sadd.s32 %s163, 1
      %p167 = scmp.eq.s32.totalorder %s35, 1
      %p168 = scmp.ne.s32.totalorder %s163, %s165
      %p169 = scmp.eq.s32.totalorder %s35, 0
      %p170 = por %p168, %p169
      %p171 = scmp.ne.s32.totalorder %s163, %s165
      %p172 = scmp.eq.s32.totalorder %s40, 1
      %p173 = por %p171, %p172
      %p174 = scmp.ne.s32.totalorder %s165, %s166
      %p175 = scmp.eq.s32.totalorder %s40, 0
      %p176 = por %p174, %p175
      %p177 = scmp.ne.s32.totalorder %s165, %s166
      %p178 = scmp.eq.s32.totalorder %s41, 1
      %p179 = por %p177, %p178
      %p181 = scmp.ne.s32.totalorder %s166, %s180
      %p182 = scmp.eq.s32.totalorder %s41, 0
      %p183 = por %p181, %p182
      %s185 = sadd.s32 %s184, 1
      %p188 = scmp.eq.s32.totalorder %s35, 1
      %p189 = scmp.ne.s32.totalorder %s184, %s186
      %p190 = scmp.eq.s32.totalorder %s35, 0
      %p191 = por %p189, %p190
      %p192 = scmp.ne.s32.totalorder %s184, %s186
      %p193 = scmp.eq.s32.totalorder %s40, 1
      %p194 = por %p192, %p193
      %p195 = scmp.ne.s32.totalorder %s186, %s187
      %p196 = scmp.eq.s32.totalorder %s40, 0
      %p197 = por %p195, %p196
      %p198 = scmp.ne.s32.totalorder %s186, %s187
      %p199 = scmp.eq.s32.totalorder %s41, 1
      %p200 = por %p198, %p199
      %p202 = scmp.ne.s32.totalorder %s187, %s201
      %p203 = scmp.eq.s32.totalorder %s41, 0
      %p204 = por %p202, %p203
      %s206 = sadd.s32 %s205, 1
      %p209 = scmp.eq.s32.totalorder %s35, 1
      %p210 = scmp.ne.s32.totalorder %s205, %s207
      %p211 = scmp.eq.s32.totalorder %s35, 0
      %p212 = por %p210, %p211
      %p213 = scmp.ne.s32.totalorder %s205, %s207
      %p214 = scmp.eq.s32.totalorder %s40, 1
      %p215 = por %p213, %p214
      %p216 = scmp.ne.s32.totalorder %s207, %s208
      %p217 = scmp.eq.s32.totalorder %s40, 0
      %p218 = por %p216, %p217
      %p219 = scmp.ne.s32.totalorder %s207, %s208
      %p220 = scmp.eq.s32.totalorder %s41, 1
      %p221 = por %p219, %p220
      %p223 = scmp.ne.s32.totalorder %s208, %s222
      %p224 = scmp.eq.s32.totalorder %s41, 0
      %p225 = por %p223, %p224
      %s227 = sadd.s32 %s226, 1
      %p230 = scmp.eq.s32.totalorder %s35, 1
      %p231 = scmp.ne.s32.totalorder %s226, %s228
      %p232 = scmp.eq.s32.totalorder %s35, 0
      %p233 = por %p231, %p232
      %p234 = scmp.ne.s32.totalorder %s226, %s228
      %p235 = scmp.eq.s32.totalorder %s40, 1
      %p236 = por %p234, %p235
      %p237 = scmp.ne.s32.totalorder %s228, %s229
      %p238 = scmp.eq.s32.totalorder %s40, 0
      %p239 = por %p237, %p238
      %p240 = scmp.ne.s32.totalorder %s228, %s229
      %p241 = scmp.eq.s32.totalorder %s41, 1
      %p242 = por %p240, %p241
      %p244 = scmp.ne.s32.totalorder %s229, %s243
      %p245 = scmp.eq.s32.totalorder %s41, 0
      %p246 = por %p244, %p245
      %s248 = sadd.s32 %s247, 1
      %p251 = scmp.eq.s32.totalorder %s35, 1
      %p252 = scmp.ne.s32.totalorder %s247, %s249
      %p253 = scmp.eq.s32.totalorder %s35, 0
      %p254 = por %p252, %p253
      %p255 = scmp.ne.s32.totalorder %s247, %s249
      %p256 = scmp.eq.s32.totalorder %s40, 1
      %p257 = por %p255, %p256
      %p258 = scmp.ne.s32.totalorder %s249, %s250
      %p259 = scmp.eq.s32.totalorder %s40, 0
      %p260 = por %p258, %p259
      %p261 = scmp.ne.s32.totalorder %s249, %s250
      %p262 = scmp.eq.s32.totalorder %s41, 1
      %p263 = por %p261, %p262
      %p265 = scmp.ne.s32.totalorder %s250, %s264
      %p266 = scmp.eq.s32.totalorder %s41, 0
      %p267 = por %p265, %p266
      %s269 = sadd.s32 %s268, 1
      %p272 = scmp.eq.s32.totalorder %s35, 1
      %p273 = scmp.ne.s32.totalorder %s268, %s270
      %p274 = scmp.eq.s32.totalorder %s35, 0
      %p275 = por %p273, %p274
      %p276 = scmp.ne.s32.totalorder %s268, %s270
      %p277 = scmp.eq.s32.totalorder %s40, 1
      %p278 = por %p276, %p277
      %p279 = scmp.ne.s32.totalorder %s270, %s271
      %p280 = scmp.eq.s32.totalorder %s40, 0
      %p281 = por %p279, %p280
      %p282 = scmp.ne.s32.totalorder %s270, %s271
      %p283 = scmp.eq.s32.totalorder %s41, 1
      %p284 = por %p282, %p283
      %p286 = scmp.ne.s32.totalorder %s271, %s285
      %p287 = scmp.eq.s32.totalorder %s41, 0
      %p288 = por %p286, %p287
      %s290 = sadd.s32 %s289, 1
      %p293 = scmp.eq.s32.totalorder %s35, 1
      %p294 = scmp.ne.s32.totalorder %s289, %s291
      %p295 = scmp.eq.s32.totalorder %s35, 0
      %p296 = por %p294, %p295
      %p297 = scmp.ne.s32.totalorder %s289, %s291
      %p298 = scmp.eq.s32.totalorder %s40, 1
      %p299 = por %p297, %p298
      %p300 = scmp.ne.s32.totalorder %s291, %s292
      %p301 = scmp.eq.s32.totalorder %s40, 0
      %p302 = por %p300, %p301
      %p303 = scmp.ne.s32.totalorder %s291, %s292
      %p304 = scmp.eq.s32.totalorder %s41, 1
      %p305 = por %p303, %p304
      %p307 = scmp.ne.s32.totalorder %s292, %s306
      %p308 = scmp.eq.s32.totalorder %s41, 0
      %p309 = por %p307, %p308
      %s311 = sadd.s32 %s310, 1
      %p314 = scmp.eq.s32.totalorder %s35, 1
      %p315 = scmp.ne.s32.totalorder %s310, %s312
      %p316 = scmp.eq.s32.totalorder %s35, 0
      %p317 = por %p315, %p316
      %p318 = scmp.ne.s32.totalorder %s310, %s312
      %p319 = scmp.eq.s32.totalorder %s40, 1
      %p320 = por %p318, %p319
      %p321 = scmp.ne.s32.totalorder %s312, %s313
      %p322 = scmp.eq.s32.totalorder %s40, 0
      %p323 = por %p321, %p322
      %p324 = scmp.ne.s32.totalorder %s312, %s313
      %p325 = scmp.eq.s32.totalorder %s41, 1
      %p326 = por %p324, %p325
      %p328 = scmp.ne.s32.totalorder %s313, %s327
      %p329 = scmp.eq.s32.totalorder %s41, 0
      %p330 = por %p328, %p329
      %s332 = sadd.s32 %s331, 1
      %p335 = scmp.eq.s32.totalorder %s35, 1
      %p336 = scmp.ne.s32.totalorder %s331, %s333
      %p337 = scmp.eq.s32.totalorder %s35, 0
      %p338 = por %p336, %p337
      %p339 = scmp.ne.s32.totalorder %s331, %s333
      %p340 = scmp.eq.s32.totalorder %s40, 1
      %p341 = por %p339, %p340
      %p342 = scmp.ne.s32.totalorder %s333, %s334
      %p343 = scmp.eq.s32.totalorder %s40, 0
      %p344 = por %p342, %p343
      %p345 = scmp.ne.s32.totalorder %s333, %s334
      %p346 = scmp.eq.s32.totalorder %s41, 1
      %p347 = por %p345, %p346
      %p349 = scmp.ne.s32.totalorder %s334, %s348
      %p350 = scmp.eq.s32.totalorder %s41, 0
      %p351 = por %p349, %p350
      %s353 = sadd.s32 %s352, 1
      %p356 = scmp.eq.s32.totalorder %s35, 1
      %p357 = scmp.ne.s32.totalorder %s352, %s354
      %p358 = scmp.eq.s32.totalorder %s35, 0
      %p359 = por %p357, %p358
      %p360 = scmp.ne.s32.totalorder %s352, %s354
      %p361 = scmp.eq.s32.totalorder %s40, 1
      %p362 = por %p360, %p361
      %p363 = scmp.ne.s32.totalorder %s354, %s355
      %p364 = scmp.eq.s32.totalorder %s40, 0
      %p365 = por %p363, %p364
      %p366 = scmp.ne.s32.totalorder %s354, %s355
      %p367 = scmp.eq.s32.totalorder %s41, 1
      %p368 = por %p366, %p367
      %p370 = scmp.ne.s32.totalorder %s355, %s369
      %p371 = scmp.eq.s32.totalorder %s41, 0
      %p372 = por %p370, %p371
      %s373 = ssub.s32 %s35, %s42
      %p374 = scmp.eq.s32.totalorder %s373, 0
      %s376 = sadd.s32 %s375, 1
      %s377 = scalar_select %p374, %s375, %s376
      %p380 = pneg %p374
      %p381 = scmp.eq.s32.totalorder %s35, 1
      %p382 = por %p380, %p381
      %p383 = scmp.ne.s32.totalorder %s375, %s378
      %p384 = scmp.eq.s32.totalorder %s35, 0
      %p385 = por %p383, %p384
      %p386 = scmp.ne.s32.totalorder %s375, %s378
      %p387 = scmp.eq.s32.totalorder %s40, 1
      %p388 = por %p386, %p387
      %p389 = scmp.ne.s32.totalorder %s378, %s379
      %p390 = scmp.eq.s32.totalorder %s40, 0
      %p391 = por %p389, %p390
      %p392 = scmp.ne.s32.totalorder %s378, %s379
      %p393 = scmp.eq.s32.totalorder %s41, 1
      %p394 = por %p392, %p393
      %p396 = scmp.ne.s32.totalorder %s379, %s395
      %p397 = scmp.eq.s32.totalorder %s41, 0
      %p398 = por %p396, %p397
      %s399 = ssub.s32 %s35, %s42
      %p400 = scmp.eq.s32.totalorder %s399, 0
      %s402 = sadd.s32 %s401, 1
      %s403 = scalar_select %p400, %s401, %s402
      %p406 = pneg %p400
      %p407 = scmp.eq.s32.totalorder %s35, 1
      %p408 = por %p406, %p407
      %p409 = scmp.ne.s32.totalorder %s401, %s404
      %p410 = scmp.eq.s32.totalorder %s35, 0
      %p411 = por %p409, %p410
      %p412 = scmp.ne.s32.totalorder %s401, %s404
      %p413 = scmp.eq.s32.totalorder %s40, 1
      %p414 = por %p412, %p413
      %p415 = scmp.ne.s32.totalorder %s404, %s405
      %p416 = scmp.eq.s32.totalorder %s40, 0
      %p417 = por %p415, %p416
      %p418 = scmp.ne.s32.totalorder %s404, %s405
      %p419 = scmp.eq.s32.totalorder %s41, 1
      %p420 = por %p418, %p419
      %p422 = scmp.ne.s32.totalorder %s405, %s421
      %p423 = scmp.eq.s32.totalorder %s41, 0
      %p424 = por %p422, %p423
      %p425 = scmp.le.s32.totalorder 1, %s35
      %p426 = scmp.lt.s32.totalorder %s35, 3
      %p427 = pnand %p425, %p426
      %p428 = pneg %p427
      // Predicated region
      $region9: #{tpu_custom_call.1} parent=5 // pred_check
        _
      $region10: #{tpu_custom_call.1} parent=5 // pred_check_branch
        %430 = sbr.rel (%p427) target = $region12
      $region11: #{tpu_custom_call.1} parent=5 // pred_region
        %s431 = ssub.s32 %s35, 1
        // Predicated region
        $region13: #{tpu_custom_call.1} parent=11 // pred_check
          %p432 = pneg %p134
        $region14: #{tpu_custom_call.1} parent=11 // pred_check_branch
          %434 = sbr.rel (%p432) target = $region16
        $region15: #{tpu_custom_call.1} parent=11 // pred_region
          %s436 = ssub.s32 256, 256
          %437 = vsyncadd [#allocation7], %s436
          %s438 = sshll.u32 [#allocation6], 4
          %s439 = int_to_ptr.vmem [resolvable:$true] %s438
          %444 = dma.hbm_to_vmem [thread:$0]  %s3, 256, %s439, [#allocation7], 64, 64, 4
        $region16: #{tpu_custom_call.1} parent=11 // pred_fallthru
          _
        // Predicated region
        $region17: #{tpu_custom_call.1} parent=11 // pred_check
          %p445 = pneg %p155
        $region18: #{tpu_custom_call.1} parent=11 // pred_check_branch
          %447 = sbr.rel (%p445) target = $region20
        $region19: #{tpu_custom_call.1} parent=11 // pred_region
          _
        $region20: #{tpu_custom_call.1} parent=11 // pred_fallthru
          _
        // Predicated region
        $region21: #{tpu_custom_call.1} parent=11 // pred_check
          %p448 = pneg %p176
        $region22: #{tpu_custom_call.1} parent=11 // pred_check_branch
          %450 = sbr.rel (%p448) target = $region24
        $region23: #{tpu_custom_call.1} parent=11 // pred_region
          %s452 = ssub.s32 256, 256
          %453 = vsyncadd [#allocation7], %s452
          %s454 = sshll.u32 [#allocation8], 4
          %s455 = int_to_ptr.vmem [resolvable:$true] %s454
          %460 = dma.hbm_to_vmem [thread:$0]  %s5, 256, %s455, [#allocation7], 64, 64, 4
        $region24: #{tpu_custom_call.1} parent=11 // pred_fallthru
          _
        // Predicated region
        $region25: #{tpu_custom_call.1} parent=11 // pred_check
          %p461 = pneg %p197
        $region26: #{tpu_custom_call.1} parent=11 // pred_check_branch
          %463 = sbr.rel (%p461) target = $region28
        $region27: #{tpu_custom_call.1} parent=11 // pred_region
          _
        $region28: #{tpu_custom_call.1} parent=11 // pred_fallthru
          _
        // Predicated region
        $region29: #{tpu_custom_call.1} parent=11 // pred_check
          %p464 = pneg %p218
        $region30: #{tpu_custom_call.1} parent=11 // pred_check_branch
          %466 = sbr.rel (%p464) target = $region32
        $region31: #{tpu_custom_call.1} parent=11 // pred_region
          %s468 = ssub.s32 16, 16
          %469 = vsyncadd [#allocation10], %s468
          %s471 = sshll.u32 [#allocation9], 4
          %s472 = int_to_ptr.vmem [resolvable:$true] %s471
          %474 = dma.hbm_to_vmem [thread:$0]  %s7, 16, %s472, [#allocation10]
        $region32: #{tpu_custom_call.1} parent=11 // pred_fallthru
          _
        // Predicated region
        $region33: #{tpu_custom_call.1} parent=11 // pred_check
          %p475 = pneg %p239
        $region34: #{tpu_custom_call.1} parent=11 // pred_check_branch
          %477 = sbr.rel (%p475) target = $region36
        $region35: #{tpu_custom_call.1} parent=11 // pred_region
          %s479 = ssub.s32 16, 16
          %480 = vsyncadd [#allocation10], %s479
          %s482 = sshll.u32 [#allocation11], 4
          %s483 = int_to_ptr.vmem [resolvable:$true] %s482
          %485 = dma.hbm_to_vmem [thread:$0]  %s8, 16, %s483, [#allocation10]
        $region36: #{tpu_custom_call.1} parent=11 // pred_fallthru
          _
        // Predicated region
        $region37: #{tpu_custom_call.1} parent=11 // pred_check
          %p486 = pneg %p260
        $region38: #{tpu_custom_call.1} parent=11 // pred_check_branch
          %488 = sbr.rel (%p486) target = $region40
        $region39: #{tpu_custom_call.1} parent=11 // pred_region
          %s490 = ssub.s32 16, 16
          %491 = vsyncadd [#allocation13], %s490
          %s493 = sshll.u32 [#allocation12], 4
          %s494 = int_to_ptr.vmem [resolvable:$true] %s493
          %496 = dma.hbm_to_vmem [thread:$0]  %s9, 16, %s494, [#allocation13]
        $region40: #{tpu_custom_call.1} parent=11 // pred_fallthru
          _
        // Predicated region
        $region41: #{tpu_custom_call.1} parent=11 // pred_check
          %p497 = pneg %p281
        $region42: #{tpu_custom_call.1} parent=11 // pred_check_branch
          %499 = sbr.rel (%p497) target = $region44
        $region43: #{tpu_custom_call.1} parent=11 // pred_region
          _
        $region44: #{tpu_custom_call.1} parent=11 // pred_fallthru
          _
        // Predicated region
        $region45: #{tpu_custom_call.1} parent=11 // pred_check
          %p500 = pneg %p302
        $region46: #{tpu_custom_call.1} parent=11 // pred_check_branch
          %502 = sbr.rel (%p500) target = $region48
        $region47: #{tpu_custom_call.1} parent=11 // pred_region
          _
        $region48: #{tpu_custom_call.1} parent=11 // pred_fallthru
          _
        // Predicated region
        $region49: #{tpu_custom_call.1} parent=11 // pred_check
          %p503 = pneg %p323
        $region50: #{tpu_custom_call.1} parent=11 // pred_check_branch
          %505 = sbr.rel (%p503) target = $region52
        $region51: #{tpu_custom_call.1} parent=11 // pred_region
          _
        $region52: #{tpu_custom_call.1} parent=11 // pred_fallthru
          _
        // Predicated region
        $region53: #{tpu_custom_call.1} parent=11 // pred_check
          %p506 = pneg %p344
        $region54: #{tpu_custom_call.1} parent=11 // pred_check_branch
          %508 = sbr.rel (%p506) target = $region56
        $region55: #{tpu_custom_call.1} parent=11 // pred_region
          _
        $region56: #{tpu_custom_call.1} parent=11 // pred_fallthru
          _
        // Predicated region
        $region57: #{tpu_custom_call.1} parent=11 // pred_check
          %p509 = pneg %p365
        $region58: #{tpu_custom_call.1} parent=11 // pred_check_branch
          %511 = sbr.rel (%p509) target = $region60
        $region59: #{tpu_custom_call.1} parent=11 // pred_region
          _
        $region60: #{tpu_custom_call.1} parent=11 // pred_fallthru
          _
      $region12: #{tpu_custom_call.1} parent=5 // pred_fallthru
        _
      %p512 = scmp.lt.s32.totalorder %s35, 2
      // Predicated region
      $region61: #{tpu_custom_call.1} parent=5 // pred_check
        %p513 = pneg %p512
      $region62: #{tpu_custom_call.1} parent=5 // pred_check_branch
        %515 = sbr.rel (%p513) target = $region64
      $region63: #{tpu_custom_call.1} parent=5 // pred_region
        // Predicated region
        $region65: #{tpu_custom_call.1} parent=63 // pred_check
          %p516 = pneg %p55
        $region66: #{tpu_custom_call.1} parent=63 // pred_check_branch
          %518 = sbr.rel (%p516) target = $region68
        $region67: #{tpu_custom_call.1} parent=63 // pred_region
          %s519 = smul.u32 2, %s35
          %p520 = scmp.lt.s32.totalorder %s519, 3
          %s521 = scalar_select %p520, %s519, 3
          %s522 = smul.addr %s521, 8
          %s523 = scalar_lea.vmem %s0, %s522
          %s524 = smul.u32 2, %s35
        $region68: #{tpu_custom_call.1} parent=63 // pred_fallthru
          _
        // Predicated region
        $region69: #{tpu_custom_call.1} parent=63 // pred_check
          %p525 = pneg %p81
        $region70: #{tpu_custom_call.1} parent=63 // pred_check_branch
          %527 = sbr.rel (%p525) target = $region72
        $region71: #{tpu_custom_call.1} parent=63 // pred_region
          %s528 = sand.u32 %s71, 1
          %s529 = scalar_lea.sflag [#allocation4], %s528
          %s530 = sand.u32 %s71, 1
          %s531 = smul.addr %s530, 4
          %s532 = scalar_lea.vmem [#allocation3], %s531
          %s533 = smul.u32 2, %s35
          %s535 = ssub.s32 64, 64
          %536 = vsyncadd %s529, %s535
          %s537 = smul.addr %s533, 32
          %s538 = scalar_lea.hbm %s1, %s537
          %s539 = sshll.u32 %s532, 4
          %s540 = int_to_ptr.vmem [resolvable:$true] %s539
          %545 = dma.hbm_to_vmem [thread:$0]  %s538, 64, %s540, %s529, 32, 32, 2
        $region72: #{tpu_custom_call.1} parent=63 // pred_fallthru
          _
        // Predicated region
        $region73: #{tpu_custom_call.1} parent=63 // pred_check
          %p546 = pneg %p107
        $region74: #{tpu_custom_call.1} parent=63 // pred_check_branch
          %548 = sbr.rel (%p546) target = $region76
        $region75: #{tpu_custom_call.1} parent=63 // pred_region
          %s549 = smul.u32 2, %s35
          %p550 = scmp.lt.s32.totalorder %s549, 3
          %s551 = scalar_select %p550, %s549, 3
          %s552 = smul.addr %s551, 4
          %s553 = scalar_lea.vmem %s2, %s552
          %s554 = smul.u32 2, %s35
        $region76: #{tpu_custom_call.1} parent=63 // pred_fallthru
          _
      $region64: #{tpu_custom_call.1} parent=5 // pred_fallthru
        _
      %p555 = scmp.le.s32.totalorder 1, %s35
      %p556 = scmp.lt.s32.totalorder %s35, 3
      %p557 = pnand %p555, %p556
      %p558 = pneg %p557
      // Predicated region
      $region77: #{tpu_custom_call.1} parent=5 // pred_check
        _
      $region78: #{tpu_custom_call.1} parent=5 // pred_check_branch
        %560 = sbr.rel (%p557) target = $region80
      $region79: #{tpu_custom_call.1} parent=5 // pred_region
        %s561 = ssub.s32 %s35, 1
        %s562 = sand.u32 %s74, 1
        %s563 = scalar_lea.sflag [#allocation4], %s562
        %s564 = sand.u32 %s74, 1
        %s565 = smul.addr %s564, 4
        %s566 = scalar_lea.vmem [#allocation3], %s565
        // Predicated region
        $region81: #{tpu_custom_call.1} parent=79 // pred_check
          %p567 = pneg %p87
        $region82: #{tpu_custom_call.1} parent=79 // pred_check_branch
          %569 = sbr.rel (%p567) target = $region84
        $region83: #{tpu_custom_call.1} parent=79 // pred_region
          %570 = dma.done %s563, 64
        $region84: #{tpu_custom_call.1} parent=79 // pred_fallthru
          _
        // Predicated region
        $region85: #{tpu_custom_call.1} parent=79 // pred_check
          %p571 = pneg %p134
        $region86: #{tpu_custom_call.1} parent=79 // pred_check_branch
          %573 = sbr.rel (%p571) target = $region88
        $region87: #{tpu_custom_call.1} parent=79 // pred_region
          %574 = dma.done [#allocation7], 256
        $region88: #{tpu_custom_call.1} parent=79 // pred_fallthru
          _
        // Predicated region
        $region89: #{tpu_custom_call.1} parent=79 // pred_check
          %p575 = pneg %p176
        $region90: #{tpu_custom_call.1} parent=79 // pred_check_branch
          %577 = sbr.rel (%p575) target = $region92
        $region91: #{tpu_custom_call.1} parent=79 // pred_region
          %578 = dma.done [#allocation7], 256
        $region92: #{tpu_custom_call.1} parent=79 // pred_fallthru
          _
        // Predicated region
        $region93: #{tpu_custom_call.1} parent=79 // pred_check
          %p579 = pneg %p218
        $region94: #{tpu_custom_call.1} parent=79 // pred_check_branch
          %581 = sbr.rel (%p579) target = $region96
        $region95: #{tpu_custom_call.1} parent=79 // pred_region
          %582 = dma.done [#allocation10], 16
        $region96: #{tpu_custom_call.1} parent=79 // pred_fallthru
          _
        // Predicated region
        $region97: #{tpu_custom_call.1} parent=79 // pred_check
          %p583 = pneg %p239
        $region98: #{tpu_custom_call.1} parent=79 // pred_check_branch
          %585 = sbr.rel (%p583) target = $region100
        $region99: #{tpu_custom_call.1} parent=79 // pred_region
          %586 = dma.done [#allocation10], 16
        $region100: #{tpu_custom_call.1} parent=79 // pred_fallthru
          _
        // Predicated region
        $region101: #{tpu_custom_call.1} parent=79 // pred_check
          %p587 = pneg %p260
        $region102: #{tpu_custom_call.1} parent=79 // pred_check_branch
          %589 = sbr.rel (%p587) target = $region104
        $region103: #{tpu_custom_call.1} parent=79 // pred_region
          %590 = dma.done [#allocation13], 16
        $region104: #{tpu_custom_call.1} parent=79 // pred_fallthru
          _
        %s591 = smul.u32 2, %s40
        %p592 = scmp.lt.s32.totalorder %s591, 3
        %s593 = scalar_select %p592, %s591, 3
        %s594 = smul.addr %s593, 8
        %s595 = scalar_lea.vmem %s0, %s594
        %p596 = pneg %p61
        %p597 = pneg %p58
        %s598 = sand.u32 %s74, 1
        %s599 = scalar_lea.sflag [#allocation4], %s598
        %s600 = sand.u32 %s74, 1
        %s601 = smul.addr %s600, 4
        %s602 = scalar_lea.vmem [#allocation3], %s601
        %p603 = pneg %p87
        %p604 = pneg %p84
        %s605 = smul.u32 2, %s40
        %p606 = scmp.lt.s32.totalorder %s605, 3
        %s607 = scalar_select %p606, %s605, 3
        %s608 = smul.addr %s607, 4
        %s609 = scalar_lea.vmem %s2, %s608
        %p610 = pneg %p113
        %p611 = pneg %p110
        %p612 = pneg %p134
        %p613 = pneg %p131
        %p614 = pneg %p155
        %p615 = pneg %p152
        %p616 = pneg %p176
        %p617 = pneg %p173
        %p618 = pneg %p197
        %p619 = pneg %p194
        %p620 = pneg %p218
        %p621 = pneg %p215
        %p622 = pneg %p239
        %p623 = pneg %p236
        %p624 = pneg %p260
        %p625 = pneg %p257
        %p626 = pneg %p281
        %p627 = pneg %p278
        %p628 = pneg %p302
        %p629 = pneg %p299
        %p630 = pneg %p323
        %p631 = pneg %p320
        %p632 = pneg %p344
        %p633 = pneg %p341
        %p634 = pneg %p365
        %p635 = pneg %p362
        %p636 = pneg %p391
        %p637 = pneg %p388
        %s638 = sand.u32 %s378, 1
        %s639 = scalar_lea.sflag [#allocation5], %s638
        %s640 = sand.u32 %s378, 1
        %s641 = smul.addr %s640, 16
        %s642 = scalar_lea.vmem [#allocation14], %s641
        %p643 = pneg %p417
        %p644 = pneg %p414
        %s645 = sand.u32 %s404, 1
        %s646 = scalar_lea.sflag [#allocation16], %s645
        %s647 = sand.u32 %s404, 1
        %s648 = smul.addr %s647, 2
        %s649 = scalar_lea.vmem [#allocation15], %s648
        %s650 = smul.u32 2, %s40
        %p651 = scmp.lt.s32.totalorder %s650, 3
        %s652 = scalar_select %p651, %s650, 3
        %s653 = smul.addr %s652, 8
        %s654 = scalar_lea.vmem %s0, %s653
        %s655 = smul.u32 2, %s40
        %s656 = smul.u32 2, %s40
        %s657 = smul.u32 2, %s40
        %p658 = scmp.lt.s32.totalorder %s657, 3
        %s659 = scalar_select %p658, %s657, 3
        %s660 = smul.addr %s659, 4
        %s661 = scalar_lea.vmem %s2, %s660
        %s662 = smul.u32 2, %s40
        %s663 = smul.u32 2, %s40
        %s664 = smul.u32 2, %s40
        %v666 = vld [vmem:[%s654] sm:$0xff]
        %v667 = vld [vmem:[%s654 + $0x8] sm:$0xff]
        %v668 = vpack.c.bf16 %v667, %v666
        %v669 = vld [vmem:[#allocation6] sm:$0xf]
        %v670 = vld [vmem:[#allocation6 + $0x4] sm:$0xf]
        %v671 = vld [vmem:[#allocation6 + $0x8] sm:$0xf]
        %v672 = vld [vmem:[#allocation6 + $0xc] sm:$0xf]
        %v673 = vld [vmem:[%s4] sm:$0x1]
        %v675 = vlaneseq
        %v676 = vshrl.u32 %v675, 7
        %v677 = vsub.s32 0, %v676
        %v678 = vrot.slane %v673, %v677
        %v684 = vunpack.c.l.b16 %v669
        %v685 = vunpack.c.l.b16 %v670
        %v686 = vunpack.c.l.b16 %v671
        %v687 = vunpack.c.l.b16 %v672
        %v688 = vpack.c.b16 %v685, %v684
        %v689 = vpack.c.b16 %v687, %v686
        %vm692 = vcmask 261120
        %v694 = vsel %vm692, %v668, 0
        %696 = vmatprep.subr.bf16.mxu0 0
        %697 = vmatpush1.bf16.msra.mxu0 %v688
        %698 = vmatprep.subr.bf16.mxu0 0
        %699 = vmatpush1.bf16.msra.mxu0 %v689
        %700 = vmatprep.subr.bf16.mxu0 0
        %701 = vmatpush1.bf16.msra.mxu0 0
        %702 = vmatprep.subr.bf16.mxu0 0
        %703 = vmatpush1.bf16.msra.mxu0 0
        %704 = vmatprep.subr.bf16.mxu0 0
        %705 = vmatpush1.bf16.msra.mxu0 0
        %706 = vmatprep.subr.bf16.mxu0 0
        %707 = vmatpush1.bf16.msra.mxu0 0
        %708 = vmatprep.subr.bf16.mxu0 0
        %709 = vmatpush1.bf16.msra.mxu0 0
        %710 = vmatprep.subr.bf16.mxu0 0
        %711 = vmatpush1.bf16.msra.mxu0 0
        %712 = vmatprep.subr.bf16.mxu0 0
        %713 = vmatpush1.bf16.msra.mxu0 0
        %714 = vmatprep.subr.bf16.mxu0 0
        %715 = vmatpush1.bf16.msra.mxu0 0
        %716 = vmatprep.subr.bf16.mxu0 0
        %717 = vmatpush1.bf16.msra.mxu0 0
        %718 = vmatprep.subr.bf16.mxu0 0
        %719 = vmatpush1.bf16.msra.mxu0 0
        %720 = vmatprep.subr.bf16.mxu0 0
        %721 = vmatpush1.bf16.msra.mxu0 0
        %722 = vmatprep.subr.bf16.mxu0 0
        %723 = vmatpush1.bf16.msra.mxu0 0
        %724 = vmatprep.subr.bf16.mxu0 0
        %725 = vmatpush1.bf16.msra.mxu0 0
        %726 = vmatprep.subr.bf16.mxu0 0
        %727 = vmatpush1.bf16.msra.mxu0 0
        %728 = vmatprep.mubr.bf16.mxu0 0
        %729 = vmatmul.mubr.bf16.gmra.mrb[0].mxu0 %v694
        %v730 = vpop.f32.mrb[0].mxu0
        %v731 = vadd.f32 %v678, %v730
        %v732 = vpop.f32.mrb[0].mxu0
        %v733 = vpop.f32.mrb[0].mxu0
        %v734 = vadd.f32 %v678, %v733
        %v735 = vpop.f32.mrb[0].mxu0
        %736 = vdwg.mxu0
        %v737 = vld [vmem:[%s566] sm:$0x3]
        %v738 = vunpack.c.0.s8 %v737
        %v739 = vcvt.s32.f32 %v738
        %v740 = vmul.f32 %v739, -1e+09
        %v741 = vpack.c.bf16 %v731, %v731
        %743 = vrot.lane.b32.xlu0 %v741, 96
        %v744 = vpop.permute.xlu0 %743
        %vm745 = vcmask 64512
        %v747 = vsel %vm745, %v741, 0
        %v750 = vsel %vm745, %v744, 0
        %752 = vmatprep.subr.bf16.mxu0 0
        %753 = vmatpush1.bf16.xpose.msra.mxu0 %v750
        %754 = vmatprep.subr.bf16.mxu0 0
        %755 = vmatpush1.bf16.xpose.msra.mxu0 0
        %756 = vmatprep.subr.bf16.mxu0 0
        %757 = vmatpush1.bf16.xpose.msra.mxu0 0
        %758 = vmatprep.subr.bf16.mxu0 0
        %759 = vmatpush1.bf16.xpose.msra.mxu0 0
        %760 = vmatprep.subr.bf16.mxu0 0
        %761 = vmatpush1.bf16.xpose.msra.mxu0 0
        %762 = vmatprep.subr.bf16.mxu0 0
        %763 = vmatpush1.bf16.xpose.msra.mxu0 0
        %764 = vmatprep.subr.bf16.mxu0 0
        %765 = vmatpush1.bf16.xpose.msra.mxu0 0
        %766 = vmatprep.subr.bf16.mxu0 0
        %767 = vmatpush1.bf16.xpose.msra.mxu0 0
        %768 = vmatprep.subr.bf16.mxu0 0
        %769 = vmatpush1.bf16.xpose.msra.mxu0 0
        %770 = vmatprep.subr.bf16.mxu0 0
        %771 = vmatpush1.bf16.xpose.msra.mxu0 0
        %772 = vmatprep.subr.bf16.mxu0 0
        %773 = vmatpush1.bf16.xpose.msra.mxu0 0
        %774 = vmatprep.subr.bf16.mxu0 0
        %775 = vmatpush1.bf16.xpose.msra.mxu0 0
        %776 = vmatprep.subr.bf16.mxu0 0
        %777 = vmatpush1.bf16.xpose.msra.mxu0 0
        %778 = vmatprep.subr.bf16.mxu0 0
        %779 = vmatpush1.bf16.xpose.msra.mxu0 0
        %780 = vmatprep.subr.bf16.mxu0 0
        %781 = vmatpush1.bf16.xpose.msra.mxu0 0
        %782 = vmatprep.subr.bf16.mxu0 0
        %783 = vmatpush1.bf16.xpose.msra.mxu0 0
        %784 = vmatprep.mubr.bf16.mxu0 0
        %785 = vmatmul.mubr.bf16.gmra.mrb[0].mxu0 %v747
        %v786 = vpop.f32.mrb[0].mxu0
        %v787 = vadd.f32 %v740, %v786
        %v788 = vpop.f32.mrb[0].mxu0
        %v789 = vpop.f32.mrb[0].mxu0
        %v790 = vpop.f32.mrb[0].mxu0
        %791 = vdwg.mxu0
        %v792 = vsel %vm745, %v787, -inf
        %793 = vmax.xlane.f32.xlu0 %v792
        %v794 = vpop.xlane.xlu0 %793
        %v795 = vsub.f32 %v787, %v794
        %v796 = vmul.f32 %v795, 1.442695
        %v797 = vpow.pop %v796
        %v798 = vsel %vm745, %v797, 0.0
        %799 = vadd.xlane.f32.xlu0 %v798
        %v800 = vpop.xlane.xlu0 %799
        %v801 = vrcp.pop %v800
        %v802 = vpack.c.bf16 %v797, %v797
        %803 = vrot.lane.b32.xlu0 %v741, 64
        %v804 = vpop.permute.xlu0 %803
        %v806 = vsel %vm745, %v802, 0
        %vm808 = vcmask 1043456
        %v810 = vsel %vm808, %v804, 0
        %812 = vmatprep.subr.bf16.mxu0 0
        %813 = vmatpush1.bf16.msra.mxu0 %v810
        %814 = vmatprep.subr.bf16.mxu0 0
        %815 = vmatpush1.bf16.msra.mxu0 0
        %816 = vmatprep.subr.bf16.mxu0 0
        %817 = vmatpush1.bf16.msra.mxu0 0
        %818 = vmatprep.subr.bf16.mxu0 0
        %819 = vmatpush1.bf16.msra.mxu0 0
        %820 = vmatprep.subr.bf16.mxu0 0
        %821 = vmatpush1.bf16.msra.mxu0 0
        %822 = vmatprep.subr.bf16.mxu0 0
        %823 = vmatpush1.bf16.msra.mxu0 0
        %824 = vmatprep.subr.bf16.mxu0 0
        %825 = vmatpush1.bf16.msra.mxu0 0
        %826 = vmatprep.subr.bf16.mxu0 0
        %827 = vmatpush1.bf16.msra.mxu0 0
        %828 = vmatprep.subr.bf16.mxu0 0
        %829 = vmatpush1.bf16.msra.mxu0 0
        %830 = vmatprep.subr.bf16.mxu0 0
        %831 = vmatpush1.bf16.msra.mxu0 0
        %832 = vmatprep.subr.bf16.mxu0 0
        %833 = vmatpush1.bf16.msra.mxu0 0
        %834 = vmatprep.subr.bf16.mxu0 0
        %835 = vmatpush1.bf16.msra.mxu0 0
        %836 = vmatprep.subr.bf16.mxu0 0
        %837 = vmatpush1.bf16.msra.mxu0 0
        %838 = vmatprep.subr.bf16.mxu0 0
        %839 = vmatpush1.bf16.msra.mxu0 0
        %840 = vmatprep.subr.bf16.mxu0 0
        %841 = vmatpush1.bf16.msra.mxu0 0
        %842 = vmatprep.subr.bf16.mxu0 0
        %843 = vmatpush1.bf16.msra.mxu0 0
        %844 = vmatprep.mubr.bf16.mxu0 0
        %845 = vmatmul.mubr.bf16.gmra.mrb[0].mxu0 %v806
        %v846 = vpop.f32.mrb[0].mxu0
        %v847 = vadd.f32 0.0, %v846
        %v848 = vpop.f32.mrb[0].mxu0
        %v849 = vpop.f32.mrb[0].mxu0
        %v850 = vpop.f32.mrb[0].mxu0
        %851 = vdwg.mxu0
        %v852 = vmul.f32 %v847, %v801
        %853 = vst.msk [vmem:[#allocation2] sm:$0xff] %vm745, %v852
        %v854 = vpack.c.bf16 %v801, %v801
        %855 = vrot.lane.b32.xlu0 %v741, 120
        %v856 = vpop.permute.xlu0 %855
        %857 = vrot.lane.b32.xlu0 %v741, 88
        %v858 = vpop.permute.xlu0 %857
        %v860 = vsel %vm745, %v856, 0
        %v863 = vsel %vm745, %v858, 0
        %865 = vmatprep.subr.bf16.mxu0 0
        %866 = vmatpush1.bf16.xpose.msra.mxu0 %v863
        %867 = vmatprep.subr.bf16.mxu0 0
        %868 = vmatpush1.bf16.xpose.msra.mxu0 0
        %869 = vmatprep.subr.bf16.mxu0 0
        %870 = vmatpush1.bf16.xpose.msra.mxu0 0
        %871 = vmatprep.subr.bf16.mxu0 0
        %872 = vmatpush1.bf16.xpose.msra.mxu0 0
        %873 = vmatprep.subr.bf16.mxu0 0
        %874 = vmatpush1.bf16.xpose.msra.mxu0 0
        %875 = vmatprep.subr.bf16.mxu0 0
        %876 = vmatpush1.bf16.xpose.msra.mxu0 0
        %877 = vmatprep.subr.bf16.mxu0 0
        %878 = vmatpush1.bf16.xpose.msra.mxu0 0
        %879 = vmatprep.subr.bf16.mxu0 0
        %880 = vmatpush1.bf16.xpose.msra.mxu0 0
        %881 = vmatprep.subr.bf16.mxu0 0
        %882 = vmatpush1.bf16.xpose.msra.mxu0 0
        %883 = vmatprep.subr.bf16.mxu0 0
        %884 = vmatpush1.bf16.xpose.msra.mxu0 0
        %885 = vmatprep.subr.bf16.mxu0 0
        %886 = vmatpush1.bf16.xpose.msra.mxu0 0
        %887 = vmatprep.subr.bf16.mxu0 0
        %888 = vmatpush1.bf16.xpose.msra.mxu0 0
        %889 = vmatprep.subr.bf16.mxu0 0
        %890 = vmatpush1.bf16.xpose.msra.mxu0 0
        %891 = vmatprep.subr.bf16.mxu0 0
        %892 = vmatpush1.bf16.xpose.msra.mxu0 0
        %893 = vmatprep.subr.bf16.mxu0 0
        %894 = vmatpush1.bf16.xpose.msra.mxu0 0
        %895 = vmatprep.subr.bf16.mxu0 0
        %896 = vmatpush1.bf16.xpose.msra.mxu0 0
        %897 = vmatprep.mubr.bf16.mxu0 0
        %898 = vmatmul.mubr.bf16.gmra.mrb[0].mxu0 %v860
        %v899 = vpop.f32.mrb[0].mxu0
        %v900 = vadd.f32 %v740, %v899
        %v901 = vpop.f32.mrb[0].mxu0
        %v902 = vpop.f32.mrb[0].mxu0
        %v903 = vpop.f32.mrb[0].mxu0
        %904 = vdwg.mxu0
        %v905 = vsel %vm745, %v900, -inf
        %906 = vmax.xlane.f32.xlu0 %v905
        %v907 = vpop.xlane.xlu0 %906
        %v908 = vsub.f32 %v900, %v907
        %v909 = vmul.f32 %v908, 1.442695
        %v910 = vpow.pop %v909
        %v911 = vsel %vm745, %v910, 0.0
        %912 = vadd.xlane.f32.xlu0 %v911
        %v913 = vpop.xlane.xlu0 %912
        %v914 = vrcp.pop %v913
        %v915 = vpack.c.bf16 %v910, %v910
        %916 = vrot.lane.b32.xlu0 %v741, 56
        %v917 = vpop.permute.xlu0 %916
        %v919 = vsel %vm745, %v915, 0
        %v922 = vsel %vm808, %v917, 0
        %924 = vmatprep.subr.bf16.mxu0 0
        %925 = vmatpush1.bf16.msra.mxu0 %v922
        %926 = vmatprep.subr.bf16.mxu0 0
        %927 = vmatpush1.bf16.msra.mxu0 0
        %928 = vmatprep.subr.bf16.mxu0 0
        %929 = vmatpush1.bf16.msra.mxu0 0
        %930 = vmatprep.subr.bf16.mxu0 0
        %931 = vmatpush1.bf16.msra.mxu0 0
        %932 = vmatprep.subr.bf16.mxu0 0
        %933 = vmatpush1.bf16.msra.mxu0 0
        %934 = vmatprep.subr.bf16.mxu0 0
        %935 = vmatpush1.bf16.msra.mxu0 0
        %936 = vmatprep.subr.bf16.mxu0 0
        %937 = vmatpush1.bf16.msra.mxu0 0
        %938 = vmatprep.subr.bf16.mxu0 0
        %939 = vmatpush1.bf16.msra.mxu0 0
        %940 = vmatprep.subr.bf16.mxu0 0
        %941 = vmatpush1.bf16.msra.mxu0 0
        %942 = vmatprep.subr.bf16.mxu0 0
        %943 = vmatpush1.bf16.msra.mxu0 0
        %944 = vmatprep.subr.bf16.mxu0 0
        %945 = vmatpush1.bf16.msra.mxu0 0
        %946 = vmatprep.subr.bf16.mxu0 0
        %947 = vmatpush1.bf16.msra.mxu0 0
        %948 = vmatprep.subr.bf16.mxu0 0
        %949 = vmatpush1.bf16.msra.mxu0 0
        %950 = vmatprep.subr.bf16.mxu0 0
        %951 = vmatpush1.bf16.msra.mxu0 0
        %952 = vmatprep.subr.bf16.mxu0 0
        %953 = vmatpush1.bf16.msra.mxu0 0
        %954 = vmatprep.subr.bf16.mxu0 0
        %955 = vmatpush1.bf16.msra.mxu0 0
        %956 = vmatprep.mubr.bf16.mxu0 0
        %957 = vmatmul.mubr.bf16.gmra.mrb[0].mxu0 %v919
        %v958 = vpop.f32.mrb[0].mxu0
        %v959 = vadd.f32 0.0, %v958
        %v960 = vpop.f32.mrb[0].mxu0
        %v961 = vpop.f32.mrb[0].mxu0
        %v962 = vpop.f32.mrb[0].mxu0
        %963 = vdwg.mxu0
        %v964 = vmul.f32 %v959, %v914
        %966 = vrot.lane.b32.xlu0 %v964, 8
        %v967 = vpop.permute.xlu0 %966
        %vm969 = vcmask 130112
        %970 = vst.msk [vmem:[#allocation2] sm:$0xff] %vm969, %v967
        %v971 = vpack.c.bf16 %v914, %v914
        %972 = vxpose.xlu0.c.b16.start [1/8] %v971, 128
        %973 = vxpose.xlu0.c.b16.cont [2/8] 0, 128
        %974 = vxpose.xlu0.c.b16.cont [3/8] 0, 128
        %975 = vxpose.xlu0.c.b16.cont [4/8] 0, 128
        %976 = vxpose.xlu0.c.b16.cont [5/8] 0, 128
        %977 = vxpose.xlu0.c.b16.cont [6/8] 0, 128
        %978 = vxpose.xlu0.c.b16.cont [7/8] 0, 128
        %979 = vxpose.xlu0.c.b16.end [8/8] 0, 128
        %v980 = vpop.trf.xlu0
        %v981 = vpop.trf.xlu0
        %v982 = vpop.trf.xlu0
        %v983 = vpop.trf.xlu0
        %v984 = vpop.trf.xlu0
        %v985 = vpop.trf.xlu0
        %v986 = vpop.trf.xlu0
        %v987 = vpop.trf.xlu0
        %v989 = vsel %vm745, %v980, 0
        %v991 = vsel %vm808, %v915, 0
        %993 = vmatprep.subr.bf16.mxu0 0
        %994 = vmatpush1.bf16.msra.mxu0 %v991
        %995 = vmatprep.subr.bf16.mxu0 0
        %996 = vmatpush1.bf16.msra.mxu0 0
        %997 = vmatprep.subr.bf16.mxu0 0
        %998 = vmatpush1.bf16.msra.mxu0 0
        %999 = vmatprep.subr.bf16.mxu0 0
        %1000 = vmatpush1.bf16.msra.mxu0 0
        %1001 = vmatprep.subr.bf16.mxu0 0
        %1002 = vmatpush1.bf16.msra.mxu0 0
        %1003 = vmatprep.subr.bf16.mxu0 0
        %1004 = vmatpush1.bf16.msra.mxu0 0
        %1005 = vmatprep.subr.bf16.mxu0 0
        %1006 = vmatpush1.bf16.msra.mxu0 0
        %1007 = vmatprep.subr.bf16.mxu0 0
        %1008 = vmatpush1.bf16.msra.mxu0 0
        %1009 = vmatprep.subr.bf16.mxu0 0
        %1010 = vmatpush1.bf16.msra.mxu0 0
        %1011 = vmatprep.subr.bf16.mxu0 0
        %1012 = vmatpush1.bf16.msra.mxu0 0
        %1013 = vmatprep.subr.bf16.mxu0 0
        %1014 = vmatpush1.bf16.msra.mxu0 0
        %1015 = vmatprep.subr.bf16.mxu0 0
        %1016 = vmatpush1.bf16.msra.mxu0 0
        %1017 = vmatprep.subr.bf16.mxu0 0
        %1018 = vmatpush1.bf16.msra.mxu0 0
        %1019 = vmatprep.subr.bf16.mxu0 0
        %1020 = vmatpush1.bf16.msra.mxu0 0
        %1021 = vmatprep.subr.bf16.mxu0 0
        %1022 = vmatpush1.bf16.msra.mxu0 0
        %1023 = vmatprep.subr.bf16.mxu0 0
        %1024 = vmatpush1.bf16.msra.mxu0 0
        %1025 = vmatprep.mubr.bf16.mxu0 0
        %1026 = vmatmul.mubr.bf16.gmra.mrb[0].mxu0 %v989
        %v1027 = vpop.f32.mrb[0].mxu0
        %v1028 = vadd.f32 0.0, %v1027
        %v1029 = vpop.f32.mrb[0].mxu0
        %v1030 = vpop.f32.mrb[0].mxu0
        %v1031 = vpop.f32.mrb[0].mxu0
        %1032 = vdwg.mxu0
        %1033 = vxpose.xlu0.c.b16.start [1/8] %v854, 128
        %1034 = vxpose.xlu0.c.b16.cont [2/8] 0, 128
        %1035 = vxpose.xlu0.c.b16.cont [3/8] 0, 128
        %1036 = vxpose.xlu0.c.b16.cont [4/8] 0, 128
        %1037 = vxpose.xlu0.c.b16.cont [5/8] 0, 128
        %1038 = vxpose.xlu0.c.b16.cont [6/8] 0, 128
        %1039 = vxpose.xlu0.c.b16.cont [7/8] 0, 128
        %1040 = vxpose.xlu0.c.b16.end [8/8] 0, 128
        %v1041 = vpop.trf.xlu0
        %v1042 = vpop.trf.xlu0
        %v1043 = vpop.trf.xlu0
        %v1044 = vpop.trf.xlu0
        %v1045 = vpop.trf.xlu0
        %v1046 = vpop.trf.xlu0
        %v1047 = vpop.trf.xlu0
        %v1048 = vpop.trf.xlu0
        %v1050 = vsel %vm745, %v1041, 0
        %v1052 = vsel %vm808, %v802, 0
        %1054 = vmatprep.subr.bf16.mxu0 0
        %1055 = vmatpush1.bf16.msra.mxu0 %v1052
        %1056 = vmatprep.subr.bf16.mxu0 0
        %1057 = vmatpush1.bf16.msra.mxu0 0
        %1058 = vmatprep.subr.bf16.mxu0 0
        %1059 = vmatpush1.bf16.msra.mxu0 0
        %1060 = vmatprep.subr.bf16.mxu0 0
        %1061 = vmatpush1.bf16.msra.mxu0 0
        %1062 = vmatprep.subr.bf16.mxu0 0
        %1063 = vmatpush1.bf16.msra.mxu0 0
        %1064 = vmatprep.subr.bf16.mxu0 0
        %1065 = vmatpush1.bf16.msra.mxu0 0
        %1066 = vmatprep.subr.bf16.mxu0 0
        %1067 = vmatpush1.bf16.msra.mxu0 0
        %1068 = vmatprep.subr.bf16.mxu0 0
        %1069 = vmatpush1.bf16.msra.mxu0 0
        %1070 = vmatprep.subr.bf16.mxu0 0
        %1071 = vmatpush1.bf16.msra.mxu0 0
        %1072 = vmatprep.subr.bf16.mxu0 0
        %1073 = vmatpush1.bf16.msra.mxu0 0
        %1074 = vmatprep.subr.bf16.mxu0 0
        %1075 = vmatpush1.bf16.msra.mxu0 0
        %1076 = vmatprep.subr.bf16.mxu0 0
        %1077 = vmatpush1.bf16.msra.mxu0 0
        %1078 = vmatprep.subr.bf16.mxu0 0
        %1079 = vmatpush1.bf16.msra.mxu0 0
        %1080 = vmatprep.subr.bf16.mxu0 0
        %1081 = vmatpush1.bf16.msra.mxu0 0
        %1082 = vmatprep.subr.bf16.mxu0 0
        %1083 = vmatpush1.bf16.msra.mxu0 0
        %1084 = vmatprep.subr.bf16.mxu0 0
        %1085 = vmatpush1.bf16.msra.mxu0 0
        %1086 = vmatprep.mubr.bf16.mxu0 0
        %1087 = vmatmul.mubr.bf16.gmra.mrb[0].mxu0 %v1050
        %v1088 = vpop.f32.mrb[0].mxu0
        %v1089 = vadd.f32 %v1028, %v1088
        %v1090 = vpop.f32.mrb[0].mxu0
        %v1091 = vpop.f32.mrb[0].mxu0
        %v1092 = vpop.f32.mrb[0].mxu0
        %1093 = vdwg.mxu0
        %1094 = vrot.lane.b32.xlu0 %v741, 112
        %v1095 = vpop.permute.xlu0 %1094
        %1096 = vrot.lane.b32.xlu0 %v741, 80
        %v1097 = vpop.permute.xlu0 %1096
        %v1099 = vsel %vm745, %v1095, 0
        %v1102 = vsel %vm745, %v1097, 0
        %1104 = vmatprep.subr.bf16.mxu0 0
        %1105 = vmatpush1.bf16.xpose.msra.mxu0 %v1102
        %1106 = vmatprep.subr.bf16.mxu0 0
        %1107 = vmatpush1.bf16.xpose.msra.mxu0 0
        %1108 = vmatprep.subr.bf16.mxu0 0
        %1109 = vmatpush1.bf16.xpose.msra.mxu0 0
        %1110 = vmatprep.subr.bf16.mxu0 0
        %1111 = vmatpush1.bf16.xpose.msra.mxu0 0
        %1112 = vmatprep.subr.bf16.mxu0 0
        %1113 = vmatpush1.bf16.xpose.msra.mxu0 0
        %1114 = vmatprep.subr.bf16.mxu0 0
        %1115 = vmatpush1.bf16.xpose.msra.mxu0 0
        %1116 = vmatprep.subr.bf16.mxu0 0
        %1117 = vmatpush1.bf16.xpose.msra.mxu0 0
        %1118 = vmatprep.subr.bf16.mxu0 0
        %1119 = vmatpush1.bf16.xpose.msra.mxu0 0
        %1120 = vmatprep.subr.bf16.mxu0 0
        %1121 = vmatpush1.bf16.xpose.msra.mxu0 0
        %1122 = vmatprep.subr.bf16.mxu0 0
        %1123 = vmatpush1.bf16.xpose.msra.mxu0 0
        %1124 = vmatprep.subr.bf16.mxu0 0
        %1125 = vmatpush1.bf16.xpose.msra.mxu0 0
        %1126 = vmatprep.subr.bf16.mxu0 0
        %1127 = vmatpush1.bf16.xpose.msra.mxu0 0
        %1128 = vmatprep.subr.bf16.mxu0 0
        %1129 = vmatpush1.bf16.xpose.msra.mxu0 0
        %1130 = vmatprep.subr.bf16.mxu0 0
        %1131 = vmatpush1.bf16.xpose.msra.mxu0 0
        %1132 = vmatprep.subr.bf16.mxu0 0
        %1133 = vmatpush1.bf16.xpose.msra.mxu0 0
        %1134 = vmatprep.subr.bf16.mxu0 0
        %1135 = vmatpush1.bf16.xpose.msra.mxu0 0
        %1136 = vmatprep.mubr.bf16.mxu0 0
        %1137 = vmatmul.mubr.bf16.gmra.mrb[0].mxu0 %v1099
        %v1138 = vpop.f32.mrb[0].mxu0
        %v1139 = vadd.f32 %v740, %v1138
        %v1140 = vpop.f32.mrb[0].mxu0
        %v1141 = vpop.f32.mrb[0].mxu0
        %v1142 = vpop.f32.mrb[0].mxu0
        %1143 = vdwg.mxu0
        %v1144 = vsel %vm745, %v1139, -inf
        %1145 = vmax.xlane.f32.xlu0 %v1144
        %v1146 = vpop.xlane.xlu0 %1145
        %v1147 = vsub.f32 %v1139, %v1146
        %v1148 = vmul.f32 %v1147, 1.442695
        %v1149 = vpow.pop %v1148
        %v1150 = vsel %vm745, %v1149, 0.0
        %1151 = vadd.xlane.f32.xlu0 %v1150
        %v1152 = vpop.xlane.xlu0 %1151
        %v1153 = vrcp.pop %v1152
        %v1154 = vpack.c.bf16 %v1149, %v1149
        %1155 = vrot.lane.b32.xlu0 %v741, 48
        %v1156 = vpop.permute.xlu0 %1155
        %v1158 = vsel %vm745, %v1154, 0
        %v1161 = vsel %vm808, %v1156, 0
        %1163 = vmatprep.subr.bf16.mxu0 0
        %1164 = vmatpush1.bf16.msra.mxu0 %v1161
        %1165 = vmatprep.subr.bf16.mxu0 0
        %1166 = vmatpush1.bf16.msra.mxu0 0
        %1167 = vmatprep.subr.bf16.mxu0 0
        %1168 = vmatpush1.bf16.msra.mxu0 0
        %1169 = vmatprep.subr.bf16.mxu0 0
        %1170 = vmatpush1.bf16.msra.mxu0 0
        %1171 = vmatprep.subr.bf16.mxu0 0
        %1172 = vmatpush1.bf16.msra.mxu0 0
        %1173 = vmatprep.subr.bf16.mxu0 0
        %1174 = vmatpush1.bf16.msra.mxu0 0
        %1175 = vmatprep.subr.bf16.mxu0 0
        %1176 = vmatpush1.bf16.msra.mxu0 0
        %1177 = vmatprep.subr.bf16.mxu0 0
        %1178 = vmatpush1.bf16.msra.mxu0 0
        %1179 = vmatprep.subr.bf16.mxu0 0
        %1180 = vmatpush1.bf16.msra.mxu0 0
        %1181 = vmatprep.subr.bf16.mxu0 0
        %1182 = vmatpush1.bf16.msra.mxu0 0
        %1183 = vmatprep.subr.bf16.mxu0 0
        %1184 = vmatpush1.bf16.msra.mxu0 0
        %1185 = vmatprep.subr.bf16.mxu0 0
        %1186 = vmatpush1.bf16.msra.mxu0 0
        %1187 = vmatprep.subr.bf16.mxu0 0
        %1188 = vmatpush1.bf16.msra.mxu0 0
        %1189 = vmatprep.subr.bf16.mxu0 0
        %1190 = vmatpush1.bf16.msra.mxu0 0
        %1191 = vmatprep.subr.bf16.mxu0 0
        %1192 = vmatpush1.bf16.msra.mxu0 0
        %1193 = vmatprep.subr.bf16.mxu0 0
        %1194 = vmatpush1.bf16.msra.mxu0 0
        %1195 = vmatprep.mubr.bf16.mxu0 0
        %1196 = vmatmul.mubr.bf16.gmra.mrb[0].mxu0 %v1158
        %v1197 = vpop.f32.mrb[0].mxu0
        %v1198 = vadd.f32 0.0, %v1197
        %v1199 = vpop.f32.mrb[0].mxu0
        %v1200 = vpop.f32.mrb[0].mxu0
        %v1201 = vpop.f32.mrb[0].mxu0
        %1202 = vdwg.mxu0
        %v1203 = vmul.f32 %v1198, %v1153
        %1205 = vrot.lane.b32.xlu0 %v1203, 16
        %v1206 = vpop.permute.xlu0 %1205
        %vm1208 = vcmask 195712
        %1209 = vst.msk [vmem:[#allocation2] sm:$0xff] %vm1208, %v1206
        %v1210 = vpack.c.bf16 %v1153, %v1153
        %1211 = vxpose.xlu0.c.b16.start [1/8] %v1210, 128
        %1212 = vxpose.xlu0.c.b16.cont [2/8] 0, 128
        %1213 = vxpose.xlu0.c.b16.cont [3/8] 0, 128
        %1214 = vxpose.xlu0.c.b16.cont [4/8] 0, 128
        %1215 = vxpose.xlu0.c.b16.cont [5/8] 0, 128
        %1216 = vxpose.xlu0.c.b16.cont [6/8] 0, 128
        %1217 = vxpose.xlu0.c.b16.cont [7/8] 0, 128
        %1218 = vxpose.xlu0.c.b16.end [8/8] 0, 128
        %v1219 = vpop.trf.xlu0
        %v1220 = vpop.trf.xlu0
        %v1221 = vpop.trf.xlu0
        %v1222 = vpop.trf.xlu0
        %v1223 = vpop.trf.xlu0
        %v1224 = vpop.trf.xlu0
        %v1225 = vpop.trf.xlu0
        %v1226 = vpop.trf.xlu0
        %v1228 = vsel %vm745, %v1219, 0
        %v1230 = vsel %vm808, %v1154, 0
        %1232 = vmatprep.subr.bf16.mxu0 0
        %1233 = vmatpush1.bf16.msra.mxu0 %v1230
        %1234 = vmatprep.subr.bf16.mxu0 0
        %1235 = vmatpush1.bf16.msra.mxu0 0
        %1236 = vmatprep.subr.bf16.mxu0 0
        %1237 = vmatpush1.bf16.msra.mxu0 0
        %1238 = vmatprep.subr.bf16.mxu0 0
        %1239 = vmatpush1.bf16.msra.mxu0 0
        %1240 = vmatprep.subr.bf16.mxu0 0
        %1241 = vmatpush1.bf16.msra.mxu0 0
        %1242 = vmatprep.subr.bf16.mxu0 0
        %1243 = vmatpush1.bf16.msra.mxu0 0
        %1244 = vmatprep.subr.bf16.mxu0 0
        %1245 = vmatpush1.bf16.msra.mxu0 0
        %1246 = vmatprep.subr.bf16.mxu0 0
        %1247 = vmatpush1.bf16.msra.mxu0 0
        %1248 = vmatprep.subr.bf16.mxu0 0
        %1249 = vmatpush1.bf16.msra.mxu0 0
        %1250 = vmatprep.subr.bf16.mxu0 0
        %1251 = vmatpush1.bf16.msra.mxu0 0
        %1252 = vmatprep.subr.bf16.mxu0 0
        %1253 = vmatpush1.bf16.msra.mxu0 0
        %1254 = vmatprep.subr.bf16.mxu0 0
        %1255 = vmatpush1.bf16.msra.mxu0 0
        %1256 = vmatprep.subr.bf16.mxu0 0
        %1257 = vmatpush1.bf16.msra.mxu0 0
        %1258 = vmatprep.subr.bf16.mxu0 0
        %1259 = vmatpush1.bf16.msra.mxu0 0
        %1260 = vmatprep.subr.bf16.mxu0 0
        %1261 = vmatpush1.bf16.msra.mxu0 0
        %1262 = vmatprep.subr.bf16.mxu0 0
        %1263 = vmatpush1.bf16.msra.mxu0 0
        %1264 = vmatprep.mubr.bf16.mxu0 0
        %1265 = vmatmul.mubr.bf16.gmra.mrb[0].mxu0 %v1228
        %v1266 = vpop.f32.mrb[0].mxu0
        %v1267 = vadd.f32 0.0, %v1266
        %v1268 = vpop.f32.mrb[0].mxu0
        %v1269 = vpop.f32.mrb[0].mxu0
        %v1270 = vpop.f32.mrb[0].mxu0
        %1271 = vdwg.mxu0
        %v1272 = vadd.f32 %v1089, %v1267
        %1273 = vrot.lane.b32.xlu0 %v741, 104
        %v1274 = vpop.permute.xlu0 %1273
        %1275 = vrot.lane.b32.xlu0 %v741, 72
        %v1276 = vpop.permute.xlu0 %1275
        %v1278 = vsel %vm745, %v1274, 0
        %v1281 = vsel %vm745, %v1276, 0
        %1283 = vmatprep.subr.bf16.mxu0 0
        %1284 = vmatpush1.bf16.xpose.msra.mxu0 %v1281
        %1285 = vmatprep.subr.bf16.mxu0 0
        %1286 = vmatpush1.bf16.xpose.msra.mxu0 0
        %1287 = vmatprep.subr.bf16.mxu0 0
        %1288 = vmatpush1.bf16.xpose.msra.mxu0 0
        %1289 = vmatprep.subr.bf16.mxu0 0
        %1290 = vmatpush1.bf16.xpose.msra.mxu0 0
        %1291 = vmatprep.subr.bf16.mxu0 0
        %1292 = vmatpush1.bf16.xpose.msra.mxu0 0
        %1293 = vmatprep.subr.bf16.mxu0 0
        %1294 = vmatpush1.bf16.xpose.msra.mxu0 0
        %1295 = vmatprep.subr.bf16.mxu0 0
        %1296 = vmatpush1.bf16.xpose.msra.mxu0 0
        %1297 = vmatprep.subr.bf16.mxu0 0
        %1298 = vmatpush1.bf16.xpose.msra.mxu0 0
        %1299 = vmatprep.subr.bf16.mxu0 0
        %1300 = vmatpush1.bf16.xpose.msra.mxu0 0
        %1301 = vmatprep.subr.bf16.mxu0 0
        %1302 = vmatpush1.bf16.xpose.msra.mxu0 0
        %1303 = vmatprep.subr.bf16.mxu0 0
        %1304 = vmatpush1.bf16.xpose.msra.mxu0 0
        %1305 = vmatprep.subr.bf16.mxu0 0
        %1306 = vmatpush1.bf16.xpose.msra.mxu0 0
        %1307 = vmatprep.subr.bf16.mxu0 0
        %1308 = vmatpush1.bf16.xpose.msra.mxu0 0
        %1309 = vmatprep.subr.bf16.mxu0 0
        %1310 = vmatpush1.bf16.xpose.msra.mxu0 0
        %1311 = vmatprep.subr.bf16.mxu0 0
        %1312 = vmatpush1.bf16.xpose.msra.mxu0 0
        %1313 = vmatprep.subr.bf16.mxu0 0
        %1314 = vmatpush1.bf16.xpose.msra.mxu0 0
        %1315 = vmatprep.mubr.bf16.mxu0 0
        %1316 = vmatmul.mubr.bf16.gmra.mrb[0].mxu0 %v1278
        %v1317 = vpop.f32.mrb[0].mxu0
        %v1318 = vadd.f32 %v740, %v1317
        %v1319 = vpop.f32.mrb[0].mxu0
        %v1320 = vpop.f32.mrb[0].mxu0
        %v1321 = vpop.f32.mrb[0].mxu0
        %1322 = vdwg.mxu0
        %v1323 = vsel %vm745, %v1318, -inf
        %1324 = vmax.xlane.f32.xlu0 %v1323
        %v1325 = vpop.xlane.xlu0 %1324
        %v1326 = vsub.f32 %v1318, %v1325
        %v1327 = vmul.f32 %v1326, 1.442695
        %v1328 = vpow.pop %v1327
        %v1329 = vsel %vm745, %v1328, 0.0
        %1330 = vadd.xlane.f32.xlu0 %v1329
        %v1331 = vpop.xlane.xlu0 %1330
        %v1332 = vrcp.pop %v1331
        %v1333 = vpack.c.bf16 %v1328, %v1328
        %1334 = vrot.lane.b32.xlu0 %v741, 40
        %v1335 = vpop.permute.xlu0 %1334
        %v1337 = vsel %vm745, %v1333, 0
        %v1340 = vsel %vm808, %v1335, 0
        %1342 = vmatprep.subr.bf16.mxu0 0
        %1343 = vmatpush1.bf16.msra.mxu0 %v1340
        %1344 = vmatprep.subr.bf16.mxu0 0
        %1345 = vmatpush1.bf16.msra.mxu0 0
        %1346 = vmatprep.subr.bf16.mxu0 0
        %1347 = vmatpush1.bf16.msra.mxu0 0
        %1348 = vmatprep.subr.bf16.mxu0 0
        %1349 = vmatpush1.bf16.msra.mxu0 0
        %1350 = vmatprep.subr.bf16.mxu0 0
        %1351 = vmatpush1.bf16.msra.mxu0 0
        %1352 = vmatprep.subr.bf16.mxu0 0
        %1353 = vmatpush1.bf16.msra.mxu0 0
        %1354 = vmatprep.subr.bf16.mxu0 0
        %1355 = vmatpush1.bf16.msra.mxu0 0
        %1356 = vmatprep.subr.bf16.mxu0 0
        %1357 = vmatpush1.bf16.msra.mxu0 0
        %1358 = vmatprep.subr.bf16.mxu0 0
        %1359 = vmatpush1.bf16.msra.mxu0 0
        %1360 = vmatprep.subr.bf16.mxu0 0
        %1361 = vmatpush1.bf16.msra.mxu0 0
        %1362 = vmatprep.subr.bf16.mxu0 0
        %1363 = vmatpush1.bf16.msra.mxu0 0
        %1364 = vmatprep.subr.bf16.mxu0 0
        %1365 = vmatpush1.bf16.msra.mxu0 0
        %1366 = vmatprep.subr.bf16.mxu0 0
        %1367 = vmatpush1.bf16.msra.mxu0 0
        %1368 = vmatprep.subr.bf16.mxu0 0
        %1369 = vmatpush1.bf16.msra.mxu0 0
        %1370 = vmatprep.subr.bf16.mxu0 0
        %1371 = vmatpush1.bf16.msra.mxu0 0
        %1372 = vmatprep.subr.bf16.mxu0 0
        %1373 = vmatpush1.bf16.msra.mxu0 0
        %1374 = vmatprep.mubr.bf16.mxu0 0
        %1375 = vmatmul.mubr.bf16.gmra.mrb[0].mxu0 %v1337
        %v1376 = vpop.f32.mrb[0].mxu0
        %v1377 = vadd.f32 0.0, %v1376
        %v1378 = vpop.f32.mrb[0].mxu0
        %v1379 = vpop.f32.mrb[0].mxu0
        %v1380 = vpop.f32.mrb[0].mxu0
        %1381 = vdwg.mxu0
        %v1382 = vmul.f32 %v1377, %v1332
        %1384 = vrot.lane.b32.xlu0 %v1382, 24
        %v1385 = vpop.permute.xlu0 %1384
        %vm1387 = vcmask 261312
        %1388 = vst.msk [vmem:[#allocation2] sm:$0xff] %vm1387, %v1385
        %v1389 = vpack.c.bf16 %v1332, %v1332
        %1390 = vxpose.xlu0.c.b16.start [1/8] %v1389, 128
        %1391 = vxpose.xlu0.c.b16.cont [2/8] 0, 128
        %1392 = vxpose.xlu0.c.b16.cont [3/8] 0, 128
        %1393 = vxpose.xlu0.c.b16.cont [4/8] 0, 128
        %1394 = vxpose.xlu0.c.b16.cont [5/8] 0, 128
        %1395 = vxpose.xlu0.c.b16.cont [6/8] 0, 128
        %1396 = vxpose.xlu0.c.b16.cont [7/8] 0, 128
        %1397 = vxpose.xlu0.c.b16.end [8/8] 0, 128
        %v1398 = vpop.trf.xlu0
        %v1399 = vpop.trf.xlu0
        %v1400 = vpop.trf.xlu0
        %v1401 = vpop.trf.xlu0
        %v1402 = vpop.trf.xlu0
        %v1403 = vpop.trf.xlu0
        %v1404 = vpop.trf.xlu0
        %v1405 = vpop.trf.xlu0
        %v1407 = vsel %vm745, %v1398, 0
        %v1409 = vsel %vm808, %v1333, 0
        %1411 = vmatprep.subr.bf16.mxu0 0
        %1412 = vmatpush1.bf16.msra.mxu0 %v1409
        %1413 = vmatprep.subr.bf16.mxu0 0
        %1414 = vmatpush1.bf16.msra.mxu0 0
        %1415 = vmatprep.subr.bf16.mxu0 0
        %1416 = vmatpush1.bf16.msra.mxu0 0
        %1417 = vmatprep.subr.bf16.mxu0 0
        %1418 = vmatpush1.bf16.msra.mxu0 0
        %1419 = vmatprep.subr.bf16.mxu0 0
        %1420 = vmatpush1.bf16.msra.mxu0 0
        %1421 = vmatprep.subr.bf16.mxu0 0
        %1422 = vmatpush1.bf16.msra.mxu0 0
        %1423 = vmatprep.subr.bf16.mxu0 0
        %1424 = vmatpush1.bf16.msra.mxu0 0
        %1425 = vmatprep.subr.bf16.mxu0 0
        %1426 = vmatpush1.bf16.msra.mxu0 0
        %1427 = vmatprep.subr.bf16.mxu0 0
        %1428 = vmatpush1.bf16.msra.mxu0 0
        %1429 = vmatprep.subr.bf16.mxu0 0
        %1430 = vmatpush1.bf16.msra.mxu0 0
        %1431 = vmatprep.subr.bf16.mxu0 0
        %1432 = vmatpush1.bf16.msra.mxu0 0
        %1433 = vmatprep.subr.bf16.mxu0 0
        %1434 = vmatpush1.bf16.msra.mxu0 0
        %1435 = vmatprep.subr.bf16.mxu0 0
        %1436 = vmatpush1.bf16.msra.mxu0 0
        %1437 = vmatprep.subr.bf16.mxu0 0
        %1438 = vmatpush1.bf16.msra.mxu0 0
        %1439 = vmatprep.subr.bf16.mxu0 0
        %1440 = vmatpush1.bf16.msra.mxu0 0
        %1441 = vmatprep.subr.bf16.mxu0 0
        %1442 = vmatpush1.bf16.msra.mxu0 0
        %1443 = vmatprep.mubr.bf16.mxu0 0
        %1444 = vmatmul.mubr.bf16.gmra.mrb[0].mxu0 %v1407
        %v1445 = vpop.f32.mrb[0].mxu0
        %v1446 = vadd.f32 0.0, %v1445
        %v1447 = vpop.f32.mrb[0].mxu0
        %v1448 = vpop.f32.mrb[0].mxu0
        %v1449 = vpop.f32.mrb[0].mxu0
        %1450 = vdwg.mxu0
        %v1451 = vadd.f32 %v1272, %v1446
        %v1452 = vld [vmem:[%s661] sm:$0xf]
        %v1453 = vmul.f32 %v1451, 0.25
        %v1454 = vlaneseq
        %v1455 = vshrl.u32 %v1454, 7
        %v1456 = vsub.s32 0, %v1455
        %v1457 = vrot.slane %v1453, %v1456
        %v1458 = vmul.f32 %v1457, %v1452
        %v1459 = vsub.f32 1.0, %v1452
        %v1460 = vmul.f32 %v1459, -1e+10
        %v1461 = vadd.f32 %v1458, %v1460
        %vm1462 = vcmask 60416
        %v1463 = vsel %vm1462, %v1461, -inf
        %1464 = vmax.xlane.f32.xlu0 %v1463
        %v1465 = vpop.xlane.xlu0 %1464
        %v1466 = vsub.f32 %v1461, %v1465
        %v1467 = vmul.f32 %v1466, 1.442695
        %v1468 = vpow.pop %v1467
        %v1469 = vsel %vm1462, %v1468, 0.0
        %1470 = vadd.xlane.f32.xlu0 %v1469
        %v1471 = vpop.xlane.xlu0 %1470
        %v1472 = vrcp.pop %v1471
        %v1473 = vmul.f32 %v1468, %v1472
        %v1474 = vmul.f32 %v1473, %v1452
        %v1475 = vsel %vm1462, %v1474, 0.0
        %v1476 = vrot.slane %v1475, 4
        %v1477 = vadd.f32 %v1475, %v1476
        %v1478 = vrot.slane %v1477, 2
        %v1479 = vadd.f32 %v1477, %v1478
        %v1480 = vrot.slane %v1479, 1
        %v1481 = vadd.f32 %v1479, %v1480
        %v1482 = vsel %vm745, %v1481, 0.0
        %1483 = vst [vmem:[%s649] sm:$0x1] %v1482
        %s1484 = scalar_lea.vmem %s566, 2 [#allocation3]
        %v1485 = vld [vmem:[%s1484] sm:$0x3]
        %v1486 = vunpack.c.0.s8 %v1485
        %v1487 = vcvt.s32.f32 %v1486
        %v1488 = vmul.f32 %v1487, -1e+09
        %v1489 = vpack.c.bf16 %v734, %v734
        %1491 = vrot.lane.b32.xlu0 %v1489, 96
        %v1492 = vpop.permute.xlu0 %1491
        %v1494 = vsel %vm745, %v1489, 0
        %v1497 = vsel %vm745, %v1492, 0
        %1499 = vmatprep.subr.bf16.mxu0 0
        %1500 = vmatpush1.bf16.xpose.msra.mxu0 %v1497
        %1501 = vmatprep.subr.bf16.mxu0 0
        %1502 = vmatpush1.bf16.xpose.msra.mxu0 0
        %1503 = vmatprep.subr.bf16.mxu0 0
        %1504 = vmatpush1.bf16.xpose.msra.mxu0 0
        %1505 = vmatprep.subr.bf16.mxu0 0
        %1506 = vmatpush1.bf16.xpose.msra.mxu0 0
        %1507 = vmatprep.subr.bf16.mxu0 0
        %1508 = vmatpush1.bf16.xpose.msra.mxu0 0
        %1509 = vmatprep.subr.bf16.mxu0 0
        %1510 = vmatpush1.bf16.xpose.msra.mxu0 0
        %1511 = vmatprep.subr.bf16.mxu0 0
        %1512 = vmatpush1.bf16.xpose.msra.mxu0 0
        %1513 = vmatprep.subr.bf16.mxu0 0
        %1514 = vmatpush1.bf16.xpose.msra.mxu0 0
        %1515 = vmatprep.subr.bf16.mxu0 0
        %1516 = vmatpush1.bf16.xpose.msra.mxu0 0
        %1517 = vmatprep.subr.bf16.mxu0 0
        %1518 = vmatpush1.bf16.xpose.msra.mxu0 0
        %1519 = vmatprep.subr.bf16.mxu0 0
        %1520 = vmatpush1.bf16.xpose.msra.mxu0 0
        %1521 = vmatprep.subr.bf16.mxu0 0
        %1522 = vmatpush1.bf16.xpose.msra.mxu0 0
        %1523 = vmatprep.subr.bf16.mxu0 0
        %1524 = vmatpush1.bf16.xpose.msra.mxu0 0
        %1525 = vmatprep.subr.bf16.mxu0 0
        %1526 = vmatpush1.bf16.xpose.msra.mxu0 0
        %1527 = vmatprep.subr.bf16.mxu0 0
        %1528 = vmatpush1.bf16.xpose.msra.mxu0 0
        %1529 = vmatprep.subr.bf16.mxu0 0
        %1530 = vmatpush1.bf16.xpose.msra.mxu0 0
        %1531 = vmatprep.mubr.bf16.mxu0 0
        %1532 = vmatmul.mubr.bf16.gmra.mrb[0].mxu0 %v1494
        %v1533 = vpop.f32.mrb[0].mxu0
        %v1534 = vadd.f32 %v1488, %v1533
        %v1535 = vpop.f32.mrb[0].mxu0
        %v1536 = vpop.f32.mrb[0].mxu0
        %v1537 = vpop.f32.mrb[0].mxu0
        %1538 = vdwg.mxu0
        %v1539 = vsel %vm745, %v1534, -inf
        %1540 = vmax.xlane.f32.xlu0 %v1539
        %v1541 = vpop.xlane.xlu0 %1540
        %v1542 = vsub.f32 %v1534, %v1541
        %v1543 = vmul.f32 %v1542, 1.442695
        %v1544 = vpow.pop %v1543
        %v1545 = vsel %vm745, %v1544, 0.0
        %1546 = vadd.xlane.f32.xlu0 %v1545
        %v1547 = vpop.xlane.xlu0 %1546
        %v1548 = vrcp.pop %v1547
        %v1549 = vpack.c.bf16 %v1544, %v1544
        %1550 = vrot.lane.b32.xlu0 %v1489, 64
        %v1551 = vpop.permute.xlu0 %1550
        %v1553 = vsel %vm745, %v1549, 0
        %v1556 = vsel %vm808, %v1551, 0
        %1558 = vmatprep.subr.bf16.mxu0 0
        %1559 = vmatpush1.bf16.msra.mxu0 %v1556
        %1560 = vmatprep.subr.bf16.mxu0 0
        %1561 = vmatpush1.bf16.msra.mxu0 0
        %1562 = vmatprep.subr.bf16.mxu0 0
        %1563 = vmatpush1.bf16.msra.mxu0 0
        %1564 = vmatprep.subr.bf16.mxu0 0
        %1565 = vmatpush1.bf16.msra.mxu0 0
        %1566 = vmatprep.subr.bf16.mxu0 0
        %1567 = vmatpush1.bf16.msra.mxu0 0
        %1568 = vmatprep.subr.bf16.mxu0 0
        %1569 = vmatpush1.bf16.msra.mxu0 0
        %1570 = vmatprep.subr.bf16.mxu0 0
        %1571 = vmatpush1.bf16.msra.mxu0 0
        %1572 = vmatprep.subr.bf16.mxu0 0
        %1573 = vmatpush1.bf16.msra.mxu0 0
        %1574 = vmatprep.subr.bf16.mxu0 0
        %1575 = vmatpush1.bf16.msra.mxu0 0
        %1576 = vmatprep.subr.bf16.mxu0 0
        %1577 = vmatpush1.bf16.msra.mxu0 0
        %1578 = vmatprep.subr.bf16.mxu0 0
        %1579 = vmatpush1.bf16.msra.mxu0 0
        %1580 = vmatprep.subr.bf16.mxu0 0
        %1581 = vmatpush1.bf16.msra.mxu0 0
        %1582 = vmatprep.subr.bf16.mxu0 0
        %1583 = vmatpush1.bf16.msra.mxu0 0
        %1584 = vmatprep.subr.bf16.mxu0 0
        %1585 = vmatpush1.bf16.msra.mxu0 0
        %1586 = vmatprep.subr.bf16.mxu0 0
        %1587 = vmatpush1.bf16.msra.mxu0 0
        %1588 = vmatprep.subr.bf16.mxu0 0
        %1589 = vmatpush1.bf16.msra.mxu0 0
        %1590 = vmatprep.mubr.bf16.mxu0 0
        %1591 = vmatmul.mubr.bf16.gmra.mrb[0].mxu0 %v1553
        %v1592 = vpop.f32.mrb[0].mxu0
        %v1593 = vadd.f32 0.0, %v1592
        %v1594 = vpop.f32.mrb[0].mxu0
        %v1595 = vpop.f32.mrb[0].mxu0
        %v1596 = vpop.f32.mrb[0].mxu0
        %1597 = vdwg.mxu0
        %v1598 = vmul.f32 %v1593, %v1548
        %1599 = vst.msk [vmem:[#allocation2 + $0x8] sm:$0xff] %vm745, %v1598
        %v1600 = vpack.c.bf16 %v1548, %v1548
        %1601 = vrot.lane.b32.xlu0 %v1489, 120
        %v1602 = vpop.permute.xlu0 %1601
        %1603 = vrot.lane.b32.xlu0 %v1489, 88
        %v1604 = vpop.permute.xlu0 %1603
        %v1606 = vsel %vm745, %v1602, 0
        %v1609 = vsel %vm745, %v1604, 0
        %1611 = vmatprep.subr.bf16.mxu0 0
        %1612 = vmatpush1.bf16.xpose.msra.mxu0 %v1609
        %1613 = vmatprep.subr.bf16.mxu0 0
        %1614 = vmatpush1.bf16.xpose.msra.mxu0 0
        %1615 = vmatprep.subr.bf16.mxu0 0
        %1616 = vmatpush1.bf16.xpose.msra.mxu0 0
        %1617 = vmatprep.subr.bf16.mxu0 0
        %1618 = vmatpush1.bf16.xpose.msra.mxu0 0
        %1619 = vmatprep.subr.bf16.mxu0 0
        %1620 = vmatpush1.bf16.xpose.msra.mxu0 0
        %1621 = vmatprep.subr.bf16.mxu0 0
        %1622 = vmatpush1.bf16.xpose.msra.mxu0 0
        %1623 = vmatprep.subr.bf16.mxu0 0
        %1624 = vmatpush1.bf16.xpose.msra.mxu0 0
        %1625 = vmatprep.subr.bf16.mxu0 0
        %1626 = vmatpush1.bf16.xpose.msra.mxu0 0
        %1627 = vmatprep.subr.bf16.mxu0 0
        %1628 = vmatpush1.bf16.xpose.msra.mxu0 0
        %1629 = vmatprep.subr.bf16.mxu0 0
        %1630 = vmatpush1.bf16.xpose.msra.mxu0 0
        %1631 = vmatprep.subr.bf16.mxu0 0
        %1632 = vmatpush1.bf16.xpose.msra.mxu0 0
        %1633 = vmatprep.subr.bf16.mxu0 0
        %1634 = vmatpush1.bf16.xpose.msra.mxu0 0
        %1635 = vmatprep.subr.bf16.mxu0 0
        %1636 = vmatpush1.bf16.xpose.msra.mxu0 0
        %1637 = vmatprep.subr.bf16.mxu0 0
        %1638 = vmatpush1.bf16.xpose.msra.mxu0 0
        %1639 = vmatprep.subr.bf16.mxu0 0
        %1640 = vmatpush1.bf16.xpose.msra.mxu0 0
        %1641 = vmatprep.subr.bf16.mxu0 0
        %1642 = vmatpush1.bf16.xpose.msra.mxu0 0
        %1643 = vmatprep.mubr.bf16.mxu0 0
        %1644 = vmatmul.mubr.bf16.gmra.mrb[0].mxu0 %v1606
        %v1645 = vpop.f32.mrb[0].mxu0
        %v1646 = vadd.f32 %v1488, %v1645
        %v1647 = vpop.f32.mrb[0].mxu0
        %v1648 = vpop.f32.mrb[0].mxu0
        %v1649 = vpop.f32.mrb[0].mxu0
        %1650 = vdwg.mxu0
        %v1651 = vsel %vm745, %v1646, -inf
        %1652 = vmax.xlane.f32.xlu0 %v1651
        %v1653 = vpop.xlane.xlu0 %1652
        %v1654 = vsub.f32 %v1646, %v1653
        %v1655 = vmul.f32 %v1654, 1.442695
        %v1656 = vpow.pop %v1655
        %v1657 = vsel %vm745, %v1656, 0.0
        %1658 = vadd.xlane.f32.xlu0 %v1657
        %v1659 = vpop.xlane.xlu0 %1658
        %v1660 = vrcp.pop %v1659
        %v1661 = vpack.c.bf16 %v1656, %v1656
        %1662 = vrot.lane.b32.xlu0 %v1489, 56
        %v1663 = vpop.permute.xlu0 %1662
        %v1665 = vsel %vm745, %v1661, 0
        %v1668 = vsel %vm808, %v1663, 0
        %1670 = vmatprep.subr.bf16.mxu0 0
        %1671 = vmatpush1.bf16.msra.mxu0 %v1668
        %1672 = vmatprep.subr.bf16.mxu0 0
        %1673 = vmatpush1.bf16.msra.mxu0 0
        %1674 = vmatprep.subr.bf16.mxu0 0
        %1675 = vmatpush1.bf16.msra.mxu0 0
        %1676 = vmatprep.subr.bf16.mxu0 0
        %1677 = vmatpush1.bf16.msra.mxu0 0
        %1678 = vmatprep.subr.bf16.mxu0 0
        %1679 = vmatpush1.bf16.msra.mxu0 0
        %1680 = vmatprep.subr.bf16.mxu0 0
        %1681 = vmatpush1.bf16.msra.mxu0 0
        %1682 = vmatprep.subr.bf16.mxu0 0
        %1683 = vmatpush1.bf16.msra.mxu0 0
        %1684 = vmatprep.subr.bf16.mxu0 0
        %1685 = vmatpush1.bf16.msra.mxu0 0
        %1686 = vmatprep.subr.bf16.mxu0 0
        %1687 = vmatpush1.bf16.msra.mxu0 0
        %1688 = vmatprep.subr.bf16.mxu0 0
        %1689 = vmatpush1.bf16.msra.mxu0 0
        %1690 = vmatprep.subr.bf16.mxu0 0
        %1691 = vmatpush1.bf16.msra.mxu0 0
        %1692 = vmatprep.subr.bf16.mxu0 0
        %1693 = vmatpush1.bf16.msra.mxu0 0
        %1694 = vmatprep.subr.bf16.mxu0 0
        %1695 = vmatpush1.bf16.msra.mxu0 0
        %1696 = vmatprep.subr.bf16.mxu0 0
        %1697 = vmatpush1.bf16.msra.mxu0 0
        %1698 = vmatprep.subr.bf16.mxu0 0
        %1699 = vmatpush1.bf16.msra.mxu0 0
        %1700 = vmatprep.subr.bf16.mxu0 0
        %1701 = vmatpush1.bf16.msra.mxu0 0
        %1702 = vmatprep.mubr.bf16.mxu0 0
        %1703 = vmatmul.mubr.bf16.gmra.mrb[0].mxu0 %v1665
        %v1704 = vpop.f32.mrb[0].mxu0
        %v1705 = vadd.f32 0.0, %v1704
        %v1706 = vpop.f32.mrb[0].mxu0
        %v1707 = vpop.f32.mrb[0].mxu0
        %v1708 = vpop.f32.mrb[0].mxu0
        %1709 = vdwg.mxu0
        %v1710 = vmul.f32 %v1705, %v1660
        %1712 = vrot.lane.b32.xlu0 %v1710, 8
        %v1713 = vpop.permute.xlu0 %1712
        %1715 = vst.msk [vmem:[#allocation2 + $0x8] sm:$0xff] %vm969, %v1713
        %v1716 = vpack.c.bf16 %v1660, %v1660
        %1717 = vxpose.xlu0.c.b16.start [1/8] %v1716, 128
        %1718 = vxpose.xlu0.c.b16.cont [2/8] 0, 128
        %1719 = vxpose.xlu0.c.b16.cont [3/8] 0, 128
        %1720 = vxpose.xlu0.c.b16.cont [4/8] 0, 128
        %1721 = vxpose.xlu0.c.b16.cont [5/8] 0, 128
        %1722 = vxpose.xlu0.c.b16.cont [6/8] 0, 128
        %1723 = vxpose.xlu0.c.b16.cont [7/8] 0, 128
        %1724 = vxpose.xlu0.c.b16.end [8/8] 0, 128
        %v1725 = vpop.trf.xlu0
        %v1726 = vpop.trf.xlu0
        %v1727 = vpop.trf.xlu0
        %v1728 = vpop.trf.xlu0
        %v1729 = vpop.trf.xlu0
        %v1730 = vpop.trf.xlu0
        %v1731 = vpop.trf.xlu0
        %v1732 = vpop.trf.xlu0
        %v1734 = vsel %vm745, %v1725, 0
        %v1736 = vsel %vm808, %v1661, 0
        %1738 = vmatprep.subr.bf16.mxu0 0
        %1739 = vmatpush1.bf16.msra.mxu0 %v1736
        %1740 = vmatprep.subr.bf16.mxu0 0
        %1741 = vmatpush1.bf16.msra.mxu0 0
        %1742 = vmatprep.subr.bf16.mxu0 0
        %1743 = vmatpush1.bf16.msra.mxu0 0
        %1744 = vmatprep.subr.bf16.mxu0 0
        %1745 = vmatpush1.bf16.msra.mxu0 0
        %1746 = vmatprep.subr.bf16.mxu0 0
        %1747 = vmatpush1.bf16.msra.mxu0 0
        %1748 = vmatprep.subr.bf16.mxu0 0
        %1749 = vmatpush1.bf16.msra.mxu0 0
        %1750 = vmatprep.subr.bf16.mxu0 0
        %1751 = vmatpush1.bf16.msra.mxu0 0
        %1752 = vmatprep.subr.bf16.mxu0 0
        %1753 = vmatpush1.bf16.msra.mxu0 0
        %1754 = vmatprep.subr.bf16.mxu0 0
        %1755 = vmatpush1.bf16.msra.mxu0 0
        %1756 = vmatprep.subr.bf16.mxu0 0
        %1757 = vmatpush1.bf16.msra.mxu0 0
        %1758 = vmatprep.subr.bf16.mxu0 0
        %1759 = vmatpush1.bf16.msra.mxu0 0
        %1760 = vmatprep.subr.bf16.mxu0 0
        %1761 = vmatpush1.bf16.msra.mxu0 0
        %1762 = vmatprep.subr.bf16.mxu0 0
        %1763 = vmatpush1.bf16.msra.mxu0 0
        %1764 = vmatprep.subr.bf16.mxu0 0
        %1765 = vmatpush1.bf16.msra.mxu0 0
        %1766 = vmatprep.subr.bf16.mxu0 0
        %1767 = vmatpush1.bf16.msra.mxu0 0
        %1768 = vmatprep.subr.bf16.mxu0 0
        %1769 = vmatpush1.bf16.msra.mxu0 0
        %1770 = vmatprep.mubr.bf16.mxu0 0
        %1771 = vmatmul.mubr.bf16.gmra.mrb[0].mxu0 %v1734
        %v1772 = vpop.f32.mrb[0].mxu0
        %v1773 = vadd.f32 0.0, %v1772
        %v1774 = vpop.f32.mrb[0].mxu0
        %v1775 = vpop.f32.mrb[0].mxu0
        %v1776 = vpop.f32.mrb[0].mxu0
        %1777 = vdwg.mxu0
        %1778 = vxpose.xlu0.c.b16.start [1/8] %v1600, 128
        %1779 = vxpose.xlu0.c.b16.cont [2/8] 0, 128
        %1780 = vxpose.xlu0.c.b16.cont [3/8] 0, 128
        %1781 = vxpose.xlu0.c.b16.cont [4/8] 0, 128
        %1782 = vxpose.xlu0.c.b16.cont [5/8] 0, 128
        %1783 = vxpose.xlu0.c.b16.cont [6/8] 0, 128
        %1784 = vxpose.xlu0.c.b16.cont [7/8] 0, 128
        %1785 = vxpose.xlu0.c.b16.end [8/8] 0, 128
        %v1786 = vpop.trf.xlu0
        %v1787 = vpop.trf.xlu0
        %v1788 = vpop.trf.xlu0
        %v1789 = vpop.trf.xlu0
        %v1790 = vpop.trf.xlu0
        %v1791 = vpop.trf.xlu0
        %v1792 = vpop.trf.xlu0
        %v1793 = vpop.trf.xlu0
        %v1795 = vsel %vm745, %v1786, 0
        %v1797 = vsel %vm808, %v1549, 0
        %1799 = vmatprep.subr.bf16.mxu0 0
        %1800 = vmatpush1.bf16.msra.mxu0 %v1797
        %1801 = vmatprep.subr.bf16.mxu0 0
        %1802 = vmatpush1.bf16.msra.mxu0 0
        %1803 = vmatprep.subr.bf16.mxu0 0
        %1804 = vmatpush1.bf16.msra.mxu0 0
        %1805 = vmatprep.subr.bf16.mxu0 0
        %1806 = vmatpush1.bf16.msra.mxu0 0
        %1807 = vmatprep.subr.bf16.mxu0 0
        %1808 = vmatpush1.bf16.msra.mxu0 0
        %1809 = vmatprep.subr.bf16.mxu0 0
        %1810 = vmatpush1.bf16.msra.mxu0 0
        %1811 = vmatprep.subr.bf16.mxu0 0
        %1812 = vmatpush1.bf16.msra.mxu0 0
        %1813 = vmatprep.subr.bf16.mxu0 0
        %1814 = vmatpush1.bf16.msra.mxu0 0
        %1815 = vmatprep.subr.bf16.mxu0 0
        %1816 = vmatpush1.bf16.msra.mxu0 0
        %1817 = vmatprep.subr.bf16.mxu0 0
        %1818 = vmatpush1.bf16.msra.mxu0 0
        %1819 = vmatprep.subr.bf16.mxu0 0
        %1820 = vmatpush1.bf16.msra.mxu0 0
        %1821 = vmatprep.subr.bf16.mxu0 0
        %1822 = vmatpush1.bf16.msra.mxu0 0
        %1823 = vmatprep.subr.bf16.mxu0 0
        %1824 = vmatpush1.bf16.msra.mxu0 0
        %1825 = vmatprep.subr.bf16.mxu0 0
        %1826 = vmatpush1.bf16.msra.mxu0 0
        %1827 = vmatprep.subr.bf16.mxu0 0
        %1828 = vmatpush1.bf16.msra.mxu0 0
        %1829 = vmatprep.subr.bf16.mxu0 0
        %1830 = vmatpush1.bf16.msra.mxu0 0
        %1831 = vmatprep.mubr.bf16.mxu0 0
        %1832 = vmatmul.mubr.bf16.gmra.mrb[0].mxu0 %v1795
        %v1833 = vpop.f32.mrb[0].mxu0
        %v1834 = vadd.f32 %v1773, %v1833
        %v1835 = vpop.f32.mrb[0].mxu0
        %v1836 = vpop.f32.mrb[0].mxu0
        %v1837 = vpop.f32.mrb[0].mxu0
        %1838 = vdwg.mxu0
        %1839 = vrot.lane.b32.xlu0 %v1489, 112
        %v1840 = vpop.permute.xlu0 %1839
        %1841 = vrot.lane.b32.xlu0 %v1489, 80
        %v1842 = vpop.permute.xlu0 %1841
        %v1844 = vsel %vm745, %v1840, 0
        %v1847 = vsel %vm745, %v1842, 0
        %1849 = vmatprep.subr.bf16.mxu0 0
        %1850 = vmatpush1.bf16.xpose.msra.mxu0 %v1847
        %1851 = vmatprep.subr.bf16.mxu0 0
        %1852 = vmatpush1.bf16.xpose.msra.mxu0 0
        %1853 = vmatprep.subr.bf16.mxu0 0
        %1854 = vmatpush1.bf16.xpose.msra.mxu0 0
        %1855 = vmatprep.subr.bf16.mxu0 0
        %1856 = vmatpush1.bf16.xpose.msra.mxu0 0
        %1857 = vmatprep.subr.bf16.mxu0 0
        %1858 = vmatpush1.bf16.xpose.msra.mxu0 0
        %1859 = vmatprep.subr.bf16.mxu0 0
        %1860 = vmatpush1.bf16.xpose.msra.mxu0 0
        %1861 = vmatprep.subr.bf16.mxu0 0
        %1862 = vmatpush1.bf16.xpose.msra.mxu0 0
        %1863 = vmatprep.subr.bf16.mxu0 0
        %1864 = vmatpush1.bf16.xpose.msra.mxu0 0
        %1865 = vmatprep.subr.bf16.mxu0 0
        %1866 = vmatpush1.bf16.xpose.msra.mxu0 0
        %1867 = vmatprep.subr.bf16.mxu0 0
        %1868 = vmatpush1.bf16.xpose.msra.mxu0 0
        %1869 = vmatprep.subr.bf16.mxu0 0
        %1870 = vmatpush1.bf16.xpose.msra.mxu0 0
        %1871 = vmatprep.subr.bf16.mxu0 0
        %1872 = vmatpush1.bf16.xpose.msra.mxu0 0
        %1873 = vmatprep.subr.bf16.mxu0 0
        %1874 = vmatpush1.bf16.xpose.msra.mxu0 0
        %1875 = vmatprep.subr.bf16.mxu0 0
        %1876 = vmatpush1.bf16.xpose.msra.mxu0 0
        %1877 = vmatprep.subr.bf16.mxu0 0
        %1878 = vmatpush1.bf16.xpose.msra.mxu0 0
        %1879 = vmatprep.subr.bf16.mxu0 0
        %1880 = vmatpush1.bf16.xpose.msra.mxu0 0
        %1881 = vmatprep.mubr.bf16.mxu0 0
        %1882 = vmatmul.mubr.bf16.gmra.mrb[0].mxu0 %v1844
        %v1883 = vpop.f32.mrb[0].mxu0
        %v1884 = vadd.f32 %v1488, %v1883
        %v1885 = vpop.f32.mrb[0].mxu0
        %v1886 = vpop.f32.mrb[0].mxu0
        %v1887 = vpop.f32.mrb[0].mxu0
        %1888 = vdwg.mxu0
        %v1889 = vsel %vm745, %v1884, -inf
        %1890 = vmax.xlane.f32.xlu0 %v1889
        %v1891 = vpop.xlane.xlu0 %1890
        %v1892 = vsub.f32 %v1884, %v1891
        %v1893 = vmul.f32 %v1892, 1.442695
        %v1894 = vpow.pop %v1893
        %v1895 = vsel %vm745, %v1894, 0.0
        %1896 = vadd.xlane.f32.xlu0 %v1895
        %v1897 = vpop.xlane.xlu0 %1896
        %v1898 = vrcp.pop %v1897
        %v1899 = vpack.c.bf16 %v1894, %v1894
        %1900 = vrot.lane.b32.xlu0 %v1489, 48
        %v1901 = vpop.permute.xlu0 %1900
        %v1903 = vsel %vm745, %v1899, 0
        %v1906 = vsel %vm808, %v1901, 0
        %1908 = vmatprep.subr.bf16.mxu0 0
        %1909 = vmatpush1.bf16.msra.mxu0 %v1906
        %1910 = vmatprep.subr.bf16.mxu0 0
        %1911 = vmatpush1.bf16.msra.mxu0 0
        %1912 = vmatprep.subr.bf16.mxu0 0
        %1913 = vmatpush1.bf16.msra.mxu0 0
        %1914 = vmatprep.subr.bf16.mxu0 0
        %1915 = vmatpush1.bf16.msra.mxu0 0
        %1916 = vmatprep.subr.bf16.mxu0 0
        %1917 = vmatpush1.bf16.msra.mxu0 0
        %1918 = vmatprep.subr.bf16.mxu0 0
        %1919 = vmatpush1.bf16.msra.mxu0 0
        %1920 = vmatprep.subr.bf16.mxu0 0
        %1921 = vmatpush1.bf16.msra.mxu0 0
        %1922 = vmatprep.subr.bf16.mxu0 0
        %1923 = vmatpush1.bf16.msra.mxu0 0
        %1924 = vmatprep.subr.bf16.mxu0 0
        %1925 = vmatpush1.bf16.msra.mxu0 0
        %1926 = vmatprep.subr.bf16.mxu0 0
        %1927 = vmatpush1.bf16.msra.mxu0 0
        %1928 = vmatprep.subr.bf16.mxu0 0
        %1929 = vmatpush1.bf16.msra.mxu0 0
        %1930 = vmatprep.subr.bf16.mxu0 0
        %1931 = vmatpush1.bf16.msra.mxu0 0
        %1932 = vmatprep.subr.bf16.mxu0 0
        %1933 = vmatpush1.bf16.msra.mxu0 0
        %1934 = vmatprep.subr.bf16.mxu0 0
        %1935 = vmatpush1.bf16.msra.mxu0 0
        %1936 = vmatprep.subr.bf16.mxu0 0
        %1937 = vmatpush1.bf16.msra.mxu0 0
        %1938 = vmatprep.subr.bf16.mxu0 0
        %1939 = vmatpush1.bf16.msra.mxu0 0
        %1940 = vmatprep.mubr.bf16.mxu0 0
        %1941 = vmatmul.mubr.bf16.gmra.mrb[0].mxu0 %v1903
        %v1942 = vpop.f32.mrb[0].mxu0
        %v1943 = vadd.f32 0.0, %v1942
        %v1944 = vpop.f32.mrb[0].mxu0
        %v1945 = vpop.f32.mrb[0].mxu0
        %v1946 = vpop.f32.mrb[0].mxu0
        %1947 = vdwg.mxu0
        %v1948 = vmul.f32 %v1943, %v1898
        %1950 = vrot.lane.b32.xlu0 %v1948, 16
        %v1951 = vpop.permute.xlu0 %1950
        %1953 = vst.msk [vmem:[#allocation2 + $0x8] sm:$0xff] %vm1208, %v1951
        %v1954 = vpack.c.bf16 %v1898, %v1898
        %1955 = vxpose.xlu0.c.b16.start [1/8] %v1954, 128
        %1956 = vxpose.xlu0.c.b16.cont [2/8] 0, 128
        %1957 = vxpose.xlu0.c.b16.cont [3/8] 0, 128
        %1958 = vxpose.xlu0.c.b16.cont [4/8] 0, 128
        %1959 = vxpose.xlu0.c.b16.cont [5/8] 0, 128
        %1960 = vxpose.xlu0.c.b16.cont [6/8] 0, 128
        %1961 = vxpose.xlu0.c.b16.cont [7/8] 0, 128
        %1962 = vxpose.xlu0.c.b16.end [8/8] 0, 128
        %v1963 = vpop.trf.xlu0
        %v1964 = vpop.trf.xlu0
        %v1965 = vpop.trf.xlu0
        %v1966 = vpop.trf.xlu0
        %v1967 = vpop.trf.xlu0
        %v1968 = vpop.trf.xlu0
        %v1969 = vpop.trf.xlu0
        %v1970 = vpop.trf.xlu0
        %v1972 = vsel %vm745, %v1963, 0
        %v1974 = vsel %vm808, %v1899, 0
        %1976 = vmatprep.subr.bf16.mxu0 0
        %1977 = vmatpush1.bf16.msra.mxu0 %v1974
        %1978 = vmatprep.subr.bf16.mxu0 0
        %1979 = vmatpush1.bf16.msra.mxu0 0
        %1980 = vmatprep.subr.bf16.mxu0 0
        %1981 = vmatpush1.bf16.msra.mxu0 0
        %1982 = vmatprep.subr.bf16.mxu0 0
        %1983 = vmatpush1.bf16.msra.mxu0 0
        %1984 = vmatprep.subr.bf16.mxu0 0
        %1985 = vmatpush1.bf16.msra.mxu0 0
        %1986 = vmatprep.subr.bf16.mxu0 0
        %1987 = vmatpush1.bf16.msra.mxu0 0
        %1988 = vmatprep.subr.bf16.mxu0 0
        %1989 = vmatpush1.bf16.msra.mxu0 0
        %1990 = vmatprep.subr.bf16.mxu0 0
        %1991 = vmatpush1.bf16.msra.mxu0 0
        %1992 = vmatprep.subr.bf16.mxu0 0
        %1993 = vmatpush1.bf16.msra.mxu0 0
        %1994 = vmatprep.subr.bf16.mxu0 0
        %1995 = vmatpush1.bf16.msra.mxu0 0
        %1996 = vmatprep.subr.bf16.mxu0 0
        %1997 = vmatpush1.bf16.msra.mxu0 0
        %1998 = vmatprep.subr.bf16.mxu0 0
        %1999 = vmatpush1.bf16.msra.mxu0 0
        %2000 = vmatprep.subr.bf16.mxu0 0
        %2001 = vmatpush1.bf16.msra.mxu0 0
        %2002 = vmatprep.subr.bf16.mxu0 0
        %2003 = vmatpush1.bf16.msra.mxu0 0
        %2004 = vmatprep.subr.bf16.mxu0 0
        %2005 = vmatpush1.bf16.msra.mxu0 0
        %2006 = vmatprep.subr.bf16.mxu0 0
        %2007 = vmatpush1.bf16.msra.mxu0 0
        %2008 = vmatprep.mubr.bf16.mxu0 0
        %2009 = vmatmul.mubr.bf16.gmra.mrb[0].mxu0 %v1972
        %v2010 = vpop.f32.mrb[0].mxu0
        %v2011 = vadd.f32 0.0, %v2010
        %v2012 = vpop.f32.mrb[0].mxu0
        %v2013 = vpop.f32.mrb[0].mxu0
        %v2014 = vpop.f32.mrb[0].mxu0
        %2015 = vdwg.mxu0
        %v2016 = vadd.f32 %v1834, %v2011
        %2017 = vrot.lane.b32.xlu0 %v1489, 104
        %v2018 = vpop.permute.xlu0 %2017
        %2019 = vrot.lane.b32.xlu0 %v1489, 72
        %v2020 = vpop.permute.xlu0 %2019
        %v2022 = vsel %vm745, %v2018, 0
        %v2025 = vsel %vm745, %v2020, 0
        %2027 = vmatprep.subr.bf16.mxu0 0
        %2028 = vmatpush1.bf16.xpose.msra.mxu0 %v2025
        %2029 = vmatprep.subr.bf16.mxu0 0
        %2030 = vmatpush1.bf16.xpose.msra.mxu0 0
        %2031 = vmatprep.subr.bf16.mxu0 0
        %2032 = vmatpush1.bf16.xpose.msra.mxu0 0
        %2033 = vmatprep.subr.bf16.mxu0 0
        %2034 = vmatpush1.bf16.xpose.msra.mxu0 0
        %2035 = vmatprep.subr.bf16.mxu0 0
        %2036 = vmatpush1.bf16.xpose.msra.mxu0 0
        %2037 = vmatprep.subr.bf16.mxu0 0
        %2038 = vmatpush1.bf16.xpose.msra.mxu0 0
        %2039 = vmatprep.subr.bf16.mxu0 0
        %2040 = vmatpush1.bf16.xpose.msra.mxu0 0
        %2041 = vmatprep.subr.bf16.mxu0 0
        %2042 = vmatpush1.bf16.xpose.msra.mxu0 0
        %2043 = vmatprep.subr.bf16.mxu0 0
        %2044 = vmatpush1.bf16.xpose.msra.mxu0 0
        %2045 = vmatprep.subr.bf16.mxu0 0
        %2046 = vmatpush1.bf16.xpose.msra.mxu0 0
        %2047 = vmatprep.subr.bf16.mxu0 0
        %2048 = vmatpush1.bf16.xpose.msra.mxu0 0
        %2049 = vmatprep.subr.bf16.mxu0 0
        %2050 = vmatpush1.bf16.xpose.msra.mxu0 0
        %2051 = vmatprep.subr.bf16.mxu0 0
        %2052 = vmatpush1.bf16.xpose.msra.mxu0 0
        %2053 = vmatprep.subr.bf16.mxu0 0
        %2054 = vmatpush1.bf16.xpose.msra.mxu0 0
        %2055 = vmatprep.subr.bf16.mxu0 0
        %2056 = vmatpush1.bf16.xpose.msra.mxu0 0
        %2057 = vmatprep.subr.bf16.mxu0 0
        %2058 = vmatpush1.bf16.xpose.msra.mxu0 0
        %2059 = vmatprep.mubr.bf16.mxu0 0
        %2060 = vmatmul.mubr.bf16.gmra.mrb[0].mxu0 %v2022
        %v2061 = vpop.f32.mrb[0].mxu0
        %v2062 = vadd.f32 %v1488, %v2061
        %v2063 = vpop.f32.mrb[0].mxu0
        %v2064 = vpop.f32.mrb[0].mxu0
        %v2065 = vpop.f32.mrb[0].mxu0
        %2066 = vdwg.mxu0
        %v2067 = vsel %vm745, %v2062, -inf
        %2068 = vmax.xlane.f32.xlu0 %v2067
        %v2069 = vpop.xlane.xlu0 %2068
        %v2070 = vsub.f32 %v2062, %v2069
        %v2071 = vmul.f32 %v2070, 1.442695
        %v2072 = vpow.pop %v2071
        %v2073 = vsel %vm745, %v2072, 0.0
        %2074 = vadd.xlane.f32.xlu0 %v2073
        %v2075 = vpop.xlane.xlu0 %2074
        %v2076 = vrcp.pop %v2075
        %v2077 = vpack.c.bf16 %v2072, %v2072
        %2078 = vrot.lane.b32.xlu0 %v1489, 40
        %v2079 = vpop.permute.xlu0 %2078
        %v2081 = vsel %vm745, %v2077, 0
        %v2084 = vsel %vm808, %v2079, 0
        %2086 = vmatprep.subr.bf16.mxu0 0
        %2087 = vmatpush1.bf16.msra.mxu0 %v2084
        %2088 = vmatprep.subr.bf16.mxu0 0
        %2089 = vmatpush1.bf16.msra.mxu0 0
        %2090 = vmatprep.subr.bf16.mxu0 0
        %2091 = vmatpush1.bf16.msra.mxu0 0
        %2092 = vmatprep.subr.bf16.mxu0 0
        %2093 = vmatpush1.bf16.msra.mxu0 0
        %2094 = vmatprep.subr.bf16.mxu0 0
        %2095 = vmatpush1.bf16.msra.mxu0 0
        %2096 = vmatprep.subr.bf16.mxu0 0
        %2097 = vmatpush1.bf16.msra.mxu0 0
        %2098 = vmatprep.subr.bf16.mxu0 0
        %2099 = vmatpush1.bf16.msra.mxu0 0
        %2100 = vmatprep.subr.bf16.mxu0 0
        %2101 = vmatpush1.bf16.msra.mxu0 0
        %2102 = vmatprep.subr.bf16.mxu0 0
        %2103 = vmatpush1.bf16.msra.mxu0 0
        %2104 = vmatprep.subr.bf16.mxu0 0
        %2105 = vmatpush1.bf16.msra.mxu0 0
        %2106 = vmatprep.subr.bf16.mxu0 0
        %2107 = vmatpush1.bf16.msra.mxu0 0
        %2108 = vmatprep.subr.bf16.mxu0 0
        %2109 = vmatpush1.bf16.msra.mxu0 0
        %2110 = vmatprep.subr.bf16.mxu0 0
        %2111 = vmatpush1.bf16.msra.mxu0 0
        %2112 = vmatprep.subr.bf16.mxu0 0
        %2113 = vmatpush1.bf16.msra.mxu0 0
        %2114 = vmatprep.subr.bf16.mxu0 0
        %2115 = vmatpush1.bf16.msra.mxu0 0
        %2116 = vmatprep.subr.bf16.mxu0 0
        %2117 = vmatpush1.bf16.msra.mxu0 0
        %2118 = vmatprep.mubr.bf16.mxu0 0
        %2119 = vmatmul.mubr.bf16.gmra.mrb[0].mxu0 %v2081
        %v2120 = vpop.f32.mrb[0].mxu0
        %v2121 = vadd.f32 0.0, %v2120
        %v2122 = vpop.f32.mrb[0].mxu0
        %v2123 = vpop.f32.mrb[0].mxu0
        %v2124 = vpop.f32.mrb[0].mxu0
        %2125 = vdwg.mxu0
        %v2126 = vmul.f32 %v2121, %v2076
        %2128 = vrot.lane.b32.xlu0 %v2126, 24
        %v2129 = vpop.permute.xlu0 %2128
        %2131 = vst.msk [vmem:[#allocation2 + $0x8] sm:$0xff] %vm1387, %v2129
        %v2132 = vpack.c.bf16 %v2076, %v2076
        %2133 = vxpose.xlu0.c.b16.start [1/8] %v2132, 128
        %2134 = vxpose.xlu0.c.b16.cont [2/8] 0, 128
        %2135 = vxpose.xlu0.c.b16.cont [3/8] 0, 128
        %2136 = vxpose.xlu0.c.b16.cont [4/8] 0, 128
        %2137 = vxpose.xlu0.c.b16.cont [5/8] 0, 128
        %2138 = vxpose.xlu0.c.b16.cont [6/8] 0, 128
        %2139 = vxpose.xlu0.c.b16.cont [7/8] 0, 128
        %2140 = vxpose.xlu0.c.b16.end [8/8] 0, 128
        %v2141 = vpop.trf.xlu0
        %v2142 = vpop.trf.xlu0
        %v2143 = vpop.trf.xlu0
        %v2144 = vpop.trf.xlu0
        %v2145 = vpop.trf.xlu0
        %v2146 = vpop.trf.xlu0
        %v2147 = vpop.trf.xlu0
        %v2148 = vpop.trf.xlu0
        %v2150 = vsel %vm745, %v2141, 0
        %v2152 = vsel %vm808, %v2077, 0
        %2154 = vmatprep.subr.bf16.mxu0 0
        %2155 = vmatpush1.bf16.msra.mxu0 %v2152
        %2156 = vmatprep.subr.bf16.mxu0 0
        %2157 = vmatpush1.bf16.msra.mxu0 0
        %2158 = vmatprep.subr.bf16.mxu0 0
        %2159 = vmatpush1.bf16.msra.mxu0 0
        %2160 = vmatprep.subr.bf16.mxu0 0
        %2161 = vmatpush1.bf16.msra.mxu0 0
        %2162 = vmatprep.subr.bf16.mxu0 0
        %2163 = vmatpush1.bf16.msra.mxu0 0
        %2164 = vmatprep.subr.bf16.mxu0 0
        %2165 = vmatpush1.bf16.msra.mxu0 0
        %2166 = vmatprep.subr.bf16.mxu0 0
        %2167 = vmatpush1.bf16.msra.mxu0 0
        %2168 = vmatprep.subr.bf16.mxu0 0
        %2169 = vmatpush1.bf16.msra.mxu0 0
        %2170 = vmatprep.subr.bf16.mxu0 0
        %2171 = vmatpush1.bf16.msra.mxu0 0
        %2172 = vmatprep.subr.bf16.mxu0 0
        %2173 = vmatpush1.bf16.msra.mxu0 0
        %2174 = vmatprep.subr.bf16.mxu0 0
        %2175 = vmatpush1.bf16.msra.mxu0 0
        %2176 = vmatprep.subr.bf16.mxu0 0
        %2177 = vmatpush1.bf16.msra.mxu0 0
        %2178 = vmatprep.subr.bf16.mxu0 0
        %2179 = vmatpush1.bf16.msra.mxu0 0
        %2180 = vmatprep.subr.bf16.mxu0 0
        %2181 = vmatpush1.bf16.msra.mxu0 0
        %2182 = vmatprep.subr.bf16.mxu0 0
        %2183 = vmatpush1.bf16.msra.mxu0 0
        %2184 = vmatprep.subr.bf16.mxu0 0
        %2185 = vmatpush1.bf16.msra.mxu0 0
        %2186 = vmatprep.mubr.bf16.mxu0 0
        %2187 = vmatmul.mubr.bf16.gmra.mrb[0].mxu0 %v2150
        %v2188 = vpop.f32.mrb[0].mxu0
        %v2189 = vadd.f32 0.0, %v2188
        %v2190 = vpop.f32.mrb[0].mxu0
        %v2191 = vpop.f32.mrb[0].mxu0
        %v2192 = vpop.f32.mrb[0].mxu0
        %2193 = vdwg.mxu0
        %v2194 = vadd.f32 %v2016, %v2189
        %s2195 = scalar_lea.vmem %s661, 4
        %v2196 = vld [vmem:[%s2195] sm:$0xf]
        %v2197 = vmul.f32 %v2194, 0.25
        %v2198 = vlaneseq
        %v2199 = vshrl.u32 %v2198, 7
        %v2200 = vsub.s32 0, %v2199
        %v2201 = vrot.slane %v2197, %v2200
        %v2202 = vmul.f32 %v2201, %v2196
        %v2203 = vsub.f32 1.0, %v2196
        %v2204 = vmul.f32 %v2203, -1e+10
        %v2205 = vadd.f32 %v2202, %v2204
        %v2206 = vsel %vm1462, %v2205, -inf
        %2207 = vmax.xlane.f32.xlu0 %v2206
        %v2208 = vpop.xlane.xlu0 %2207
        %v2209 = vsub.f32 %v2205, %v2208
        %v2210 = vmul.f32 %v2209, 1.442695
        %v2211 = vpow.pop %v2210
        %v2212 = vsel %vm1462, %v2211, 0.0
        %2213 = vadd.xlane.f32.xlu0 %v2212
        %v2214 = vpop.xlane.xlu0 %2213
        %v2215 = vrcp.pop %v2214
        %v2216 = vmul.f32 %v2211, %v2215
        %v2217 = vmul.f32 %v2216, %v2196
        %v2218 = vsel %vm1462, %v2217, 0.0
        %v2219 = vrot.slane %v2218, 4
        %v2220 = vadd.f32 %v2218, %v2219
        %v2221 = vrot.slane %v2220, 2
        %v2222 = vadd.f32 %v2220, %v2221
        %v2223 = vrot.slane %v2222, 1
        %v2224 = vadd.f32 %v2222, %v2223
        %v2225 = vsel %vm745, %v2224, 0.0
        %s2226 = scalar_lea.vmem %s649, 1 [#allocation15]
        %2227 = vst [vmem:[%s2226] sm:$0x1] %v2225
        %v2228 = vld [vmem:[#allocation2] sm:$0xff]
        %v2229 = vld [vmem:[#allocation2 + $0x8] sm:$0xff]
        %v2230 = vpack.c.bf16 %v2229, %v2228
        %v2231 = vld [vmem:[#allocation8] sm:$0xf]
        %v2232 = vld [vmem:[#allocation8 + $0x4] sm:$0xf]
        %v2233 = vld [vmem:[#allocation8 + $0x8] sm:$0xf]
        %v2234 = vld [vmem:[#allocation8 + $0xc] sm:$0xf]
        %v2235 = vld [vmem:[%s6] sm:$0x1]
        %v2237 = vlaneseq
        %v2238 = vshrl.u32 %v2237, 7
        %v2239 = vsub.s32 0, %v2238
        %v2240 = vrot.slane %v2235, %v2239
        %v2246 = vunpack.c.l.b16 %v2231
        %v2247 = vunpack.c.l.b16 %v2232
        %v2248 = vunpack.c.l.b16 %v2233
        %v2249 = vunpack.c.l.b16 %v2234
        %v2250 = vpack.c.b16 %v2247, %v2246
        %v2251 = vpack.c.b16 %v2249, %v2248
        %v2255 = vsel %vm692, %v2230, 0
        %2257 = vmatprep.subr.bf16.mxu0 0
        %2258 = vmatpush1.bf16.msra.mxu0 %v2250
        %2259 = vmatprep.subr.bf16.mxu0 0
        %2260 = vmatpush1.bf16.msra.mxu0 %v2251
        %2261 = vmatprep.subr.bf16.mxu0 0
        %2262 = vmatpush1.bf16.msra.mxu0 0
        %2263 = vmatprep.subr.bf16.mxu0 0
        %2264 = vmatpush1.bf16.msra.mxu0 0
        %2265 = vmatprep.subr.bf16.mxu0 0
        %2266 = vmatpush1.bf16.msra.mxu0 0
        %2267 = vmatprep.subr.bf16.mxu0 0
        %2268 = vmatpush1.bf16.msra.mxu0 0
        %2269 = vmatprep.subr.bf16.mxu0 0
        %2270 = vmatpush1.bf16.msra.mxu0 0
        %2271 = vmatprep.subr.bf16.mxu0 0
        %2272 = vmatpush1.bf16.msra.mxu0 0
        %2273 = vmatprep.subr.bf16.mxu0 0
        %2274 = vmatpush1.bf16.msra.mxu0 0
        %2275 = vmatprep.subr.bf16.mxu0 0
        %2276 = vmatpush1.bf16.msra.mxu0 0
        %2277 = vmatprep.subr.bf16.mxu0 0
        %2278 = vmatpush1.bf16.msra.mxu0 0
        %2279 = vmatprep.subr.bf16.mxu0 0
        %2280 = vmatpush1.bf16.msra.mxu0 0
        %2281 = vmatprep.subr.bf16.mxu0 0
        %2282 = vmatpush1.bf16.msra.mxu0 0
        %2283 = vmatprep.subr.bf16.mxu0 0
        %2284 = vmatpush1.bf16.msra.mxu0 0
        %2285 = vmatprep.subr.bf16.mxu0 0
        %2286 = vmatpush1.bf16.msra.mxu0 0
        %2287 = vmatprep.subr.bf16.mxu0 0
        %2288 = vmatpush1.bf16.msra.mxu0 0
        %2289 = vmatprep.mubr.bf16.mxu0 0
        %2290 = vmatmul.mubr.bf16.gmra.mrb[0].mxu0 %v2255
        %v2291 = vpop.f32.mrb[0].mxu0
        %v2292 = vadd.f32 %v2240, %v2291
        %v2293 = vpop.f32.mrb[0].mxu0
        %v2294 = vpop.f32.mrb[0].mxu0
        %v2295 = vadd.f32 %v2240, %v2294
        %v2296 = vpop.f32.mrb[0].mxu0
        %2297 = vdwg.mxu0
        %v2298 = vadd.f32 %v666, %v2292
        %v2299 = vadd.f32 %v667, %v2295
        %v2300 = vsel %vm692, %v2298, 0.0
        %2301 = vadd.xlane.f32.xlu0 %v2300
        %v2302 = vpop.xlane.xlu0 %2301
        %v2303 = vsel %vm692, %v2299, 0.0
        %2304 = vadd.xlane.f32.xlu0 %v2303
        %v2305 = vpop.xlane.xlu0 %2304
        %v2306 = vrcp.pop 32.0
        %v2307 = vmul.f32 %v2302, %v2306
        %v2308 = vmul.f32 %v2305, %v2306
        %v2309 = vsub.f32 %v2298, %v2307
        %v2310 = vsub.f32 %v2299, %v2308
        %v2311 = vmul.f32 %v2309, %v2309
        %v2312 = vmul.f32 %v2310, %v2310
        %v2313 = vsel %vm692, %v2311, 0.0
        %2314 = vadd.xlane.f32.xlu0 %v2313
        %v2315 = vpop.xlane.xlu0 %2314
        %v2316 = vsel %vm692, %v2312, 0.0
        %2317 = vadd.xlane.f32.xlu0 %v2316
        %v2318 = vpop.xlane.xlu0 %2317
        %v2319 = vmul.f32 %v2315, %v2306
        %v2320 = vmul.f32 %v2318, %v2306
        %v2321 = vadd.f32 %v2319, 1e-05
        %v2322 = vadd.f32 %v2320, 1e-05
        %v2323 = vrsqrt.pop %v2321
        %v2324 = vrsqrt.pop %v2322
        %v2325 = vmul.f32 %v2309, %v2323
        %v2326 = vmul.f32 %v2310, %v2324
        %v2327 = vld [vmem:[#allocation9] sm:$0x1]
        %v2329 = vlaneseq
        %v2330 = vshrl.u32 %v2329, 7
        %v2331 = vsub.s32 0, %v2330
        %v2332 = vrot.slane %v2327, %v2331
        %v2334 = vmul.f32 %v2325, %v2332
        %v2335 = vmul.f32 %v2326, %v2332
        %v2336 = vld [vmem:[#allocation11] sm:$0x1]
        %v2338 = vlaneseq
        %v2339 = vshrl.u32 %v2338, 7
        %v2340 = vsub.s32 0, %v2339
        %v2341 = vrot.slane %v2336, %v2340
        %v2343 = vadd.f32 %v2334, %v2341
        %v2344 = vadd.f32 %v2335, %v2341
        %v2345 = vpack.c.bf16 %v2344, %v2343
        %v2346 = vld [vmem:[%s11] sm:$0xf]
        %v2347 = vld [vmem:[%s11 + $0x4] sm:$0xf]
        %v2348 = vld [vmem:[%s11 + $0x8] sm:$0xf]
        %v2349 = vld [vmem:[%s11 + $0xc] sm:$0xf]
        %v2350 = vld [vmem:[%s12] sm:$0x1]
        %v2352 = vlaneseq
        %v2353 = vshrl.u32 %v2352, 7
        %v2354 = vsub.s32 0, %v2353
        %v2355 = vrot.slane %v2350, %v2354
        %v2361 = vunpack.c.l.b16 %v2346
        %v2362 = vunpack.c.l.b16 %v2347
        %v2363 = vunpack.c.l.b16 %v2348
        %v2364 = vunpack.c.l.b16 %v2349
        %v2365 = vpack.c.b16 %v2362, %v2361
        %v2366 = vpack.c.b16 %v2364, %v2363
        %v2370 = vsel %vm692, %v2345, 0
        %2372 = vmatprep.subr.bf16.mxu0 0
        %2373 = vmatpush1.bf16.msra.mxu0 %v2365
        %2374 = vmatprep.subr.bf16.mxu0 0
        %2375 = vmatpush1.bf16.msra.mxu0 %v2366
        %2376 = vmatprep.subr.bf16.mxu0 0
        %2377 = vmatpush1.bf16.msra.mxu0 0
        %2378 = vmatprep.subr.bf16.mxu0 0
        %2379 = vmatpush1.bf16.msra.mxu0 0
        %2380 = vmatprep.subr.bf16.mxu0 0
        %2381 = vmatpush1.bf16.msra.mxu0 0
        %2382 = vmatprep.subr.bf16.mxu0 0
        %2383 = vmatpush1.bf16.msra.mxu0 0
        %2384 = vmatprep.subr.bf16.mxu0 0
        %2385 = vmatpush1.bf16.msra.mxu0 0
        %2386 = vmatprep.subr.bf16.mxu0 0
        %2387 = vmatpush1.bf16.msra.mxu0 0
        %2388 = vmatprep.subr.bf16.mxu0 0
        %2389 = vmatpush1.bf16.msra.mxu0 0
        %2390 = vmatprep.subr.bf16.mxu0 0
        %2391 = vmatpush1.bf16.msra.mxu0 0
        %2392 = vmatprep.subr.bf16.mxu0 0
        %2393 = vmatpush1.bf16.msra.mxu0 0
        %2394 = vmatprep.subr.bf16.mxu0 0
        %2395 = vmatpush1.bf16.msra.mxu0 0
        %2396 = vmatprep.subr.bf16.mxu0 0
        %2397 = vmatpush1.bf16.msra.mxu0 0
        %2398 = vmatprep.subr.bf16.mxu0 0
        %2399 = vmatpush1.bf16.msra.mxu0 0
        %2400 = vmatprep.subr.bf16.mxu0 0
        %2401 = vmatpush1.bf16.msra.mxu0 0
        %2402 = vmatprep.subr.bf16.mxu0 0
        %2403 = vmatpush1.bf16.msra.mxu0 0
        %2404 = vmatprep.mubr.bf16.mxu0 0
        %2405 = vmatmul.mubr.bf16.gmra.mrb[0].mxu0 %v2370
        %v2406 = vpop.f32.mrb[0].mxu0
        %v2407 = vadd.f32 %v2355, %v2406
        %v2408 = vpop.f32.mrb[0].mxu0
        %v2409 = vpop.f32.mrb[0].mxu0
        %v2410 = vadd.f32 %v2355, %v2409
        %v2411 = vpop.f32.mrb[0].mxu0
        %2412 = vdwg.mxu0
        %v2413 = vmax.f32 %v2407, 0.0
        %v2414 = vmax.f32 %v2410, 0.0
        %v2415 = vpack.c.bf16 %v2414, %v2413
        %v2416 = vld [vmem:[%s13] sm:$0xf]
        %v2417 = vld [vmem:[%s13 + $0x4] sm:$0xf]
        %v2418 = vld [vmem:[%s13 + $0x8] sm:$0xf]
        %v2419 = vld [vmem:[%s13 + $0xc] sm:$0xf]
        %v2420 = vld [vmem:[%s13 + $0x10] sm:$0xf]
        %v2421 = vld [vmem:[%s13 + $0x14] sm:$0xf]
        %v2422 = vld [vmem:[%s13 + $0x18] sm:$0xf]
        %v2423 = vld [vmem:[%s13 + $0x1c] sm:$0xf]
        %v2424 = vld [vmem:[%s14] sm:$0x1]
        %v2426 = vlaneseq
        %v2427 = vshrl.u32 %v2426, 7
        %v2428 = vsub.s32 0, %v2427
        %v2429 = vrot.slane %v2424, %v2428
        %v2439 = vunpack.c.l.b16 %v2416
        %v2440 = vunpack.c.l.b16 %v2417
        %v2441 = vunpack.c.l.b16 %v2418
        %v2442 = vunpack.c.l.b16 %v2419
        %v2443 = vunpack.c.l.b16 %v2420
        %v2444 = vunpack.c.l.b16 %v2421
        %v2445 = vunpack.c.l.b16 %v2422
        %v2446 = vunpack.c.l.b16 %v2423
        %v2447 = vpack.c.b16 %v2440, %v2439
        %v2448 = vpack.c.b16 %v2442, %v2441
        %v2449 = vpack.c.b16 %v2444, %v2443
        %v2450 = vpack.c.b16 %v2446, %v2445
        %vm2455 = vcmask 523264
        %v2457 = vsel %vm2455, %v2415, 0
        %2459 = vmatprep.subr.bf16.mxu0 0
        %2460 = vmatpush1.bf16.msra.mxu0 %v2447
        %2461 = vmatprep.subr.bf16.mxu0 0
        %2462 = vmatpush1.bf16.msra.mxu0 %v2448
        %2463 = vmatprep.subr.bf16.mxu0 0
        %2464 = vmatpush1.bf16.msra.mxu0 %v2449
        %2465 = vmatprep.subr.bf16.mxu0 0
        %2466 = vmatpush1.bf16.msra.mxu0 %v2450
        %2467 = vmatprep.subr.bf16.mxu0 0
        %2468 = vmatpush1.bf16.msra.mxu0 0
        %2469 = vmatprep.subr.bf16.mxu0 0
        %2470 = vmatpush1.bf16.msra.mxu0 0
        %2471 = vmatprep.subr.bf16.mxu0 0
        %2472 = vmatpush1.bf16.msra.mxu0 0
        %2473 = vmatprep.subr.bf16.mxu0 0
        %2474 = vmatpush1.bf16.msra.mxu0 0
        %2475 = vmatprep.subr.bf16.mxu0 0
        %2476 = vmatpush1.bf16.msra.mxu0 0
        %2477 = vmatprep.subr.bf16.mxu0 0
        %2478 = vmatpush1.bf16.msra.mxu0 0
        %2479 = vmatprep.subr.bf16.mxu0 0
        %2480 = vmatpush1.bf16.msra.mxu0 0
        %2481 = vmatprep.subr.bf16.mxu0 0
        %2482 = vmatpush1.bf16.msra.mxu0 0
        %2483 = vmatprep.subr.bf16.mxu0 0
        %2484 = vmatpush1.bf16.msra.mxu0 0
        %2485 = vmatprep.subr.bf16.mxu0 0
        %2486 = vmatpush1.bf16.msra.mxu0 0
        %2487 = vmatprep.subr.bf16.mxu0 0
        %2488 = vmatpush1.bf16.msra.mxu0 0
        %2489 = vmatprep.subr.bf16.mxu0 0
        %2490 = vmatpush1.bf16.msra.mxu0 0
        %2491 = vmatprep.mubr.bf16.mxu0 0
        %2492 = vmatmul.mubr.bf16.gmra.mrb[0].mxu0 %v2457
        %v2493 = vpop.f32.mrb[0].mxu0
        %v2494 = vadd.f32 %v2429, %v2493
        %v2495 = vpop.f32.mrb[0].mxu0
        %v2496 = vpop.f32.mrb[0].mxu0
        %v2497 = vadd.f32 %v2429, %v2496
        %v2498 = vpop.f32.mrb[0].mxu0
        %2499 = vdwg.mxu0
        %v2500 = vadd.f32 %v2343, %v2494
        %v2501 = vadd.f32 %v2344, %v2497
        %v2502 = vsel %vm692, %v2500, 0.0
        %2503 = vadd.xlane.f32.xlu0 %v2502
        %v2504 = vpop.xlane.xlu0 %2503
        %v2505 = vsel %vm692, %v2501, 0.0
        %2506 = vadd.xlane.f32.xlu0 %v2505
        %v2507 = vpop.xlane.xlu0 %2506
        %v2508 = vmul.f32 %v2504, %v2306
        %v2509 = vmul.f32 %v2507, %v2306
        %v2510 = vsub.f32 %v2500, %v2508
        %v2511 = vsub.f32 %v2501, %v2509
        %v2512 = vmul.f32 %v2510, %v2510
        %v2513 = vmul.f32 %v2511, %v2511
        %v2514 = vsel %vm692, %v2512, 0.0
        %2515 = vadd.xlane.f32.xlu0 %v2514
        %v2516 = vpop.xlane.xlu0 %2515
        %v2517 = vsel %vm692, %v2513, 0.0
        %2518 = vadd.xlane.f32.xlu0 %v2517
        %v2519 = vpop.xlane.xlu0 %2518
        %v2520 = vmul.f32 %v2516, %v2306
        %v2521 = vmul.f32 %v2519, %v2306
        %v2522 = vadd.f32 %v2520, 1e-05
        %v2523 = vadd.f32 %v2521, 1e-05
        %v2524 = vrsqrt.pop %v2522
        %v2525 = vrsqrt.pop %v2523
        %v2526 = vmul.f32 %v2510, %v2524
        %v2527 = vmul.f32 %v2511, %v2525
        %v2528 = vld [vmem:[#allocation12] sm:$0x1]
        %v2530 = vlaneseq
        %v2531 = vshrl.u32 %v2530, 7
        %v2532 = vsub.s32 0, %v2531
        %v2533 = vrot.slane %v2528, %v2532
        %v2535 = vmul.f32 %v2526, %v2533
        %v2536 = vmul.f32 %v2527, %v2533
        %v2537 = vld [vmem:[%s10] sm:$0x1]
        %v2539 = vlaneseq
        %v2540 = vshrl.u32 %v2539, 7
        %v2541 = vsub.s32 0, %v2540
        %v2542 = vrot.slane %v2537, %v2541
        %v2544 = vadd.f32 %v2535, %v2542
        %v2545 = vadd.f32 %v2536, %v2542
        %2546 = vst.msk [vmem:[%s642] sm:$0xff] %vm692, %v2544
        %2547 = vst.msk [vmem:[%s642 + $0x8] sm:$0xff] %vm692, %v2545
        %s2548 = sand.u32 %s378, 1
        %s2549 = scalar_lea.sflag [#allocation5], %s2548
        %s2550 = sand.u32 %s378, 1
        %s2551 = smul.addr %s2550, 16
        %s2552 = scalar_lea.vmem [#allocation14], %s2551
        %s2553 = sand.u32 %s404, 1
        %s2554 = scalar_lea.sflag [#allocation16], %s2553
        %s2555 = sand.u32 %s404, 1
        %s2556 = smul.addr %s2555, 2
        %s2557 = scalar_lea.vmem [#allocation15], %s2556
        // Predicated region
        $region105: #{tpu_custom_call.1} parent=79 // pred_check
          %p2558 = pneg %p388
        $region106: #{tpu_custom_call.1} parent=79 // pred_check_branch
          %2560 = sbr.rel (%p2558) target = $region108
        $region107: #{tpu_custom_call.1} parent=79 // pred_region
          %s2561 = smul.u32 2, %s40
          %s2563 = ssub.s32 256, 256
          %2564 = vsyncadd %s2549, %s2563
          %s2565 = smul.addr %s2561, 128
          %s2566 = scalar_lea.hbm %s15, %s2565
          %s2567 = sshll.u32 %s2552, 4
          %s2568 = int_to_ptr.vmem [resolvable:$true] %s2567
          %2573 = dma.vmem_to_hbm [thread:$0]  %s2568, 256, %s2566, %s2549, 128, 128, 8
        $region108: #{tpu_custom_call.1} parent=79 // pred_fallthru
          _
        // Predicated region
        $region109: #{tpu_custom_call.1} parent=79 // pred_check
          %p2574 = pneg %p414
        $region110: #{tpu_custom_call.1} parent=79 // pred_check_branch
          %2576 = sbr.rel (%p2574) target = $region112
        $region111: #{tpu_custom_call.1} parent=79 // pred_region
          %s2577 = smul.u32 2, %s40
          %s2579 = ssub.s32 32, 32
          %2580 = vsyncadd %s2554, %s2579
          %s2581 = smul.addr %s2577, 16
          %s2582 = scalar_lea.hbm %s16, %s2581
          %s2583 = sshll.u32 %s2557, 4
          %s2584 = int_to_ptr.vmem [resolvable:$true] %s2583
          %2589 = dma.vmem_to_hbm [thread:$0]  %s2584, 32, %s2582, %s2554, 16, 16, 1
        $region112: #{tpu_custom_call.1} parent=79 // pred_fallthru
          _
      $region80: #{tpu_custom_call.1} parent=5 // pred_fallthru
        _
      %p2590 = scmp.le.s32.totalorder 2, %s35
      // Predicated region
      $region113: #{tpu_custom_call.1} parent=5 // pred_check
        %p2591 = pneg %p2590
      $region114: #{tpu_custom_call.1} parent=5 // pred_check_branch
        %2593 = sbr.rel (%p2591) target = $region116
      $region115: #{tpu_custom_call.1} parent=5 // pred_region
        %s2594 = ssub.s32 %s35, 2
        // Predicated region
        $region117: #{tpu_custom_call.1} parent=115 // pred_check
          %p2595 = pneg %p394
        $region118: #{tpu_custom_call.1} parent=115 // pred_check_branch
          %2597 = sbr.rel (%p2595) target = $region120
        $region119: #{tpu_custom_call.1} parent=115 // pred_region
          %s2598 = sand.u32 %s379, 1
          %s2599 = scalar_lea.sflag [#allocation5], %s2598
          %s2600 = sand.u32 %s379, 1
          %s2601 = smul.addr %s2600, 16
          %s2602 = scalar_lea.vmem [#allocation14], %s2601
          %2603 = dma.done %s2599, 256
        $region120: #{tpu_custom_call.1} parent=115 // pred_fallthru
          _
        // Predicated region
        $region121: #{tpu_custom_call.1} parent=115 // pred_check
          %p2604 = pneg %p420
        $region122: #{tpu_custom_call.1} parent=115 // pred_check_branch
          %2606 = sbr.rel (%p2604) target = $region124
        $region123: #{tpu_custom_call.1} parent=115 // pred_region
          %s2607 = sand.u32 %s405, 1
          %s2608 = scalar_lea.sflag [#allocation16], %s2607
          %s2609 = sand.u32 %s405, 1
          %s2610 = smul.addr %s2609, 2
          %s2611 = scalar_lea.vmem [#allocation15], %s2610
          %2612 = dma.done %s2608, 32
        $region124: #{tpu_custom_call.1} parent=115 // pred_fallthru
          _
      $region116: #{tpu_custom_call.1} parent=5 // pred_fallthru
        _
    $region6: #{tpu_custom_call.1} parent=1 // loop_footer
      %s39 = sadd.s32 1, %s35
    $region7: #{tpu_custom_call.1} parent=1 // loop_footer_branch
      %34 = sbr.rel target = $region3
    $region8: #{tpu_custom_call.1} parent=1 // loop_exit
      _
    %2613 = vsyncpa [#allocation4], 1
    %s2614 = scalar_lea.sflag [#allocation4], 1
    %2615 = vsyncpa %s2614, 1
    %2616 = vsyncpa [#allocation7], 1
    %2617 = vsyncpa [#allocation10], 1
    %2618 = vsyncpa [#allocation13], 1
    %2619 = vsyncpa [#allocation5], 1
    %s2620 = scalar_lea.sflag [#allocation5], 1
    %2621 = vsyncpa %s2620, 1
    %2622 = vsyncpa [#allocation16], 1
    %s2623 = scalar_lea.sflag [#allocation16], 1
    %2624 = vsyncpa %s2623, 1

</llo_original>
